<compile_context>
chip_gen: v6e
topology: v6e:2x2x1
jax: 0.10.0
libtpu: 0.0.40
codegen_flags: <defaults>
</compile_context>

<pallas_src>
import numpy as np
import jax
import jax.numpy as jnp
from jax.experimental import pallas as pl
from jax.experimental.pallas import tpu as pltpu

LANE = 128


def _round_up(n, m):
    return ((n + m - 1) // m) * m


def _pick_bt(B, cap=32):
    """Conv batch tile: keep >= 2 grid steps (megacore) and cap the block size (VMEM)."""
    if B <= 1:
        return 1
    return max(1, min(cap, (B + 1) // 2))


# ---------------- Pallas kernels (hot paths) ----------------

def _conv_bn_prelu_pool_kernel(p_ref, w_ref, scale_ref, shift_ref, alpha_ref, o_ref):
    """Batch-tiled conv (im2col matmul) + folded BN + PReLU + 2x2 max-pool.

    p_ref  : (BT, 4*HP*WP, Kp)  bf16 patches; per image, rows grouped by pool quadrant
             (quadrant-major, (hp, wp)-minor).
    w_ref  : (Kp, 128)          bf16 weights, Cout zero-padded to 128 lanes.
    o_ref  : (BT, HP*WP, 128)   bf16 pooled output (lane-dense stores).
    """
    bt, m4, kp = p_ref.shape
    m = m4 // 4
    y = jnp.dot(p_ref[...].reshape(bt * m4, kp), w_ref[...],
                preferred_element_type=jnp.float32)
    y = y * scale_ref[...] + shift_ref[...]
    y = jnp.where(y > 0, y, alpha_ref[...] * y)
    y = y.reshape(bt, m4, LANE)
    pooled = jnp.maximum(jnp.maximum(y[:, 0 * m:1 * m], y[:, 1 * m:2 * m]),
                         jnp.maximum(y[:, 2 * m:3 * m], y[:, 3 * m:4 * m]))
    o_ref[...] = pooled.astype(o_ref.dtype)


def _fc_fused_kernel(x_ref, w1_ref, s_ref, sh_ref, alpha_ref, w2_ref, b2_ref, o_ref):
    """fc1 (bf16 MXU) + folded bn3 + PReLU + fc2 (f32); hidden never leaves VMEM."""
    h = jnp.dot(x_ref[...], w1_ref[...], preferred_element_type=jnp.float32)
    h = h * s_ref[...] + sh_ref[...]
    h = jnp.where(h > 0, h, alpha_ref[...] * h)
    # TODO(synk): nn.Dropout(p=0.5) is identity in eval mode; train-mode RNG dropout
    # would need pltpu.prng_seed / prng_random_bits here.
    o_ref[...] = jnp.dot(h, w2_ref[...], preferred_element_type=jnp.float32) + b2_ref[...]


# ---------------- im2col glue ----------------

def _im2col_pooled(x_nhwc, k, kp):
    """im2col whose rows are ordered (pool-quadrant, hp, wp) so the 2x2 max-pool is an
    elementwise max of 4 contiguous row groups inside the conv kernel.  Columns are
    channel-major, (ky,kx)-minor -> matches torch weight.reshape(Cout,-1).  The zero-pad
    to Kp columns and the bf16 cast are fused here so only one HBM intermediate exists."""
    B, H, W, C = x_nhwc.shape
    Ho, Wo = H - k + 1, W - k + 1
    HP, WP = Ho // 2, Wo // 2
    quads = []
    for qy in range(2):
        for qx in range(2):
            cols = []
            for ky in range(k):
                for kx in range(k):
                    cols.append(x_nhwc[:, qy + ky: qy + ky + 2 * HP: 2,
                                          qx + kx: qx + kx + 2 * WP: 2, :])
            patch = jnp.stack(cols, axis=-1)                  # (B, HP, WP, C, k*k)
            quads.append(patch.reshape(B, HP * WP, C * k * k))
    patches = jnp.stack(quads, axis=1).reshape(B, 4 * HP * WP, C * k * k)
    patches = jnp.pad(patches, ((0, 0), (0, 0), (0, kp - C * k * k)))
    return patches.astype(jnp.bfloat16), (HP, WP)


# ---------------- weight pre-baking (run once, outside jit) ----------------

def prepare_params(p, eps=1e-5):
    f32 = jnp.float32

    def bn_fold(gamma, beta, mean, var, bias):
        scale = (gamma / jnp.sqrt(var + eps)).astype(f32)
        shift = ((bias - mean) * scale + beta).astype(f32)
        return scale, shift

    def conv_prep(w_oihw, bias, g, b, m, v, alpha):
        cout, cin, k, _ = w_oihw.shape
        K = cin * k * k
        kp = _round_up(K, 32)                                 # conv1 25->32, conv2 500->512
        wmat = jnp.pad(w_oihw.reshape(cout, -1).T,
                       ((0, kp - K), (0, LANE - cout))).astype(jnp.bfloat16)
        s, sh = bn_fold(g, b, m, v, bias)
        pad = ((0, 0), (0, LANE - cout))
        return dict(
            k=k, cout=cout, w=wmat,
            scale=jnp.pad(s.reshape(1, -1), pad),             # padded channels -> exactly 0
            shift=jnp.pad(sh.reshape(1, -1), pad),
            alpha=jnp.broadcast_to(alpha.astype(f32), (1, LANE)))

    conv1 = conv_prep(p['conv1_w'], p['conv1_b'], p['bn1_g'], p['bn1_b'],
                      p['bn1_m'], p['bn1_v'], p['prelu_a'])
    conv2 = conv_prep(p['conv2_w'], p['conv2_b'], p['bn2_g'], p['bn2_b'],
                      p['bn2_m'], p['bn2_v'], p['prelu_a'])

    # fc path: fold the PyTorch NCHW flatten + conv2 lane padding into fc1's rows.
    hdim, fin = p['fc1_w'].shape                              # (500, 800)
    cout2 = conv2['cout']                                     # 50
    hw = fin // cout2                                         # 16
    hs = ws = int(round(hw ** 0.5))                           # 4, 4
    hp = _round_up(hdim, LANE)                                # 512
    nout = p['fc2_w'].shape[0]                                # 10

    w1 = p['fc1_w'].T.reshape(cout2, hs, ws, hdim)            # rows indexed (c, h, w)
    w1 = jnp.transpose(w1, (1, 2, 0, 3))                      # -> (h, w, c, hdim)  (NHWC order)
    w1 = jnp.pad(w1, ((0, 0), (0, 0), (0, LANE - cout2), (0, hp - hdim)))
    w1 = w1.reshape(hs * ws * LANE, hp).astype(jnp.bfloat16)  # accepts (B, hs*ws*128) directly

    s3, sh3 = bn_fold(p['bn3_g'], p['bn3_b'], p['bn3_m'], p['bn3_v'], p['fc1_b'])
    padh = ((0, 0), (0, hp - hdim))
    fc = dict(
        w1=w1,
        scale=jnp.pad(s3.reshape(1, -1), padh),
        shift=jnp.pad(sh3.reshape(1, -1), padh),
        alpha=jnp.broadcast_to(p['prelu_a'].astype(f32), (1, hp)),
        w2=jnp.pad(p['fc2_w'].T, ((0, hp - hdim), (0, LANE - nout))).astype(f32),
        b2=jnp.pad(p['fc2_b'].reshape(1, -1).astype(f32), ((0, 0), (0, LANE - nout))),
        nout=nout)
    return dict(conv1=conv1, conv2=conv2, fc=fc)


# ---------------- pallas_call wrappers ----------------

def _conv_bn_prelu_pool(x_nhwc, prep):
    """Fused conv(5x5, VALID) + folded BN + PReLU + 2x2 max-pool, batch-tiled.
    Returns (B, HP*WP, 128) bf16 lane-padded feature map and (HP, WP)."""
    B = x_nhwc.shape[0]
    kp = prep['w'].shape[0]
    patches, (HP, WP) = _im2col_pooled(x_nhwc, prep['k'], kp)  # (B, 4*HP*WP, Kp) bf16
    M4 = 4 * HP * WP
    bt = _pick_bt(B)
    Bp = _round_up(B, bt)
    if Bp != B:
        patches = jnp.pad(patches, ((0, Bp - B), (0, 0), (0, 0)))

    out = pl.pallas_call(
        _conv_bn_prelu_pool_kernel,
        out_shape=jax.ShapeDtypeStruct((Bp, HP * WP, LANE), jnp.bfloat16),
        grid=(Bp // bt,),
        in_specs=[
            pl.BlockSpec((bt, M4, kp), lambda b: (b, 0, 0)),
            pl.BlockSpec((kp, LANE), lambda b: (0, 0)),
            pl.BlockSpec((1, LANE), lambda b: (0, 0)),
            pl.BlockSpec((1, LANE), lambda b: (0, 0)),
            pl.BlockSpec((1, LANE), lambda b: (0, 0)),
        ],
        out_specs=pl.BlockSpec((bt, HP * WP, LANE), lambda b: (b, 0, 0)),
        compiler_params=pltpu.CompilerParams(dimension_semantics=("parallel",)),
    )(patches, prep['w'], prep['scale'], prep['shift'], prep['alpha'])
    return out[:B], (HP, WP)


def _fc_fused(x, prep):
    """fc1(800->500) + bn3 + PReLU + fc2(500->10); x is the lane-padded NHWC flatten
    (B, hs*ws*128) in bf16.  Batch-gridded, weights VMEM-resident."""
    B, Kin = x.shape
    Hp = prep['w1'].shape[1]
    mt = min(256, _round_up(B, 8))
    Bp = _round_up(B, mt)
    if Bp != B:
        x = jnp.pad(x, ((0, Bp - B), (0, 0)))

    out = pl.pallas_call(
        _fc_fused_kernel,
        out_shape=jax.ShapeDtypeStruct((Bp, LANE), jnp.float32),
        grid=(Bp // mt,),
        in_specs=[
            pl.BlockSpec((mt, Kin), lambda i: (i, 0)),
            pl.BlockSpec((Kin, Hp), lambda i: (0, 0)),
            pl.BlockSpec((1, Hp), lambda i: (0, 0)),
            pl.BlockSpec((1, Hp), lambda i: (0, 0)),
            pl.BlockSpec((1, Hp), lambda i: (0, 0)),
            pl.BlockSpec((Hp, LANE), lambda i: (0, 0)),
            pl.BlockSpec((1, LANE), lambda i: (0, 0)),
        ],
        out_specs=pl.BlockSpec((mt, LANE), lambda i: (i, 0)),
        compiler_params=pltpu.CompilerParams(dimension_semantics=("parallel",)),
    )(x, prep['w1'], prep['scale'], prep['shift'], prep['alpha'],
      prep['w2'], prep['b2'])
    return out[:B, :prep['nout']]


def make_lenet_forward(params):
    prep = prepare_params(params)            # pre-baked once; baked as constants in jit
    c1, c2, fc = prep['conv1'], prep['conv2'], prep['fc']

    @jax.jit
    def forward(x_nchw):
        B = x_nchw.shape[0]
        x = jnp.transpose(x_nchw, (0, 2, 3, 1))                       # NCHW -> NHWC
        y, (h1, w1_) = _conv_bn_prelu_pool(x, c1)                     # (B,144,128) bf16
        y = y[:, :, :c1['cout']].reshape(B, h1, w1_, c1['cout'])      # (B,12,12,20)
        y, (h2, w2_) = _conv_bn_prelu_pool(y, c2)                     # (B,16,128) bf16
        # NHWC flatten with lane padding kept: fc1's pre-permuted weight rows absorb the
        # NCHW flatten order and zero out the padded channels.
        y = y.reshape(B, h2 * w2_ * LANE)                             # (B,2048) bf16
        return _fc_fused(y, fc)                                       # (B,10) f32
    return forward


# ---------------- pure-JAX f32 reference (correctness check) ----------------

def reference_forward(x_nchw, p, eps=1e-5):
    def conv(x, w, b):
        y = jax.lax.conv_general_dilated(x, w, (1, 1), 'VALID',
                                         dimension_numbers=('NCHW', 'OIHW', 'NCHW'))
        return y + b.reshape(1, -1, 1, 1)

    def bn(x, g, bt, m, v):
        shape = (1, -1) + (1,) * (x.ndim - 2)
        return (x - m.reshape(shape)) / jnp.sqrt(v.reshape(shape) + eps) * g.reshape(shape) + bt.reshape(shape)

    def prelu(x, a):
        return jnp.where(x > 0, x, a[0] * x)

    def pool(x):
        B, C, H, W = x.shape
        return x.reshape(B, C, H // 2, 2, W // 2, 2).max(axis=(3, 5))

    x = conv(x_nchw, p['conv1_w'], p['conv1_b'])
    x = pool(prelu(bn(x, p['bn1_g'], p['bn1_b'], p['bn1_m'], p['bn1_v']), p['prelu_a']))
    x = conv(x, p['conv2_w'], p['conv2_b'])
    x = pool(prelu(bn(x, p['bn2_g'], p['bn2_b'], p['bn2_m'], p['bn2_v']), p['prelu_a']))
    x = x.reshape(x.shape[0], -1)
    x = x @ p['fc1_w'].T + p['fc1_b']
    x = prelu(bn(x, p['bn3_g'], p['bn3_b'], p['bn3_m'], p['bn3_v']), p['prelu_a'])
    x = x @ p['fc2_w'].T + p['fc2_b']
    return x


# ---------------- main ----------------

if __name__ == "__main__":
    key = jax.random.PRNGKey(0)
    ks = jax.random.split(key, 24)
    f32 = jnp.float32

    def bn_params(k0, k1, k2, k3, c):
        return (1.0 + 0.1 * jax.random.normal(k0, (c,), f32),     # gamma
                0.1 * jax.random.normal(k1, (c,), f32),           # beta
                0.1 * jax.random.normal(k2, (c,), f32),           # running_mean
                0.5 + jnp.abs(jax.random.normal(k3, (c,), f32)))  # running_var > 0

    bn1 = bn_params(ks[4], ks[5], ks[6], ks[7], 20)
    bn2 = bn_params(ks[8], ks[9], ks[10], ks[11], 50)
    bn3 = bn_params(ks[12], ks[13], ks[14], ks[15], 500)

    params = {
        'prelu_a': jnp.array([0.25], dtype=f32),                            # nn.PReLU() default
        'conv1_w': 0.1 * jax.random.normal(ks[0], (20, 1, 5, 5), f32),
        'conv1_b': 0.1 * jax.random.normal(ks[1], (20,), f32),
        'conv2_w': 0.05 * jax.random.normal(ks[2], (50, 20, 5, 5), f32),
        'conv2_b': 0.1 * jax.random.normal(ks[3], (50,), f32),
        'bn1_g': bn1[0], 'bn1_b': bn1[1], 'bn1_m': bn1[2], 'bn1_v': bn1[3],
        'bn2_g': bn2[0], 'bn2_b': bn2[1], 'bn2_m': bn2[2], 'bn2_v': bn2[3],
        'bn3_g': bn3[0], 'bn3_b': bn3[1], 'bn3_m': bn3[2], 'bn3_v': bn3[3],
        'fc1_w': 0.03 * jax.random.normal(ks[16], (500, 800), f32),
        'fc1_b': 0.1 * jax.random.normal(ks[17], (500,), f32),
        'fc2_w': 0.05 * jax.random.normal(ks[18], (10, 500), f32),
        'fc2_b': 0.1 * jax.random.normal(ks[19], (10,), f32),
    }

    # fc1 expects 800 = 50*4*4 flat features => spatial input must be 28x28, 1 channel.
    # B=8 -> conv batch tile BT=4 gives a 2-step "parallel" grid (exercises megacore).
    x = jax.random.normal(ks[20], (8, 1, 28, 28), f32)

    forward = make_lenet_forward(params)
    out = jax.block_until_ready(forward(x))

    ref = reference_forward(x, params)
    # conv patches/weights/activations and fc1 run in bf16 on the MXU (f32 accumulate,
    # f32 BN/PReLU epilogue), so tolerance is relaxed vs the pure-f32 reference.
    np.testing.assert_allclose(np.asarray(out), np.asarray(ref), rtol=5e-2, atol=5e-2)

    print("KERNEL_OK")
</pallas_src>

<mosaic_0001>
module attributes {stable_mosaic.version = 11 : i64} {
  func.func @_conv_bn_prelu_pool_kernel(%arg0: i32, %arg1: memref<4x576x32xbf16, #tpu.memory_space<vmem>>, %arg2: memref<32x128xbf16, #tpu.memory_space<vmem>>, %arg3: memref<1x128xf32, #tpu.memory_space<vmem>>, %arg4: memref<1x128xf32, #tpu.memory_space<vmem>>, %arg5: memref<1x128xf32, #tpu.memory_space<vmem>>, %arg6: memref<4x144x128xbf16, #tpu.memory_space<vmem>>) attributes {dimension_semantics = [#tpu.dimension_semantics<parallel>], iteration_bounds = array<i64: 2>, scalar_prefetch = 0 : i64, scratch_operands = 0 : i64, tpu.core_type = #tpu.core_type<tc>, window_params = [{transform_indices = @transform_0, window_bounds = array<i64: 4, 576, 32>}, {pipeline_mode = #tpu.pipeline_mode<synchronous>, transform_indices = @transform_1, window_bounds = array<i64: 32, 128>}, {pipeline_mode = #tpu.pipeline_mode<synchronous>, transform_indices = @transform_2, window_bounds = array<i64: 1, 128>}, {pipeline_mode = #tpu.pipeline_mode<synchronous>, transform_indices = @transform_3, window_bounds = array<i64: 1, 128>}, {pipeline_mode = #tpu.pipeline_mode<synchronous>, transform_indices = @transform_4, window_bounds = array<i64: 1, 128>}, {transform_indices = @transform_5, window_bounds = array<i64: 4, 144, 128>}]} {
    %c0 = arith.constant 0 : index
    %c0_0 = arith.constant 0 : index
    %c0_1 = arith.constant 0 : index
    %0 = vector.load %arg1[%c0, %c0_0, %c0_1] : memref<4x576x32xbf16, #tpu.memory_space<vmem>>, vector<4x576x32xbf16>
    %1 = vector.shape_cast %0 : vector<4x576x32xbf16> to vector<2304x32xbf16>
    %c0_2 = arith.constant 0 : index
    %c0_3 = arith.constant 0 : index
    %2 = vector.load %arg2[%c0_2, %c0_3] : memref<32x128xbf16, #tpu.memory_space<vmem>>, vector<32x128xbf16>
    %cst = arith.constant dense<0.000000e+00> : vector<2304x128xf32>
    %3 = tpu.matmul %1, %2, %cst {dimension_numbers = #tpu.dot_dimension_numbers<[1], [0], [0], [1], [0, 0, 1, 1], [], []>} : vector<2304x32xbf16>, vector<32x128xbf16>, vector<2304x128xf32> -> vector<2304x128xf32>
    %c0_4 = arith.constant 0 : index
    %c0_5 = arith.constant 0 : index
    %4 = vector.load %arg3[%c0_4, %c0_5] : memref<1x128xf32, #tpu.memory_space<vmem>>, vector<1x128xf32>
    %5 = vector.broadcast %4 : vector<1x128xf32> to vector<2304x128xf32>
    %6 = arith.mulf %3, %5 : vector<2304x128xf32>
    %c0_6 = arith.constant 0 : index
    %c0_7 = arith.constant 0 : index
    %7 = vector.load %arg4[%c0_6, %c0_7] : memref<1x128xf32, #tpu.memory_space<vmem>>, vector<1x128xf32>
    %8 = vector.broadcast %7 : vector<1x128xf32> to vector<2304x128xf32>
    %9 = arith.addf %6, %8 : vector<2304x128xf32>
    %cst_8 = arith.constant 0.000000e+00 : f32
    %10 = vector.broadcast %cst_8 : f32 to vector<2304x128xf32>
    %11 = arith.cmpf ogt, %9, %10 : vector<2304x128xf32>
    %c0_9 = arith.constant 0 : index
    %c0_10 = arith.constant 0 : index
    %12 = vector.load %arg5[%c0_9, %c0_10] : memref<1x128xf32, #tpu.memory_space<vmem>>, vector<1x128xf32>
    %13 = vector.broadcast %12 : vector<1x128xf32> to vector<2304x128xf32>
    %14 = arith.mulf %13, %9 : vector<2304x128xf32>
    %15 = arith.select %11, %9, %14 : vector<2304x128xi1>, vector<2304x128xf32>
    %16 = vector.shape_cast %15 : vector<2304x128xf32> to vector<4x576x128xf32>
    %17 = vector.extract_strided_slice %16 {offsets = [0, 0, 0], sizes = [4, 144, 128], strides = [1, 1, 1]} : vector<4x576x128xf32> to vector<4x144x128xf32>
    %18 = vector.extract_strided_slice %16 {offsets = [0, 144, 0], sizes = [4, 144, 128], strides = [1, 1, 1]} : vector<4x576x128xf32> to vector<4x144x128xf32>
    %19 = arith.maximumf %17, %18 : vector<4x144x128xf32>
    %20 = vector.extract_strided_slice %16 {offsets = [0, 288, 0], sizes = [4, 144, 128], strides = [1, 1, 1]} : vector<4x576x128xf32> to vector<4x144x128xf32>
    %21 = vector.extract_strided_slice %16 {offsets = [0, 432, 0], sizes = [4, 144, 128], strides = [1, 1, 1]} : vector<4x576x128xf32> to vector<4x144x128xf32>
    %22 = arith.maximumf %20, %21 : vector<4x144x128xf32>
    %23 = arith.maximumf %19, %22 : vector<4x144x128xf32>
    %24 = arith.truncf %23 : vector<4x144x128xf32> to vector<4x144x128xbf16>
    %c0_11 = arith.constant 0 : index
    %c0_12 = arith.constant 0 : index
    %c0_13 = arith.constant 0 : index
    %25 = vector.load %arg6[%c0_11, %c0_12, %c0_13] : memref<4x144x128xbf16, #tpu.memory_space<vmem>>, vector<4x144x128xbf16>
    tpu.vector_store %arg6[%c0_11, %c0_12, %c0_13], %24 {strides = array<i32>} : memref<4x144x128xbf16, #tpu.memory_space<vmem>>, vector<4x144x128xbf16>,
    return
  }
  func.func @transform_0(%arg0: i32) -> (i32, i32, i32) {
    %c0_i32 = arith.constant 0 : i32
    %c0_i32_0 = arith.constant 0 : i32
    %c0_i32_1 = arith.constant 0 : i32
    return %arg0, %c0_i32, %c0_i32_0 : i32, i32, i32
  }
  func.func @transform_1(%arg0: i32) -> (i32, i32) {
    %c0_i32 = arith.constant 0 : i32
    %c0_i32_0 = arith.constant 0 : i32
    %c0_i32_1 = arith.constant 0 : i32
    return %c0_i32, %c0_i32_0 : i32, i32
  }
  func.func @transform_2(%arg0: i32) -> (i32, i32) {
    %c0_i32 = arith.constant 0 : i32
    %c0_i32_0 = arith.constant 0 : i32
    %c0_i32_1 = arith.constant 0 : i32
    return %c0_i32, %c0_i32_0 : i32, i32
  }
  func.func @transform_3(%arg0: i32) -> (i32, i32) {
    %c0_i32 = arith.constant 0 : i32
    %c0_i32_0 = arith.constant 0 : i32
    %c0_i32_1 = arith.constant 0 : i32
    return %c0_i32, %c0_i32_0 : i32, i32
  }
  func.func @transform_4(%arg0: i32) -> (i32, i32) {
    %c0_i32 = arith.constant 0 : i32
    %c0_i32_0 = arith.constant 0 : i32
    %c0_i32_1 = arith.constant 0 : i32
    return %c0_i32, %c0_i32_0 : i32, i32
  }
  func.func @transform_5(%arg0: i32) -> (i32, i32, i32) {
    %c0_i32 = arith.constant 0 : i32
    %c0_i32_0 = arith.constant 0 : i32
    %c0_i32_1 = arith.constant 0 : i32
    return %arg0, %c0_i32, %c0_i32_0 : i32, i32, i32
  }
}

module attributes {stable_mosaic.version = 11 : i64} {
  func.func @_conv_bn_prelu_pool_kernel(%arg0: i32, %arg1: memref<4x64x512xbf16, #tpu.memory_space<vmem>>, %arg2: memref<512x128xbf16, #tpu.memory_space<vmem>>, %arg3: memref<1x128xf32, #tpu.memory_space<vmem>>, %arg4: memref<1x128xf32, #tpu.memory_space<vmem>>, %arg5: memref<1x128xf32, #tpu.memory_space<vmem>>, %arg6: memref<4x16x128xbf16, #tpu.memory_space<vmem>>) attributes {dimension_semantics = [#tpu.dimension_semantics<parallel>], iteration_bounds = array<i64: 2>, scalar_prefetch = 0 : i64, scratch_operands = 0 : i64, tpu.core_type = #tpu.core_type<tc>, window_params = [{transform_indices = @transform_0, window_bounds = array<i64: 4, 64, 512>}, {pipeline_mode = #tpu.pipeline_mode<synchronous>, transform_indices = @transform_1, window_bounds = array<i64: 512, 128>}, {pipeline_mode = #tpu.pipeline_mode<synchronous>, transform_indices = @transform_2, window_bounds = array<i64: 1, 128>}, {pipeline_mode = #tpu.pipeline_mode<synchronous>, transform_indices = @transform_3, window_bounds = array<i64: 1, 128>}, {pipeline_mode = #tpu.pipeline_mode<synchronous>, transform_indices = @transform_4, window_bounds = array<i64: 1, 128>}, {transform_indices = @transform_5, window_bounds = array<i64: 4, 16, 128>}]} {
    %c0 = arith.constant 0 : index
    %c0_0 = arith.constant 0 : index
    %c0_1 = arith.constant 0 : index
    %0 = vector.load %arg1[%c0, %c0_0, %c0_1] : memref<4x64x512xbf16, #tpu.memory_space<vmem>>, vector<4x64x512xbf16>
    %1 = vector.shape_cast %0 : vector<4x64x512xbf16> to vector<256x512xbf16>
    %c0_2 = arith.constant 0 : index
    %c0_3 = arith.constant 0 : index
    %2 = vector.load %arg2[%c0_2, %c0_3] : memref<512x128xbf16, #tpu.memory_space<vmem>>, vector<512x128xbf16>
    %cst = arith.constant dense<0.000000e+00> : vector<256x128xf32>
    %3 = tpu.matmul %1, %2, %cst {dimension_numbers = #tpu.dot_dimension_numbers<[1], [0], [0], [1], [0, 0, 1, 1], [], []>} : vector<256x512xbf16>, vector<512x128xbf16>, vector<256x128xf32> -> vector<256x128xf32>
    %c0_4 = arith.constant 0 : index
    %c0_5 = arith.constant 0 : index
    %4 = vector.load %arg3[%c0_4, %c0_5] : memref<1x128xf32, #tpu.memory_space<vmem>>, vector<1x128xf32>
    %5 = vector.broadcast %4 : vector<1x128xf32> to vector<256x128xf32>
    %6 = arith.mulf %3, %5 : vector<256x128xf32>
    %c0_6 = arith.constant 0 : index
    %c0_7 = arith.constant 0 : index
    %7 = vector.load %arg4[%c0_6, %c0_7] : memref<1x128xf32, #tpu.memory_space<vmem>>, vector<1x128xf32>
    %8 = vector.broadcast %7 : vector<1x128xf32> to vector<256x128xf32>
    %9 = arith.addf %6, %8 : vector<256x128xf32>
    %cst_8 = arith.constant 0.000000e+00 : f32
    %10 = vector.broadcast %cst_8 : f32 to vector<256x128xf32>
    %11 = arith.cmpf ogt, %9, %10 : vector<256x128xf32>
    %c0_9 = arith.constant 0 : index
    %c0_10 = arith.constant 0 : index
    %12 = vector.load %arg5[%c0_9, %c0_10] : memref<1x128xf32, #tpu.memory_space<vmem>>, vector<1x128xf32>
    %13 = vector.broadcast %12 : vector<1x128xf32> to vector<256x128xf32>
    %14 = arith.mulf %13, %9 : vector<256x128xf32>
    %15 = arith.select %11, %9, %14 : vector<256x128xi1>, vector<256x128xf32>
    %16 = vector.shape_cast %15 : vector<256x128xf32> to vector<4x64x128xf32>
    %17 = vector.extract_strided_slice %16 {offsets = [0, 0, 0], sizes = [4, 16, 128], strides = [1, 1, 1]} : vector<4x64x128xf32> to vector<4x16x128xf32>
    %18 = vector.extract_strided_slice %16 {offsets = [0, 16, 0], sizes = [4, 16, 128], strides = [1, 1, 1]} : vector<4x64x128xf32> to vector<4x16x128xf32>
    %19 = arith.maximumf %17, %18 : vector<4x16x128xf32>
    %20 = vector.extract_strided_slice %16 {offsets = [0, 32, 0], sizes = [4, 16, 128], strides = [1, 1, 1]} : vector<4x64x128xf32> to vector<4x16x128xf32>
    %21 = vector.extract_strided_slice %16 {offsets = [0, 48, 0], sizes = [4, 16, 128], strides = [1, 1, 1]} : vector<4x64x128xf32> to vector<4x16x128xf32>
    %22 = arith.maximumf %20, %21 : vector<4x16x128xf32>
    %23 = arith.maximumf %19, %22 : vector<4x16x128xf32>
    %24 = arith.truncf %23 : vector<4x16x128xf32> to vector<4x16x128xbf16>
    %c0_11 = arith.constant 0 : index
    %c0_12 = arith.constant 0 : index
    %c0_13 = arith.constant 0 : index
    %25 = vector.load %arg6[%c0_11, %c0_12, %c0_13] : memref<4x16x128xbf16, #tpu.memory_space<vmem>>, vector<4x16x128xbf16>
    tpu.vector_store %arg6[%c0_11, %c0_12, %c0_13], %24 {strides = array<i32>} : memref<4x16x128xbf16, #tpu.memory_space<vmem>>, vector<4x16x128xbf16>,
    return
  }
  func.func @transform_0(%arg0: i32) -> (i32, i32, i32) {
    %c0_i32 = arith.constant 0 : i32
    %c0_i32_0 = arith.constant 0 : i32
    %c0_i32_1 = arith.constant 0 : i32
    return %arg0, %c0_i32, %c0_i32_0 : i32, i32, i32
  }
  func.func @transform_1(%arg0: i32) -> (i32, i32) {
    %c0_i32 = arith.constant 0 : i32
    %c0_i32_0 = arith.constant 0 : i32
    %c0_i32_1 = arith.constant 0 : i32
    return %c0_i32, %c0_i32_0 : i32, i32
  }
  func.func @transform_2(%arg0: i32) -> (i32, i32) {
    %c0_i32 = arith.constant 0 : i32
    %c0_i32_0 = arith.constant 0 : i32
    %c0_i32_1 = arith.constant 0 : i32
    return %c0_i32, %c0_i32_0 : i32, i32
  }
  func.func @transform_3(%arg0: i32) -> (i32, i32) {
    %c0_i32 = arith.constant 0 : i32
    %c0_i32_0 = arith.constant 0 : i32
    %c0_i32_1 = arith.constant 0 : i32
    return %c0_i32, %c0_i32_0 : i32, i32
  }
  func.func @transform_4(%arg0: i32) -> (i32, i32) {
    %c0_i32 = arith.constant 0 : i32
    %c0_i32_0 = arith.constant 0 : i32
    %c0_i32_1 = arith.constant 0 : i32
    return %c0_i32, %c0_i32_0 : i32, i32
  }
  func.func @transform_5(%arg0: i32) -> (i32, i32, i32) {
    %c0_i32 = arith.constant 0 : i32
    %c0_i32_0 = arith.constant 0 : i32
    %c0_i32_1 = arith.constant 0 : i32
    return %arg0, %c0_i32, %c0_i32_0 : i32, i32, i32
  }
}

module attributes {stable_mosaic.version = 11 : i64} {
  func.func @_fc_fused_kernel(%arg0: i32, %arg1: memref<8x2048xbf16, #tpu.memory_space<vmem>>, %arg2: memref<2048x512xbf16, #tpu.memory_space<vmem>>, %arg3: memref<1x512xf32, #tpu.memory_space<vmem>>, %arg4: memref<1x512xf32, #tpu.memory_space<vmem>>, %arg5: memref<1x512xf32, #tpu.memory_space<vmem>>, %arg6: memref<512x128xf32, #tpu.memory_space<vmem>>, %arg7: memref<1x128xf32, #tpu.memory_space<vmem>>, %arg8: memref<8x128xf32, #tpu.memory_space<vmem>>) attributes {dimension_semantics = [#tpu.dimension_semantics<parallel>], iteration_bounds = array<i64: 1>, scalar_prefetch = 0 : i64, scratch_operands = 0 : i64, tpu.core_type = #tpu.core_type<tc>, window_params = [{transform_indices = @transform_0, window_bounds = array<i64: 8, 2048>}, {pipeline_mode = #tpu.pipeline_mode<synchronous>, transform_indices = @transform_1, window_bounds = array<i64: 2048, 512>}, {pipeline_mode = #tpu.pipeline_mode<synchronous>, transform_indices = @transform_2, window_bounds = array<i64: 1, 512>}, {pipeline_mode = #tpu.pipeline_mode<synchronous>, transform_indices = @transform_3, window_bounds = array<i64: 1, 512>}, {pipeline_mode = #tpu.pipeline_mode<synchronous>, transform_indices = @transform_4, window_bounds = array<i64: 1, 512>}, {pipeline_mode = #tpu.pipeline_mode<synchronous>, transform_indices = @transform_5, window_bounds = array<i64: 512, 128>}, {pipeline_mode = #tpu.pipeline_mode<synchronous>, transform_indices = @transform_6, window_bounds = array<i64: 1, 128>}, {transform_indices = @transform_7, window_bounds = array<i64: 8, 128>}]} {
    %c0 = arith.constant 0 : index
    %c0_0 = arith.constant 0 : index
    %0 = vector.load %arg1[%c0, %c0_0] : memref<8x2048xbf16, #tpu.memory_space<vmem>>, vector<8x2048xbf16>
    %c0_1 = arith.constant 0 : index
    %c0_2 = arith.constant 0 : index
    %1 = vector.load %arg2[%c0_1, %c0_2] : memref<2048x512xbf16, #tpu.memory_space<vmem>>, vector<2048x512xbf16>
    %cst = arith.constant dense<0.000000e+00> : vector<8x512xf32>
    %2 = tpu.matmul %0, %1, %cst {dimension_numbers = #tpu.dot_dimension_numbers<[1], [0], [0], [1], [0, 0, 1, 1], [], []>} : vector<8x2048xbf16>, vector<2048x512xbf16>, vector<8x512xf32> -> vector<8x512xf32>
    %c0_3 = arith.constant 0 : index
    %c0_4 = arith.constant 0 : index
    %3 = vector.load %arg3[%c0_3, %c0_4] : memref<1x512xf32, #tpu.memory_space<vmem>>, vector<1x512xf32>
    %4 = vector.broadcast %3 : vector<1x512xf32> to vector<8x512xf32>
    %5 = arith.mulf %2, %4 : vector<8x512xf32>
    %c0_5 = arith.constant 0 : index
    %c0_6 = arith.constant 0 : index
    %6 = vector.load %arg4[%c0_5, %c0_6] : memref<1x512xf32, #tpu.memory_space<vmem>>, vector<1x512xf32>
    %7 = vector.broadcast %6 : vector<1x512xf32> to vector<8x512xf32>
    %8 = arith.addf %5, %7 : vector<8x512xf32>
    %cst_7 = arith.constant 0.000000e+00 : f32
    %9 = vector.broadcast %cst_7 : f32 to vector<8x512xf32>
    %10 = arith.cmpf ogt, %8, %9 : vector<8x512xf32>
    %c0_8 = arith.constant 0 : index
    %c0_9 = arith.constant 0 : index
    %11 = vector.load %arg5[%c0_8, %c0_9] : memref<1x512xf32, #tpu.memory_space<vmem>>, vector<1x512xf32>
    %12 = vector.broadcast %11 : vector<1x512xf32> to vector<8x512xf32>
    %13 = arith.mulf %12, %8 : vector<8x512xf32>
    %14 = arith.select %10, %8, %13 : vector<8x512xi1>, vector<8x512xf32>
    %c0_10 = arith.constant 0 : index
    %c0_11 = arith.constant 0 : index
    %15 = vector.load %arg6[%c0_10, %c0_11] : memref<512x128xf32, #tpu.memory_space<vmem>>, vector<512x128xf32>
    %cst_12 = arith.constant dense<0.000000e+00> : vector<8x128xf32>
    %16 = tpu.matmul %14, %15, %cst_12 {dimension_numbers = #tpu.dot_dimension_numbers<[1], [0], [0], [1], [0, 0, 1, 1], [], []>} : vector<8x512xf32>, vector<512x128xf32>, vector<8x128xf32> -> vector<8x128xf32>
    %c0_13 = arith.constant 0 : index
    %c0_14 = arith.constant 0 : index
    %17 = vector.load %arg7[%c0_13, %c0_14] : memref<1x128xf32, #tpu.memory_space<vmem>>, vector<1x128xf32>
    %18 = vector.broadcast %17 : vector<1x128xf32> to vector<8x128xf32>
    %19 = arith.addf %16, %18 : vector<8x128xf32>
    %c0_15 = arith.constant 0 : index
    %c0_16 = arith.constant 0 : index
    %20 = vector.load %arg8[%c0_15, %c0_16] : memref<8x128xf32, #tpu.memory_space<vmem>>, vector<8x128xf32>
    tpu.vector_store %arg8[%c0_15, %c0_16], %19 {strides = array<i32>} : memref<8x128xf32, #tpu.memory_space<vmem>>, vector<8x128xf32>,
    return
  }
  func.func @transform_0(%arg0: i32) -> (i32, i32) {
    %c0_i32 = arith.constant 0 : i32
    %c0_i32_0 = arith.constant 0 : i32
    return %arg0, %c0_i32 : i32, i32
  }
  func.func @transform_1(%arg0: i32) -> (i32, i32) {
    %c0_i32 = arith.constant 0 : i32
    %c0_i32_0 = arith.constant 0 : i32
    %c0_i32_1 = arith.constant 0 : i32
    return %c0_i32, %c0_i32_0 : i32, i32
  }
  func.func @transform_2(%arg0: i32) -> (i32, i32) {
    %c0_i32 = arith.constant 0 : i32
    %c0_i32_0 = arith.constant 0 : i32
    %c0_i32_1 = arith.constant 0 : i32
    return %c0_i32, %c0_i32_0 : i32, i32
  }
  func.func @transform_3(%arg0: i32) -> (i32, i32) {
    %c0_i32 = arith.constant 0 : i32
    %c0_i32_0 = arith.constant 0 : i32
    %c0_i32_1 = arith.constant 0 : i32
    return %c0_i32, %c0_i32_0 : i32, i32
  }
  func.func @transform_4(%arg0: i32) -> (i32, i32) {
    %c0_i32 = arith.constant 0 : i32
    %c0_i32_0 = arith.constant 0 : i32
    %c0_i32_1 = arith.constant 0 : i32
    return %c0_i32, %c0_i32_0 : i32, i32
  }
  func.func @transform_5(%arg0: i32) -> (i32, i32) {
    %c0_i32 = arith.constant 0 : i32
    %c0_i32_0 = arith.constant 0 : i32
    %c0_i32_1 = arith.constant 0 : i32
    return %c0_i32, %c0_i32_0 : i32, i32
  }
  func.func @transform_6(%arg0: i32) -> (i32, i32) {
    %c0_i32 = arith.constant 0 : i32
    %c0_i32_0 = arith.constant 0 : i32
    %c0_i32_1 = arith.constant 0 : i32
    return %c0_i32, %c0_i32_0 : i32, i32
  }
  func.func @transform_7(%arg0: i32) -> (i32, i32) {
    %c0_i32 = arith.constant 0 : i32
    %c0_i32_0 = arith.constant 0 : i32
    return %arg0, %c0_i32 : i32, i32
  }
}

</mosaic_0001>

<llo_original>
// kernel: forward.3
$region0: #{forward.3}
  #allocation0 [shape = 'u32[]', space=smem, size = 0x4, offset = 0x4, fixed_abs, tag = 'smem constant byte address 0x4 - core index']
  #allocation1 [shape = 'u32[144,128]{1,0:T(1,128)}', space=vmem, size = 0x12000, scoped, tag = 'internal scratch']
  %s0 = inlined_call_operand.vmem [shape: bf16[8,576,32], index: 0, kind: input, shape index: {}]
  %s1 = inlined_call_operand.vmem [shape: bf16[32,128], index: 1, kind: input, shape index: {}]
  %s2 = inlined_call_operand.vmem [shape: f32[1,128], index: 2, kind: input, shape index: {}]
  %s3 = inlined_call_operand.vmem [shape: f32[1,128], index: 3, kind: input, shape index: {}]
  %s4 = inlined_call_operand.vmem [shape: f32[1,128], index: 4, kind: input, shape index: {}]
  %s5 = inlined_call_operand.vmem [shape: bf16[8,144,128], index: 5, kind: output, shape index: {}]
  %s6 = sld [smem:[#allocation0]]
  $region53: #{forward.3} parent=0
    _
  %s8 = ssub.s32 1, %s6
  %s9 = scalar_select 0, %s8, %s6
  loop: start=0, step=1, limit=4
  $region2: #{forward.3} parent=0 // loop_pre_header
    _
  $region3: #{forward.3} parent=0 // loop_header
    %s11 = sphi 0, %s15
    %p12 = scmp.ge.s32.totalorder %s11, 4
    %s21 = sphi 0, %s23
    %s24 = sphi 0, %s21
    %s25 = sphi 0, %s24
    %s41 = sphi 0, %s25
    %s45 = sphi 0, %s45
    %s47 = sphi 0, %s45
    %s48 = sphi 0, %s47
    %s62 = sphi 0, %s48
    %s66 = sphi 0, %s66
    %s68 = sphi 0, %s66
    %s69 = sphi 0, %s68
    %s83 = sphi 0, %s69
    %s87 = sphi 0, %s87
    %s89 = sphi 0, %s87
    %s90 = sphi 0, %s89
    %s104 = sphi 0, %s90
    %s108 = sphi 0, %s108
    %s110 = sphi 0, %s108
    %s111 = sphi 0, %s110
    %s125 = sphi 0, %s111
    %s131 = sphi 0, %s133
    %s134 = sphi 0, %s131
    %s135 = sphi 0, %s134
    %s151 = sphi 0, %s135
  $region4: #{forward.3} parent=0 // loop_header_branch
    %14 = sbr.rel (%p12) target = $region8
  $region5: #{forward.3} parent=0 // loop_body
    %s16 = ssub.s32 %s11, 1
    %s17 = ssub.s32 %s11, 2
    %s18 = sadd.s32 %s11, 1
    %s19 = ssub.s32 %s11, %s18
    %p20 = scmp.eq.s32.totalorder %s19, 0
    %s22 = sadd.s32 %s21, 1
    %s23 = scalar_select %p20, %s21, %s22
    %p26 = pneg %p20
    %p27 = scmp.eq.s32.totalorder %s11, 1
    %p28 = por %p26, %p27
    %p29 = scmp.ne.s32.totalorder %s21, %s24
    %p30 = scmp.eq.s32.totalorder %s11, 0
    %p31 = por %p29, %p30
    %p32 = scmp.ne.s32.totalorder %s21, %s24
    %p33 = scmp.eq.s32.totalorder %s16, 1
    %p34 = por %p32, %p33
    %p35 = scmp.ne.s32.totalorder %s24, %s25
    %p36 = scmp.eq.s32.totalorder %s16, 0
    %p37 = por %p35, %p36
    %p38 = scmp.ne.s32.totalorder %s24, %s25
    %p39 = scmp.eq.s32.totalorder %s17, 1
    %p40 = por %p38, %p39
    %p42 = scmp.ne.s32.totalorder %s25, %s41
    %p43 = scmp.eq.s32.totalorder %s17, 0
    %p44 = por %p42, %p43
    %s46 = sadd.s32 %s45, 1
    %p49 = scmp.eq.s32.totalorder %s11, 1
    %p50 = scmp.ne.s32.totalorder %s45, %s47
    %p51 = scmp.eq.s32.totalorder %s11, 0
    %p52 = por %p50, %p51
    %p53 = scmp.ne.s32.totalorder %s45, %s47
    %p54 = scmp.eq.s32.totalorder %s16, 1
    %p55 = por %p53, %p54
    %p56 = scmp.ne.s32.totalorder %s47, %s48
    %p57 = scmp.eq.s32.totalorder %s16, 0
    %p58 = por %p56, %p57
    %p59 = scmp.ne.s32.totalorder %s47, %s48
    %p60 = scmp.eq.s32.totalorder %s17, 1
    %p61 = por %p59, %p60
    %p63 = scmp.ne.s32.totalorder %s48, %s62
    %p64 = scmp.eq.s32.totalorder %s17, 0
    %p65 = por %p63, %p64
    %s67 = sadd.s32 %s66, 1
    %p70 = scmp.eq.s32.totalorder %s11, 1
    %p71 = scmp.ne.s32.totalorder %s66, %s68
    %p72 = scmp.eq.s32.totalorder %s11, 0
    %p73 = por %p71, %p72
    %p74 = scmp.ne.s32.totalorder %s66, %s68
    %p75 = scmp.eq.s32.totalorder %s16, 1
    %p76 = por %p74, %p75
    %p77 = scmp.ne.s32.totalorder %s68, %s69
    %p78 = scmp.eq.s32.totalorder %s16, 0
    %p79 = por %p77, %p78
    %p80 = scmp.ne.s32.totalorder %s68, %s69
    %p81 = scmp.eq.s32.totalorder %s17, 1
    %p82 = por %p80, %p81
    %p84 = scmp.ne.s32.totalorder %s69, %s83
    %p85 = scmp.eq.s32.totalorder %s17, 0
    %p86 = por %p84, %p85
    %s88 = sadd.s32 %s87, 1
    %p91 = scmp.eq.s32.totalorder %s11, 1
    %p92 = scmp.ne.s32.totalorder %s87, %s89
    %p93 = scmp.eq.s32.totalorder %s11, 0
    %p94 = por %p92, %p93
    %p95 = scmp.ne.s32.totalorder %s87, %s89
    %p96 = scmp.eq.s32.totalorder %s16, 1
    %p97 = por %p95, %p96
    %p98 = scmp.ne.s32.totalorder %s89, %s90
    %p99 = scmp.eq.s32.totalorder %s16, 0
    %p100 = por %p98, %p99
    %p101 = scmp.ne.s32.totalorder %s89, %s90
    %p102 = scmp.eq.s32.totalorder %s17, 1
    %p103 = por %p101, %p102
    %p105 = scmp.ne.s32.totalorder %s90, %s104
    %p106 = scmp.eq.s32.totalorder %s17, 0
    %p107 = por %p105, %p106
    %s109 = sadd.s32 %s108, 1
    %p112 = scmp.eq.s32.totalorder %s11, 1
    %p113 = scmp.ne.s32.totalorder %s108, %s110
    %p114 = scmp.eq.s32.totalorder %s11, 0
    %p115 = por %p113, %p114
    %p116 = scmp.ne.s32.totalorder %s108, %s110
    %p117 = scmp.eq.s32.totalorder %s16, 1
    %p118 = por %p116, %p117
    %p119 = scmp.ne.s32.totalorder %s110, %s111
    %p120 = scmp.eq.s32.totalorder %s16, 0
    %p121 = por %p119, %p120
    %p122 = scmp.ne.s32.totalorder %s110, %s111
    %p123 = scmp.eq.s32.totalorder %s17, 1
    %p124 = por %p122, %p123
    %p126 = scmp.ne.s32.totalorder %s111, %s125
    %p127 = scmp.eq.s32.totalorder %s17, 0
    %p128 = por %p126, %p127
    %s129 = ssub.s32 %s11, %s18
    %p130 = scmp.eq.s32.totalorder %s129, 0
    %s132 = sadd.s32 %s131, 1
    %s133 = scalar_select %p130, %s131, %s132
    %p136 = pneg %p130
    %p137 = scmp.eq.s32.totalorder %s11, 1
    %p138 = por %p136, %p137
    %p139 = scmp.ne.s32.totalorder %s131, %s134
    %p140 = scmp.eq.s32.totalorder %s11, 0
    %p141 = por %p139, %p140
    %p142 = scmp.ne.s32.totalorder %s131, %s134
    %p143 = scmp.eq.s32.totalorder %s16, 1
    %p144 = por %p142, %p143
    %p145 = scmp.ne.s32.totalorder %s134, %s135
    %p146 = scmp.eq.s32.totalorder %s16, 0
    %p147 = por %p145, %p146
    %p148 = scmp.ne.s32.totalorder %s134, %s135
    %p149 = scmp.eq.s32.totalorder %s17, 1
    %p150 = por %p148, %p149
    %p152 = scmp.ne.s32.totalorder %s135, %s151
    %p153 = scmp.eq.s32.totalorder %s17, 0
    %p154 = por %p152, %p153
    %p155 = scmp.le.s32.totalorder 1, %s11
    %p156 = scmp.lt.s32.totalorder %s11, 3
    %p157 = pnand %p155, %p156
    %p158 = pneg %p157
    // Predicated region
    $region9: #{forward.3} parent=5 // pred_check
      _
    $region10: #{forward.3} parent=5 // pred_check_branch
      %160 = sbr.rel (%p157) target = $region12
    $region11: #{forward.3} parent=5 // pred_region
      %s161 = ssub.s32 %s11, 1
      // Predicated region
      $region13: #{forward.3} parent=11 // pred_check
        %p162 = pneg %p58
      $region14: #{forward.3} parent=11 // pred_check_branch
        %164 = sbr.rel (%p162) target = $region16
      $region15: #{forward.3} parent=11 // pred_region
        _
      $region16: #{forward.3} parent=11 // pred_fallthru
        _
      // Predicated region
      $region17: #{forward.3} parent=11 // pred_check
        %p165 = pneg %p79
      $region18: #{forward.3} parent=11 // pred_check_branch
        %167 = sbr.rel (%p165) target = $region20
      $region19: #{forward.3} parent=11 // pred_region
        _
      $region20: #{forward.3} parent=11 // pred_fallthru
        _
      // Predicated region
      $region21: #{forward.3} parent=11 // pred_check
        %p168 = pneg %p100
      $region22: #{forward.3} parent=11 // pred_check_branch
        %170 = sbr.rel (%p168) target = $region24
      $region23: #{forward.3} parent=11 // pred_region
        _
      $region24: #{forward.3} parent=11 // pred_fallthru
        _
      // Predicated region
      $region25: #{forward.3} parent=11 // pred_check
        %p171 = pneg %p121
      $region26: #{forward.3} parent=11 // pred_check_branch
        %173 = sbr.rel (%p171) target = $region28
      $region27: #{forward.3} parent=11 // pred_region
        _
      $region28: #{forward.3} parent=11 // pred_fallthru
        _
    $region12: #{forward.3} parent=5 // pred_fallthru
      _
    %p174 = scmp.lt.s32.totalorder %s11, 2
    // Predicated region
    $region29: #{forward.3} parent=5 // pred_check
      %p175 = pneg %p174
    $region30: #{forward.3} parent=5 // pred_check_branch
      %177 = sbr.rel (%p175) target = $region32
    $region31: #{forward.3} parent=5 // pred_region
      // Predicated region
      $region33: #{forward.3} parent=31 // pred_check
        %p178 = pneg %p31
      $region34: #{forward.3} parent=31 // pred_check_branch
        %180 = sbr.rel (%p178) target = $region36
      $region35: #{forward.3} parent=31 // pred_region
        %s181 = smul.u32 4, %s11
        %p182 = scmp.lt.s32.totalorder %s181, 7
        %s183 = scalar_select %p182, %s181, 7
        %s184 = smul.addr %s183, 72
        %s185 = smul.addr %s184, 4
        %s186 = scalar_lea.vmem %s0, %s185
        %s187 = smul.u32 4, %s11
      $region36: #{forward.3} parent=31 // pred_fallthru
        _
    $region32: #{forward.3} parent=5 // pred_fallthru
      _
    %p188 = scmp.le.s32.totalorder 1, %s11
    %p189 = scmp.lt.s32.totalorder %s11, 3
    %p190 = pnand %p188, %p189
    %p191 = pneg %p190
    // Predicated region
    $region37: #{forward.3} parent=5 // pred_check
      _
    $region38: #{forward.3} parent=5 // pred_check_branch
      %193 = sbr.rel (%p190) target = $region40
    $region39: #{forward.3} parent=5 // pred_region
      %s194 = ssub.s32 %s11, 1
      %s195 = smul.u32 4, %s16
      %p196 = scmp.lt.s32.totalorder %s195, 7
      %s197 = scalar_select %p196, %s195, 7
      %s198 = smul.addr %s197, 72
      %s199 = smul.addr %s198, 4
      %s200 = scalar_lea.vmem %s0, %s199
      %p201 = pneg %p37
      %p202 = pneg %p34
      %p203 = pneg %p58
      %p204 = pneg %p55
      %p205 = pneg %p79
      %p206 = pneg %p76
      %p207 = pneg %p100
      %p208 = pneg %p97
      %p209 = pneg %p121
      %p210 = pneg %p118
      %p211 = pneg %p147
      %p212 = pneg %p144
      %s213 = smul.u32 4, %s16
      %p214 = scmp.lt.s32.totalorder %s213, 7
      %s215 = scalar_select %p214, %s213, 7
      %s216 = smul.addr %s215, 18
      %s217 = smul.addr %s216, 4
      %s218 = scalar_lea.vmem %s5, %s217
      %s219 = smul.u32 4, %s16
      %p220 = scmp.lt.s32.totalorder %s219, 7
      %s221 = scalar_select %p220, %s219, 7
      %s222 = smul.addr %s221, 72
      %s223 = smul.addr %s222, 4
      %s224 = scalar_lea.vmem %s0, %s223
      %s225 = smul.u32 4, %s16
      %s226 = smul.u32 4, %s16
      %p227 = scmp.lt.s32.totalorder %s226, 7
      %s228 = scalar_select %p227, %s226, 7
      %s229 = smul.addr %s228, 18
      %s230 = smul.addr %s229, 4
      %s231 = scalar_lea.vmem %s5, %s230
      %s232 = smul.u32 4, %s16
      %v234 = vld [vmem:[%s224] sm:$0xf]
      %v235 = vld [vmem:[%s224 + $0x4] sm:$0xf]
      %v236 = vld [vmem:[%s224 + $0x8] sm:$0xf]
      %v237 = vld [vmem:[%s224 + $0xc] sm:$0xf]
      %v238 = vld [vmem:[%s224 + $0x10] sm:$0xf]
      %v239 = vld [vmem:[%s224 + $0x14] sm:$0xf]
      %v240 = vld [vmem:[%s224 + $0x18] sm:$0xf]
      %v241 = vld [vmem:[%s224 + $0x1c] sm:$0xf]
      %v242 = vld [vmem:[%s224 + $0x20] sm:$0xf]
      %v243 = vld [vmem:[%s224 + $0x24] sm:$0xf]
      %v244 = vld [vmem:[%s224 + $0x28] sm:$0xf]
      %v245 = vld [vmem:[%s224 + $0x2c] sm:$0xf]
      %v246 = vld [vmem:[%s224 + $0x30] sm:$0xf]
      %v247 = vld [vmem:[%s224 + $0x34] sm:$0xf]
      %v248 = vld [vmem:[%s224 + $0x38] sm:$0xf]
      %v249 = vld [vmem:[%s224 + $0x3c] sm:$0xf]
      %v250 = vld [vmem:[%s224 + $0x40] sm:$0xf]
      %v251 = vld [vmem:[%s224 + $0x44] sm:$0xf]
      %v252 = vld [vmem:[%s224 + $0x48] sm:$0xf]
      %v253 = vld [vmem:[%s224 + $0x4c] sm:$0xf]
      %v254 = vld [vmem:[%s224 + $0x50] sm:$0xf]
      %v255 = vld [vmem:[%s224 + $0x54] sm:$0xf]
      %v256 = vld [vmem:[%s224 + $0x58] sm:$0xf]
      %v257 = vld [vmem:[%s224 + $0x5c] sm:$0xf]
      %v258 = vld [vmem:[%s224 + $0x60] sm:$0xf]
      %v259 = vld [vmem:[%s224 + $0x64] sm:$0xf]
      %v260 = vld [vmem:[%s224 + $0x68] sm:$0xf]
      %v261 = vld [vmem:[%s224 + $0x6c] sm:$0xf]
      %v262 = vld [vmem:[%s224 + $0x70] sm:$0xf]
      %v263 = vld [vmem:[%s224 + $0x74] sm:$0xf]
      %v264 = vld [vmem:[%s224 + $0x78] sm:$0xf]
      %v265 = vld [vmem:[%s224 + $0x7c] sm:$0xf]
      %v266 = vld [vmem:[%s224 + $0x80] sm:$0xf]
      %v267 = vld [vmem:[%s224 + $0x84] sm:$0xf]
      %v268 = vld [vmem:[%s224 + $0x88] sm:$0xf]
      %v269 = vld [vmem:[%s224 + $0x8c] sm:$0xf]
      %v270 = vld [vmem:[%s224 + $0x90] sm:$0xf]
      %v271 = vld [vmem:[%s224 + $0x94] sm:$0xf]
      %v272 = vld [vmem:[%s224 + $0x98] sm:$0xf]
      %v273 = vld [vmem:[%s224 + $0x9c] sm:$0xf]
      %v274 = vld [vmem:[%s224 + $0xa0] sm:$0xf]
      %v275 = vld [vmem:[%s224 + $0xa4] sm:$0xf]
      %v276 = vld [vmem:[%s224 + $0xa8] sm:$0xf]
      %v277 = vld [vmem:[%s224 + $0xac] sm:$0xf]
      %v278 = vld [vmem:[%s224 + $0xb0] sm:$0xf]
      %v279 = vld [vmem:[%s224 + $0xb4] sm:$0xf]
      %v280 = vld [vmem:[%s224 + $0xb8] sm:$0xf]
      %v281 = vld [vmem:[%s224 + $0xbc] sm:$0xf]
      %v282 = vld [vmem:[%s224 + $0xc0] sm:$0xf]
      %v283 = vld [vmem:[%s224 + $0xc4] sm:$0xf]
      %v284 = vld [vmem:[%s224 + $0xc8] sm:$0xf]
      %v285 = vld [vmem:[%s224 + $0xcc] sm:$0xf]
      %v286 = vld [vmem:[%s224 + $0xd0] sm:$0xf]
      %v287 = vld [vmem:[%s224 + $0xd4] sm:$0xf]
      %v288 = vld [vmem:[%s224 + $0xd8] sm:$0xf]
      %v289 = vld [vmem:[%s224 + $0xdc] sm:$0xf]
      %v290 = vld [vmem:[%s224 + $0xe0] sm:$0xf]
      %v291 = vld [vmem:[%s224 + $0xe4] sm:$0xf]
      %v292 = vld [vmem:[%s224 + $0xe8] sm:$0xf]
      %v293 = vld [vmem:[%s224 + $0xec] sm:$0xf]
      %v294 = vld [vmem:[%s224 + $0xf0] sm:$0xf]
      %v295 = vld [vmem:[%s224 + $0xf4] sm:$0xf]
      %v296 = vld [vmem:[%s224 + $0xf8] sm:$0xf]
      %v297 = vld [vmem:[%s224 + $0xfc] sm:$0xf]
      %v298 = vld [vmem:[%s224 + $0x100] sm:$0xf]
      %v299 = vld [vmem:[%s224 + $0x104] sm:$0xf]
      %v300 = vld [vmem:[%s224 + $0x108] sm:$0xf]
      %v301 = vld [vmem:[%s224 + $0x10c] sm:$0xf]
      %v302 = vld [vmem:[%s224 + $0x110] sm:$0xf]
      %v303 = vld [vmem:[%s224 + $0x114] sm:$0xf]
      %v304 = vld [vmem:[%s224 + $0x118] sm:$0xf]
      %v305 = vld [vmem:[%s224 + $0x11c] sm:$0xf]
      %v306 = vld [vmem:[%s224 + $0x120] sm:$0xf]
      %v307 = vld [vmem:[%s224 + $0x124] sm:$0xf]
      %v308 = vld [vmem:[%s224 + $0x128] sm:$0xf]
      %v309 = vld [vmem:[%s224 + $0x12c] sm:$0xf]
      %v310 = vld [vmem:[%s224 + $0x130] sm:$0xf]
      %v311 = vld [vmem:[%s224 + $0x134] sm:$0xf]
      %v312 = vld [vmem:[%s224 + $0x138] sm:$0xf]
      %v313 = vld [vmem:[%s224 + $0x13c] sm:$0xf]
      %v314 = vld [vmem:[%s224 + $0x140] sm:$0xf]
      %v315 = vld [vmem:[%s224 + $0x144] sm:$0xf]
      %v316 = vld [vmem:[%s224 + $0x148] sm:$0xf]
      %v317 = vld [vmem:[%s224 + $0x14c] sm:$0xf]
      %v318 = vld [vmem:[%s224 + $0x150] sm:$0xf]
      %v319 = vld [vmem:[%s224 + $0x154] sm:$0xf]
      %v320 = vld [vmem:[%s224 + $0x158] sm:$0xf]
      %v321 = vld [vmem:[%s224 + $0x15c] sm:$0xf]
      %v322 = vld [vmem:[%s224 + $0x160] sm:$0xf]
      %v323 = vld [vmem:[%s224 + $0x164] sm:$0xf]
      %v324 = vld [vmem:[%s224 + $0x168] sm:$0xf]
      %v325 = vld [vmem:[%s224 + $0x16c] sm:$0xf]
      %v326 = vld [vmem:[%s224 + $0x170] sm:$0xf]
      %v327 = vld [vmem:[%s224 + $0x174] sm:$0xf]
      %v328 = vld [vmem:[%s224 + $0x178] sm:$0xf]
      %v329 = vld [vmem:[%s224 + $0x17c] sm:$0xf]
      %v330 = vld [vmem:[%s224 + $0x180] sm:$0xf]
      %v331 = vld [vmem:[%s224 + $0x184] sm:$0xf]
      %v332 = vld [vmem:[%s224 + $0x188] sm:$0xf]
      %v333 = vld [vmem:[%s224 + $0x18c] sm:$0xf]
      %v334 = vld [vmem:[%s224 + $0x190] sm:$0xf]
      %v335 = vld [vmem:[%s224 + $0x194] sm:$0xf]
      %v336 = vld [vmem:[%s224 + $0x198] sm:$0xf]
      %v337 = vld [vmem:[%s224 + $0x19c] sm:$0xf]
      %v338 = vld [vmem:[%s224 + $0x1a0] sm:$0xf]
      %v339 = vld [vmem:[%s224 + $0x1a4] sm:$0xf]
      %v340 = vld [vmem:[%s224 + $0x1a8] sm:$0xf]
      %v341 = vld [vmem:[%s224 + $0x1ac] sm:$0xf]
      %v342 = vld [vmem:[%s224 + $0x1b0] sm:$0xf]
      %v343 = vld [vmem:[%s224 + $0x1b4] sm:$0xf]
      %v344 = vld [vmem:[%s224 + $0x1b8] sm:$0xf]
      %v345 = vld [vmem:[%s224 + $0x1bc] sm:$0xf]
      %v346 = vld [vmem:[%s224 + $0x1c0] sm:$0xf]
      %v347 = vld [vmem:[%s224 + $0x1c4] sm:$0xf]
      %v348 = vld [vmem:[%s224 + $0x1c8] sm:$0xf]
      %v349 = vld [vmem:[%s224 + $0x1cc] sm:$0xf]
      %v350 = vld [vmem:[%s224 + $0x1d0] sm:$0xf]
      %v351 = vld [vmem:[%s224 + $0x1d4] sm:$0xf]
      %v352 = vld [vmem:[%s224 + $0x1d8] sm:$0xf]
      %v353 = vld [vmem:[%s224 + $0x1dc] sm:$0xf]
      %v354 = vld [vmem:[%s224 + $0x1e0] sm:$0xf]
      %v355 = vld [vmem:[%s224 + $0x1e4] sm:$0xf]
      %v356 = vld [vmem:[%s224 + $0x1e8] sm:$0xf]
      %v357 = vld [vmem:[%s224 + $0x1ec] sm:$0xf]
      %v358 = vld [vmem:[%s224 + $0x1f0] sm:$0xf]
      %v359 = vld [vmem:[%s224 + $0x1f4] sm:$0xf]
      %v360 = vld [vmem:[%s224 + $0x1f8] sm:$0xf]
      %v361 = vld [vmem:[%s224 + $0x1fc] sm:$0xf]
      %v362 = vld [vmem:[%s224 + $0x200] sm:$0xf]
      %v363 = vld [vmem:[%s224 + $0x204] sm:$0xf]
      %v364 = vld [vmem:[%s224 + $0x208] sm:$0xf]
      %v365 = vld [vmem:[%s224 + $0x20c] sm:$0xf]
      %v366 = vld [vmem:[%s224 + $0x210] sm:$0xf]
      %v367 = vld [vmem:[%s224 + $0x214] sm:$0xf]
      %v368 = vld [vmem:[%s224 + $0x218] sm:$0xf]
      %v369 = vld [vmem:[%s224 + $0x21c] sm:$0xf]
      %v370 = vld [vmem:[%s224 + $0x220] sm:$0xf]
      %v371 = vld [vmem:[%s224 + $0x224] sm:$0xf]
      %v372 = vld [vmem:[%s224 + $0x228] sm:$0xf]
      %v373 = vld [vmem:[%s224 + $0x22c] sm:$0xf]
      %v374 = vld [vmem:[%s224 + $0x230] sm:$0xf]
      %v375 = vld [vmem:[%s224 + $0x234] sm:$0xf]
      %v376 = vld [vmem:[%s224 + $0x238] sm:$0xf]
      %v377 = vld [vmem:[%s224 + $0x23c] sm:$0xf]
      %v378 = vld [vmem:[%s224 + $0x240] sm:$0xf]
      %v379 = vld [vmem:[%s224 + $0x244] sm:$0xf]
      %v380 = vld [vmem:[%s224 + $0x248] sm:$0xf]
      %v381 = vld [vmem:[%s224 + $0x24c] sm:$0xf]
      %v382 = vld [vmem:[%s224 + $0x250] sm:$0xf]
      %v383 = vld [vmem:[%s224 + $0x254] sm:$0xf]
      %v384 = vld [vmem:[%s224 + $0x258] sm:$0xf]
      %v385 = vld [vmem:[%s224 + $0x25c] sm:$0xf]
      %v386 = vld [vmem:[%s224 + $0x260] sm:$0xf]
      %v387 = vld [vmem:[%s224 + $0x264] sm:$0xf]
      %v388 = vld [vmem:[%s224 + $0x268] sm:$0xf]
      %v389 = vld [vmem:[%s224 + $0x26c] sm:$0xf]
      %v390 = vld [vmem:[%s224 + $0x270] sm:$0xf]
      %v391 = vld [vmem:[%s224 + $0x274] sm:$0xf]
      %v392 = vld [vmem:[%s224 + $0x278] sm:$0xf]
      %v393 = vld [vmem:[%s224 + $0x27c] sm:$0xf]
      %v394 = vld [vmem:[%s224 + $0x280] sm:$0xf]
      %v395 = vld [vmem:[%s224 + $0x284] sm:$0xf]
      %v396 = vld [vmem:[%s224 + $0x288] sm:$0xf]
      %v397 = vld [vmem:[%s224 + $0x28c] sm:$0xf]
      %v398 = vld [vmem:[%s224 + $0x290] sm:$0xf]
      %v399 = vld [vmem:[%s224 + $0x294] sm:$0xf]
      %v400 = vld [vmem:[%s224 + $0x298] sm:$0xf]
      %v401 = vld [vmem:[%s224 + $0x29c] sm:$0xf]
      %v402 = vld [vmem:[%s224 + $0x2a0] sm:$0xf]
      %v403 = vld [vmem:[%s224 + $0x2a4] sm:$0xf]
      %v404 = vld [vmem:[%s224 + $0x2a8] sm:$0xf]
      %v405 = vld [vmem:[%s224 + $0x2ac] sm:$0xf]
      %v406 = vld [vmem:[%s224 + $0x2b0] sm:$0xf]
      %v407 = vld [vmem:[%s224 + $0x2b4] sm:$0xf]
      %v408 = vld [vmem:[%s224 + $0x2b8] sm:$0xf]
      %v409 = vld [vmem:[%s224 + $0x2bc] sm:$0xf]
      %v410 = vld [vmem:[%s224 + $0x2c0] sm:$0xf]
      %v411 = vld [vmem:[%s224 + $0x2c4] sm:$0xf]
      %v412 = vld [vmem:[%s224 + $0x2c8] sm:$0xf]
      %v413 = vld [vmem:[%s224 + $0x2cc] sm:$0xf]
      %v414 = vld [vmem:[%s224 + $0x2d0] sm:$0xf]
      %v415 = vld [vmem:[%s224 + $0x2d4] sm:$0xf]
      %v416 = vld [vmem:[%s224 + $0x2d8] sm:$0xf]
      %v417 = vld [vmem:[%s224 + $0x2dc] sm:$0xf]
      %v418 = vld [vmem:[%s224 + $0x2e0] sm:$0xf]
      %v419 = vld [vmem:[%s224 + $0x2e4] sm:$0xf]
      %v420 = vld [vmem:[%s224 + $0x2e8] sm:$0xf]
      %v421 = vld [vmem:[%s224 + $0x2ec] sm:$0xf]
      %v422 = vld [vmem:[%s224 + $0x2f0] sm:$0xf]
      %v423 = vld [vmem:[%s224 + $0x2f4] sm:$0xf]
      %v424 = vld [vmem:[%s224 + $0x2f8] sm:$0xf]
      %v425 = vld [vmem:[%s224 + $0x2fc] sm:$0xf]
      %v426 = vld [vmem:[%s224 + $0x300] sm:$0xf]
      %v427 = vld [vmem:[%s224 + $0x304] sm:$0xf]
      %v428 = vld [vmem:[%s224 + $0x308] sm:$0xf]
      %v429 = vld [vmem:[%s224 + $0x30c] sm:$0xf]
      %v430 = vld [vmem:[%s224 + $0x310] sm:$0xf]
      %v431 = vld [vmem:[%s224 + $0x314] sm:$0xf]
      %v432 = vld [vmem:[%s224 + $0x318] sm:$0xf]
      %v433 = vld [vmem:[%s224 + $0x31c] sm:$0xf]
      %v434 = vld [vmem:[%s224 + $0x320] sm:$0xf]
      %v435 = vld [vmem:[%s224 + $0x324] sm:$0xf]
      %v436 = vld [vmem:[%s224 + $0x328] sm:$0xf]
      %v437 = vld [vmem:[%s224 + $0x32c] sm:$0xf]
      %v438 = vld [vmem:[%s224 + $0x330] sm:$0xf]
      %v439 = vld [vmem:[%s224 + $0x334] sm:$0xf]
      %v440 = vld [vmem:[%s224 + $0x338] sm:$0xf]
      %v441 = vld [vmem:[%s224 + $0x33c] sm:$0xf]
      %v442 = vld [vmem:[%s224 + $0x340] sm:$0xf]
      %v443 = vld [vmem:[%s224 + $0x344] sm:$0xf]
      %v444 = vld [vmem:[%s224 + $0x348] sm:$0xf]
      %v445 = vld [vmem:[%s224 + $0x34c] sm:$0xf]
      %v446 = vld [vmem:[%s224 + $0x350] sm:$0xf]
      %v447 = vld [vmem:[%s224 + $0x354] sm:$0xf]
      %v448 = vld [vmem:[%s224 + $0x358] sm:$0xf]
      %v449 = vld [vmem:[%s224 + $0x35c] sm:$0xf]
      %v450 = vld [vmem:[%s224 + $0x360] sm:$0xf]
      %v451 = vld [vmem:[%s224 + $0x364] sm:$0xf]
      %v452 = vld [vmem:[%s224 + $0x368] sm:$0xf]
      %v453 = vld [vmem:[%s224 + $0x36c] sm:$0xf]
      %v454 = vld [vmem:[%s224 + $0x370] sm:$0xf]
      %v455 = vld [vmem:[%s224 + $0x374] sm:$0xf]
      %v456 = vld [vmem:[%s224 + $0x378] sm:$0xf]
      %v457 = vld [vmem:[%s224 + $0x37c] sm:$0xf]
      %v458 = vld [vmem:[%s224 + $0x380] sm:$0xf]
      %v459 = vld [vmem:[%s224 + $0x384] sm:$0xf]
      %v460 = vld [vmem:[%s224 + $0x388] sm:$0xf]
      %v461 = vld [vmem:[%s224 + $0x38c] sm:$0xf]
      %v462 = vld [vmem:[%s224 + $0x390] sm:$0xf]
      %v463 = vld [vmem:[%s224 + $0x394] sm:$0xf]
      %v464 = vld [vmem:[%s224 + $0x398] sm:$0xf]
      %v465 = vld [vmem:[%s224 + $0x39c] sm:$0xf]
      %v466 = vld [vmem:[%s224 + $0x3a0] sm:$0xf]
      %v467 = vld [vmem:[%s224 + $0x3a4] sm:$0xf]
      %v468 = vld [vmem:[%s224 + $0x3a8] sm:$0xf]
      %v469 = vld [vmem:[%s224 + $0x3ac] sm:$0xf]
      %v470 = vld [vmem:[%s224 + $0x3b0] sm:$0xf]
      %v471 = vld [vmem:[%s224 + $0x3b4] sm:$0xf]
      %v472 = vld [vmem:[%s224 + $0x3b8] sm:$0xf]
      %v473 = vld [vmem:[%s224 + $0x3bc] sm:$0xf]
      %v474 = vld [vmem:[%s224 + $0x3c0] sm:$0xf]
      %v475 = vld [vmem:[%s224 + $0x3c4] sm:$0xf]
      %v476 = vld [vmem:[%s224 + $0x3c8] sm:$0xf]
      %v477 = vld [vmem:[%s224 + $0x3cc] sm:$0xf]
      %v478 = vld [vmem:[%s224 + $0x3d0] sm:$0xf]
      %v479 = vld [vmem:[%s224 + $0x3d4] sm:$0xf]
      %v480 = vld [vmem:[%s224 + $0x3d8] sm:$0xf]
      %v481 = vld [vmem:[%s224 + $0x3dc] sm:$0xf]
      %v482 = vld [vmem:[%s224 + $0x3e0] sm:$0xf]
      %v483 = vld [vmem:[%s224 + $0x3e4] sm:$0xf]
      %v484 = vld [vmem:[%s224 + $0x3e8] sm:$0xf]
      %v485 = vld [vmem:[%s224 + $0x3ec] sm:$0xf]
      %v486 = vld [vmem:[%s224 + $0x3f0] sm:$0xf]
      %v487 = vld [vmem:[%s224 + $0x3f4] sm:$0xf]
      %v488 = vld [vmem:[%s224 + $0x3f8] sm:$0xf]
      %v489 = vld [vmem:[%s224 + $0x3fc] sm:$0xf]
      %v490 = vld [vmem:[%s224 + $0x400] sm:$0xf]
      %v491 = vld [vmem:[%s224 + $0x404] sm:$0xf]
      %v492 = vld [vmem:[%s224 + $0x408] sm:$0xf]
      %v493 = vld [vmem:[%s224 + $0x40c] sm:$0xf]
      %v494 = vld [vmem:[%s224 + $0x410] sm:$0xf]
      %v495 = vld [vmem:[%s224 + $0x414] sm:$0xf]
      %v496 = vld [vmem:[%s224 + $0x418] sm:$0xf]
      %v497 = vld [vmem:[%s224 + $0x41c] sm:$0xf]
      %v498 = vld [vmem:[%s224 + $0x420] sm:$0xf]
      %v499 = vld [vmem:[%s224 + $0x424] sm:$0xf]
      %v500 = vld [vmem:[%s224 + $0x428] sm:$0xf]
      %v501 = vld [vmem:[%s224 + $0x42c] sm:$0xf]
      %v502 = vld [vmem:[%s224 + $0x430] sm:$0xf]
      %v503 = vld [vmem:[%s224 + $0x434] sm:$0xf]
      %v504 = vld [vmem:[%s224 + $0x438] sm:$0xf]
      %v505 = vld [vmem:[%s224 + $0x43c] sm:$0xf]
      %v506 = vld [vmem:[%s224 + $0x440] sm:$0xf]
      %v507 = vld [vmem:[%s224 + $0x444] sm:$0xf]
      %v508 = vld [vmem:[%s224 + $0x448] sm:$0xf]
      %v509 = vld [vmem:[%s224 + $0x44c] sm:$0xf]
      %v510 = vld [vmem:[%s224 + $0x450] sm:$0xf]
      %v511 = vld [vmem:[%s224 + $0x454] sm:$0xf]
      %v512 = vld [vmem:[%s224 + $0x458] sm:$0xf]
      %v513 = vld [vmem:[%s224 + $0x45c] sm:$0xf]
      %v514 = vld [vmem:[%s224 + $0x460] sm:$0xf]
      %v515 = vld [vmem:[%s224 + $0x464] sm:$0xf]
      %v516 = vld [vmem:[%s224 + $0x468] sm:$0xf]
      %v517 = vld [vmem:[%s224 + $0x46c] sm:$0xf]
      %v518 = vld [vmem:[%s224 + $0x470] sm:$0xf]
      %v519 = vld [vmem:[%s224 + $0x474] sm:$0xf]
      %v520 = vld [vmem:[%s224 + $0x478] sm:$0xf]
      %v521 = vld [vmem:[%s224 + $0x47c] sm:$0xf]
      %v522 = vld [vmem:[%s1] sm:$0xf]
      %v523 = vld [vmem:[%s1 + $0x4] sm:$0xf]
      %v524 = vld [vmem:[%s1 + $0x8] sm:$0xf]
      %v525 = vld [vmem:[%s1 + $0xc] sm:$0xf]
      %v814 = vunpack.c.l.b16 %v234
      %v815 = vunpack.c.l.b16 %v235
      %v816 = vunpack.c.l.b16 %v236
      %v817 = vunpack.c.l.b16 %v237
      %v818 = vunpack.c.l.b16 %v238
      %v819 = vunpack.c.l.b16 %v239
      %v820 = vunpack.c.l.b16 %v240
      %v821 = vunpack.c.l.b16 %v241
      %v822 = vunpack.c.l.b16 %v242
      %v823 = vunpack.c.l.b16 %v243
      %v824 = vunpack.c.l.b16 %v244
      %v825 = vunpack.c.l.b16 %v245
      %v826 = vunpack.c.l.b16 %v246
      %v827 = vunpack.c.l.b16 %v247
      %v828 = vunpack.c.l.b16 %v248
      %v829 = vunpack.c.l.b16 %v249
      %v830 = vunpack.c.l.b16 %v250
      %v831 = vunpack.c.l.b16 %v251
      %v832 = vunpack.c.l.b16 %v252
      %v833 = vunpack.c.l.b16 %v253
      %v834 = vunpack.c.l.b16 %v254
      %v835 = vunpack.c.l.b16 %v255
      %v836 = vunpack.c.l.b16 %v256
      %v837 = vunpack.c.l.b16 %v257
      %v838 = vunpack.c.l.b16 %v258
      %v839 = vunpack.c.l.b16 %v259
      %v840 = vunpack.c.l.b16 %v260
      %v841 = vunpack.c.l.b16 %v261
      %v842 = vunpack.c.l.b16 %v262
      %v843 = vunpack.c.l.b16 %v263
      %v844 = vunpack.c.l.b16 %v264
      %v845 = vunpack.c.l.b16 %v265
      %v846 = vunpack.c.l.b16 %v266
      %v847 = vunpack.c.l.b16 %v267
      %v848 = vunpack.c.l.b16 %v268
      %v849 = vunpack.c.l.b16 %v269
      %v850 = vunpack.c.l.b16 %v270
      %v851 = vunpack.c.l.b16 %v271
      %v852 = vunpack.c.l.b16 %v272
      %v853 = vunpack.c.l.b16 %v273
      %v854 = vunpack.c.l.b16 %v274
      %v855 = vunpack.c.l.b16 %v275
      %v856 = vunpack.c.l.b16 %v276
      %v857 = vunpack.c.l.b16 %v277
      %v858 = vunpack.c.l.b16 %v278
      %v859 = vunpack.c.l.b16 %v279
      %v860 = vunpack.c.l.b16 %v280
      %v861 = vunpack.c.l.b16 %v281
      %v862 = vunpack.c.l.b16 %v282
      %v863 = vunpack.c.l.b16 %v283
      %v864 = vunpack.c.l.b16 %v284
      %v865 = vunpack.c.l.b16 %v285
      %v866 = vunpack.c.l.b16 %v286
      %v867 = vunpack.c.l.b16 %v287
      %v868 = vunpack.c.l.b16 %v288
      %v869 = vunpack.c.l.b16 %v289
      %v870 = vunpack.c.l.b16 %v290
      %v871 = vunpack.c.l.b16 %v291
      %v872 = vunpack.c.l.b16 %v292
      %v873 = vunpack.c.l.b16 %v293
      %v874 = vunpack.c.l.b16 %v294
      %v875 = vunpack.c.l.b16 %v295
      %v876 = vunpack.c.l.b16 %v296
      %v877 = vunpack.c.l.b16 %v297
      %v878 = vunpack.c.l.b16 %v298
      %v879 = vunpack.c.l.b16 %v299
      %v880 = vunpack.c.l.b16 %v300
      %v881 = vunpack.c.l.b16 %v301
      %v882 = vunpack.c.l.b16 %v302
      %v883 = vunpack.c.l.b16 %v303
      %v884 = vunpack.c.l.b16 %v304
      %v885 = vunpack.c.l.b16 %v305
      %v886 = vunpack.c.l.b16 %v306
      %v887 = vunpack.c.l.b16 %v307
      %v888 = vunpack.c.l.b16 %v308
      %v889 = vunpack.c.l.b16 %v309
      %v890 = vunpack.c.l.b16 %v310
      %v891 = vunpack.c.l.b16 %v311
      %v892 = vunpack.c.l.b16 %v312
      %v893 = vunpack.c.l.b16 %v313
      %v894 = vunpack.c.l.b16 %v314
      %v895 = vunpack.c.l.b16 %v315
      %v896 = vunpack.c.l.b16 %v316
      %v897 = vunpack.c.l.b16 %v317
      %v898 = vunpack.c.l.b16 %v318
      %v899 = vunpack.c.l.b16 %v319
      %v900 = vunpack.c.l.b16 %v320
      %v901 = vunpack.c.l.b16 %v321
      %v902 = vunpack.c.l.b16 %v322
      %v903 = vunpack.c.l.b16 %v323
      %v904 = vunpack.c.l.b16 %v324
      %v905 = vunpack.c.l.b16 %v325
      %v906 = vunpack.c.l.b16 %v326
      %v907 = vunpack.c.l.b16 %v327
      %v908 = vunpack.c.l.b16 %v328
      %v909 = vunpack.c.l.b16 %v329
      %v910 = vunpack.c.l.b16 %v330
      %v911 = vunpack.c.l.b16 %v331
      %v912 = vunpack.c.l.b16 %v332
      %v913 = vunpack.c.l.b16 %v333
      %v914 = vunpack.c.l.b16 %v334
      %v915 = vunpack.c.l.b16 %v335
      %v916 = vunpack.c.l.b16 %v336
      %v917 = vunpack.c.l.b16 %v337
      %v918 = vunpack.c.l.b16 %v338
      %v919 = vunpack.c.l.b16 %v339
      %v920 = vunpack.c.l.b16 %v340
      %v921 = vunpack.c.l.b16 %v341
      %v922 = vunpack.c.l.b16 %v342
      %v923 = vunpack.c.l.b16 %v343
      %v924 = vunpack.c.l.b16 %v344
      %v925 = vunpack.c.l.b16 %v345
      %v926 = vunpack.c.l.b16 %v346
      %v927 = vunpack.c.l.b16 %v347
      %v928 = vunpack.c.l.b16 %v348
      %v929 = vunpack.c.l.b16 %v349
      %v930 = vunpack.c.l.b16 %v350
      %v931 = vunpack.c.l.b16 %v351
      %v932 = vunpack.c.l.b16 %v352
      %v933 = vunpack.c.l.b16 %v353
      %v934 = vunpack.c.l.b16 %v354
      %v935 = vunpack.c.l.b16 %v355
      %v936 = vunpack.c.l.b16 %v356
      %v937 = vunpack.c.l.b16 %v357
      %v938 = vunpack.c.l.b16 %v358
      %v939 = vunpack.c.l.b16 %v359
      %v940 = vunpack.c.l.b16 %v360
      %v941 = vunpack.c.l.b16 %v361
      %v942 = vunpack.c.l.b16 %v362
      %v943 = vunpack.c.l.b16 %v363
      %v944 = vunpack.c.l.b16 %v364
      %v945 = vunpack.c.l.b16 %v365
      %v946 = vunpack.c.l.b16 %v366
      %v947 = vunpack.c.l.b16 %v367
      %v948 = vunpack.c.l.b16 %v368
      %v949 = vunpack.c.l.b16 %v369
      %v950 = vunpack.c.l.b16 %v370
      %v951 = vunpack.c.l.b16 %v371
      %v952 = vunpack.c.l.b16 %v372
      %v953 = vunpack.c.l.b16 %v373
      %v954 = vunpack.c.l.b16 %v374
      %v955 = vunpack.c.l.b16 %v375
      %v956 = vunpack.c.l.b16 %v376
      %v957 = vunpack.c.l.b16 %v377
      %v958 = vunpack.c.l.b16 %v378
      %v959 = vunpack.c.l.b16 %v379
      %v960 = vunpack.c.l.b16 %v380
      %v961 = vunpack.c.l.b16 %v381
      %v962 = vunpack.c.l.b16 %v382
      %v963 = vunpack.c.l.b16 %v383
      %v964 = vunpack.c.l.b16 %v384
      %v965 = vunpack.c.l.b16 %v385
      %v966 = vunpack.c.l.b16 %v386
      %v967 = vunpack.c.l.b16 %v387
      %v968 = vunpack.c.l.b16 %v388
      %v969 = vunpack.c.l.b16 %v389
      %v970 = vunpack.c.l.b16 %v390
      %v971 = vunpack.c.l.b16 %v391
      %v972 = vunpack.c.l.b16 %v392
      %v973 = vunpack.c.l.b16 %v393
      %v974 = vunpack.c.l.b16 %v394
      %v975 = vunpack.c.l.b16 %v395
      %v976 = vunpack.c.l.b16 %v396
      %v977 = vunpack.c.l.b16 %v397
      %v978 = vunpack.c.l.b16 %v398
      %v979 = vunpack.c.l.b16 %v399
      %v980 = vunpack.c.l.b16 %v400
      %v981 = vunpack.c.l.b16 %v401
      %v982 = vunpack.c.l.b16 %v402
      %v983 = vunpack.c.l.b16 %v403
      %v984 = vunpack.c.l.b16 %v404
      %v985 = vunpack.c.l.b16 %v405
      %v986 = vunpack.c.l.b16 %v406
      %v987 = vunpack.c.l.b16 %v407
      %v988 = vunpack.c.l.b16 %v408
      %v989 = vunpack.c.l.b16 %v409
      %v990 = vunpack.c.l.b16 %v410
      %v991 = vunpack.c.l.b16 %v411
      %v992 = vunpack.c.l.b16 %v412
      %v993 = vunpack.c.l.b16 %v413
      %v994 = vunpack.c.l.b16 %v414
      %v995 = vunpack.c.l.b16 %v415
      %v996 = vunpack.c.l.b16 %v416
      %v997 = vunpack.c.l.b16 %v417
      %v998 = vunpack.c.l.b16 %v418
      %v999 = vunpack.c.l.b16 %v419
      %v1000 = vunpack.c.l.b16 %v420
      %v1001 = vunpack.c.l.b16 %v421
      %v1002 = vunpack.c.l.b16 %v422
      %v1003 = vunpack.c.l.b16 %v423
      %v1004 = vunpack.c.l.b16 %v424
      %v1005 = vunpack.c.l.b16 %v425
      %v1006 = vunpack.c.l.b16 %v426
      %v1007 = vunpack.c.l.b16 %v427
      %v1008 = vunpack.c.l.b16 %v428
      %v1009 = vunpack.c.l.b16 %v429
      %v1010 = vunpack.c.l.b16 %v430
      %v1011 = vunpack.c.l.b16 %v431
      %v1012 = vunpack.c.l.b16 %v432
      %v1013 = vunpack.c.l.b16 %v433
      %v1014 = vunpack.c.l.b16 %v434
      %v1015 = vunpack.c.l.b16 %v435
      %v1016 = vunpack.c.l.b16 %v436
      %v1017 = vunpack.c.l.b16 %v437
      %v1018 = vunpack.c.l.b16 %v438
      %v1019 = vunpack.c.l.b16 %v439
      %v1020 = vunpack.c.l.b16 %v440
      %v1021 = vunpack.c.l.b16 %v441
      %v1022 = vunpack.c.l.b16 %v442
      %v1023 = vunpack.c.l.b16 %v443
      %v1024 = vunpack.c.l.b16 %v444
      %v1025 = vunpack.c.l.b16 %v445
      %v1026 = vunpack.c.l.b16 %v446
      %v1027 = vunpack.c.l.b16 %v447
      %v1028 = vunpack.c.l.b16 %v448
      %v1029 = vunpack.c.l.b16 %v449
      %v1030 = vunpack.c.l.b16 %v450
      %v1031 = vunpack.c.l.b16 %v451
      %v1032 = vunpack.c.l.b16 %v452
      %v1033 = vunpack.c.l.b16 %v453
      %v1034 = vunpack.c.l.b16 %v454
      %v1035 = vunpack.c.l.b16 %v455
      %v1036 = vunpack.c.l.b16 %v456
      %v1037 = vunpack.c.l.b16 %v457
      %v1038 = vunpack.c.l.b16 %v458
      %v1039 = vunpack.c.l.b16 %v459
      %v1040 = vunpack.c.l.b16 %v460
      %v1041 = vunpack.c.l.b16 %v461
      %v1042 = vunpack.c.l.b16 %v462
      %v1043 = vunpack.c.l.b16 %v463
      %v1044 = vunpack.c.l.b16 %v464
      %v1045 = vunpack.c.l.b16 %v465
      %v1046 = vunpack.c.l.b16 %v466
      %v1047 = vunpack.c.l.b16 %v467
      %v1048 = vunpack.c.l.b16 %v468
      %v1049 = vunpack.c.l.b16 %v469
      %v1050 = vunpack.c.l.b16 %v470
      %v1051 = vunpack.c.l.b16 %v471
      %v1052 = vunpack.c.l.b16 %v472
      %v1053 = vunpack.c.l.b16 %v473
      %v1054 = vunpack.c.l.b16 %v474
      %v1055 = vunpack.c.l.b16 %v475
      %v1056 = vunpack.c.l.b16 %v476
      %v1057 = vunpack.c.l.b16 %v477
      %v1058 = vunpack.c.l.b16 %v478
      %v1059 = vunpack.c.l.b16 %v479
      %v1060 = vunpack.c.l.b16 %v480
      %v1061 = vunpack.c.l.b16 %v481
      %v1062 = vunpack.c.l.b16 %v482
      %v1063 = vunpack.c.l.b16 %v483
      %v1064 = vunpack.c.l.b16 %v484
      %v1065 = vunpack.c.l.b16 %v485
      %v1066 = vunpack.c.l.b16 %v486
      %v1067 = vunpack.c.l.b16 %v487
      %v1068 = vunpack.c.l.b16 %v488
      %v1069 = vunpack.c.l.b16 %v489
      %v1070 = vunpack.c.l.b16 %v490
      %v1071 = vunpack.c.l.b16 %v491
      %v1072 = vunpack.c.l.b16 %v492
      %v1073 = vunpack.c.l.b16 %v493
      %v1074 = vunpack.c.l.b16 %v494
      %v1075 = vunpack.c.l.b16 %v495
      %v1076 = vunpack.c.l.b16 %v496
      %v1077 = vunpack.c.l.b16 %v497
      %v1078 = vunpack.c.l.b16 %v498
      %v1079 = vunpack.c.l.b16 %v499
      %v1080 = vunpack.c.l.b16 %v500
      %v1081 = vunpack.c.l.b16 %v501
      %v1082 = vunpack.c.l.b16 %v502
      %v1083 = vunpack.c.l.b16 %v503
      %v1084 = vunpack.c.l.b16 %v504
      %v1085 = vunpack.c.l.b16 %v505
      %v1086 = vunpack.c.l.b16 %v506
      %v1087 = vunpack.c.l.b16 %v507
      %v1088 = vunpack.c.l.b16 %v508
      %v1089 = vunpack.c.l.b16 %v509
      %v1090 = vunpack.c.l.b16 %v510
      %v1091 = vunpack.c.l.b16 %v511
      %v1092 = vunpack.c.l.b16 %v512
      %v1093 = vunpack.c.l.b16 %v513
      %v1094 = vunpack.c.l.b16 %v514
      %v1095 = vunpack.c.l.b16 %v515
      %v1096 = vunpack.c.l.b16 %v516
      %v1097 = vunpack.c.l.b16 %v517
      %v1098 = vunpack.c.l.b16 %v518
      %v1099 = vunpack.c.l.b16 %v519
      %v1100 = vunpack.c.l.b16 %v520
      %v1101 = vunpack.c.l.b16 %v521
      %v1102 = vpack.c.b16 %v815, %v814
      %v1103 = vpack.c.b16 %v817, %v816
      %v1104 = vpack.c.b16 %v819, %v818
      %v1105 = vpack.c.b16 %v821, %v820
      %v1106 = vpack.c.b16 %v823, %v822
      %v1107 = vpack.c.b16 %v825, %v824
      %v1108 = vpack.c.b16 %v827, %v826
      %v1109 = vpack.c.b16 %v829, %v828
      %v1110 = vpack.c.b16 %v831, %v830
      %v1111 = vpack.c.b16 %v833, %v832
      %v1112 = vpack.c.b16 %v835, %v834
      %v1113 = vpack.c.b16 %v837, %v836
      %v1114 = vpack.c.b16 %v839, %v838
      %v1115 = vpack.c.b16 %v841, %v840
      %v1116 = vpack.c.b16 %v843, %v842
      %v1117 = vpack.c.b16 %v845, %v844
      %v1118 = vpack.c.b16 %v847, %v846
      %v1119 = vpack.c.b16 %v849, %v848
      %v1120 = vpack.c.b16 %v851, %v850
      %v1121 = vpack.c.b16 %v853, %v852
      %v1122 = vpack.c.b16 %v855, %v854
      %v1123 = vpack.c.b16 %v857, %v856
      %v1124 = vpack.c.b16 %v859, %v858
      %v1125 = vpack.c.b16 %v861, %v860
      %v1126 = vpack.c.b16 %v863, %v862
      %v1127 = vpack.c.b16 %v865, %v864
      %v1128 = vpack.c.b16 %v867, %v866
      %v1129 = vpack.c.b16 %v869, %v868
      %v1130 = vpack.c.b16 %v871, %v870
      %v1131 = vpack.c.b16 %v873, %v872
      %v1132 = vpack.c.b16 %v875, %v874
      %v1133 = vpack.c.b16 %v877, %v876
      %v1134 = vpack.c.b16 %v879, %v878
      %v1135 = vpack.c.b16 %v881, %v880
      %v1136 = vpack.c.b16 %v883, %v882
      %v1137 = vpack.c.b16 %v885, %v884
      %v1138 = vpack.c.b16 %v887, %v886
      %v1139 = vpack.c.b16 %v889, %v888
      %v1140 = vpack.c.b16 %v891, %v890
      %v1141 = vpack.c.b16 %v893, %v892
      %v1142 = vpack.c.b16 %v895, %v894
      %v1143 = vpack.c.b16 %v897, %v896
      %v1144 = vpack.c.b16 %v899, %v898
      %v1145 = vpack.c.b16 %v901, %v900
      %v1146 = vpack.c.b16 %v903, %v902
      %v1147 = vpack.c.b16 %v905, %v904
      %v1148 = vpack.c.b16 %v907, %v906
      %v1149 = vpack.c.b16 %v909, %v908
      %v1150 = vpack.c.b16 %v911, %v910
      %v1151 = vpack.c.b16 %v913, %v912
      %v1152 = vpack.c.b16 %v915, %v914
      %v1153 = vpack.c.b16 %v917, %v916
      %v1154 = vpack.c.b16 %v919, %v918
      %v1155 = vpack.c.b16 %v921, %v920
      %v1156 = vpack.c.b16 %v923, %v922
      %v1157 = vpack.c.b16 %v925, %v924
      %v1158 = vpack.c.b16 %v927, %v926
      %v1159 = vpack.c.b16 %v929, %v928
      %v1160 = vpack.c.b16 %v931, %v930
      %v1161 = vpack.c.b16 %v933, %v932
      %v1162 = vpack.c.b16 %v935, %v934
      %v1163 = vpack.c.b16 %v937, %v936
      %v1164 = vpack.c.b16 %v939, %v938
      %v1165 = vpack.c.b16 %v941, %v940
      %v1166 = vpack.c.b16 %v943, %v942
      %v1167 = vpack.c.b16 %v945, %v944
      %v1168 = vpack.c.b16 %v947, %v946
      %v1169 = vpack.c.b16 %v949, %v948
      %v1170 = vpack.c.b16 %v951, %v950
      %v1171 = vpack.c.b16 %v953, %v952
      %v1172 = vpack.c.b16 %v955, %v954
      %v1173 = vpack.c.b16 %v957, %v956
      %v1174 = vpack.c.b16 %v959, %v958
      %v1175 = vpack.c.b16 %v961, %v960
      %v1176 = vpack.c.b16 %v963, %v962
      %v1177 = vpack.c.b16 %v965, %v964
      %v1178 = vpack.c.b16 %v967, %v966
      %v1179 = vpack.c.b16 %v969, %v968
      %v1180 = vpack.c.b16 %v971, %v970
      %v1181 = vpack.c.b16 %v973, %v972
      %v1182 = vpack.c.b16 %v975, %v974
      %v1183 = vpack.c.b16 %v977, %v976
      %v1184 = vpack.c.b16 %v979, %v978
      %v1185 = vpack.c.b16 %v981, %v980
      %v1186 = vpack.c.b16 %v983, %v982
      %v1187 = vpack.c.b16 %v985, %v984
      %v1188 = vpack.c.b16 %v987, %v986
      %v1189 = vpack.c.b16 %v989, %v988
      %v1190 = vpack.c.b16 %v991, %v990
      %v1191 = vpack.c.b16 %v993, %v992
      %v1192 = vpack.c.b16 %v995, %v994
      %v1193 = vpack.c.b16 %v997, %v996
      %v1194 = vpack.c.b16 %v999, %v998
      %v1195 = vpack.c.b16 %v1001, %v1000
      %v1196 = vpack.c.b16 %v1003, %v1002
      %v1197 = vpack.c.b16 %v1005, %v1004
      %v1198 = vpack.c.b16 %v1007, %v1006
      %v1199 = vpack.c.b16 %v1009, %v1008
      %v1200 = vpack.c.b16 %v1011, %v1010
      %v1201 = vpack.c.b16 %v1013, %v1012
      %v1202 = vpack.c.b16 %v1015, %v1014
      %v1203 = vpack.c.b16 %v1017, %v1016
      %v1204 = vpack.c.b16 %v1019, %v1018
      %v1205 = vpack.c.b16 %v1021, %v1020
      %v1206 = vpack.c.b16 %v1023, %v1022
      %v1207 = vpack.c.b16 %v1025, %v1024
      %v1208 = vpack.c.b16 %v1027, %v1026
      %v1209 = vpack.c.b16 %v1029, %v1028
      %v1210 = vpack.c.b16 %v1031, %v1030
      %v1211 = vpack.c.b16 %v1033, %v1032
      %v1212 = vpack.c.b16 %v1035, %v1034
      %v1213 = vpack.c.b16 %v1037, %v1036
      %v1214 = vpack.c.b16 %v1039, %v1038
      %v1215 = vpack.c.b16 %v1041, %v1040
      %v1216 = vpack.c.b16 %v1043, %v1042
      %v1217 = vpack.c.b16 %v1045, %v1044
      %v1218 = vpack.c.b16 %v1047, %v1046
      %v1219 = vpack.c.b16 %v1049, %v1048
      %v1220 = vpack.c.b16 %v1051, %v1050
      %v1221 = vpack.c.b16 %v1053, %v1052
      %v1222 = vpack.c.b16 %v1055, %v1054
      %v1223 = vpack.c.b16 %v1057, %v1056
      %v1224 = vpack.c.b16 %v1059, %v1058
      %v1225 = vpack.c.b16 %v1061, %v1060
      %v1226 = vpack.c.b16 %v1063, %v1062
      %v1227 = vpack.c.b16 %v1065, %v1064
      %v1228 = vpack.c.b16 %v1067, %v1066
      %v1229 = vpack.c.b16 %v1069, %v1068
      %v1230 = vpack.c.b16 %v1071, %v1070
      %v1231 = vpack.c.b16 %v1073, %v1072
      %v1232 = vpack.c.b16 %v1075, %v1074
      %v1233 = vpack.c.b16 %v1077, %v1076
      %v1234 = vpack.c.b16 %v1079, %v1078
      %v1235 = vpack.c.b16 %v1081, %v1080
      %v1236 = vpack.c.b16 %v1083, %v1082
      %v1237 = vpack.c.b16 %v1085, %v1084
      %v1238 = vpack.c.b16 %v1087, %v1086
      %v1239 = vpack.c.b16 %v1089, %v1088
      %v1240 = vpack.c.b16 %v1091, %v1090
      %v1241 = vpack.c.b16 %v1093, %v1092
      %v1242 = vpack.c.b16 %v1095, %v1094
      %v1243 = vpack.c.b16 %v1097, %v1096
      %v1244 = vpack.c.b16 %v1099, %v1098
      %v1245 = vpack.c.b16 %v1101, %v1100
      %v1250 = vunpack.c.l.b16 %v522
      %v1251 = vunpack.c.l.b16 %v523
      %v1252 = vunpack.c.l.b16 %v524
      %v1253 = vunpack.c.l.b16 %v525
      %v1254 = vpack.c.b16 %v1251, %v1250
      %v1255 = vpack.c.b16 %v1253, %v1252
      %vm1258 = vcmask 261120
      %v1260 = vsel %vm1258, %v1102, 0
      %v1263 = vsel %vm1258, %v1103, 0
      %v1266 = vsel %vm1258, %v1104, 0
      %v1269 = vsel %vm1258, %v1105, 0
      %v1272 = vsel %vm1258, %v1106, 0
      %v1275 = vsel %vm1258, %v1107, 0
      %v1278 = vsel %vm1258, %v1108, 0
      %v1281 = vsel %vm1258, %v1109, 0
      %v1284 = vsel %vm1258, %v1110, 0
      %v1287 = vsel %vm1258, %v1111, 0
      %v1290 = vsel %vm1258, %v1112, 0
      %v1293 = vsel %vm1258, %v1113, 0
      %v1296 = vsel %vm1258, %v1114, 0
      %v1299 = vsel %vm1258, %v1115, 0
      %v1302 = vsel %vm1258, %v1116, 0
      %v1305 = vsel %vm1258, %v1117, 0
      %v1308 = vsel %vm1258, %v1118, 0
      %v1311 = vsel %vm1258, %v1119, 0
      %v1314 = vsel %vm1258, %v1120, 0
      %v1317 = vsel %vm1258, %v1121, 0
      %v1320 = vsel %vm1258, %v1122, 0
      %v1323 = vsel %vm1258, %v1123, 0
      %v1326 = vsel %vm1258, %v1124, 0
      %v1329 = vsel %vm1258, %v1125, 0
      %v1332 = vsel %vm1258, %v1126, 0
      %v1335 = vsel %vm1258, %v1127, 0
      %v1338 = vsel %vm1258, %v1128, 0
      %v1341 = vsel %vm1258, %v1129, 0
      %v1344 = vsel %vm1258, %v1130, 0
      %v1347 = vsel %vm1258, %v1131, 0
      %v1350 = vsel %vm1258, %v1132, 0
      %v1353 = vsel %vm1258, %v1133, 0
      %v1356 = vsel %vm1258, %v1134, 0
      %v1359 = vsel %vm1258, %v1135, 0
      %v1362 = vsel %vm1258, %v1136, 0
      %v1365 = vsel %vm1258, %v1137, 0
      %v1368 = vsel %vm1258, %v1138, 0
      %v1371 = vsel %vm1258, %v1139, 0
      %v1374 = vsel %vm1258, %v1140, 0
      %v1377 = vsel %vm1258, %v1141, 0
      %v1380 = vsel %vm1258, %v1142, 0
      %v1383 = vsel %vm1258, %v1143, 0
      %v1386 = vsel %vm1258, %v1144, 0
      %v1389 = vsel %vm1258, %v1145, 0
      %v1392 = vsel %vm1258, %v1146, 0
      %v1395 = vsel %vm1258, %v1147, 0
      %v1398 = vsel %vm1258, %v1148, 0
      %v1401 = vsel %vm1258, %v1149, 0
      %v1404 = vsel %vm1258, %v1150, 0
      %v1407 = vsel %vm1258, %v1151, 0
      %v1410 = vsel %vm1258, %v1152, 0
      %v1413 = vsel %vm1258, %v1153, 0
      %v1416 = vsel %vm1258, %v1154, 0
      %v1419 = vsel %vm1258, %v1155, 0
      %v1422 = vsel %vm1258, %v1156, 0
      %v1425 = vsel %vm1258, %v1157, 0
      %v1428 = vsel %vm1258, %v1158, 0
      %v1431 = vsel %vm1258, %v1159, 0
      %v1434 = vsel %vm1258, %v1160, 0
      %v1437 = vsel %vm1258, %v1161, 0
      %v1440 = vsel %vm1258, %v1162, 0
      %v1443 = vsel %vm1258, %v1163, 0
      %v1446 = vsel %vm1258, %v1164, 0
      %v1449 = vsel %vm1258, %v1165, 0
      %v1452 = vsel %vm1258, %v1166, 0
      %v1455 = vsel %vm1258, %v1167, 0
      %v1458 = vsel %vm1258, %v1168, 0
      %v1461 = vsel %vm1258, %v1169, 0
      %v1464 = vsel %vm1258, %v1170, 0
      %v1467 = vsel %vm1258, %v1171, 0
      %v1470 = vsel %vm1258, %v1172, 0
      %v1473 = vsel %vm1258, %v1173, 0
      %v1476 = vsel %vm1258, %v1174, 0
      %v1479 = vsel %vm1258, %v1175, 0
      %v1482 = vsel %vm1258, %v1176, 0
      %v1485 = vsel %vm1258, %v1177, 0
      %v1488 = vsel %vm1258, %v1178, 0
      %v1491 = vsel %vm1258, %v1179, 0
      %v1494 = vsel %vm1258, %v1180, 0
      %v1497 = vsel %vm1258, %v1181, 0
      %v1500 = vsel %vm1258, %v1182, 0
      %v1503 = vsel %vm1258, %v1183, 0
      %v1506 = vsel %vm1258, %v1184, 0
      %v1509 = vsel %vm1258, %v1185, 0
      %v1512 = vsel %vm1258, %v1186, 0
      %v1515 = vsel %vm1258, %v1187, 0
      %v1518 = vsel %vm1258, %v1188, 0
      %v1521 = vsel %vm1258, %v1189, 0
      %v1524 = vsel %vm1258, %v1190, 0
      %v1527 = vsel %vm1258, %v1191, 0
      %v1530 = vsel %vm1258, %v1192, 0
      %v1533 = vsel %vm1258, %v1193, 0
      %v1536 = vsel %vm1258, %v1194, 0
      %v1539 = vsel %vm1258, %v1195, 0
      %v1542 = vsel %vm1258, %v1196, 0
      %v1545 = vsel %vm1258, %v1197, 0
      %v1548 = vsel %vm1258, %v1198, 0
      %v1551 = vsel %vm1258, %v1199, 0
      %v1554 = vsel %vm1258, %v1200, 0
      %v1557 = vsel %vm1258, %v1201, 0
      %v1560 = vsel %vm1258, %v1202, 0
      %v1563 = vsel %vm1258, %v1203, 0
      %v1566 = vsel %vm1258, %v1204, 0
      %v1569 = vsel %vm1258, %v1205, 0
      %v1572 = vsel %vm1258, %v1206, 0
      %v1575 = vsel %vm1258, %v1207, 0
      %v1578 = vsel %vm1258, %v1208, 0
      %v1581 = vsel %vm1258, %v1209, 0
      %v1584 = vsel %vm1258, %v1210, 0
      %v1587 = vsel %vm1258, %v1211, 0
      %v1590 = vsel %vm1258, %v1212, 0
      %v1593 = vsel %vm1258, %v1213, 0
      %v1596 = vsel %vm1258, %v1214, 0
      %v1599 = vsel %vm1258, %v1215, 0
      %v1602 = vsel %vm1258, %v1216, 0
      %v1605 = vsel %vm1258, %v1217, 0
      %v1608 = vsel %vm1258, %v1218, 0
      %v1611 = vsel %vm1258, %v1219, 0
      %v1614 = vsel %vm1258, %v1220, 0
      %v1617 = vsel %vm1258, %v1221, 0
      %v1620 = vsel %vm1258, %v1222, 0
      %v1623 = vsel %vm1258, %v1223, 0
      %v1626 = vsel %vm1258, %v1224, 0
      %v1629 = vsel %vm1258, %v1225, 0
      %v1632 = vsel %vm1258, %v1226, 0
      %v1635 = vsel %vm1258, %v1227, 0
      %v1638 = vsel %vm1258, %v1228, 0
      %v1641 = vsel %vm1258, %v1229, 0
      %v1644 = vsel %vm1258, %v1230, 0
      %v1647 = vsel %vm1258, %v1231, 0
      %v1650 = vsel %vm1258, %v1232, 0
      %v1653 = vsel %vm1258, %v1233, 0
      %v1656 = vsel %vm1258, %v1234, 0
      %v1659 = vsel %vm1258, %v1235, 0
      %v1662 = vsel %vm1258, %v1236, 0
      %v1665 = vsel %vm1258, %v1237, 0
      %v1668 = vsel %vm1258, %v1238, 0
      %v1671 = vsel %vm1258, %v1239, 0
      %v1674 = vsel %vm1258, %v1240, 0
      %v1677 = vsel %vm1258, %v1241, 0
      %v1680 = vsel %vm1258, %v1242, 0
      %v1683 = vsel %vm1258, %v1243, 0
      %v1686 = vsel %vm1258, %v1244, 0
      %v1689 = vsel %vm1258, %v1245, 0
      %1691 = vmatprep.subr.bf16.mxu0 0
      %1692 = vmatpush1.bf16.msra.mxu0 0
      %1693 = vmatprep.subr.bf16.mxu0 0
      %1694 = vmatpush1.bf16.msra.mxu0 0
      %1695 = vmatprep.subr.bf16.mxu0 0
      %1696 = vmatpush1.bf16.msra.mxu0 0
      %1697 = vmatprep.subr.bf16.mxu0 0
      %1698 = vmatpush1.bf16.msra.mxu0 0
      %1699 = vmatprep.subr.bf16.mxu0 0
      %1700 = vmatpush1.bf16.msra.mxu0 0
      %1701 = vmatprep.subr.bf16.mxu0 0
      %1702 = vmatpush1.bf16.msra.mxu0 0
      %1703 = vmatprep.subr.bf16.mxu0 0
      %1704 = vmatpush1.bf16.msra.mxu0 %v1255
      %1705 = vmatprep.subr.bf16.mxu0 0
      %1706 = vmatpush1.bf16.msra.mxu0 %v1254
      %1707 = vmatprep.subr.bf16.mxu0 0
      %1708 = vmatpush2.bf16.msra.mxu0 0
      %1709 = vmatprep.subr.bf16.mxu0 0
      %1710 = vmatpush2.bf16.msra.mxu0 0
      %1711 = vmatprep.subr.bf16.mxu0 0
      %1712 = vmatpush2.bf16.msra.mxu0 0
      %1713 = vmatprep.subr.bf16.mxu0 0
      %1714 = vmatpush2.bf16.msra.mxu0 0
      %1715 = vmatprep.subr.bf16.mxu0 0
      %1716 = vmatpush2.bf16.msra.mxu0 0
      %1717 = vmatprep.subr.bf16.mxu0 0
      %1718 = vmatpush2.bf16.msra.mxu0 0
      %1719 = vmatprep.subr.bf16.mxu0 0
      %1720 = vmatpush2.bf16.msra.mxu0 0
      %1721 = vmatprep.subr.bf16.mxu0 0
      %1722 = vmatpush2.bf16.msra.mxu0 0
      %1723 = vmatprep.mubr.bf16.mxu0 0
      %1724 = vmatmul.mubr.bf16.gmra.mxu0 %v1260
      %v1725 = vpop.f32.mrf.mxu0
      %v1726 = vadd.f32 0.0, %v1725
      %v1727 = vpop.f32.mrf.mxu0
      %v1728 = vpop.f32.mrf.mxu0
      %v1729 = vadd.f32 0.0, %v1728
      %v1730 = vpop.f32.mrf.mxu0
      %1731 = vmatprep.mubr.bf16.mxu0 0
      %1732 = vmatmul.mubr.bf16.gmra.mxu0 %v1263
      %v1733 = vpop.f32.mrf.mxu0
      %v1734 = vadd.f32 0.0, %v1733
      %v1735 = vpop.f32.mrf.mxu0
      %v1736 = vpop.f32.mrf.mxu0
      %v1737 = vadd.f32 0.0, %v1736
      %v1738 = vpop.f32.mrf.mxu0
      %1739 = vmatprep.mubr.bf16.mxu0 0
      %1740 = vmatmul.mubr.bf16.gmra.mxu0 %v1266
      %v1741 = vpop.f32.mrf.mxu0
      %v1742 = vadd.f32 0.0, %v1741
      %v1743 = vpop.f32.mrf.mxu0
      %v1744 = vpop.f32.mrf.mxu0
      %v1745 = vadd.f32 0.0, %v1744
      %v1746 = vpop.f32.mrf.mxu0
      %1747 = vmatprep.mubr.bf16.mxu0 0
      %1748 = vmatmul.mubr.bf16.gmra.mxu0 %v1269
      %v1749 = vpop.f32.mrf.mxu0
      %v1750 = vadd.f32 0.0, %v1749
      %v1751 = vpop.f32.mrf.mxu0
      %v1752 = vpop.f32.mrf.mxu0
      %v1753 = vadd.f32 0.0, %v1752
      %v1754 = vpop.f32.mrf.mxu0
      %1755 = vmatprep.mubr.bf16.mxu0 0
      %1756 = vmatmul.mubr.bf16.gmra.mxu0 %v1272
      %v1757 = vpop.f32.mrf.mxu0
      %v1758 = vadd.f32 0.0, %v1757
      %v1759 = vpop.f32.mrf.mxu0
      %v1760 = vpop.f32.mrf.mxu0
      %v1761 = vadd.f32 0.0, %v1760
      %v1762 = vpop.f32.mrf.mxu0
      %1763 = vmatprep.mubr.bf16.mxu0 0
      %1764 = vmatmul.mubr.bf16.gmra.mxu0 %v1275
      %v1765 = vpop.f32.mrf.mxu0
      %v1766 = vadd.f32 0.0, %v1765
      %v1767 = vpop.f32.mrf.mxu0
      %v1768 = vpop.f32.mrf.mxu0
      %v1769 = vadd.f32 0.0, %v1768
      %v1770 = vpop.f32.mrf.mxu0
      %1771 = vmatprep.mubr.bf16.mxu0 0
      %1772 = vmatmul.mubr.bf16.gmra.mxu0 %v1278
      %v1773 = vpop.f32.mrf.mxu0
      %v1774 = vadd.f32 0.0, %v1773
      %v1775 = vpop.f32.mrf.mxu0
      %v1776 = vpop.f32.mrf.mxu0
      %v1777 = vadd.f32 0.0, %v1776
      %v1778 = vpop.f32.mrf.mxu0
      %1779 = vmatprep.mubr.bf16.mxu0 0
      %1780 = vmatmul.mubr.bf16.gmra.mxu0 %v1281
      %v1781 = vpop.f32.mrf.mxu0
      %v1782 = vadd.f32 0.0, %v1781
      %v1783 = vpop.f32.mrf.mxu0
      %v1784 = vpop.f32.mrf.mxu0
      %v1785 = vadd.f32 0.0, %v1784
      %v1786 = vpop.f32.mrf.mxu0
      %1787 = vmatprep.mubr.bf16.mxu0 0
      %1788 = vmatmul.mubr.bf16.gmra.mxu0 %v1284
      %v1789 = vpop.f32.mrf.mxu0
      %v1790 = vadd.f32 0.0, %v1789
      %v1791 = vpop.f32.mrf.mxu0
      %v1792 = vpop.f32.mrf.mxu0
      %v1793 = vadd.f32 0.0, %v1792
      %v1794 = vpop.f32.mrf.mxu0
      %1795 = vmatprep.mubr.bf16.mxu0 0
      %1796 = vmatmul.mubr.bf16.gmra.mxu0 %v1287
      %v1797 = vpop.f32.mrf.mxu0
      %v1798 = vadd.f32 0.0, %v1797
      %v1799 = vpop.f32.mrf.mxu0
      %v1800 = vpop.f32.mrf.mxu0
      %v1801 = vadd.f32 0.0, %v1800
      %v1802 = vpop.f32.mrf.mxu0
      %1803 = vmatprep.mubr.bf16.mxu0 0
      %1804 = vmatmul.mubr.bf16.gmra.mxu0 %v1290
      %v1805 = vpop.f32.mrf.mxu0
      %v1806 = vadd.f32 0.0, %v1805
      %v1807 = vpop.f32.mrf.mxu0
      %v1808 = vpop.f32.mrf.mxu0
      %v1809 = vadd.f32 0.0, %v1808
      %v1810 = vpop.f32.mrf.mxu0
      %1811 = vmatprep.mubr.bf16.mxu0 0
      %1812 = vmatmul.mubr.bf16.gmra.mxu0 %v1293
      %v1813 = vpop.f32.mrf.mxu0
      %v1814 = vadd.f32 0.0, %v1813
      %v1815 = vpop.f32.mrf.mxu0
      %v1816 = vpop.f32.mrf.mxu0
      %v1817 = vadd.f32 0.0, %v1816
      %v1818 = vpop.f32.mrf.mxu0
      %1819 = vmatprep.mubr.bf16.mxu0 0
      %1820 = vmatmul.mubr.bf16.gmra.mxu0 %v1296
      %v1821 = vpop.f32.mrf.mxu0
      %v1822 = vadd.f32 0.0, %v1821
      %v1823 = vpop.f32.mrf.mxu0
      %v1824 = vpop.f32.mrf.mxu0
      %v1825 = vadd.f32 0.0, %v1824
      %v1826 = vpop.f32.mrf.mxu0
      %1827 = vmatprep.mubr.bf16.mxu0 0
      %1828 = vmatmul.mubr.bf16.gmra.mxu0 %v1299
      %v1829 = vpop.f32.mrf.mxu0
      %v1830 = vadd.f32 0.0, %v1829
      %v1831 = vpop.f32.mrf.mxu0
      %v1832 = vpop.f32.mrf.mxu0
      %v1833 = vadd.f32 0.0, %v1832
      %v1834 = vpop.f32.mrf.mxu0
      %1835 = vmatprep.mubr.bf16.mxu0 0
      %1836 = vmatmul.mubr.bf16.gmra.mxu0 %v1302
      %v1837 = vpop.f32.mrf.mxu0
      %v1838 = vadd.f32 0.0, %v1837
      %v1839 = vpop.f32.mrf.mxu0
      %v1840 = vpop.f32.mrf.mxu0
      %v1841 = vadd.f32 0.0, %v1840
      %v1842 = vpop.f32.mrf.mxu0
      %1843 = vmatprep.mubr.bf16.mxu0 0
      %1844 = vmatmul.mubr.bf16.gmra.mxu0 %v1305
      %v1845 = vpop.f32.mrf.mxu0
      %v1846 = vadd.f32 0.0, %v1845
      %v1847 = vpop.f32.mrf.mxu0
      %v1848 = vpop.f32.mrf.mxu0
      %v1849 = vadd.f32 0.0, %v1848
      %v1850 = vpop.f32.mrf.mxu0
      %1851 = vmatprep.mubr.bf16.mxu0 0
      %1852 = vmatmul.mubr.bf16.gmra.mxu0 %v1308
      %v1853 = vpop.f32.mrf.mxu0
      %v1854 = vadd.f32 0.0, %v1853
      %v1855 = vpop.f32.mrf.mxu0
      %v1856 = vpop.f32.mrf.mxu0
      %v1857 = vadd.f32 0.0, %v1856
      %v1858 = vpop.f32.mrf.mxu0
      %1859 = vmatprep.mubr.bf16.mxu0 0
      %1860 = vmatmul.mubr.bf16.gmra.mxu0 %v1311
      %v1861 = vpop.f32.mrf.mxu0
      %v1862 = vadd.f32 0.0, %v1861
      %v1863 = vpop.f32.mrf.mxu0
      %v1864 = vpop.f32.mrf.mxu0
      %v1865 = vadd.f32 0.0, %v1864
      %v1866 = vpop.f32.mrf.mxu0
      %1867 = vmatprep.mubr.bf16.mxu0 0
      %1868 = vmatmul.mubr.bf16.gmra.mxu0 %v1314
      %v1869 = vpop.f32.mrf.mxu0
      %v1870 = vadd.f32 0.0, %v1869
      %v1871 = vpop.f32.mrf.mxu0
      %v1872 = vpop.f32.mrf.mxu0
      %v1873 = vadd.f32 0.0, %v1872
      %v1874 = vpop.f32.mrf.mxu0
      %1875 = vmatprep.mubr.bf16.mxu0 0
      %1876 = vmatmul.mubr.bf16.gmra.mxu0 %v1317
      %v1877 = vpop.f32.mrf.mxu0
      %v1878 = vadd.f32 0.0, %v1877
      %v1879 = vpop.f32.mrf.mxu0
      %v1880 = vpop.f32.mrf.mxu0
      %v1881 = vadd.f32 0.0, %v1880
      %v1882 = vpop.f32.mrf.mxu0
      %1883 = vmatprep.mubr.bf16.mxu0 0
      %1884 = vmatmul.mubr.bf16.gmra.mxu0 %v1320
      %v1885 = vpop.f32.mrf.mxu0
      %v1886 = vadd.f32 0.0, %v1885
      %v1887 = vpop.f32.mrf.mxu0
      %v1888 = vpop.f32.mrf.mxu0
      %v1889 = vadd.f32 0.0, %v1888
      %v1890 = vpop.f32.mrf.mxu0
      %1891 = vmatprep.mubr.bf16.mxu0 0
      %1892 = vmatmul.mubr.bf16.gmra.mxu0 %v1323
      %v1893 = vpop.f32.mrf.mxu0
      %v1894 = vadd.f32 0.0, %v1893
      %v1895 = vpop.f32.mrf.mxu0
      %v1896 = vpop.f32.mrf.mxu0
      %v1897 = vadd.f32 0.0, %v1896
      %v1898 = vpop.f32.mrf.mxu0
      %1899 = vmatprep.mubr.bf16.mxu0 0
      %1900 = vmatmul.mubr.bf16.gmra.mxu0 %v1326
      %v1901 = vpop.f32.mrf.mxu0
      %v1902 = vadd.f32 0.0, %v1901
      %v1903 = vpop.f32.mrf.mxu0
      %v1904 = vpop.f32.mrf.mxu0
      %v1905 = vadd.f32 0.0, %v1904
      %v1906 = vpop.f32.mrf.mxu0
      %1907 = vmatprep.mubr.bf16.mxu0 0
      %1908 = vmatmul.mubr.bf16.gmra.mxu0 %v1329
      %v1909 = vpop.f32.mrf.mxu0
      %v1910 = vadd.f32 0.0, %v1909
      %v1911 = vpop.f32.mrf.mxu0
      %v1912 = vpop.f32.mrf.mxu0
      %v1913 = vadd.f32 0.0, %v1912
      %v1914 = vpop.f32.mrf.mxu0
      %1915 = vmatprep.mubr.bf16.mxu0 0
      %1916 = vmatmul.mubr.bf16.gmra.mxu0 %v1332
      %v1917 = vpop.f32.mrf.mxu0
      %v1918 = vadd.f32 0.0, %v1917
      %v1919 = vpop.f32.mrf.mxu0
      %v1920 = vpop.f32.mrf.mxu0
      %v1921 = vadd.f32 0.0, %v1920
      %v1922 = vpop.f32.mrf.mxu0
      %1923 = vmatprep.mubr.bf16.mxu0 0
      %1924 = vmatmul.mubr.bf16.gmra.mxu0 %v1335
      %v1925 = vpop.f32.mrf.mxu0
      %v1926 = vadd.f32 0.0, %v1925
      %v1927 = vpop.f32.mrf.mxu0
      %v1928 = vpop.f32.mrf.mxu0
      %v1929 = vadd.f32 0.0, %v1928
      %v1930 = vpop.f32.mrf.mxu0
      %1931 = vmatprep.mubr.bf16.mxu0 0
      %1932 = vmatmul.mubr.bf16.gmra.mxu0 %v1338
      %v1933 = vpop.f32.mrf.mxu0
      %v1934 = vadd.f32 0.0, %v1933
      %v1935 = vpop.f32.mrf.mxu0
      %v1936 = vpop.f32.mrf.mxu0
      %v1937 = vadd.f32 0.0, %v1936
      %v1938 = vpop.f32.mrf.mxu0
      %1939 = vmatprep.mubr.bf16.mxu0 0
      %1940 = vmatmul.mubr.bf16.gmra.mxu0 %v1341
      %v1941 = vpop.f32.mrf.mxu0
      %v1942 = vadd.f32 0.0, %v1941
      %v1943 = vpop.f32.mrf.mxu0
      %v1944 = vpop.f32.mrf.mxu0
      %v1945 = vadd.f32 0.0, %v1944
      %v1946 = vpop.f32.mrf.mxu0
      %1947 = vmatprep.mubr.bf16.mxu0 0
      %1948 = vmatmul.mubr.bf16.gmra.mxu0 %v1344
      %v1949 = vpop.f32.mrf.mxu0
      %v1950 = vadd.f32 0.0, %v1949
      %v1951 = vpop.f32.mrf.mxu0
      %v1952 = vpop.f32.mrf.mxu0
      %v1953 = vadd.f32 0.0, %v1952
      %v1954 = vpop.f32.mrf.mxu0
      %1955 = vmatprep.mubr.bf16.mxu0 0
      %1956 = vmatmul.mubr.bf16.gmra.mxu0 %v1347
      %v1957 = vpop.f32.mrf.mxu0
      %v1958 = vadd.f32 0.0, %v1957
      %v1959 = vpop.f32.mrf.mxu0
      %v1960 = vpop.f32.mrf.mxu0
      %v1961 = vadd.f32 0.0, %v1960
      %v1962 = vpop.f32.mrf.mxu0
      %1963 = vmatprep.mubr.bf16.mxu0 0
      %1964 = vmatmul.mubr.bf16.gmra.mxu0 %v1350
      %v1965 = vpop.f32.mrf.mxu0
      %v1966 = vadd.f32 0.0, %v1965
      %v1967 = vpop.f32.mrf.mxu0
      %v1968 = vpop.f32.mrf.mxu0
      %v1969 = vadd.f32 0.0, %v1968
      %v1970 = vpop.f32.mrf.mxu0
      %1971 = vmatprep.mubr.bf16.mxu0 0
      %1972 = vmatmul.mubr.bf16.gmra.mxu0 %v1353
      %v1973 = vpop.f32.mrf.mxu0
      %v1974 = vadd.f32 0.0, %v1973
      %v1975 = vpop.f32.mrf.mxu0
      %v1976 = vpop.f32.mrf.mxu0
      %v1977 = vadd.f32 0.0, %v1976
      %v1978 = vpop.f32.mrf.mxu0
      %1979 = vmatprep.mubr.bf16.mxu0 0
      %1980 = vmatmul.mubr.bf16.gmra.mxu0 %v1356
      %v1981 = vpop.f32.mrf.mxu0
      %v1982 = vadd.f32 0.0, %v1981
      %v1983 = vpop.f32.mrf.mxu0
      %v1984 = vpop.f32.mrf.mxu0
      %v1985 = vadd.f32 0.0, %v1984
      %v1986 = vpop.f32.mrf.mxu0
      %1987 = vmatprep.mubr.bf16.mxu0 0
      %1988 = vmatmul.mubr.bf16.gmra.mxu0 %v1359
      %v1989 = vpop.f32.mrf.mxu0
      %v1990 = vadd.f32 0.0, %v1989
      %v1991 = vpop.f32.mrf.mxu0
      %v1992 = vpop.f32.mrf.mxu0
      %v1993 = vadd.f32 0.0, %v1992
      %v1994 = vpop.f32.mrf.mxu0
      %1995 = vmatprep.mubr.bf16.mxu0 0
      %1996 = vmatmul.mubr.bf16.gmra.mxu0 %v1362
      %v1997 = vpop.f32.mrf.mxu0
      %v1998 = vadd.f32 0.0, %v1997
      %v1999 = vpop.f32.mrf.mxu0
      %v2000 = vpop.f32.mrf.mxu0
      %v2001 = vadd.f32 0.0, %v2000
      %v2002 = vpop.f32.mrf.mxu0
      %2003 = vmatprep.mubr.bf16.mxu0 0
      %2004 = vmatmul.mubr.bf16.gmra.mxu0 %v1365
      %v2005 = vpop.f32.mrf.mxu0
      %v2006 = vadd.f32 0.0, %v2005
      %v2007 = vpop.f32.mrf.mxu0
      %v2008 = vpop.f32.mrf.mxu0
      %v2009 = vadd.f32 0.0, %v2008
      %v2010 = vpop.f32.mrf.mxu0
      %2011 = vmatprep.mubr.bf16.mxu0 0
      %2012 = vmatmul.mubr.bf16.gmra.mxu0 %v1368
      %v2013 = vpop.f32.mrf.mxu0
      %v2014 = vadd.f32 0.0, %v2013
      %v2015 = vpop.f32.mrf.mxu0
      %v2016 = vpop.f32.mrf.mxu0
      %v2017 = vadd.f32 0.0, %v2016
      %v2018 = vpop.f32.mrf.mxu0
      %2019 = vmatprep.mubr.bf16.mxu0 0
      %2020 = vmatmul.mubr.bf16.gmra.mxu0 %v1371
      %v2021 = vpop.f32.mrf.mxu0
      %v2022 = vadd.f32 0.0, %v2021
      %v2023 = vpop.f32.mrf.mxu0
      %v2024 = vpop.f32.mrf.mxu0
      %v2025 = vadd.f32 0.0, %v2024
      %v2026 = vpop.f32.mrf.mxu0
      %2027 = vmatprep.mubr.bf16.mxu0 0
      %2028 = vmatmul.mubr.bf16.gmra.mxu0 %v1374
      %v2029 = vpop.f32.mrf.mxu0
      %v2030 = vadd.f32 0.0, %v2029
      %v2031 = vpop.f32.mrf.mxu0
      %v2032 = vpop.f32.mrf.mxu0
      %v2033 = vadd.f32 0.0, %v2032
      %v2034 = vpop.f32.mrf.mxu0
      %2035 = vmatprep.mubr.bf16.mxu0 0
      %2036 = vmatmul.mubr.bf16.gmra.mxu0 %v1377
      %v2037 = vpop.f32.mrf.mxu0
      %v2038 = vadd.f32 0.0, %v2037
      %v2039 = vpop.f32.mrf.mxu0
      %v2040 = vpop.f32.mrf.mxu0
      %v2041 = vadd.f32 0.0, %v2040
      %v2042 = vpop.f32.mrf.mxu0
      %2043 = vmatprep.mubr.bf16.mxu0 0
      %2044 = vmatmul.mubr.bf16.gmra.mxu0 %v1380
      %v2045 = vpop.f32.mrf.mxu0
      %v2046 = vadd.f32 0.0, %v2045
      %v2047 = vpop.f32.mrf.mxu0
      %v2048 = vpop.f32.mrf.mxu0
      %v2049 = vadd.f32 0.0, %v2048
      %v2050 = vpop.f32.mrf.mxu0
      %2051 = vmatprep.mubr.bf16.mxu0 0
      %2052 = vmatmul.mubr.bf16.gmra.mxu0 %v1383
      %v2053 = vpop.f32.mrf.mxu0
      %v2054 = vadd.f32 0.0, %v2053
      %v2055 = vpop.f32.mrf.mxu0
      %v2056 = vpop.f32.mrf.mxu0
      %v2057 = vadd.f32 0.0, %v2056
      %v2058 = vpop.f32.mrf.mxu0
      %2059 = vmatprep.mubr.bf16.mxu0 0
      %2060 = vmatmul.mubr.bf16.gmra.mxu0 %v1386
      %v2061 = vpop.f32.mrf.mxu0
      %v2062 = vadd.f32 0.0, %v2061
      %v2063 = vpop.f32.mrf.mxu0
      %v2064 = vpop.f32.mrf.mxu0
      %v2065 = vadd.f32 0.0, %v2064
      %v2066 = vpop.f32.mrf.mxu0
      %2067 = vmatprep.mubr.bf16.mxu0 0
      %2068 = vmatmul.mubr.bf16.gmra.mxu0 %v1389
      %v2069 = vpop.f32.mrf.mxu0
      %v2070 = vadd.f32 0.0, %v2069
      %v2071 = vpop.f32.mrf.mxu0
      %v2072 = vpop.f32.mrf.mxu0
      %v2073 = vadd.f32 0.0, %v2072
      %v2074 = vpop.f32.mrf.mxu0
      %2075 = vmatprep.mubr.bf16.mxu0 0
      %2076 = vmatmul.mubr.bf16.gmra.mxu0 %v1392
      %v2077 = vpop.f32.mrf.mxu0
      %v2078 = vadd.f32 0.0, %v2077
      %v2079 = vpop.f32.mrf.mxu0
      %v2080 = vpop.f32.mrf.mxu0
      %v2081 = vadd.f32 0.0, %v2080
      %v2082 = vpop.f32.mrf.mxu0
      %2083 = vmatprep.mubr.bf16.mxu0 0
      %2084 = vmatmul.mubr.bf16.gmra.mxu0 %v1395
      %v2085 = vpop.f32.mrf.mxu0
      %v2086 = vadd.f32 0.0, %v2085
      %v2087 = vpop.f32.mrf.mxu0
      %v2088 = vpop.f32.mrf.mxu0
      %v2089 = vadd.f32 0.0, %v2088
      %v2090 = vpop.f32.mrf.mxu0
      %2091 = vmatprep.mubr.bf16.mxu0 0
      %2092 = vmatmul.mubr.bf16.gmra.mxu0 %v1398
      %v2093 = vpop.f32.mrf.mxu0
      %v2094 = vadd.f32 0.0, %v2093
      %v2095 = vpop.f32.mrf.mxu0
      %v2096 = vpop.f32.mrf.mxu0
      %v2097 = vadd.f32 0.0, %v2096
      %v2098 = vpop.f32.mrf.mxu0
      %2099 = vmatprep.mubr.bf16.mxu0 0
      %2100 = vmatmul.mubr.bf16.gmra.mxu0 %v1401
      %v2101 = vpop.f32.mrf.mxu0
      %v2102 = vadd.f32 0.0, %v2101
      %v2103 = vpop.f32.mrf.mxu0
      %v2104 = vpop.f32.mrf.mxu0
      %v2105 = vadd.f32 0.0, %v2104
      %v2106 = vpop.f32.mrf.mxu0
      %2107 = vmatprep.mubr.bf16.mxu0 0
      %2108 = vmatmul.mubr.bf16.gmra.mxu0 %v1404
      %v2109 = vpop.f32.mrf.mxu0
      %v2110 = vadd.f32 0.0, %v2109
      %v2111 = vpop.f32.mrf.mxu0
      %v2112 = vpop.f32.mrf.mxu0
      %v2113 = vadd.f32 0.0, %v2112
      %v2114 = vpop.f32.mrf.mxu0
      %2115 = vmatprep.mubr.bf16.mxu0 0
      %2116 = vmatmul.mubr.bf16.gmra.mxu0 %v1407
      %v2117 = vpop.f32.mrf.mxu0
      %v2118 = vadd.f32 0.0, %v2117
      %v2119 = vpop.f32.mrf.mxu0
      %v2120 = vpop.f32.mrf.mxu0
      %v2121 = vadd.f32 0.0, %v2120
      %v2122 = vpop.f32.mrf.mxu0
      %2123 = vmatprep.mubr.bf16.mxu0 0
      %2124 = vmatmul.mubr.bf16.gmra.mxu0 %v1410
      %v2125 = vpop.f32.mrf.mxu0
      %v2126 = vadd.f32 0.0, %v2125
      %v2127 = vpop.f32.mrf.mxu0
      %v2128 = vpop.f32.mrf.mxu0
      %v2129 = vadd.f32 0.0, %v2128
      %v2130 = vpop.f32.mrf.mxu0
      %2131 = vmatprep.mubr.bf16.mxu0 0
      %2132 = vmatmul.mubr.bf16.gmra.mxu0 %v1413
      %v2133 = vpop.f32.mrf.mxu0
      %v2134 = vadd.f32 0.0, %v2133
      %v2135 = vpop.f32.mrf.mxu0
      %v2136 = vpop.f32.mrf.mxu0
      %v2137 = vadd.f32 0.0, %v2136
      %v2138 = vpop.f32.mrf.mxu0
      %2139 = vmatprep.mubr.bf16.mxu0 0
      %2140 = vmatmul.mubr.bf16.gmra.mxu0 %v1416
      %v2141 = vpop.f32.mrf.mxu0
      %v2142 = vadd.f32 0.0, %v2141
      %v2143 = vpop.f32.mrf.mxu0
      %v2144 = vpop.f32.mrf.mxu0
      %v2145 = vadd.f32 0.0, %v2144
      %v2146 = vpop.f32.mrf.mxu0
      %2147 = vmatprep.mubr.bf16.mxu0 0
      %2148 = vmatmul.mubr.bf16.gmra.mxu0 %v1419
      %v2149 = vpop.f32.mrf.mxu0
      %v2150 = vadd.f32 0.0, %v2149
      %v2151 = vpop.f32.mrf.mxu0
      %v2152 = vpop.f32.mrf.mxu0
      %v2153 = vadd.f32 0.0, %v2152
      %v2154 = vpop.f32.mrf.mxu0
      %2155 = vmatprep.mubr.bf16.mxu0 0
      %2156 = vmatmul.mubr.bf16.gmra.mxu0 %v1422
      %v2157 = vpop.f32.mrf.mxu0
      %v2158 = vadd.f32 0.0, %v2157
      %v2159 = vpop.f32.mrf.mxu0
      %v2160 = vpop.f32.mrf.mxu0
      %v2161 = vadd.f32 0.0, %v2160
      %v2162 = vpop.f32.mrf.mxu0
      %2163 = vmatprep.mubr.bf16.mxu0 0
      %2164 = vmatmul.mubr.bf16.gmra.mxu0 %v1425
      %v2165 = vpop.f32.mrf.mxu0
      %v2166 = vadd.f32 0.0, %v2165
      %v2167 = vpop.f32.mrf.mxu0
      %v2168 = vpop.f32.mrf.mxu0
      %v2169 = vadd.f32 0.0, %v2168
      %v2170 = vpop.f32.mrf.mxu0
      %2171 = vmatprep.mubr.bf16.mxu0 0
      %2172 = vmatmul.mubr.bf16.gmra.mxu0 %v1428
      %v2173 = vpop.f32.mrf.mxu0
      %v2174 = vadd.f32 0.0, %v2173
      %v2175 = vpop.f32.mrf.mxu0
      %v2176 = vpop.f32.mrf.mxu0
      %v2177 = vadd.f32 0.0, %v2176
      %v2178 = vpop.f32.mrf.mxu0
      %2179 = vmatprep.mubr.bf16.mxu0 0
      %2180 = vmatmul.mubr.bf16.gmra.mxu0 %v1431
      %v2181 = vpop.f32.mrf.mxu0
      %v2182 = vadd.f32 0.0, %v2181
      %v2183 = vpop.f32.mrf.mxu0
      %v2184 = vpop.f32.mrf.mxu0
      %v2185 = vadd.f32 0.0, %v2184
      %v2186 = vpop.f32.mrf.mxu0
      %2187 = vmatprep.mubr.bf16.mxu0 0
      %2188 = vmatmul.mubr.bf16.gmra.mxu0 %v1434
      %v2189 = vpop.f32.mrf.mxu0
      %v2190 = vadd.f32 0.0, %v2189
      %v2191 = vpop.f32.mrf.mxu0
      %v2192 = vpop.f32.mrf.mxu0
      %v2193 = vadd.f32 0.0, %v2192
      %v2194 = vpop.f32.mrf.mxu0
      %2195 = vmatprep.mubr.bf16.mxu0 0
      %2196 = vmatmul.mubr.bf16.gmra.mxu0 %v1437
      %v2197 = vpop.f32.mrf.mxu0
      %v2198 = vadd.f32 0.0, %v2197
      %v2199 = vpop.f32.mrf.mxu0
      %v2200 = vpop.f32.mrf.mxu0
      %v2201 = vadd.f32 0.0, %v2200
      %v2202 = vpop.f32.mrf.mxu0
      %2203 = vmatprep.mubr.bf16.mxu0 0
      %2204 = vmatmul.mubr.bf16.gmra.mxu0 %v1440
      %v2205 = vpop.f32.mrf.mxu0
      %v2206 = vadd.f32 0.0, %v2205
      %v2207 = vpop.f32.mrf.mxu0
      %v2208 = vpop.f32.mrf.mxu0
      %v2209 = vadd.f32 0.0, %v2208
      %v2210 = vpop.f32.mrf.mxu0
      %2211 = vmatprep.mubr.bf16.mxu0 0
      %2212 = vmatmul.mubr.bf16.gmra.mxu0 %v1443
      %v2213 = vpop.f32.mrf.mxu0
      %v2214 = vadd.f32 0.0, %v2213
      %v2215 = vpop.f32.mrf.mxu0
      %v2216 = vpop.f32.mrf.mxu0
      %v2217 = vadd.f32 0.0, %v2216
      %v2218 = vpop.f32.mrf.mxu0
      %2219 = vmatprep.mubr.bf16.mxu0 0
      %2220 = vmatmul.mubr.bf16.gmra.mxu0 %v1446
      %v2221 = vpop.f32.mrf.mxu0
      %v2222 = vadd.f32 0.0, %v2221
      %v2223 = vpop.f32.mrf.mxu0
      %v2224 = vpop.f32.mrf.mxu0
      %v2225 = vadd.f32 0.0, %v2224
      %v2226 = vpop.f32.mrf.mxu0
      %2227 = vmatprep.mubr.bf16.mxu0 0
      %2228 = vmatmul.mubr.bf16.gmra.mxu0 %v1449
      %v2229 = vpop.f32.mrf.mxu0
      %v2230 = vadd.f32 0.0, %v2229
      %v2231 = vpop.f32.mrf.mxu0
      %v2232 = vpop.f32.mrf.mxu0
      %v2233 = vadd.f32 0.0, %v2232
      %v2234 = vpop.f32.mrf.mxu0
      %2235 = vmatprep.mubr.bf16.mxu0 0
      %2236 = vmatmul.mubr.bf16.gmra.mxu0 %v1452
      %v2237 = vpop.f32.mrf.mxu0
      %v2238 = vadd.f32 0.0, %v2237
      %v2239 = vpop.f32.mrf.mxu0
      %v2240 = vpop.f32.mrf.mxu0
      %v2241 = vadd.f32 0.0, %v2240
      %v2242 = vpop.f32.mrf.mxu0
      %2243 = vmatprep.mubr.bf16.mxu0 0
      %2244 = vmatmul.mubr.bf16.gmra.mxu0 %v1455
      %v2245 = vpop.f32.mrf.mxu0
      %v2246 = vadd.f32 0.0, %v2245
      %v2247 = vpop.f32.mrf.mxu0
      %v2248 = vpop.f32.mrf.mxu0
      %v2249 = vadd.f32 0.0, %v2248
      %v2250 = vpop.f32.mrf.mxu0
      %2251 = vmatprep.mubr.bf16.mxu0 0
      %2252 = vmatmul.mubr.bf16.gmra.mxu0 %v1458
      %v2253 = vpop.f32.mrf.mxu0
      %v2254 = vadd.f32 0.0, %v2253
      %v2255 = vpop.f32.mrf.mxu0
      %v2256 = vpop.f32.mrf.mxu0
      %v2257 = vadd.f32 0.0, %v2256
      %v2258 = vpop.f32.mrf.mxu0
      %2259 = vmatprep.mubr.bf16.mxu0 0
      %2260 = vmatmul.mubr.bf16.gmra.mxu0 %v1461
      %v2261 = vpop.f32.mrf.mxu0
      %v2262 = vadd.f32 0.0, %v2261
      %v2263 = vpop.f32.mrf.mxu0
      %v2264 = vpop.f32.mrf.mxu0
      %v2265 = vadd.f32 0.0, %v2264
      %v2266 = vpop.f32.mrf.mxu0
      %2267 = vmatprep.mubr.bf16.mxu0 0
      %2268 = vmatmul.mubr.bf16.gmra.mxu0 %v1464
      %v2269 = vpop.f32.mrf.mxu0
      %v2270 = vadd.f32 0.0, %v2269
      %v2271 = vpop.f32.mrf.mxu0
      %v2272 = vpop.f32.mrf.mxu0
      %v2273 = vadd.f32 0.0, %v2272
      %v2274 = vpop.f32.mrf.mxu0
      %2275 = vmatprep.mubr.bf16.mxu0 0
      %2276 = vmatmul.mubr.bf16.gmra.mxu0 %v1467
      %v2277 = vpop.f32.mrf.mxu0
      %v2278 = vadd.f32 0.0, %v2277
      %v2279 = vpop.f32.mrf.mxu0
      %v2280 = vpop.f32.mrf.mxu0
      %v2281 = vadd.f32 0.0, %v2280
      %v2282 = vpop.f32.mrf.mxu0
      %2283 = vmatprep.mubr.bf16.mxu0 0
      %2284 = vmatmul.mubr.bf16.gmra.mxu0 %v1470
      %v2285 = vpop.f32.mrf.mxu0
      %v2286 = vadd.f32 0.0, %v2285
      %v2287 = vpop.f32.mrf.mxu0
      %v2288 = vpop.f32.mrf.mxu0
      %v2289 = vadd.f32 0.0, %v2288
      %v2290 = vpop.f32.mrf.mxu0
      %2291 = vmatprep.mubr.bf16.mxu0 0
      %2292 = vmatmul.mubr.bf16.gmra.mxu0 %v1473
      %v2293 = vpop.f32.mrf.mxu0
      %v2294 = vadd.f32 0.0, %v2293
      %v2295 = vpop.f32.mrf.mxu0
      %v2296 = vpop.f32.mrf.mxu0
      %v2297 = vadd.f32 0.0, %v2296
      %v2298 = vpop.f32.mrf.mxu0
      %2299 = vmatprep.mubr.bf16.mxu0 0
      %2300 = vmatmul.mubr.bf16.gmra.mxu0 %v1476
      %v2301 = vpop.f32.mrf.mxu0
      %v2302 = vadd.f32 0.0, %v2301
      %v2303 = vpop.f32.mrf.mxu0
      %v2304 = vpop.f32.mrf.mxu0
      %v2305 = vadd.f32 0.0, %v2304
      %v2306 = vpop.f32.mrf.mxu0
      %2307 = vmatprep.mubr.bf16.mxu0 0
      %2308 = vmatmul.mubr.bf16.gmra.mxu0 %v1479
      %v2309 = vpop.f32.mrf.mxu0
      %v2310 = vadd.f32 0.0, %v2309
      %v2311 = vpop.f32.mrf.mxu0
      %v2312 = vpop.f32.mrf.mxu0
      %v2313 = vadd.f32 0.0, %v2312
      %v2314 = vpop.f32.mrf.mxu0
      %2315 = vmatprep.mubr.bf16.mxu0 0
      %2316 = vmatmul.mubr.bf16.gmra.mxu0 %v1482
      %v2317 = vpop.f32.mrf.mxu0
      %v2318 = vadd.f32 0.0, %v2317
      %v2319 = vpop.f32.mrf.mxu0
      %v2320 = vpop.f32.mrf.mxu0
      %v2321 = vadd.f32 0.0, %v2320
      %v2322 = vpop.f32.mrf.mxu0
      %2323 = vmatprep.mubr.bf16.mxu0 0
      %2324 = vmatmul.mubr.bf16.gmra.mxu0 %v1485
      %v2325 = vpop.f32.mrf.mxu0
      %v2326 = vadd.f32 0.0, %v2325
      %v2327 = vpop.f32.mrf.mxu0
      %v2328 = vpop.f32.mrf.mxu0
      %v2329 = vadd.f32 0.0, %v2328
      %v2330 = vpop.f32.mrf.mxu0
      %2331 = vmatprep.mubr.bf16.mxu0 0
      %2332 = vmatmul.mubr.bf16.gmra.mxu0 %v1488
      %v2333 = vpop.f32.mrf.mxu0
      %v2334 = vadd.f32 0.0, %v2333
      %v2335 = vpop.f32.mrf.mxu0
      %v2336 = vpop.f32.mrf.mxu0
      %v2337 = vadd.f32 0.0, %v2336
      %v2338 = vpop.f32.mrf.mxu0
      %2339 = vmatprep.mubr.bf16.mxu0 0
      %2340 = vmatmul.mubr.bf16.gmra.mxu0 %v1491
      %v2341 = vpop.f32.mrf.mxu0
      %v2342 = vadd.f32 0.0, %v2341
      %v2343 = vpop.f32.mrf.mxu0
      %v2344 = vpop.f32.mrf.mxu0
      %v2345 = vadd.f32 0.0, %v2344
      %v2346 = vpop.f32.mrf.mxu0
      %2347 = vmatprep.mubr.bf16.mxu0 0
      %2348 = vmatmul.mubr.bf16.gmra.mxu0 %v1494
      %v2349 = vpop.f32.mrf.mxu0
      %v2350 = vadd.f32 0.0, %v2349
      %v2351 = vpop.f32.mrf.mxu0
      %v2352 = vpop.f32.mrf.mxu0
      %v2353 = vadd.f32 0.0, %v2352
      %v2354 = vpop.f32.mrf.mxu0
      %2355 = vmatprep.mubr.bf16.mxu0 0
      %2356 = vmatmul.mubr.bf16.gmra.mxu0 %v1497
      %v2357 = vpop.f32.mrf.mxu0
      %v2358 = vadd.f32 0.0, %v2357
      %v2359 = vpop.f32.mrf.mxu0
      %v2360 = vpop.f32.mrf.mxu0
      %v2361 = vadd.f32 0.0, %v2360
      %v2362 = vpop.f32.mrf.mxu0
      %2363 = vmatprep.mubr.bf16.mxu0 0
      %2364 = vmatmul.mubr.bf16.gmra.mxu0 %v1500
      %v2365 = vpop.f32.mrf.mxu0
      %v2366 = vadd.f32 0.0, %v2365
      %v2367 = vpop.f32.mrf.mxu0
      %v2368 = vpop.f32.mrf.mxu0
      %v2369 = vadd.f32 0.0, %v2368
      %v2370 = vpop.f32.mrf.mxu0
      %2371 = vmatprep.mubr.bf16.mxu0 0
      %2372 = vmatmul.mubr.bf16.gmra.mxu0 %v1503
      %v2373 = vpop.f32.mrf.mxu0
      %v2374 = vadd.f32 0.0, %v2373
      %v2375 = vpop.f32.mrf.mxu0
      %v2376 = vpop.f32.mrf.mxu0
      %v2377 = vadd.f32 0.0, %v2376
      %v2378 = vpop.f32.mrf.mxu0
      %2379 = vmatprep.mubr.bf16.mxu0 0
      %2380 = vmatmul.mubr.bf16.gmra.mxu0 %v1506
      %v2381 = vpop.f32.mrf.mxu0
      %v2382 = vadd.f32 0.0, %v2381
      %v2383 = vpop.f32.mrf.mxu0
      %v2384 = vpop.f32.mrf.mxu0
      %v2385 = vadd.f32 0.0, %v2384
      %v2386 = vpop.f32.mrf.mxu0
      %2387 = vmatprep.mubr.bf16.mxu0 0
      %2388 = vmatmul.mubr.bf16.gmra.mxu0 %v1509
      %v2389 = vpop.f32.mrf.mxu0
      %v2390 = vadd.f32 0.0, %v2389
      %v2391 = vpop.f32.mrf.mxu0
      %v2392 = vpop.f32.mrf.mxu0
      %v2393 = vadd.f32 0.0, %v2392
      %v2394 = vpop.f32.mrf.mxu0
      %2395 = vmatprep.mubr.bf16.mxu0 0
      %2396 = vmatmul.mubr.bf16.gmra.mxu0 %v1512
      %v2397 = vpop.f32.mrf.mxu0
      %v2398 = vadd.f32 0.0, %v2397
      %v2399 = vpop.f32.mrf.mxu0
      %v2400 = vpop.f32.mrf.mxu0
      %v2401 = vadd.f32 0.0, %v2400
      %v2402 = vpop.f32.mrf.mxu0
      %2403 = vmatprep.mubr.bf16.mxu0 0
      %2404 = vmatmul.mubr.bf16.gmra.mxu0 %v1515
      %v2405 = vpop.f32.mrf.mxu0
      %v2406 = vadd.f32 0.0, %v2405
      %v2407 = vpop.f32.mrf.mxu0
      %v2408 = vpop.f32.mrf.mxu0
      %v2409 = vadd.f32 0.0, %v2408
      %v2410 = vpop.f32.mrf.mxu0
      %2411 = vmatprep.mubr.bf16.mxu0 0
      %2412 = vmatmul.mubr.bf16.gmra.mxu0 %v1518
      %v2413 = vpop.f32.mrf.mxu0
      %v2414 = vadd.f32 0.0, %v2413
      %v2415 = vpop.f32.mrf.mxu0
      %v2416 = vpop.f32.mrf.mxu0
      %v2417 = vadd.f32 0.0, %v2416
      %v2418 = vpop.f32.mrf.mxu0
      %2419 = vmatprep.mubr.bf16.mxu0 0
      %2420 = vmatmul.mubr.bf16.gmra.mxu0 %v1521
      %v2421 = vpop.f32.mrf.mxu0
      %v2422 = vadd.f32 0.0, %v2421
      %v2423 = vpop.f32.mrf.mxu0
      %v2424 = vpop.f32.mrf.mxu0
      %v2425 = vadd.f32 0.0, %v2424
      %v2426 = vpop.f32.mrf.mxu0
      %2427 = vmatprep.mubr.bf16.mxu0 0
      %2428 = vmatmul.mubr.bf16.gmra.mxu0 %v1524
      %v2429 = vpop.f32.mrf.mxu0
      %v2430 = vadd.f32 0.0, %v2429
      %v2431 = vpop.f32.mrf.mxu0
      %v2432 = vpop.f32.mrf.mxu0
      %v2433 = vadd.f32 0.0, %v2432
      %v2434 = vpop.f32.mrf.mxu0
      %2435 = vmatprep.mubr.bf16.mxu0 0
      %2436 = vmatmul.mubr.bf16.gmra.mxu0 %v1527
      %v2437 = vpop.f32.mrf.mxu0
      %v2438 = vadd.f32 0.0, %v2437
      %v2439 = vpop.f32.mrf.mxu0
      %v2440 = vpop.f32.mrf.mxu0
      %v2441 = vadd.f32 0.0, %v2440
      %v2442 = vpop.f32.mrf.mxu0
      %2443 = vmatprep.mubr.bf16.mxu0 0
      %2444 = vmatmul.mubr.bf16.gmra.mxu0 %v1530
      %v2445 = vpop.f32.mrf.mxu0
      %v2446 = vadd.f32 0.0, %v2445
      %v2447 = vpop.f32.mrf.mxu0
      %v2448 = vpop.f32.mrf.mxu0
      %v2449 = vadd.f32 0.0, %v2448
      %v2450 = vpop.f32.mrf.mxu0
      %2451 = vmatprep.mubr.bf16.mxu0 0
      %2452 = vmatmul.mubr.bf16.gmra.mxu0 %v1533
      %v2453 = vpop.f32.mrf.mxu0
      %v2454 = vadd.f32 0.0, %v2453
      %v2455 = vpop.f32.mrf.mxu0
      %v2456 = vpop.f32.mrf.mxu0
      %v2457 = vadd.f32 0.0, %v2456
      %v2458 = vpop.f32.mrf.mxu0
      %2459 = vmatprep.mubr.bf16.mxu0 0
      %2460 = vmatmul.mubr.bf16.gmra.mxu0 %v1536
      %v2461 = vpop.f32.mrf.mxu0
      %v2462 = vadd.f32 0.0, %v2461
      %v2463 = vpop.f32.mrf.mxu0
      %v2464 = vpop.f32.mrf.mxu0
      %v2465 = vadd.f32 0.0, %v2464
      %v2466 = vpop.f32.mrf.mxu0
      %2467 = vmatprep.mubr.bf16.mxu0 0
      %2468 = vmatmul.mubr.bf16.gmra.mxu0 %v1539
      %v2469 = vpop.f32.mrf.mxu0
      %v2470 = vadd.f32 0.0, %v2469
      %v2471 = vpop.f32.mrf.mxu0
      %v2472 = vpop.f32.mrf.mxu0
      %v2473 = vadd.f32 0.0, %v2472
      %v2474 = vpop.f32.mrf.mxu0
      %2475 = vmatprep.mubr.bf16.mxu0 0
      %2476 = vmatmul.mubr.bf16.gmra.mxu0 %v1542
      %v2477 = vpop.f32.mrf.mxu0
      %v2478 = vadd.f32 0.0, %v2477
      %v2479 = vpop.f32.mrf.mxu0
      %v2480 = vpop.f32.mrf.mxu0
      %v2481 = vadd.f32 0.0, %v2480
      %v2482 = vpop.f32.mrf.mxu0
      %2483 = vmatprep.mubr.bf16.mxu0 0
      %2484 = vmatmul.mubr.bf16.gmra.mxu0 %v1545
      %v2485 = vpop.f32.mrf.mxu0
      %v2486 = vadd.f32 0.0, %v2485
      %v2487 = vpop.f32.mrf.mxu0
      %v2488 = vpop.f32.mrf.mxu0
      %v2489 = vadd.f32 0.0, %v2488
      %v2490 = vpop.f32.mrf.mxu0
      %2491 = vmatprep.mubr.bf16.mxu0 0
      %2492 = vmatmul.mubr.bf16.gmra.mxu0 %v1548
      %v2493 = vpop.f32.mrf.mxu0
      %v2494 = vadd.f32 0.0, %v2493
      %v2495 = vpop.f32.mrf.mxu0
      %v2496 = vpop.f32.mrf.mxu0
      %v2497 = vadd.f32 0.0, %v2496
      %v2498 = vpop.f32.mrf.mxu0
      %2499 = vmatprep.mubr.bf16.mxu0 0
      %2500 = vmatmul.mubr.bf16.gmra.mxu0 %v1551
      %v2501 = vpop.f32.mrf.mxu0
      %v2502 = vadd.f32 0.0, %v2501
      %v2503 = vpop.f32.mrf.mxu0
      %v2504 = vpop.f32.mrf.mxu0
      %v2505 = vadd.f32 0.0, %v2504
      %v2506 = vpop.f32.mrf.mxu0
      %2507 = vmatprep.mubr.bf16.mxu0 0
      %2508 = vmatmul.mubr.bf16.gmra.mxu0 %v1554
      %v2509 = vpop.f32.mrf.mxu0
      %v2510 = vadd.f32 0.0, %v2509
      %v2511 = vpop.f32.mrf.mxu0
      %v2512 = vpop.f32.mrf.mxu0
      %v2513 = vadd.f32 0.0, %v2512
      %v2514 = vpop.f32.mrf.mxu0
      %2515 = vmatprep.mubr.bf16.mxu0 0
      %2516 = vmatmul.mubr.bf16.gmra.mxu0 %v1557
      %v2517 = vpop.f32.mrf.mxu0
      %v2518 = vadd.f32 0.0, %v2517
      %v2519 = vpop.f32.mrf.mxu0
      %v2520 = vpop.f32.mrf.mxu0
      %v2521 = vadd.f32 0.0, %v2520
      %v2522 = vpop.f32.mrf.mxu0
      %2523 = vmatprep.mubr.bf16.mxu0 0
      %2524 = vmatmul.mubr.bf16.gmra.mxu0 %v1560
      %v2525 = vpop.f32.mrf.mxu0
      %v2526 = vadd.f32 0.0, %v2525
      %v2527 = vpop.f32.mrf.mxu0
      %v2528 = vpop.f32.mrf.mxu0
      %v2529 = vadd.f32 0.0, %v2528
      %v2530 = vpop.f32.mrf.mxu0
      %2531 = vmatprep.mubr.bf16.mxu0 0
      %2532 = vmatmul.mubr.bf16.gmra.mxu0 %v1563
      %v2533 = vpop.f32.mrf.mxu0
      %v2534 = vadd.f32 0.0, %v2533
      %v2535 = vpop.f32.mrf.mxu0
      %v2536 = vpop.f32.mrf.mxu0
      %v2537 = vadd.f32 0.0, %v2536
      %v2538 = vpop.f32.mrf.mxu0
      %2539 = vmatprep.mubr.bf16.mxu0 0
      %2540 = vmatmul.mubr.bf16.gmra.mxu0 %v1566
      %v2541 = vpop.f32.mrf.mxu0
      %v2542 = vadd.f32 0.0, %v2541
      %v2543 = vpop.f32.mrf.mxu0
      %v2544 = vpop.f32.mrf.mxu0
      %v2545 = vadd.f32 0.0, %v2544
      %v2546 = vpop.f32.mrf.mxu0
      %2547 = vmatprep.mubr.bf16.mxu0 0
      %2548 = vmatmul.mubr.bf16.gmra.mxu0 %v1569
      %v2549 = vpop.f32.mrf.mxu0
      %v2550 = vadd.f32 0.0, %v2549
      %v2551 = vpop.f32.mrf.mxu0
      %v2552 = vpop.f32.mrf.mxu0
      %v2553 = vadd.f32 0.0, %v2552
      %v2554 = vpop.f32.mrf.mxu0
      %2555 = vmatprep.mubr.bf16.mxu0 0
      %2556 = vmatmul.mubr.bf16.gmra.mxu0 %v1572
      %v2557 = vpop.f32.mrf.mxu0
      %v2558 = vadd.f32 0.0, %v2557
      %v2559 = vpop.f32.mrf.mxu0
      %v2560 = vpop.f32.mrf.mxu0
      %v2561 = vadd.f32 0.0, %v2560
      %v2562 = vpop.f32.mrf.mxu0
      %2563 = vmatprep.mubr.bf16.mxu0 0
      %2564 = vmatmul.mubr.bf16.gmra.mxu0 %v1575
      %v2565 = vpop.f32.mrf.mxu0
      %v2566 = vadd.f32 0.0, %v2565
      %v2567 = vpop.f32.mrf.mxu0
      %v2568 = vpop.f32.mrf.mxu0
      %v2569 = vadd.f32 0.0, %v2568
      %v2570 = vpop.f32.mrf.mxu0
      %2571 = vmatprep.mubr.bf16.mxu0 0
      %2572 = vmatmul.mubr.bf16.gmra.mxu0 %v1578
      %v2573 = vpop.f32.mrf.mxu0
      %v2574 = vadd.f32 0.0, %v2573
      %v2575 = vpop.f32.mrf.mxu0
      %v2576 = vpop.f32.mrf.mxu0
      %v2577 = vadd.f32 0.0, %v2576
      %v2578 = vpop.f32.mrf.mxu0
      %2579 = vmatprep.mubr.bf16.mxu0 0
      %2580 = vmatmul.mubr.bf16.gmra.mxu0 %v1581
      %v2581 = vpop.f32.mrf.mxu0
      %v2582 = vadd.f32 0.0, %v2581
      %v2583 = vpop.f32.mrf.mxu0
      %v2584 = vpop.f32.mrf.mxu0
      %v2585 = vadd.f32 0.0, %v2584
      %v2586 = vpop.f32.mrf.mxu0
      %2587 = vmatprep.mubr.bf16.mxu0 0
      %2588 = vmatmul.mubr.bf16.gmra.mxu0 %v1584
      %v2589 = vpop.f32.mrf.mxu0
      %v2590 = vadd.f32 0.0, %v2589
      %v2591 = vpop.f32.mrf.mxu0
      %v2592 = vpop.f32.mrf.mxu0
      %v2593 = vadd.f32 0.0, %v2592
      %v2594 = vpop.f32.mrf.mxu0
      %2595 = vmatprep.mubr.bf16.mxu0 0
      %2596 = vmatmul.mubr.bf16.gmra.mxu0 %v1587
      %v2597 = vpop.f32.mrf.mxu0
      %v2598 = vadd.f32 0.0, %v2597
      %v2599 = vpop.f32.mrf.mxu0
      %v2600 = vpop.f32.mrf.mxu0
      %v2601 = vadd.f32 0.0, %v2600
      %v2602 = vpop.f32.mrf.mxu0
      %2603 = vmatprep.mubr.bf16.mxu0 0
      %2604 = vmatmul.mubr.bf16.gmra.mxu0 %v1590
      %v2605 = vpop.f32.mrf.mxu0
      %v2606 = vadd.f32 0.0, %v2605
      %v2607 = vpop.f32.mrf.mxu0
      %v2608 = vpop.f32.mrf.mxu0
      %v2609 = vadd.f32 0.0, %v2608
      %v2610 = vpop.f32.mrf.mxu0
      %2611 = vmatprep.mubr.bf16.mxu0 0
      %2612 = vmatmul.mubr.bf16.gmra.mxu0 %v1593
      %v2613 = vpop.f32.mrf.mxu0
      %v2614 = vadd.f32 0.0, %v2613
      %v2615 = vpop.f32.mrf.mxu0
      %v2616 = vpop.f32.mrf.mxu0
      %v2617 = vadd.f32 0.0, %v2616
      %v2618 = vpop.f32.mrf.mxu0
      %2619 = vmatprep.mubr.bf16.mxu0 0
      %2620 = vmatmul.mubr.bf16.gmra.mxu0 %v1596
      %v2621 = vpop.f32.mrf.mxu0
      %v2622 = vadd.f32 0.0, %v2621
      %v2623 = vpop.f32.mrf.mxu0
      %v2624 = vpop.f32.mrf.mxu0
      %v2625 = vadd.f32 0.0, %v2624
      %v2626 = vpop.f32.mrf.mxu0
      %2627 = vmatprep.mubr.bf16.mxu0 0
      %2628 = vmatmul.mubr.bf16.gmra.mxu0 %v1599
      %v2629 = vpop.f32.mrf.mxu0
      %v2630 = vadd.f32 0.0, %v2629
      %v2631 = vpop.f32.mrf.mxu0
      %v2632 = vpop.f32.mrf.mxu0
      %v2633 = vadd.f32 0.0, %v2632
      %v2634 = vpop.f32.mrf.mxu0
      %2635 = vmatprep.mubr.bf16.mxu0 0
      %2636 = vmatmul.mubr.bf16.gmra.mxu0 %v1602
      %v2637 = vpop.f32.mrf.mxu0
      %v2638 = vadd.f32 0.0, %v2637
      %v2639 = vpop.f32.mrf.mxu0
      %v2640 = vpop.f32.mrf.mxu0
      %v2641 = vadd.f32 0.0, %v2640
      %v2642 = vpop.f32.mrf.mxu0
      %2643 = vmatprep.mubr.bf16.mxu0 0
      %2644 = vmatmul.mubr.bf16.gmra.mxu0 %v1605
      %v2645 = vpop.f32.mrf.mxu0
      %v2646 = vadd.f32 0.0, %v2645
      %v2647 = vpop.f32.mrf.mxu0
      %v2648 = vpop.f32.mrf.mxu0
      %v2649 = vadd.f32 0.0, %v2648
      %v2650 = vpop.f32.mrf.mxu0
      %2651 = vmatprep.mubr.bf16.mxu0 0
      %2652 = vmatmul.mubr.bf16.gmra.mxu0 %v1608
      %v2653 = vpop.f32.mrf.mxu0
      %v2654 = vadd.f32 0.0, %v2653
      %v2655 = vpop.f32.mrf.mxu0
      %v2656 = vpop.f32.mrf.mxu0
      %v2657 = vadd.f32 0.0, %v2656
      %v2658 = vpop.f32.mrf.mxu0
      %2659 = vmatprep.mubr.bf16.mxu0 0
      %2660 = vmatmul.mubr.bf16.gmra.mxu0 %v1611
      %v2661 = vpop.f32.mrf.mxu0
      %v2662 = vadd.f32 0.0, %v2661
      %v2663 = vpop.f32.mrf.mxu0
      %v2664 = vpop.f32.mrf.mxu0
      %v2665 = vadd.f32 0.0, %v2664
      %v2666 = vpop.f32.mrf.mxu0
      %2667 = vmatprep.mubr.bf16.mxu0 0
      %2668 = vmatmul.mubr.bf16.gmra.mxu0 %v1614
      %v2669 = vpop.f32.mrf.mxu0
      %v2670 = vadd.f32 0.0, %v2669
      %v2671 = vpop.f32.mrf.mxu0
      %v2672 = vpop.f32.mrf.mxu0
      %v2673 = vadd.f32 0.0, %v2672
      %v2674 = vpop.f32.mrf.mxu0
      %2675 = vmatprep.mubr.bf16.mxu0 0
      %2676 = vmatmul.mubr.bf16.gmra.mxu0 %v1617
      %v2677 = vpop.f32.mrf.mxu0
      %v2678 = vadd.f32 0.0, %v2677
      %v2679 = vpop.f32.mrf.mxu0
      %v2680 = vpop.f32.mrf.mxu0
      %v2681 = vadd.f32 0.0, %v2680
      %v2682 = vpop.f32.mrf.mxu0
      %2683 = vmatprep.mubr.bf16.mxu0 0
      %2684 = vmatmul.mubr.bf16.gmra.mxu0 %v1620
      %v2685 = vpop.f32.mrf.mxu0
      %v2686 = vadd.f32 0.0, %v2685
      %v2687 = vpop.f32.mrf.mxu0
      %v2688 = vpop.f32.mrf.mxu0
      %v2689 = vadd.f32 0.0, %v2688
      %v2690 = vpop.f32.mrf.mxu0
      %2691 = vmatprep.mubr.bf16.mxu0 0
      %2692 = vmatmul.mubr.bf16.gmra.mxu0 %v1623
      %v2693 = vpop.f32.mrf.mxu0
      %v2694 = vadd.f32 0.0, %v2693
      %v2695 = vpop.f32.mrf.mxu0
      %v2696 = vpop.f32.mrf.mxu0
      %v2697 = vadd.f32 0.0, %v2696
      %v2698 = vpop.f32.mrf.mxu0
      %2699 = vmatprep.mubr.bf16.mxu0 0
      %2700 = vmatmul.mubr.bf16.gmra.mxu0 %v1626
      %v2701 = vpop.f32.mrf.mxu0
      %v2702 = vadd.f32 0.0, %v2701
      %v2703 = vpop.f32.mrf.mxu0
      %v2704 = vpop.f32.mrf.mxu0
      %v2705 = vadd.f32 0.0, %v2704
      %v2706 = vpop.f32.mrf.mxu0
      %2707 = vmatprep.mubr.bf16.mxu0 0
      %2708 = vmatmul.mubr.bf16.gmra.mxu0 %v1629
      %v2709 = vpop.f32.mrf.mxu0
      %v2710 = vadd.f32 0.0, %v2709
      %v2711 = vpop.f32.mrf.mxu0
      %v2712 = vpop.f32.mrf.mxu0
      %v2713 = vadd.f32 0.0, %v2712
      %v2714 = vpop.f32.mrf.mxu0
      %2715 = vmatprep.mubr.bf16.mxu0 0
      %2716 = vmatmul.mubr.bf16.gmra.mxu0 %v1632
      %v2717 = vpop.f32.mrf.mxu0
      %v2718 = vadd.f32 0.0, %v2717
      %v2719 = vpop.f32.mrf.mxu0
      %v2720 = vpop.f32.mrf.mxu0
      %v2721 = vadd.f32 0.0, %v2720
      %v2722 = vpop.f32.mrf.mxu0
      %2723 = vmatprep.mubr.bf16.mxu0 0
      %2724 = vmatmul.mubr.bf16.gmra.mxu0 %v1635
      %v2725 = vpop.f32.mrf.mxu0
      %v2726 = vadd.f32 0.0, %v2725
      %v2727 = vpop.f32.mrf.mxu0
      %v2728 = vpop.f32.mrf.mxu0
      %v2729 = vadd.f32 0.0, %v2728
      %v2730 = vpop.f32.mrf.mxu0
      %2731 = vmatprep.mubr.bf16.mxu0 0
      %2732 = vmatmul.mubr.bf16.gmra.mxu0 %v1638
      %v2733 = vpop.f32.mrf.mxu0
      %v2734 = vadd.f32 0.0, %v2733
      %v2735 = vpop.f32.mrf.mxu0
      %v2736 = vpop.f32.mrf.mxu0
      %v2737 = vadd.f32 0.0, %v2736
      %v2738 = vpop.f32.mrf.mxu0
      %2739 = vmatprep.mubr.bf16.mxu0 0
      %2740 = vmatmul.mubr.bf16.gmra.mxu0 %v1641
      %v2741 = vpop.f32.mrf.mxu0
      %v2742 = vadd.f32 0.0, %v2741
      %v2743 = vpop.f32.mrf.mxu0
      %v2744 = vpop.f32.mrf.mxu0
      %v2745 = vadd.f32 0.0, %v2744
      %v2746 = vpop.f32.mrf.mxu0
      %2747 = vmatprep.mubr.bf16.mxu0 0
      %2748 = vmatmul.mubr.bf16.gmra.mxu0 %v1644
      %v2749 = vpop.f32.mrf.mxu0
      %v2750 = vadd.f32 0.0, %v2749
      %v2751 = vpop.f32.mrf.mxu0
      %v2752 = vpop.f32.mrf.mxu0
      %v2753 = vadd.f32 0.0, %v2752
      %v2754 = vpop.f32.mrf.mxu0
      %2755 = vmatprep.mubr.bf16.mxu0 0
      %2756 = vmatmul.mubr.bf16.gmra.mxu0 %v1647
      %v2757 = vpop.f32.mrf.mxu0
      %v2758 = vadd.f32 0.0, %v2757
      %v2759 = vpop.f32.mrf.mxu0
      %v2760 = vpop.f32.mrf.mxu0
      %v2761 = vadd.f32 0.0, %v2760
      %v2762 = vpop.f32.mrf.mxu0
      %2763 = vmatprep.mubr.bf16.mxu0 0
      %2764 = vmatmul.mubr.bf16.gmra.mxu0 %v1650
      %v2765 = vpop.f32.mrf.mxu0
      %v2766 = vadd.f32 0.0, %v2765
      %v2767 = vpop.f32.mrf.mxu0
      %v2768 = vpop.f32.mrf.mxu0
      %v2769 = vadd.f32 0.0, %v2768
      %v2770 = vpop.f32.mrf.mxu0
      %2771 = vmatprep.mubr.bf16.mxu0 0
      %2772 = vmatmul.mubr.bf16.gmra.mxu0 %v1653
      %v2773 = vpop.f32.mrf.mxu0
      %v2774 = vadd.f32 0.0, %v2773
      %v2775 = vpop.f32.mrf.mxu0
      %v2776 = vpop.f32.mrf.mxu0
      %v2777 = vadd.f32 0.0, %v2776
      %v2778 = vpop.f32.mrf.mxu0
      %2779 = vmatprep.mubr.bf16.mxu0 0
      %2780 = vmatmul.mubr.bf16.gmra.mxu0 %v1656
      %v2781 = vpop.f32.mrf.mxu0
      %v2782 = vadd.f32 0.0, %v2781
      %v2783 = vpop.f32.mrf.mxu0
      %v2784 = vpop.f32.mrf.mxu0
      %v2785 = vadd.f32 0.0, %v2784
      %v2786 = vpop.f32.mrf.mxu0
      %2787 = vmatprep.mubr.bf16.mxu0 0
      %2788 = vmatmul.mubr.bf16.gmra.mxu0 %v1659
      %v2789 = vpop.f32.mrf.mxu0
      %v2790 = vadd.f32 0.0, %v2789
      %v2791 = vpop.f32.mrf.mxu0
      %v2792 = vpop.f32.mrf.mxu0
      %v2793 = vadd.f32 0.0, %v2792
      %v2794 = vpop.f32.mrf.mxu0
      %2795 = vmatprep.mubr.bf16.mxu0 0
      %2796 = vmatmul.mubr.bf16.gmra.mxu0 %v1662
      %v2797 = vpop.f32.mrf.mxu0
      %v2798 = vadd.f32 0.0, %v2797
      %v2799 = vpop.f32.mrf.mxu0
      %v2800 = vpop.f32.mrf.mxu0
      %v2801 = vadd.f32 0.0, %v2800
      %v2802 = vpop.f32.mrf.mxu0
      %2803 = vmatprep.mubr.bf16.mxu0 0
      %2804 = vmatmul.mubr.bf16.gmra.mxu0 %v1665
      %v2805 = vpop.f32.mrf.mxu0
      %v2806 = vadd.f32 0.0, %v2805
      %v2807 = vpop.f32.mrf.mxu0
      %v2808 = vpop.f32.mrf.mxu0
      %v2809 = vadd.f32 0.0, %v2808
      %v2810 = vpop.f32.mrf.mxu0
      %2811 = vmatprep.mubr.bf16.mxu0 0
      %2812 = vmatmul.mubr.bf16.gmra.mxu0 %v1668
      %v2813 = vpop.f32.mrf.mxu0
      %v2814 = vadd.f32 0.0, %v2813
      %v2815 = vpop.f32.mrf.mxu0
      %v2816 = vpop.f32.mrf.mxu0
      %v2817 = vadd.f32 0.0, %v2816
      %v2818 = vpop.f32.mrf.mxu0
      %2819 = vmatprep.mubr.bf16.mxu0 0
      %2820 = vmatmul.mubr.bf16.gmra.mxu0 %v1671
      %v2821 = vpop.f32.mrf.mxu0
      %v2822 = vadd.f32 0.0, %v2821
      %v2823 = vpop.f32.mrf.mxu0
      %v2824 = vpop.f32.mrf.mxu0
      %v2825 = vadd.f32 0.0, %v2824
      %v2826 = vpop.f32.mrf.mxu0
      %2827 = vmatprep.mubr.bf16.mxu0 0
      %2828 = vmatmul.mubr.bf16.gmra.mxu0 %v1674
      %v2829 = vpop.f32.mrf.mxu0
      %v2830 = vadd.f32 0.0, %v2829
      %v2831 = vpop.f32.mrf.mxu0
      %v2832 = vpop.f32.mrf.mxu0
      %v2833 = vadd.f32 0.0, %v2832
      %v2834 = vpop.f32.mrf.mxu0
      %2835 = vmatprep.mubr.bf16.mxu0 0
      %2836 = vmatmul.mubr.bf16.gmra.mxu0 %v1677
      %v2837 = vpop.f32.mrf.mxu0
      %v2838 = vadd.f32 0.0, %v2837
      %v2839 = vpop.f32.mrf.mxu0
      %v2840 = vpop.f32.mrf.mxu0
      %v2841 = vadd.f32 0.0, %v2840
      %v2842 = vpop.f32.mrf.mxu0
      %2843 = vmatprep.mubr.bf16.mxu0 0
      %2844 = vmatmul.mubr.bf16.gmra.mxu0 %v1680
      %v2845 = vpop.f32.mrf.mxu0
      %v2846 = vadd.f32 0.0, %v2845
      %v2847 = vpop.f32.mrf.mxu0
      %v2848 = vpop.f32.mrf.mxu0
      %v2849 = vadd.f32 0.0, %v2848
      %v2850 = vpop.f32.mrf.mxu0
      %2851 = vmatprep.mubr.bf16.mxu0 0
      %2852 = vmatmul.mubr.bf16.gmra.mxu0 %v1683
      %v2853 = vpop.f32.mrf.mxu0
      %v2854 = vadd.f32 0.0, %v2853
      %v2855 = vpop.f32.mrf.mxu0
      %v2856 = vpop.f32.mrf.mxu0
      %v2857 = vadd.f32 0.0, %v2856
      %v2858 = vpop.f32.mrf.mxu0
      %2859 = vmatprep.mubr.bf16.mxu0 0
      %2860 = vmatmul.mubr.bf16.gmra.mxu0 %v1686
      %v2861 = vpop.f32.mrf.mxu0
      %v2862 = vadd.f32 0.0, %v2861
      %v2863 = vpop.f32.mrf.mxu0
      %v2864 = vpop.f32.mrf.mxu0
      %v2865 = vadd.f32 0.0, %v2864
      %v2866 = vpop.f32.mrf.mxu0
      %2867 = vmatprep.mubr.bf16.mxu0 0
      %2868 = vmatmul.mubr.bf16.gmra.mxu0 %v1689
      %v2869 = vpop.f32.mrf.mxu0
      %v2870 = vadd.f32 0.0, %v2869
      %v2871 = vpop.f32.mrf.mxu0
      %v2872 = vpop.f32.mrf.mxu0
      %v2873 = vadd.f32 0.0, %v2872
      %v2874 = vpop.f32.mrf.mxu0
      %2875 = vdwg.mxu0
      %v2876 = vld [vmem:[%s2] sm:$0x1]
      %v2878 = vlaneseq
      %v2879 = vshrl.u32 %v2878, 7
      %v2880 = vsub.s32 0, %v2879
      %v2881 = vrot.slane %v2876, %v2880
      %v2883 = vmul.f32 %v1726, %v2881
      %v2884 = vmul.f32 %v1729, %v2881
      %v2885 = vmul.f32 %v1734, %v2881
      %v2886 = vmul.f32 %v1737, %v2881
      %v2887 = vmul.f32 %v1742, %v2881
      %v2888 = vmul.f32 %v1745, %v2881
      %v2889 = vmul.f32 %v1750, %v2881
      %v2890 = vmul.f32 %v1753, %v2881
      %v2891 = vmul.f32 %v1758, %v2881
      %v2892 = vmul.f32 %v1761, %v2881
      %v2893 = vmul.f32 %v1766, %v2881
      %v2894 = vmul.f32 %v1769, %v2881
      %v2895 = vmul.f32 %v1774, %v2881
      %v2896 = vmul.f32 %v1777, %v2881
      %v2897 = vmul.f32 %v1782, %v2881
      %v2898 = vmul.f32 %v1785, %v2881
      %v2899 = vmul.f32 %v1790, %v2881
      %v2900 = vmul.f32 %v1793, %v2881
      %v2901 = vmul.f32 %v1798, %v2881
      %v2902 = vmul.f32 %v1801, %v2881
      %v2903 = vmul.f32 %v1806, %v2881
      %v2904 = vmul.f32 %v1809, %v2881
      %v2905 = vmul.f32 %v1814, %v2881
      %v2906 = vmul.f32 %v1817, %v2881
      %v2907 = vmul.f32 %v1822, %v2881
      %v2908 = vmul.f32 %v1825, %v2881
      %v2909 = vmul.f32 %v1830, %v2881
      %v2910 = vmul.f32 %v1833, %v2881
      %v2911 = vmul.f32 %v1838, %v2881
      %v2912 = vmul.f32 %v1841, %v2881
      %v2913 = vmul.f32 %v1846, %v2881
      %v2914 = vmul.f32 %v1849, %v2881
      %v2915 = vmul.f32 %v1854, %v2881
      %v2916 = vmul.f32 %v1857, %v2881
      %v2917 = vmul.f32 %v1862, %v2881
      %v2918 = vmul.f32 %v1865, %v2881
      %v2919 = vmul.f32 %v1870, %v2881
      %v2920 = vmul.f32 %v1873, %v2881
      %v2921 = vmul.f32 %v1878, %v2881
      %v2922 = vmul.f32 %v1881, %v2881
      %v2923 = vmul.f32 %v1886, %v2881
      %v2924 = vmul.f32 %v1889, %v2881
      %v2925 = vmul.f32 %v1894, %v2881
      %v2926 = vmul.f32 %v1897, %v2881
      %v2927 = vmul.f32 %v1902, %v2881
      %v2928 = vmul.f32 %v1905, %v2881
      %v2929 = vmul.f32 %v1910, %v2881
      %v2930 = vmul.f32 %v1913, %v2881
      %v2931 = vmul.f32 %v1918, %v2881
      %v2932 = vmul.f32 %v1921, %v2881
      %v2933 = vmul.f32 %v1926, %v2881
      %v2934 = vmul.f32 %v1929, %v2881
      %v2935 = vmul.f32 %v1934, %v2881
      %v2936 = vmul.f32 %v1937, %v2881
      %v2937 = vmul.f32 %v1942, %v2881
      %v2938 = vmul.f32 %v1945, %v2881
      %v2939 = vmul.f32 %v1950, %v2881
      %v2940 = vmul.f32 %v1953, %v2881
      %v2941 = vmul.f32 %v1958, %v2881
      %v2942 = vmul.f32 %v1961, %v2881
      %v2943 = vmul.f32 %v1966, %v2881
      %v2944 = vmul.f32 %v1969, %v2881
      %v2945 = vmul.f32 %v1974, %v2881
      %v2946 = vmul.f32 %v1977, %v2881
      %v2947 = vmul.f32 %v1982, %v2881
      %v2948 = vmul.f32 %v1985, %v2881
      %v2949 = vmul.f32 %v1990, %v2881
      %v2950 = vmul.f32 %v1993, %v2881
      %v2951 = vmul.f32 %v1998, %v2881
      %v2952 = vmul.f32 %v2001, %v2881
      %v2953 = vmul.f32 %v2006, %v2881
      %v2954 = vmul.f32 %v2009, %v2881
      %v2955 = vmul.f32 %v2014, %v2881
      %v2956 = vmul.f32 %v2017, %v2881
      %v2957 = vmul.f32 %v2022, %v2881
      %v2958 = vmul.f32 %v2025, %v2881
      %v2959 = vmul.f32 %v2030, %v2881
      %v2960 = vmul.f32 %v2033, %v2881
      %v2961 = vmul.f32 %v2038, %v2881
      %v2962 = vmul.f32 %v2041, %v2881
      %v2963 = vmul.f32 %v2046, %v2881
      %v2964 = vmul.f32 %v2049, %v2881
      %v2965 = vmul.f32 %v2054, %v2881
      %v2966 = vmul.f32 %v2057, %v2881
      %v2967 = vmul.f32 %v2062, %v2881
      %v2968 = vmul.f32 %v2065, %v2881
      %v2969 = vmul.f32 %v2070, %v2881
      %v2970 = vmul.f32 %v2073, %v2881
      %v2971 = vmul.f32 %v2078, %v2881
      %v2972 = vmul.f32 %v2081, %v2881
      %v2973 = vmul.f32 %v2086, %v2881
      %v2974 = vmul.f32 %v2089, %v2881
      %v2975 = vmul.f32 %v2094, %v2881
      %v2976 = vmul.f32 %v2097, %v2881
      %v2977 = vmul.f32 %v2102, %v2881
      %v2978 = vmul.f32 %v2105, %v2881
      %v2979 = vmul.f32 %v2110, %v2881
      %v2980 = vmul.f32 %v2113, %v2881
      %v2981 = vmul.f32 %v2118, %v2881
      %v2982 = vmul.f32 %v2121, %v2881
      %v2983 = vmul.f32 %v2126, %v2881
      %v2984 = vmul.f32 %v2129, %v2881
      %v2985 = vmul.f32 %v2134, %v2881
      %v2986 = vmul.f32 %v2137, %v2881
      %v2987 = vmul.f32 %v2142, %v2881
      %v2988 = vmul.f32 %v2145, %v2881
      %v2989 = vmul.f32 %v2150, %v2881
      %v2990 = vmul.f32 %v2153, %v2881
      %v2991 = vmul.f32 %v2158, %v2881
      %v2992 = vmul.f32 %v2161, %v2881
      %v2993 = vmul.f32 %v2166, %v2881
      %v2994 = vmul.f32 %v2169, %v2881
      %v2995 = vmul.f32 %v2174, %v2881
      %v2996 = vmul.f32 %v2177, %v2881
      %v2997 = vmul.f32 %v2182, %v2881
      %v2998 = vmul.f32 %v2185, %v2881
      %v2999 = vmul.f32 %v2190, %v2881
      %v3000 = vmul.f32 %v2193, %v2881
      %v3001 = vmul.f32 %v2198, %v2881
      %v3002 = vmul.f32 %v2201, %v2881
      %v3003 = vmul.f32 %v2206, %v2881
      %v3004 = vmul.f32 %v2209, %v2881
      %v3005 = vmul.f32 %v2214, %v2881
      %v3006 = vmul.f32 %v2217, %v2881
      %v3007 = vmul.f32 %v2222, %v2881
      %v3008 = vmul.f32 %v2225, %v2881
      %v3009 = vmul.f32 %v2230, %v2881
      %v3010 = vmul.f32 %v2233, %v2881
      %v3011 = vmul.f32 %v2238, %v2881
      %v3012 = vmul.f32 %v2241, %v2881
      %v3013 = vmul.f32 %v2246, %v2881
      %v3014 = vmul.f32 %v2249, %v2881
      %v3015 = vmul.f32 %v2254, %v2881
      %v3016 = vmul.f32 %v2257, %v2881
      %v3017 = vmul.f32 %v2262, %v2881
      %v3018 = vmul.f32 %v2265, %v2881
      %v3019 = vmul.f32 %v2270, %v2881
      %v3020 = vmul.f32 %v2273, %v2881
      %v3021 = vmul.f32 %v2278, %v2881
      %v3022 = vmul.f32 %v2281, %v2881
      %v3023 = vmul.f32 %v2286, %v2881
      %v3024 = vmul.f32 %v2289, %v2881
      %v3025 = vmul.f32 %v2294, %v2881
      %v3026 = vmul.f32 %v2297, %v2881
      %v3027 = vmul.f32 %v2302, %v2881
      %v3028 = vmul.f32 %v2305, %v2881
      %v3029 = vmul.f32 %v2310, %v2881
      %v3030 = vmul.f32 %v2313, %v2881
      %v3031 = vmul.f32 %v2318, %v2881
      %v3032 = vmul.f32 %v2321, %v2881
      %v3033 = vmul.f32 %v2326, %v2881
      %v3034 = vmul.f32 %v2329, %v2881
      %v3035 = vmul.f32 %v2334, %v2881
      %v3036 = vmul.f32 %v2337, %v2881
      %v3037 = vmul.f32 %v2342, %v2881
      %v3038 = vmul.f32 %v2345, %v2881
      %v3039 = vmul.f32 %v2350, %v2881
      %v3040 = vmul.f32 %v2353, %v2881
      %v3041 = vmul.f32 %v2358, %v2881
      %v3042 = vmul.f32 %v2361, %v2881
      %v3043 = vmul.f32 %v2366, %v2881
      %v3044 = vmul.f32 %v2369, %v2881
      %v3045 = vmul.f32 %v2374, %v2881
      %v3046 = vmul.f32 %v2377, %v2881
      %v3047 = vmul.f32 %v2382, %v2881
      %v3048 = vmul.f32 %v2385, %v2881
      %v3049 = vmul.f32 %v2390, %v2881
      %v3050 = vmul.f32 %v2393, %v2881
      %v3051 = vmul.f32 %v2398, %v2881
      %v3052 = vmul.f32 %v2401, %v2881
      %v3053 = vmul.f32 %v2406, %v2881
      %v3054 = vmul.f32 %v2409, %v2881
      %v3055 = vmul.f32 %v2414, %v2881
      %v3056 = vmul.f32 %v2417, %v2881
      %v3057 = vmul.f32 %v2422, %v2881
      %v3058 = vmul.f32 %v2425, %v2881
      %v3059 = vmul.f32 %v2430, %v2881
      %v3060 = vmul.f32 %v2433, %v2881
      %v3061 = vmul.f32 %v2438, %v2881
      %v3062 = vmul.f32 %v2441, %v2881
      %v3063 = vmul.f32 %v2446, %v2881
      %v3064 = vmul.f32 %v2449, %v2881
      %v3065 = vmul.f32 %v2454, %v2881
      %v3066 = vmul.f32 %v2457, %v2881
      %v3067 = vmul.f32 %v2462, %v2881
      %v3068 = vmul.f32 %v2465, %v2881
      %v3069 = vmul.f32 %v2470, %v2881
      %v3070 = vmul.f32 %v2473, %v2881
      %v3071 = vmul.f32 %v2478, %v2881
      %v3072 = vmul.f32 %v2481, %v2881
      %v3073 = vmul.f32 %v2486, %v2881
      %v3074 = vmul.f32 %v2489, %v2881
      %v3075 = vmul.f32 %v2494, %v2881
      %v3076 = vmul.f32 %v2497, %v2881
      %v3077 = vmul.f32 %v2502, %v2881
      %v3078 = vmul.f32 %v2505, %v2881
      %v3079 = vmul.f32 %v2510, %v2881
      %v3080 = vmul.f32 %v2513, %v2881
      %v3081 = vmul.f32 %v2518, %v2881
      %v3082 = vmul.f32 %v2521, %v2881
      %v3083 = vmul.f32 %v2526, %v2881
      %v3084 = vmul.f32 %v2529, %v2881
      %v3085 = vmul.f32 %v2534, %v2881
      %v3086 = vmul.f32 %v2537, %v2881
      %v3087 = vmul.f32 %v2542, %v2881
      %v3088 = vmul.f32 %v2545, %v2881
      %v3089 = vmul.f32 %v2550, %v2881
      %v3090 = vmul.f32 %v2553, %v2881
      %v3091 = vmul.f32 %v2558, %v2881
      %v3092 = vmul.f32 %v2561, %v2881
      %v3093 = vmul.f32 %v2566, %v2881
      %v3094 = vmul.f32 %v2569, %v2881
      %v3095 = vmul.f32 %v2574, %v2881
      %v3096 = vmul.f32 %v2577, %v2881
      %v3097 = vmul.f32 %v2582, %v2881
      %v3098 = vmul.f32 %v2585, %v2881
      %v3099 = vmul.f32 %v2590, %v2881
      %v3100 = vmul.f32 %v2593, %v2881
      %v3101 = vmul.f32 %v2598, %v2881
      %v3102 = vmul.f32 %v2601, %v2881
      %v3103 = vmul.f32 %v2606, %v2881
      %v3104 = vmul.f32 %v2609, %v2881
      %v3105 = vmul.f32 %v2614, %v2881
      %v3106 = vmul.f32 %v2617, %v2881
      %v3107 = vmul.f32 %v2622, %v2881
      %v3108 = vmul.f32 %v2625, %v2881
      %v3109 = vmul.f32 %v2630, %v2881
      %v3110 = vmul.f32 %v2633, %v2881
      %v3111 = vmul.f32 %v2638, %v2881
      %v3112 = vmul.f32 %v2641, %v2881
      %v3113 = vmul.f32 %v2646, %v2881
      %v3114 = vmul.f32 %v2649, %v2881
      %v3115 = vmul.f32 %v2654, %v2881
      %v3116 = vmul.f32 %v2657, %v2881
      %v3117 = vmul.f32 %v2662, %v2881
      %v3118 = vmul.f32 %v2665, %v2881
      %v3119 = vmul.f32 %v2670, %v2881
      %v3120 = vmul.f32 %v2673, %v2881
      %v3121 = vmul.f32 %v2678, %v2881
      %v3122 = vmul.f32 %v2681, %v2881
      %v3123 = vmul.f32 %v2686, %v2881
      %v3124 = vmul.f32 %v2689, %v2881
      %v3125 = vmul.f32 %v2694, %v2881
      %v3126 = vmul.f32 %v2697, %v2881
      %v3127 = vmul.f32 %v2702, %v2881
      %v3128 = vmul.f32 %v2705, %v2881
      %v3129 = vmul.f32 %v2710, %v2881
      %v3130 = vmul.f32 %v2713, %v2881
      %v3131 = vmul.f32 %v2718, %v2881
      %v3132 = vmul.f32 %v2721, %v2881
      %v3133 = vmul.f32 %v2726, %v2881
      %v3134 = vmul.f32 %v2729, %v2881
      %v3135 = vmul.f32 %v2734, %v2881
      %v3136 = vmul.f32 %v2737, %v2881
      %v3137 = vmul.f32 %v2742, %v2881
      %v3138 = vmul.f32 %v2745, %v2881
      %v3139 = vmul.f32 %v2750, %v2881
      %v3140 = vmul.f32 %v2753, %v2881
      %v3141 = vmul.f32 %v2758, %v2881
      %v3142 = vmul.f32 %v2761, %v2881
      %v3143 = vmul.f32 %v2766, %v2881
      %v3144 = vmul.f32 %v2769, %v2881
      %v3145 = vmul.f32 %v2774, %v2881
      %v3146 = vmul.f32 %v2777, %v2881
      %v3147 = vmul.f32 %v2782, %v2881
      %v3148 = vmul.f32 %v2785, %v2881
      %v3149 = vmul.f32 %v2790, %v2881
      %v3150 = vmul.f32 %v2793, %v2881
      %v3151 = vmul.f32 %v2798, %v2881
      %v3152 = vmul.f32 %v2801, %v2881
      %v3153 = vmul.f32 %v2806, %v2881
      %v3154 = vmul.f32 %v2809, %v2881
      %v3155 = vmul.f32 %v2814, %v2881
      %v3156 = vmul.f32 %v2817, %v2881
      %v3157 = vmul.f32 %v2822, %v2881
      %v3158 = vmul.f32 %v2825, %v2881
      %v3159 = vmul.f32 %v2830, %v2881
      %v3160 = vmul.f32 %v2833, %v2881
      %v3161 = vmul.f32 %v2838, %v2881
      %v3162 = vmul.f32 %v2841, %v2881
      %v3163 = vmul.f32 %v2846, %v2881
      %v3164 = vmul.f32 %v2849, %v2881
      %v3165 = vmul.f32 %v2854, %v2881
      %v3166 = vmul.f32 %v2857, %v2881
      %v3167 = vmul.f32 %v2862, %v2881
      %v3168 = vmul.f32 %v2865, %v2881
      %v3169 = vmul.f32 %v2870, %v2881
      %v3170 = vmul.f32 %v2873, %v2881
      %v3171 = vld [vmem:[%s3] sm:$0x1]
      %v3173 = vlaneseq
      %v3174 = vshrl.u32 %v3173, 7
      %v3175 = vsub.s32 0, %v3174
      %v3176 = vrot.slane %v3171, %v3175
      %v3178 = vadd.f32 %v2883, %v3176
      %v3179 = vadd.f32 %v2884, %v3176
      %v3180 = vadd.f32 %v2885, %v3176
      %v3181 = vadd.f32 %v2886, %v3176
      %v3182 = vadd.f32 %v2887, %v3176
      %v3183 = vadd.f32 %v2888, %v3176
      %v3184 = vadd.f32 %v2889, %v3176
      %v3185 = vadd.f32 %v2890, %v3176
      %v3186 = vadd.f32 %v2891, %v3176
      %v3187 = vadd.f32 %v2892, %v3176
      %v3188 = vadd.f32 %v2893, %v3176
      %v3189 = vadd.f32 %v2894, %v3176
      %v3190 = vadd.f32 %v2895, %v3176
      %v3191 = vadd.f32 %v2896, %v3176
      %v3192 = vadd.f32 %v2897, %v3176
      %v3193 = vadd.f32 %v2898, %v3176
      %v3194 = vadd.f32 %v2899, %v3176
      %v3195 = vadd.f32 %v2900, %v3176
      %v3196 = vadd.f32 %v2901, %v3176
      %v3197 = vadd.f32 %v2902, %v3176
      %v3198 = vadd.f32 %v2903, %v3176
      %v3199 = vadd.f32 %v2904, %v3176
      %v3200 = vadd.f32 %v2905, %v3176
      %v3201 = vadd.f32 %v2906, %v3176
      %v3202 = vadd.f32 %v2907, %v3176
      %v3203 = vadd.f32 %v2908, %v3176
      %v3204 = vadd.f32 %v2909, %v3176
      %v3205 = vadd.f32 %v2910, %v3176
      %v3206 = vadd.f32 %v2911, %v3176
      %v3207 = vadd.f32 %v2912, %v3176
      %v3208 = vadd.f32 %v2913, %v3176
      %v3209 = vadd.f32 %v2914, %v3176
      %v3210 = vadd.f32 %v2915, %v3176
      %v3211 = vadd.f32 %v2916, %v3176
      %v3212 = vadd.f32 %v2917, %v3176
      %v3213 = vadd.f32 %v2918, %v3176
      %v3214 = vadd.f32 %v2919, %v3176
      %v3215 = vadd.f32 %v2920, %v3176
      %v3216 = vadd.f32 %v2921, %v3176
      %v3217 = vadd.f32 %v2922, %v3176
      %v3218 = vadd.f32 %v2923, %v3176
      %v3219 = vadd.f32 %v2924, %v3176
      %v3220 = vadd.f32 %v2925, %v3176
      %v3221 = vadd.f32 %v2926, %v3176
      %v3222 = vadd.f32 %v2927, %v3176
      %v3223 = vadd.f32 %v2928, %v3176
      %v3224 = vadd.f32 %v2929, %v3176
      %v3225 = vadd.f32 %v2930, %v3176
      %v3226 = vadd.f32 %v2931, %v3176
      %v3227 = vadd.f32 %v2932, %v3176
      %v3228 = vadd.f32 %v2933, %v3176
      %v3229 = vadd.f32 %v2934, %v3176
      %v3230 = vadd.f32 %v2935, %v3176
      %v3231 = vadd.f32 %v2936, %v3176
      %v3232 = vadd.f32 %v2937, %v3176
      %v3233 = vadd.f32 %v2938, %v3176
      %v3234 = vadd.f32 %v2939, %v3176
      %v3235 = vadd.f32 %v2940, %v3176
      %v3236 = vadd.f32 %v2941, %v3176
      %v3237 = vadd.f32 %v2942, %v3176
      %v3238 = vadd.f32 %v2943, %v3176
      %v3239 = vadd.f32 %v2944, %v3176
      %v3240 = vadd.f32 %v2945, %v3176
      %v3241 = vadd.f32 %v2946, %v3176
      %v3242 = vadd.f32 %v2947, %v3176
      %v3243 = vadd.f32 %v2948, %v3176
      %v3244 = vadd.f32 %v2949, %v3176
      %v3245 = vadd.f32 %v2950, %v3176
      %v3246 = vadd.f32 %v2951, %v3176
      %v3247 = vadd.f32 %v2952, %v3176
      %v3248 = vadd.f32 %v2953, %v3176
      %v3249 = vadd.f32 %v2954, %v3176
      %v3250 = vadd.f32 %v2955, %v3176
      %v3251 = vadd.f32 %v2956, %v3176
      %v3252 = vadd.f32 %v2957, %v3176
      %v3253 = vadd.f32 %v2958, %v3176
      %v3254 = vadd.f32 %v2959, %v3176
      %v3255 = vadd.f32 %v2960, %v3176
      %v3256 = vadd.f32 %v2961, %v3176
      %v3257 = vadd.f32 %v2962, %v3176
      %v3258 = vadd.f32 %v2963, %v3176
      %v3259 = vadd.f32 %v2964, %v3176
      %v3260 = vadd.f32 %v2965, %v3176
      %v3261 = vadd.f32 %v2966, %v3176
      %v3262 = vadd.f32 %v2967, %v3176
      %v3263 = vadd.f32 %v2968, %v3176
      %v3264 = vadd.f32 %v2969, %v3176
      %v3265 = vadd.f32 %v2970, %v3176
      %v3266 = vadd.f32 %v2971, %v3176
      %v3267 = vadd.f32 %v2972, %v3176
      %v3268 = vadd.f32 %v2973, %v3176
      %v3269 = vadd.f32 %v2974, %v3176
      %v3270 = vadd.f32 %v2975, %v3176
      %v3271 = vadd.f32 %v2976, %v3176
      %v3272 = vadd.f32 %v2977, %v3176
      %v3273 = vadd.f32 %v2978, %v3176
      %v3274 = vadd.f32 %v2979, %v3176
      %v3275 = vadd.f32 %v2980, %v3176
      %v3276 = vadd.f32 %v2981, %v3176
      %v3277 = vadd.f32 %v2982, %v3176
      %v3278 = vadd.f32 %v2983, %v3176
      %v3279 = vadd.f32 %v2984, %v3176
      %v3280 = vadd.f32 %v2985, %v3176
      %v3281 = vadd.f32 %v2986, %v3176
      %v3282 = vadd.f32 %v2987, %v3176
      %v3283 = vadd.f32 %v2988, %v3176
      %v3284 = vadd.f32 %v2989, %v3176
      %v3285 = vadd.f32 %v2990, %v3176
      %v3286 = vadd.f32 %v2991, %v3176
      %v3287 = vadd.f32 %v2992, %v3176
      %v3288 = vadd.f32 %v2993, %v3176
      %v3289 = vadd.f32 %v2994, %v3176
      %v3290 = vadd.f32 %v2995, %v3176
      %v3291 = vadd.f32 %v2996, %v3176
      %v3292 = vadd.f32 %v2997, %v3176
      %v3293 = vadd.f32 %v2998, %v3176
      %v3294 = vadd.f32 %v2999, %v3176
      %v3295 = vadd.f32 %v3000, %v3176
      %v3296 = vadd.f32 %v3001, %v3176
      %v3297 = vadd.f32 %v3002, %v3176
      %v3298 = vadd.f32 %v3003, %v3176
      %v3299 = vadd.f32 %v3004, %v3176
      %v3300 = vadd.f32 %v3005, %v3176
      %v3301 = vadd.f32 %v3006, %v3176
      %v3302 = vadd.f32 %v3007, %v3176
      %v3303 = vadd.f32 %v3008, %v3176
      %v3304 = vadd.f32 %v3009, %v3176
      %v3305 = vadd.f32 %v3010, %v3176
      %v3306 = vadd.f32 %v3011, %v3176
      %v3307 = vadd.f32 %v3012, %v3176
      %v3308 = vadd.f32 %v3013, %v3176
      %v3309 = vadd.f32 %v3014, %v3176
      %v3310 = vadd.f32 %v3015, %v3176
      %v3311 = vadd.f32 %v3016, %v3176
      %v3312 = vadd.f32 %v3017, %v3176
      %v3313 = vadd.f32 %v3018, %v3176
      %v3314 = vadd.f32 %v3019, %v3176
      %v3315 = vadd.f32 %v3020, %v3176
      %v3316 = vadd.f32 %v3021, %v3176
      %v3317 = vadd.f32 %v3022, %v3176
      %v3318 = vadd.f32 %v3023, %v3176
      %v3319 = vadd.f32 %v3024, %v3176
      %v3320 = vadd.f32 %v3025, %v3176
      %v3321 = vadd.f32 %v3026, %v3176
      %v3322 = vadd.f32 %v3027, %v3176
      %v3323 = vadd.f32 %v3028, %v3176
      %v3324 = vadd.f32 %v3029, %v3176
      %v3325 = vadd.f32 %v3030, %v3176
      %v3326 = vadd.f32 %v3031, %v3176
      %v3327 = vadd.f32 %v3032, %v3176
      %v3328 = vadd.f32 %v3033, %v3176
      %v3329 = vadd.f32 %v3034, %v3176
      %v3330 = vadd.f32 %v3035, %v3176
      %v3331 = vadd.f32 %v3036, %v3176
      %v3332 = vadd.f32 %v3037, %v3176
      %v3333 = vadd.f32 %v3038, %v3176
      %v3334 = vadd.f32 %v3039, %v3176
      %v3335 = vadd.f32 %v3040, %v3176
      %v3336 = vadd.f32 %v3041, %v3176
      %v3337 = vadd.f32 %v3042, %v3176
      %v3338 = vadd.f32 %v3043, %v3176
      %v3339 = vadd.f32 %v3044, %v3176
      %v3340 = vadd.f32 %v3045, %v3176
      %v3341 = vadd.f32 %v3046, %v3176
      %v3342 = vadd.f32 %v3047, %v3176
      %v3343 = vadd.f32 %v3048, %v3176
      %v3344 = vadd.f32 %v3049, %v3176
      %v3345 = vadd.f32 %v3050, %v3176
      %v3346 = vadd.f32 %v3051, %v3176
      %v3347 = vadd.f32 %v3052, %v3176
      %v3348 = vadd.f32 %v3053, %v3176
      %v3349 = vadd.f32 %v3054, %v3176
      %v3350 = vadd.f32 %v3055, %v3176
      %v3351 = vadd.f32 %v3056, %v3176
      %v3352 = vadd.f32 %v3057, %v3176
      %v3353 = vadd.f32 %v3058, %v3176
      %v3354 = vadd.f32 %v3059, %v3176
      %v3355 = vadd.f32 %v3060, %v3176
      %v3356 = vadd.f32 %v3061, %v3176
      %v3357 = vadd.f32 %v3062, %v3176
      %v3358 = vadd.f32 %v3063, %v3176
      %v3359 = vadd.f32 %v3064, %v3176
      %v3360 = vadd.f32 %v3065, %v3176
      %v3361 = vadd.f32 %v3066, %v3176
      %v3362 = vadd.f32 %v3067, %v3176
      %v3363 = vadd.f32 %v3068, %v3176
      %v3364 = vadd.f32 %v3069, %v3176
      %v3365 = vadd.f32 %v3070, %v3176
      %v3366 = vadd.f32 %v3071, %v3176
      %v3367 = vadd.f32 %v3072, %v3176
      %v3368 = vadd.f32 %v3073, %v3176
      %v3369 = vadd.f32 %v3074, %v3176
      %v3370 = vadd.f32 %v3075, %v3176
      %v3371 = vadd.f32 %v3076, %v3176
      %v3372 = vadd.f32 %v3077, %v3176
      %v3373 = vadd.f32 %v3078, %v3176
      %v3374 = vadd.f32 %v3079, %v3176
      %v3375 = vadd.f32 %v3080, %v3176
      %v3376 = vadd.f32 %v3081, %v3176
      %v3377 = vadd.f32 %v3082, %v3176
      %v3378 = vadd.f32 %v3083, %v3176
      %v3379 = vadd.f32 %v3084, %v3176
      %v3380 = vadd.f32 %v3085, %v3176
      %v3381 = vadd.f32 %v3086, %v3176
      %v3382 = vadd.f32 %v3087, %v3176
      %v3383 = vadd.f32 %v3088, %v3176
      %v3384 = vadd.f32 %v3089, %v3176
      %v3385 = vadd.f32 %v3090, %v3176
      %v3386 = vadd.f32 %v3091, %v3176
      %v3387 = vadd.f32 %v3092, %v3176
      %v3388 = vadd.f32 %v3093, %v3176
      %v3389 = vadd.f32 %v3094, %v3176
      %v3390 = vadd.f32 %v3095, %v3176
      %v3391 = vadd.f32 %v3096, %v3176
      %v3392 = vadd.f32 %v3097, %v3176
      %v3393 = vadd.f32 %v3098, %v3176
      %v3394 = vadd.f32 %v3099, %v3176
      %v3395 = vadd.f32 %v3100, %v3176
      %v3396 = vadd.f32 %v3101, %v3176
      %v3397 = vadd.f32 %v3102, %v3176
      %v3398 = vadd.f32 %v3103, %v3176
      %v3399 = vadd.f32 %v3104, %v3176
      %v3400 = vadd.f32 %v3105, %v3176
      %v3401 = vadd.f32 %v3106, %v3176
      %v3402 = vadd.f32 %v3107, %v3176
      %v3403 = vadd.f32 %v3108, %v3176
      %v3404 = vadd.f32 %v3109, %v3176
      %v3405 = vadd.f32 %v3110, %v3176
      %v3406 = vadd.f32 %v3111, %v3176
      %v3407 = vadd.f32 %v3112, %v3176
      %v3408 = vadd.f32 %v3113, %v3176
      %v3409 = vadd.f32 %v3114, %v3176
      %v3410 = vadd.f32 %v3115, %v3176
      %v3411 = vadd.f32 %v3116, %v3176
      %v3412 = vadd.f32 %v3117, %v3176
      %v3413 = vadd.f32 %v3118, %v3176
      %v3414 = vadd.f32 %v3119, %v3176
      %v3415 = vadd.f32 %v3120, %v3176
      %v3416 = vadd.f32 %v3121, %v3176
      %v3417 = vadd.f32 %v3122, %v3176
      %v3418 = vadd.f32 %v3123, %v3176
      %v3419 = vadd.f32 %v3124, %v3176
      %v3420 = vadd.f32 %v3125, %v3176
      %v3421 = vadd.f32 %v3126, %v3176
      %v3422 = vadd.f32 %v3127, %v3176
      %v3423 = vadd.f32 %v3128, %v3176
      %v3424 = vadd.f32 %v3129, %v3176
      %v3425 = vadd.f32 %v3130, %v3176
      %v3426 = vadd.f32 %v3131, %v3176
      %v3427 = vadd.f32 %v3132, %v3176
      %v3428 = vadd.f32 %v3133, %v3176
      %v3429 = vadd.f32 %v3134, %v3176
      %v3430 = vadd.f32 %v3135, %v3176
      %v3431 = vadd.f32 %v3136, %v3176
      %v3432 = vadd.f32 %v3137, %v3176
      %v3433 = vadd.f32 %v3138, %v3176
      %v3434 = vadd.f32 %v3139, %v3176
      %v3435 = vadd.f32 %v3140, %v3176
      %v3436 = vadd.f32 %v3141, %v3176
      %v3437 = vadd.f32 %v3142, %v3176
      %v3438 = vadd.f32 %v3143, %v3176
      %v3439 = vadd.f32 %v3144, %v3176
      %v3440 = vadd.f32 %v3145, %v3176
      %v3441 = vadd.f32 %v3146, %v3176
      %v3442 = vadd.f32 %v3147, %v3176
      %v3443 = vadd.f32 %v3148, %v3176
      %v3444 = vadd.f32 %v3149, %v3176
      %v3445 = vadd.f32 %v3150, %v3176
      %v3446 = vadd.f32 %v3151, %v3176
      %v3447 = vadd.f32 %v3152, %v3176
      %v3448 = vadd.f32 %v3153, %v3176
      %v3449 = vadd.f32 %v3154, %v3176
      %v3450 = vadd.f32 %v3155, %v3176
      %v3451 = vadd.f32 %v3156, %v3176
      %v3452 = vadd.f32 %v3157, %v3176
      %v3453 = vadd.f32 %v3158, %v3176
      %v3454 = vadd.f32 %v3159, %v3176
      %v3455 = vadd.f32 %v3160, %v3176
      %v3456 = vadd.f32 %v3161, %v3176
      %v3457 = vadd.f32 %v3162, %v3176
      %v3458 = vadd.f32 %v3163, %v3176
      %v3459 = vadd.f32 %v3164, %v3176
      %v3460 = vadd.f32 %v3165, %v3176
      %v3461 = vadd.f32 %v3166, %v3176
      %v3462 = vadd.f32 %v3167, %v3176
      %v3463 = vadd.f32 %v3168, %v3176
      %v3464 = vadd.f32 %v3169, %v3176
      %v3465 = vadd.f32 %v3170, %v3176
      %vm3466 = vcmp.gt.f32.partialorder %v3178, 0.0
      %vm3467 = vcmp.gt.f32.partialorder %v3179, 0.0
      %vm3468 = vcmp.gt.f32.partialorder %v3180, 0.0
      %vm3469 = vcmp.gt.f32.partialorder %v3181, 0.0
      %vm3470 = vcmp.gt.f32.partialorder %v3182, 0.0
      %vm3471 = vcmp.gt.f32.partialorder %v3183, 0.0
      %vm3472 = vcmp.gt.f32.partialorder %v3184, 0.0
      %vm3473 = vcmp.gt.f32.partialorder %v3185, 0.0
      %vm3474 = vcmp.gt.f32.partialorder %v3186, 0.0
      %vm3475 = vcmp.gt.f32.partialorder %v3187, 0.0
      %vm3476 = vcmp.gt.f32.partialorder %v3188, 0.0
      %vm3477 = vcmp.gt.f32.partialorder %v3189, 0.0
      %vm3478 = vcmp.gt.f32.partialorder %v3190, 0.0
      %vm3479 = vcmp.gt.f32.partialorder %v3191, 0.0
      %vm3480 = vcmp.gt.f32.partialorder %v3192, 0.0
      %vm3481 = vcmp.gt.f32.partialorder %v3193, 0.0
      %vm3482 = vcmp.gt.f32.partialorder %v3194, 0.0
      %vm3483 = vcmp.gt.f32.partialorder %v3195, 0.0
      %vm3484 = vcmp.gt.f32.partialorder %v3196, 0.0
      %vm3485 = vcmp.gt.f32.partialorder %v3197, 0.0
      %vm3486 = vcmp.gt.f32.partialorder %v3198, 0.0
      %vm3487 = vcmp.gt.f32.partialorder %v3199, 0.0
      %vm3488 = vcmp.gt.f32.partialorder %v3200, 0.0
      %vm3489 = vcmp.gt.f32.partialorder %v3201, 0.0
      %vm3490 = vcmp.gt.f32.partialorder %v3202, 0.0
      %vm3491 = vcmp.gt.f32.partialorder %v3203, 0.0
      %vm3492 = vcmp.gt.f32.partialorder %v3204, 0.0
      %vm3493 = vcmp.gt.f32.partialorder %v3205, 0.0
      %vm3494 = vcmp.gt.f32.partialorder %v3206, 0.0
      %vm3495 = vcmp.gt.f32.partialorder %v3207, 0.0
      %vm3496 = vcmp.gt.f32.partialorder %v3208, 0.0
      %vm3497 = vcmp.gt.f32.partialorder %v3209, 0.0
      %vm3498 = vcmp.gt.f32.partialorder %v3210, 0.0
      %vm3499 = vcmp.gt.f32.partialorder %v3211, 0.0
      %vm3500 = vcmp.gt.f32.partialorder %v3212, 0.0
      %vm3501 = vcmp.gt.f32.partialorder %v3213, 0.0
      %vm3502 = vcmp.gt.f32.partialorder %v3214, 0.0
      %vm3503 = vcmp.gt.f32.partialorder %v3215, 0.0
      %vm3504 = vcmp.gt.f32.partialorder %v3216, 0.0
      %vm3505 = vcmp.gt.f32.partialorder %v3217, 0.0
      %vm3506 = vcmp.gt.f32.partialorder %v3218, 0.0
      %vm3507 = vcmp.gt.f32.partialorder %v3219, 0.0
      %vm3508 = vcmp.gt.f32.partialorder %v3220, 0.0
      %vm3509 = vcmp.gt.f32.partialorder %v3221, 0.0
      %vm3510 = vcmp.gt.f32.partialorder %v3222, 0.0
      %vm3511 = vcmp.gt.f32.partialorder %v3223, 0.0
      %vm3512 = vcmp.gt.f32.partialorder %v3224, 0.0
      %vm3513 = vcmp.gt.f32.partialorder %v3225, 0.0
      %vm3514 = vcmp.gt.f32.partialorder %v3226, 0.0
      %vm3515 = vcmp.gt.f32.partialorder %v3227, 0.0
      %vm3516 = vcmp.gt.f32.partialorder %v3228, 0.0
      %vm3517 = vcmp.gt.f32.partialorder %v3229, 0.0
      %vm3518 = vcmp.gt.f32.partialorder %v3230, 0.0
      %vm3519 = vcmp.gt.f32.partialorder %v3231, 0.0
      %vm3520 = vcmp.gt.f32.partialorder %v3232, 0.0
      %vm3521 = vcmp.gt.f32.partialorder %v3233, 0.0
      %vm3522 = vcmp.gt.f32.partialorder %v3234, 0.0
      %vm3523 = vcmp.gt.f32.partialorder %v3235, 0.0
      %vm3524 = vcmp.gt.f32.partialorder %v3236, 0.0
      %vm3525 = vcmp.gt.f32.partialorder %v3237, 0.0
      %vm3526 = vcmp.gt.f32.partialorder %v3238, 0.0
      %vm3527 = vcmp.gt.f32.partialorder %v3239, 0.0
      %vm3528 = vcmp.gt.f32.partialorder %v3240, 0.0
      %vm3529 = vcmp.gt.f32.partialorder %v3241, 0.0
      %vm3530 = vcmp.gt.f32.partialorder %v3242, 0.0
      %vm3531 = vcmp.gt.f32.partialorder %v3243, 0.0
      %vm3532 = vcmp.gt.f32.partialorder %v3244, 0.0
      %vm3533 = vcmp.gt.f32.partialorder %v3245, 0.0
      %vm3534 = vcmp.gt.f32.partialorder %v3246, 0.0
      %vm3535 = vcmp.gt.f32.partialorder %v3247, 0.0
      %vm3536 = vcmp.gt.f32.partialorder %v3248, 0.0
      %vm3537 = vcmp.gt.f32.partialorder %v3249, 0.0
      %vm3538 = vcmp.gt.f32.partialorder %v3250, 0.0
      %vm3539 = vcmp.gt.f32.partialorder %v3251, 0.0
      %vm3540 = vcmp.gt.f32.partialorder %v3252, 0.0
      %vm3541 = vcmp.gt.f32.partialorder %v3253, 0.0
      %vm3542 = vcmp.gt.f32.partialorder %v3254, 0.0
      %vm3543 = vcmp.gt.f32.partialorder %v3255, 0.0
      %vm3544 = vcmp.gt.f32.partialorder %v3256, 0.0
      %vm3545 = vcmp.gt.f32.partialorder %v3257, 0.0
      %vm3546 = vcmp.gt.f32.partialorder %v3258, 0.0
      %vm3547 = vcmp.gt.f32.partialorder %v3259, 0.0
      %vm3548 = vcmp.gt.f32.partialorder %v3260, 0.0
      %vm3549 = vcmp.gt.f32.partialorder %v3261, 0.0
      %vm3550 = vcmp.gt.f32.partialorder %v3262, 0.0
      %vm3551 = vcmp.gt.f32.partialorder %v3263, 0.0
      %vm3552 = vcmp.gt.f32.partialorder %v3264, 0.0
      %vm3553 = vcmp.gt.f32.partialorder %v3265, 0.0
      %vm3554 = vcmp.gt.f32.partialorder %v3266, 0.0
      %vm3555 = vcmp.gt.f32.partialorder %v3267, 0.0
      %vm3556 = vcmp.gt.f32.partialorder %v3268, 0.0
      %vm3557 = vcmp.gt.f32.partialorder %v3269, 0.0
      %vm3558 = vcmp.gt.f32.partialorder %v3270, 0.0
      %vm3559 = vcmp.gt.f32.partialorder %v3271, 0.0
      %vm3560 = vcmp.gt.f32.partialorder %v3272, 0.0
      %vm3561 = vcmp.gt.f32.partialorder %v3273, 0.0
      %vm3562 = vcmp.gt.f32.partialorder %v3274, 0.0
      %vm3563 = vcmp.gt.f32.partialorder %v3275, 0.0
      %vm3564 = vcmp.gt.f32.partialorder %v3276, 0.0
      %vm3565 = vcmp.gt.f32.partialorder %v3277, 0.0
      %vm3566 = vcmp.gt.f32.partialorder %v3278, 0.0
      %vm3567 = vcmp.gt.f32.partialorder %v3279, 0.0
      %vm3568 = vcmp.gt.f32.partialorder %v3280, 0.0
      %vm3569 = vcmp.gt.f32.partialorder %v3281, 0.0
      %vm3570 = vcmp.gt.f32.partialorder %v3282, 0.0
      %vm3571 = vcmp.gt.f32.partialorder %v3283, 0.0
      %vm3572 = vcmp.gt.f32.partialorder %v3284, 0.0
      %vm3573 = vcmp.gt.f32.partialorder %v3285, 0.0
      %vm3574 = vcmp.gt.f32.partialorder %v3286, 0.0
      %vm3575 = vcmp.gt.f32.partialorder %v3287, 0.0
      %vm3576 = vcmp.gt.f32.partialorder %v3288, 0.0
      %vm3577 = vcmp.gt.f32.partialorder %v3289, 0.0
      %vm3578 = vcmp.gt.f32.partialorder %v3290, 0.0
      %vm3579 = vcmp.gt.f32.partialorder %v3291, 0.0
      %vm3580 = vcmp.gt.f32.partialorder %v3292, 0.0
      %vm3581 = vcmp.gt.f32.partialorder %v3293, 0.0
      %vm3582 = vcmp.gt.f32.partialorder %v3294, 0.0
      %vm3583 = vcmp.gt.f32.partialorder %v3295, 0.0
      %vm3584 = vcmp.gt.f32.partialorder %v3296, 0.0
      %vm3585 = vcmp.gt.f32.partialorder %v3297, 0.0
      %vm3586 = vcmp.gt.f32.partialorder %v3298, 0.0
      %vm3587 = vcmp.gt.f32.partialorder %v3299, 0.0
      %vm3588 = vcmp.gt.f32.partialorder %v3300, 0.0
      %vm3589 = vcmp.gt.f32.partialorder %v3301, 0.0
      %vm3590 = vcmp.gt.f32.partialorder %v3302, 0.0
      %vm3591 = vcmp.gt.f32.partialorder %v3303, 0.0
      %vm3592 = vcmp.gt.f32.partialorder %v3304, 0.0
      %vm3593 = vcmp.gt.f32.partialorder %v3305, 0.0
      %vm3594 = vcmp.gt.f32.partialorder %v3306, 0.0
      %vm3595 = vcmp.gt.f32.partialorder %v3307, 0.0
      %vm3596 = vcmp.gt.f32.partialorder %v3308, 0.0
      %vm3597 = vcmp.gt.f32.partialorder %v3309, 0.0
      %vm3598 = vcmp.gt.f32.partialorder %v3310, 0.0
      %vm3599 = vcmp.gt.f32.partialorder %v3311, 0.0
      %vm3600 = vcmp.gt.f32.partialorder %v3312, 0.0
      %vm3601 = vcmp.gt.f32.partialorder %v3313, 0.0
      %vm3602 = vcmp.gt.f32.partialorder %v3314, 0.0
      %vm3603 = vcmp.gt.f32.partialorder %v3315, 0.0
      %vm3604 = vcmp.gt.f32.partialorder %v3316, 0.0
      %vm3605 = vcmp.gt.f32.partialorder %v3317, 0.0
      %vm3606 = vcmp.gt.f32.partialorder %v3318, 0.0
      %vm3607 = vcmp.gt.f32.partialorder %v3319, 0.0
      %vm3608 = vcmp.gt.f32.partialorder %v3320, 0.0
      %vm3609 = vcmp.gt.f32.partialorder %v3321, 0.0
      %vm3610 = vcmp.gt.f32.partialorder %v3322, 0.0
      %vm3611 = vcmp.gt.f32.partialorder %v3323, 0.0
      %vm3612 = vcmp.gt.f32.partialorder %v3324, 0.0
      %vm3613 = vcmp.gt.f32.partialorder %v3325, 0.0
      %vm3614 = vcmp.gt.f32.partialorder %v3326, 0.0
      %vm3615 = vcmp.gt.f32.partialorder %v3327, 0.0
      %vm3616 = vcmp.gt.f32.partialorder %v3328, 0.0
      %vm3617 = vcmp.gt.f32.partialorder %v3329, 0.0
      %vm3618 = vcmp.gt.f32.partialorder %v3330, 0.0
      %vm3619 = vcmp.gt.f32.partialorder %v3331, 0.0
      %vm3620 = vcmp.gt.f32.partialorder %v3332, 0.0
      %vm3621 = vcmp.gt.f32.partialorder %v3333, 0.0
      %vm3622 = vcmp.gt.f32.partialorder %v3334, 0.0
      %vm3623 = vcmp.gt.f32.partialorder %v3335, 0.0
      %vm3624 = vcmp.gt.f32.partialorder %v3336, 0.0
      %vm3625 = vcmp.gt.f32.partialorder %v3337, 0.0
      %vm3626 = vcmp.gt.f32.partialorder %v3338, 0.0
      %vm3627 = vcmp.gt.f32.partialorder %v3339, 0.0
      %vm3628 = vcmp.gt.f32.partialorder %v3340, 0.0
      %vm3629 = vcmp.gt.f32.partialorder %v3341, 0.0
      %vm3630 = vcmp.gt.f32.partialorder %v3342, 0.0
      %vm3631 = vcmp.gt.f32.partialorder %v3343, 0.0
      %vm3632 = vcmp.gt.f32.partialorder %v3344, 0.0
      %vm3633 = vcmp.gt.f32.partialorder %v3345, 0.0
      %vm3634 = vcmp.gt.f32.partialorder %v3346, 0.0
      %vm3635 = vcmp.gt.f32.partialorder %v3347, 0.0
      %vm3636 = vcmp.gt.f32.partialorder %v3348, 0.0
      %vm3637 = vcmp.gt.f32.partialorder %v3349, 0.0
      %vm3638 = vcmp.gt.f32.partialorder %v3350, 0.0
      %vm3639 = vcmp.gt.f32.partialorder %v3351, 0.0
      %vm3640 = vcmp.gt.f32.partialorder %v3352, 0.0
      %vm3641 = vcmp.gt.f32.partialorder %v3353, 0.0
      %vm3642 = vcmp.gt.f32.partialorder %v3354, 0.0
      %vm3643 = vcmp.gt.f32.partialorder %v3355, 0.0
      %vm3644 = vcmp.gt.f32.partialorder %v3356, 0.0
      %vm3645 = vcmp.gt.f32.partialorder %v3357, 0.0
      %vm3646 = vcmp.gt.f32.partialorder %v3358, 0.0
      %vm3647 = vcmp.gt.f32.partialorder %v3359, 0.0
      %vm3648 = vcmp.gt.f32.partialorder %v3360, 0.0
      %vm3649 = vcmp.gt.f32.partialorder %v3361, 0.0
      %vm3650 = vcmp.gt.f32.partialorder %v3362, 0.0
      %vm3651 = vcmp.gt.f32.partialorder %v3363, 0.0
      %vm3652 = vcmp.gt.f32.partialorder %v3364, 0.0
      %vm3653 = vcmp.gt.f32.partialorder %v3365, 0.0
      %vm3654 = vcmp.gt.f32.partialorder %v3366, 0.0
      %vm3655 = vcmp.gt.f32.partialorder %v3367, 0.0
      %vm3656 = vcmp.gt.f32.partialorder %v3368, 0.0
      %vm3657 = vcmp.gt.f32.partialorder %v3369, 0.0
      %vm3658 = vcmp.gt.f32.partialorder %v3370, 0.0
      %vm3659 = vcmp.gt.f32.partialorder %v3371, 0.0
      %vm3660 = vcmp.gt.f32.partialorder %v3372, 0.0
      %vm3661 = vcmp.gt.f32.partialorder %v3373, 0.0
      %vm3662 = vcmp.gt.f32.partialorder %v3374, 0.0
      %vm3663 = vcmp.gt.f32.partialorder %v3375, 0.0
      %vm3664 = vcmp.gt.f32.partialorder %v3376, 0.0
      %vm3665 = vcmp.gt.f32.partialorder %v3377, 0.0
      %vm3666 = vcmp.gt.f32.partialorder %v3378, 0.0
      %vm3667 = vcmp.gt.f32.partialorder %v3379, 0.0
      %vm3668 = vcmp.gt.f32.partialorder %v3380, 0.0
      %vm3669 = vcmp.gt.f32.partialorder %v3381, 0.0
      %vm3670 = vcmp.gt.f32.partialorder %v3382, 0.0
      %vm3671 = vcmp.gt.f32.partialorder %v3383, 0.0
      %vm3672 = vcmp.gt.f32.partialorder %v3384, 0.0
      %vm3673 = vcmp.gt.f32.partialorder %v3385, 0.0
      %vm3674 = vcmp.gt.f32.partialorder %v3386, 0.0
      %vm3675 = vcmp.gt.f32.partialorder %v3387, 0.0
      %vm3676 = vcmp.gt.f32.partialorder %v3388, 0.0
      %vm3677 = vcmp.gt.f32.partialorder %v3389, 0.0
      %vm3678 = vcmp.gt.f32.partialorder %v3390, 0.0
      %vm3679 = vcmp.gt.f32.partialorder %v3391, 0.0
      %vm3680 = vcmp.gt.f32.partialorder %v3392, 0.0
      %vm3681 = vcmp.gt.f32.partialorder %v3393, 0.0
      %vm3682 = vcmp.gt.f32.partialorder %v3394, 0.0
      %vm3683 = vcmp.gt.f32.partialorder %v3395, 0.0
      %vm3684 = vcmp.gt.f32.partialorder %v3396, 0.0
      %vm3685 = vcmp.gt.f32.partialorder %v3397, 0.0
      %vm3686 = vcmp.gt.f32.partialorder %v3398, 0.0
      %vm3687 = vcmp.gt.f32.partialorder %v3399, 0.0
      %vm3688 = vcmp.gt.f32.partialorder %v3400, 0.0
      %vm3689 = vcmp.gt.f32.partialorder %v3401, 0.0
      %vm3690 = vcmp.gt.f32.partialorder %v3402, 0.0
      %vm3691 = vcmp.gt.f32.partialorder %v3403, 0.0
      %vm3692 = vcmp.gt.f32.partialorder %v3404, 0.0
      %vm3693 = vcmp.gt.f32.partialorder %v3405, 0.0
      %vm3694 = vcmp.gt.f32.partialorder %v3406, 0.0
      %vm3695 = vcmp.gt.f32.partialorder %v3407, 0.0
      %vm3696 = vcmp.gt.f32.partialorder %v3408, 0.0
      %vm3697 = vcmp.gt.f32.partialorder %v3409, 0.0
      %vm3698 = vcmp.gt.f32.partialorder %v3410, 0.0
      %vm3699 = vcmp.gt.f32.partialorder %v3411, 0.0
      %vm3700 = vcmp.gt.f32.partialorder %v3412, 0.0
      %vm3701 = vcmp.gt.f32.partialorder %v3413, 0.0
      %vm3702 = vcmp.gt.f32.partialorder %v3414, 0.0
      %vm3703 = vcmp.gt.f32.partialorder %v3415, 0.0
      %vm3704 = vcmp.gt.f32.partialorder %v3416, 0.0
      %vm3705 = vcmp.gt.f32.partialorder %v3417, 0.0
      %vm3706 = vcmp.gt.f32.partialorder %v3418, 0.0
      %vm3707 = vcmp.gt.f32.partialorder %v3419, 0.0
      %vm3708 = vcmp.gt.f32.partialorder %v3420, 0.0
      %vm3709 = vcmp.gt.f32.partialorder %v3421, 0.0
      %vm3710 = vcmp.gt.f32.partialorder %v3422, 0.0
      %vm3711 = vcmp.gt.f32.partialorder %v3423, 0.0
      %vm3712 = vcmp.gt.f32.partialorder %v3424, 0.0
      %vm3713 = vcmp.gt.f32.partialorder %v3425, 0.0
      %vm3714 = vcmp.gt.f32.partialorder %v3426, 0.0
      %vm3715 = vcmp.gt.f32.partialorder %v3427, 0.0
      %vm3716 = vcmp.gt.f32.partialorder %v3428, 0.0
      %vm3717 = vcmp.gt.f32.partialorder %v3429, 0.0
      %vm3718 = vcmp.gt.f32.partialorder %v3430, 0.0
      %vm3719 = vcmp.gt.f32.partialorder %v3431, 0.0
      %vm3720 = vcmp.gt.f32.partialorder %v3432, 0.0
      %vm3721 = vcmp.gt.f32.partialorder %v3433, 0.0
      %vm3722 = vcmp.gt.f32.partialorder %v3434, 0.0
      %vm3723 = vcmp.gt.f32.partialorder %v3435, 0.0
      %vm3724 = vcmp.gt.f32.partialorder %v3436, 0.0
      %vm3725 = vcmp.gt.f32.partialorder %v3437, 0.0
      %vm3726 = vcmp.gt.f32.partialorder %v3438, 0.0
      %vm3727 = vcmp.gt.f32.partialorder %v3439, 0.0
      %vm3728 = vcmp.gt.f32.partialorder %v3440, 0.0
      %vm3729 = vcmp.gt.f32.partialorder %v3441, 0.0
      %vm3730 = vcmp.gt.f32.partialorder %v3442, 0.0
      %vm3731 = vcmp.gt.f32.partialorder %v3443, 0.0
      %vm3732 = vcmp.gt.f32.partialorder %v3444, 0.0
      %vm3733 = vcmp.gt.f32.partialorder %v3445, 0.0
      %vm3734 = vcmp.gt.f32.partialorder %v3446, 0.0
      %vm3735 = vcmp.gt.f32.partialorder %v3447, 0.0
      %vm3736 = vcmp.gt.f32.partialorder %v3448, 0.0
      %vm3737 = vcmp.gt.f32.partialorder %v3449, 0.0
      %vm3738 = vcmp.gt.f32.partialorder %v3450, 0.0
      %vm3739 = vcmp.gt.f32.partialorder %v3451, 0.0
      %vm3740 = vcmp.gt.f32.partialorder %v3452, 0.0
      %vm3741 = vcmp.gt.f32.partialorder %v3453, 0.0
      %vm3742 = vcmp.gt.f32.partialorder %v3454, 0.0
      %vm3743 = vcmp.gt.f32.partialorder %v3455, 0.0
      %vm3744 = vcmp.gt.f32.partialorder %v3456, 0.0
      %vm3745 = vcmp.gt.f32.partialorder %v3457, 0.0
      %vm3746 = vcmp.gt.f32.partialorder %v3458, 0.0
      %vm3747 = vcmp.gt.f32.partialorder %v3459, 0.0
      %vm3748 = vcmp.gt.f32.partialorder %v3460, 0.0
      %vm3749 = vcmp.gt.f32.partialorder %v3461, 0.0
      %vm3750 = vcmp.gt.f32.partialorder %v3462, 0.0
      %vm3751 = vcmp.gt.f32.partialorder %v3463, 0.0
      %vm3752 = vcmp.gt.f32.partialorder %v3464, 0.0
      %vm3753 = vcmp.gt.f32.partialorder %v3465, 0.0
      %v3754 = vld [vmem:[%s4] sm:$0x1]
      %v3756 = vlaneseq
      %v3757 = vshrl.u32 %v3756, 7
      %v3758 = vsub.s32 0, %v3757
      %v3759 = vrot.slane %v3754, %v3758
      %v3761 = vmul.f32 %v3759, %v3178
      %v3762 = vmul.f32 %v3759, %v3179
      %v3763 = vmul.f32 %v3759, %v3180
      %v3764 = vmul.f32 %v3759, %v3181
      %v3765 = vmul.f32 %v3759, %v3182
      %v3766 = vmul.f32 %v3759, %v3183
      %v3767 = vmul.f32 %v3759, %v3184
      %v3768 = vmul.f32 %v3759, %v3185
      %v3769 = vmul.f32 %v3759, %v3186
      %v3770 = vmul.f32 %v3759, %v3187
      %v3771 = vmul.f32 %v3759, %v3188
      %v3772 = vmul.f32 %v3759, %v3189
      %v3773 = vmul.f32 %v3759, %v3190
      %v3774 = vmul.f32 %v3759, %v3191
      %v3775 = vmul.f32 %v3759, %v3192
      %v3776 = vmul.f32 %v3759, %v3193
      %v3777 = vmul.f32 %v3759, %v3194
      %v3778 = vmul.f32 %v3759, %v3195
      %v3779 = vmul.f32 %v3759, %v3196
      %v3780 = vmul.f32 %v3759, %v3197
      %v3781 = vmul.f32 %v3759, %v3198
      %v3782 = vmul.f32 %v3759, %v3199
      %v3783 = vmul.f32 %v3759, %v3200
      %v3784 = vmul.f32 %v3759, %v3201
      %v3785 = vmul.f32 %v3759, %v3202
      %v3786 = vmul.f32 %v3759, %v3203
      %v3787 = vmul.f32 %v3759, %v3204
      %v3788 = vmul.f32 %v3759, %v3205
      %v3789 = vmul.f32 %v3759, %v3206
      %v3790 = vmul.f32 %v3759, %v3207
      %v3791 = vmul.f32 %v3759, %v3208
      %v3792 = vmul.f32 %v3759, %v3209
      %v3793 = vmul.f32 %v3759, %v3210
      %v3794 = vmul.f32 %v3759, %v3211
      %v3795 = vmul.f32 %v3759, %v3212
      %v3796 = vmul.f32 %v3759, %v3213
      %v3797 = vmul.f32 %v3759, %v3214
      %v3798 = vmul.f32 %v3759, %v3215
      %v3799 = vmul.f32 %v3759, %v3216
      %v3800 = vmul.f32 %v3759, %v3217
      %v3801 = vmul.f32 %v3759, %v3218
      %v3802 = vmul.f32 %v3759, %v3219
      %v3803 = vmul.f32 %v3759, %v3220
      %v3804 = vmul.f32 %v3759, %v3221
      %v3805 = vmul.f32 %v3759, %v3222
      %v3806 = vmul.f32 %v3759, %v3223
      %v3807 = vmul.f32 %v3759, %v3224
      %v3808 = vmul.f32 %v3759, %v3225
      %v3809 = vmul.f32 %v3759, %v3226
      %v3810 = vmul.f32 %v3759, %v3227
      %v3811 = vmul.f32 %v3759, %v3228
      %v3812 = vmul.f32 %v3759, %v3229
      %v3813 = vmul.f32 %v3759, %v3230
      %v3814 = vmul.f32 %v3759, %v3231
      %v3815 = vmul.f32 %v3759, %v3232
      %v3816 = vmul.f32 %v3759, %v3233
      %v3817 = vmul.f32 %v3759, %v3234
      %v3818 = vmul.f32 %v3759, %v3235
      %v3819 = vmul.f32 %v3759, %v3236
      %v3820 = vmul.f32 %v3759, %v3237
      %v3821 = vmul.f32 %v3759, %v3238
      %v3822 = vmul.f32 %v3759, %v3239
      %v3823 = vmul.f32 %v3759, %v3240
      %v3824 = vmul.f32 %v3759, %v3241
      %v3825 = vmul.f32 %v3759, %v3242
      %v3826 = vmul.f32 %v3759, %v3243
      %v3827 = vmul.f32 %v3759, %v3244
      %v3828 = vmul.f32 %v3759, %v3245
      %v3829 = vmul.f32 %v3759, %v3246
      %v3830 = vmul.f32 %v3759, %v3247
      %v3831 = vmul.f32 %v3759, %v3248
      %v3832 = vmul.f32 %v3759, %v3249
      %v3833 = vmul.f32 %v3759, %v3250
      %v3834 = vmul.f32 %v3759, %v3251
      %v3835 = vmul.f32 %v3759, %v3252
      %v3836 = vmul.f32 %v3759, %v3253
      %v3837 = vmul.f32 %v3759, %v3254
      %v3838 = vmul.f32 %v3759, %v3255
      %v3839 = vmul.f32 %v3759, %v3256
      %v3840 = vmul.f32 %v3759, %v3257
      %v3841 = vmul.f32 %v3759, %v3258
      %v3842 = vmul.f32 %v3759, %v3259
      %v3843 = vmul.f32 %v3759, %v3260
      %v3844 = vmul.f32 %v3759, %v3261
      %v3845 = vmul.f32 %v3759, %v3262
      %v3846 = vmul.f32 %v3759, %v3263
      %v3847 = vmul.f32 %v3759, %v3264
      %v3848 = vmul.f32 %v3759, %v3265
      %v3849 = vmul.f32 %v3759, %v3266
      %v3850 = vmul.f32 %v3759, %v3267
      %v3851 = vmul.f32 %v3759, %v3268
      %v3852 = vmul.f32 %v3759, %v3269
      %v3853 = vmul.f32 %v3759, %v3270
      %v3854 = vmul.f32 %v3759, %v3271
      %v3855 = vmul.f32 %v3759, %v3272
      %v3856 = vmul.f32 %v3759, %v3273
      %v3857 = vmul.f32 %v3759, %v3274
      %v3858 = vmul.f32 %v3759, %v3275
      %v3859 = vmul.f32 %v3759, %v3276
      %v3860 = vmul.f32 %v3759, %v3277
      %v3861 = vmul.f32 %v3759, %v3278
      %v3862 = vmul.f32 %v3759, %v3279
      %v3863 = vmul.f32 %v3759, %v3280
      %v3864 = vmul.f32 %v3759, %v3281
      %v3865 = vmul.f32 %v3759, %v3282
      %v3866 = vmul.f32 %v3759, %v3283
      %v3867 = vmul.f32 %v3759, %v3284
      %v3868 = vmul.f32 %v3759, %v3285
      %v3869 = vmul.f32 %v3759, %v3286
      %v3870 = vmul.f32 %v3759, %v3287
      %v3871 = vmul.f32 %v3759, %v3288
      %v3872 = vmul.f32 %v3759, %v3289
      %v3873 = vmul.f32 %v3759, %v3290
      %v3874 = vmul.f32 %v3759, %v3291
      %v3875 = vmul.f32 %v3759, %v3292
      %v3876 = vmul.f32 %v3759, %v3293
      %v3877 = vmul.f32 %v3759, %v3294
      %v3878 = vmul.f32 %v3759, %v3295
      %v3879 = vmul.f32 %v3759, %v3296
      %v3880 = vmul.f32 %v3759, %v3297
      %v3881 = vmul.f32 %v3759, %v3298
      %v3882 = vmul.f32 %v3759, %v3299
      %v3883 = vmul.f32 %v3759, %v3300
      %v3884 = vmul.f32 %v3759, %v3301
      %v3885 = vmul.f32 %v3759, %v3302
      %v3886 = vmul.f32 %v3759, %v3303
      %v3887 = vmul.f32 %v3759, %v3304
      %v3888 = vmul.f32 %v3759, %v3305
      %v3889 = vmul.f32 %v3759, %v3306
      %v3890 = vmul.f32 %v3759, %v3307
      %v3891 = vmul.f32 %v3759, %v3308
      %v3892 = vmul.f32 %v3759, %v3309
      %v3893 = vmul.f32 %v3759, %v3310
      %v3894 = vmul.f32 %v3759, %v3311
      %v3895 = vmul.f32 %v3759, %v3312
      %v3896 = vmul.f32 %v3759, %v3313
      %v3897 = vmul.f32 %v3759, %v3314
      %v3898 = vmul.f32 %v3759, %v3315
      %v3899 = vmul.f32 %v3759, %v3316
      %v3900 = vmul.f32 %v3759, %v3317
      %v3901 = vmul.f32 %v3759, %v3318
      %v3902 = vmul.f32 %v3759, %v3319
      %v3903 = vmul.f32 %v3759, %v3320
      %v3904 = vmul.f32 %v3759, %v3321
      %v3905 = vmul.f32 %v3759, %v3322
      %v3906 = vmul.f32 %v3759, %v3323
      %v3907 = vmul.f32 %v3759, %v3324
      %v3908 = vmul.f32 %v3759, %v3325
      %v3909 = vmul.f32 %v3759, %v3326
      %v3910 = vmul.f32 %v3759, %v3327
      %v3911 = vmul.f32 %v3759, %v3328
      %v3912 = vmul.f32 %v3759, %v3329
      %v3913 = vmul.f32 %v3759, %v3330
      %v3914 = vmul.f32 %v3759, %v3331
      %v3915 = vmul.f32 %v3759, %v3332
      %v3916 = vmul.f32 %v3759, %v3333
      %v3917 = vmul.f32 %v3759, %v3334
      %v3918 = vmul.f32 %v3759, %v3335
      %v3919 = vmul.f32 %v3759, %v3336
      %v3920 = vmul.f32 %v3759, %v3337
      %v3921 = vmul.f32 %v3759, %v3338
      %v3922 = vmul.f32 %v3759, %v3339
      %v3923 = vmul.f32 %v3759, %v3340
      %v3924 = vmul.f32 %v3759, %v3341
      %v3925 = vmul.f32 %v3759, %v3342
      %v3926 = vmul.f32 %v3759, %v3343
      %v3927 = vmul.f32 %v3759, %v3344
      %v3928 = vmul.f32 %v3759, %v3345
      %v3929 = vmul.f32 %v3759, %v3346
      %v3930 = vmul.f32 %v3759, %v3347
      %v3931 = vmul.f32 %v3759, %v3348
      %v3932 = vmul.f32 %v3759, %v3349
      %v3933 = vmul.f32 %v3759, %v3350
      %v3934 = vmul.f32 %v3759, %v3351
      %v3935 = vmul.f32 %v3759, %v3352
      %v3936 = vmul.f32 %v3759, %v3353
      %v3937 = vmul.f32 %v3759, %v3354
      %v3938 = vmul.f32 %v3759, %v3355
      %v3939 = vmul.f32 %v3759, %v3356
      %v3940 = vmul.f32 %v3759, %v3357
      %v3941 = vmul.f32 %v3759, %v3358
      %v3942 = vmul.f32 %v3759, %v3359
      %v3943 = vmul.f32 %v3759, %v3360
      %v3944 = vmul.f32 %v3759, %v3361
      %v3945 = vmul.f32 %v3759, %v3362
      %v3946 = vmul.f32 %v3759, %v3363
      %v3947 = vmul.f32 %v3759, %v3364
      %v3948 = vmul.f32 %v3759, %v3365
      %v3949 = vmul.f32 %v3759, %v3366
      %v3950 = vmul.f32 %v3759, %v3367
      %v3951 = vmul.f32 %v3759, %v3368
      %v3952 = vmul.f32 %v3759, %v3369
      %v3953 = vmul.f32 %v3759, %v3370
      %v3954 = vmul.f32 %v3759, %v3371
      %v3955 = vmul.f32 %v3759, %v3372
      %v3956 = vmul.f32 %v3759, %v3373
      %v3957 = vmul.f32 %v3759, %v3374
      %v3958 = vmul.f32 %v3759, %v3375
      %v3959 = vmul.f32 %v3759, %v3376
      %v3960 = vmul.f32 %v3759, %v3377
      %v3961 = vmul.f32 %v3759, %v3378
      %v3962 = vmul.f32 %v3759, %v3379
      %v3963 = vmul.f32 %v3759, %v3380
      %v3964 = vmul.f32 %v3759, %v3381
      %v3965 = vmul.f32 %v3759, %v3382
      %v3966 = vmul.f32 %v3759, %v3383
      %v3967 = vmul.f32 %v3759, %v3384
      %v3968 = vmul.f32 %v3759, %v3385
      %v3969 = vmul.f32 %v3759, %v3386
      %v3970 = vmul.f32 %v3759, %v3387
      %v3971 = vmul.f32 %v3759, %v3388
      %v3972 = vmul.f32 %v3759, %v3389
      %v3973 = vmul.f32 %v3759, %v3390
      %v3974 = vmul.f32 %v3759, %v3391
      %v3975 = vmul.f32 %v3759, %v3392
      %v3976 = vmul.f32 %v3759, %v3393
      %v3977 = vmul.f32 %v3759, %v3394
      %v3978 = vmul.f32 %v3759, %v3395
      %v3979 = vmul.f32 %v3759, %v3396
      %v3980 = vmul.f32 %v3759, %v3397
      %v3981 = vmul.f32 %v3759, %v3398
      %v3982 = vmul.f32 %v3759, %v3399
      %v3983 = vmul.f32 %v3759, %v3400
      %v3984 = vmul.f32 %v3759, %v3401
      %v3985 = vmul.f32 %v3759, %v3402
      %v3986 = vmul.f32 %v3759, %v3403
      %v3987 = vmul.f32 %v3759, %v3404
      %v3988 = vmul.f32 %v3759, %v3405
      %v3989 = vmul.f32 %v3759, %v3406
      %v3990 = vmul.f32 %v3759, %v3407
      %v3991 = vmul.f32 %v3759, %v3408
      %v3992 = vmul.f32 %v3759, %v3409
      %v3993 = vmul.f32 %v3759, %v3410
      %v3994 = vmul.f32 %v3759, %v3411
      %v3995 = vmul.f32 %v3759, %v3412
      %v3996 = vmul.f32 %v3759, %v3413
      %v3997 = vmul.f32 %v3759, %v3414
      %v3998 = vmul.f32 %v3759, %v3415
      %v3999 = vmul.f32 %v3759, %v3416
      %v4000 = vmul.f32 %v3759, %v3417
      %v4001 = vmul.f32 %v3759, %v3418
      %v4002 = vmul.f32 %v3759, %v3419
      %v4003 = vmul.f32 %v3759, %v3420
      %v4004 = vmul.f32 %v3759, %v3421
      %v4005 = vmul.f32 %v3759, %v3422
      %v4006 = vmul.f32 %v3759, %v3423
      %v4007 = vmul.f32 %v3759, %v3424
      %v4008 = vmul.f32 %v3759, %v3425
      %v4009 = vmul.f32 %v3759, %v3426
      %v4010 = vmul.f32 %v3759, %v3427
      %v4011 = vmul.f32 %v3759, %v3428
      %v4012 = vmul.f32 %v3759, %v3429
      %v4013 = vmul.f32 %v3759, %v3430
      %v4014 = vmul.f32 %v3759, %v3431
      %v4015 = vmul.f32 %v3759, %v3432
      %v4016 = vmul.f32 %v3759, %v3433
      %v4017 = vmul.f32 %v3759, %v3434
      %v4018 = vmul.f32 %v3759, %v3435
      %v4019 = vmul.f32 %v3759, %v3436
      %v4020 = vmul.f32 %v3759, %v3437
      %v4021 = vmul.f32 %v3759, %v3438
      %v4022 = vmul.f32 %v3759, %v3439
      %v4023 = vmul.f32 %v3759, %v3440
      %v4024 = vmul.f32 %v3759, %v3441
      %v4025 = vmul.f32 %v3759, %v3442
      %v4026 = vmul.f32 %v3759, %v3443
      %v4027 = vmul.f32 %v3759, %v3444
      %v4028 = vmul.f32 %v3759, %v3445
      %v4029 = vmul.f32 %v3759, %v3446
      %v4030 = vmul.f32 %v3759, %v3447
      %v4031 = vmul.f32 %v3759, %v3448
      %v4032 = vmul.f32 %v3759, %v3449
      %v4033 = vmul.f32 %v3759, %v3450
      %v4034 = vmul.f32 %v3759, %v3451
      %v4035 = vmul.f32 %v3759, %v3452
      %v4036 = vmul.f32 %v3759, %v3453
      %v4037 = vmul.f32 %v3759, %v3454
      %v4038 = vmul.f32 %v3759, %v3455
      %v4039 = vmul.f32 %v3759, %v3456
      %v4040 = vmul.f32 %v3759, %v3457
      %v4041 = vmul.f32 %v3759, %v3458
      %v4042 = vmul.f32 %v3759, %v3459
      %v4043 = vmul.f32 %v3759, %v3460
      %v4044 = vmul.f32 %v3759, %v3461
      %v4045 = vmul.f32 %v3759, %v3462
      %v4046 = vmul.f32 %v3759, %v3463
      %v4047 = vmul.f32 %v3759, %v3464
      %v4048 = vmul.f32 %v3759, %v3465
      %v4049 = vsel %vm3466, %v3178, %v3761
      %v4050 = vsel %vm3467, %v3179, %v3762
      %v4051 = vsel %vm3468, %v3180, %v3763
      %v4052 = vsel %vm3469, %v3181, %v3764
      %v4053 = vsel %vm3470, %v3182, %v3765
      %v4054 = vsel %vm3471, %v3183, %v3766
      %v4055 = vsel %vm3472, %v3184, %v3767
      %v4056 = vsel %vm3473, %v3185, %v3768
      %v4057 = vsel %vm3474, %v3186, %v3769
      %v4058 = vsel %vm3475, %v3187, %v3770
      %v4059 = vsel %vm3476, %v3188, %v3771
      %v4060 = vsel %vm3477, %v3189, %v3772
      %v4061 = vsel %vm3478, %v3190, %v3773
      %v4062 = vsel %vm3479, %v3191, %v3774
      %v4063 = vsel %vm3480, %v3192, %v3775
      %v4064 = vsel %vm3481, %v3193, %v3776
      %v4065 = vsel %vm3482, %v3194, %v3777
      %v4066 = vsel %vm3483, %v3195, %v3778
      %v4067 = vsel %vm3484, %v3196, %v3779
      %v4068 = vsel %vm3485, %v3197, %v3780
      %v4069 = vsel %vm3486, %v3198, %v3781
      %v4070 = vsel %vm3487, %v3199, %v3782
      %v4071 = vsel %vm3488, %v3200, %v3783
      %v4072 = vsel %vm3489, %v3201, %v3784
      %v4073 = vsel %vm3490, %v3202, %v3785
      %v4074 = vsel %vm3491, %v3203, %v3786
      %v4075 = vsel %vm3492, %v3204, %v3787
      %v4076 = vsel %vm3493, %v3205, %v3788
      %v4077 = vsel %vm3494, %v3206, %v3789
      %v4078 = vsel %vm3495, %v3207, %v3790
      %v4079 = vsel %vm3496, %v3208, %v3791
      %v4080 = vsel %vm3497, %v3209, %v3792
      %v4081 = vsel %vm3498, %v3210, %v3793
      %v4082 = vsel %vm3499, %v3211, %v3794
      %v4083 = vsel %vm3500, %v3212, %v3795
      %v4084 = vsel %vm3501, %v3213, %v3796
      %v4085 = vsel %vm3502, %v3214, %v3797
      %v4086 = vsel %vm3503, %v3215, %v3798
      %v4087 = vsel %vm3504, %v3216, %v3799
      %v4088 = vsel %vm3505, %v3217, %v3800
      %v4089 = vsel %vm3506, %v3218, %v3801
      %v4090 = vsel %vm3507, %v3219, %v3802
      %v4091 = vsel %vm3508, %v3220, %v3803
      %v4092 = vsel %vm3509, %v3221, %v3804
      %v4093 = vsel %vm3510, %v3222, %v3805
      %v4094 = vsel %vm3511, %v3223, %v3806
      %v4095 = vsel %vm3512, %v3224, %v3807
      %v4096 = vsel %vm3513, %v3225, %v3808
      %v4097 = vsel %vm3514, %v3226, %v3809
      %v4098 = vsel %vm3515, %v3227, %v3810
      %v4099 = vsel %vm3516, %v3228, %v3811
      %v4100 = vsel %vm3517, %v3229, %v3812
      %v4101 = vsel %vm3518, %v3230, %v3813
      %v4102 = vsel %vm3519, %v3231, %v3814
      %v4103 = vsel %vm3520, %v3232, %v3815
      %v4104 = vsel %vm3521, %v3233, %v3816
      %v4105 = vsel %vm3522, %v3234, %v3817
      %v4106 = vsel %vm3523, %v3235, %v3818
      %v4107 = vsel %vm3524, %v3236, %v3819
      %v4108 = vsel %vm3525, %v3237, %v3820
      %v4109 = vsel %vm3526, %v3238, %v3821
      %v4110 = vsel %vm3527, %v3239, %v3822
      %v4111 = vsel %vm3528, %v3240, %v3823
      %v4112 = vsel %vm3529, %v3241, %v3824
      %v4113 = vsel %vm3530, %v3242, %v3825
      %v4114 = vsel %vm3531, %v3243, %v3826
      %v4115 = vsel %vm3532, %v3244, %v3827
      %v4116 = vsel %vm3533, %v3245, %v3828
      %v4117 = vsel %vm3534, %v3246, %v3829
      %v4118 = vsel %vm3535, %v3247, %v3830
      %v4119 = vsel %vm3536, %v3248, %v3831
      %v4120 = vsel %vm3537, %v3249, %v3832
      %v4121 = vsel %vm3538, %v3250, %v3833
      %v4122 = vsel %vm3539, %v3251, %v3834
      %v4123 = vsel %vm3540, %v3252, %v3835
      %v4124 = vsel %vm3541, %v3253, %v3836
      %v4125 = vsel %vm3542, %v3254, %v3837
      %v4126 = vsel %vm3543, %v3255, %v3838
      %v4127 = vsel %vm3544, %v3256, %v3839
      %v4128 = vsel %vm3545, %v3257, %v3840
      %v4129 = vsel %vm3546, %v3258, %v3841
      %v4130 = vsel %vm3547, %v3259, %v3842
      %v4131 = vsel %vm3548, %v3260, %v3843
      %v4132 = vsel %vm3549, %v3261, %v3844
      %v4133 = vsel %vm3550, %v3262, %v3845
      %v4134 = vsel %vm3551, %v3263, %v3846
      %v4135 = vsel %vm3552, %v3264, %v3847
      %v4136 = vsel %vm3553, %v3265, %v3848
      %v4137 = vsel %vm3554, %v3266, %v3849
      %v4138 = vsel %vm3555, %v3267, %v3850
      %v4139 = vsel %vm3556, %v3268, %v3851
      %v4140 = vsel %vm3557, %v3269, %v3852
      %v4141 = vsel %vm3558, %v3270, %v3853
      %v4142 = vsel %vm3559, %v3271, %v3854
      %v4143 = vsel %vm3560, %v3272, %v3855
      %v4144 = vsel %vm3561, %v3273, %v3856
      %v4145 = vsel %vm3562, %v3274, %v3857
      %v4146 = vsel %vm3563, %v3275, %v3858
      %v4147 = vsel %vm3564, %v3276, %v3859
      %v4148 = vsel %vm3565, %v3277, %v3860
      %v4149 = vsel %vm3566, %v3278, %v3861
      %v4150 = vsel %vm3567, %v3279, %v3862
      %v4151 = vsel %vm3568, %v3280, %v3863
      %v4152 = vsel %vm3569, %v3281, %v3864
      %v4153 = vsel %vm3570, %v3282, %v3865
      %v4154 = vsel %vm3571, %v3283, %v3866
      %v4155 = vsel %vm3572, %v3284, %v3867
      %v4156 = vsel %vm3573, %v3285, %v3868
      %v4157 = vsel %vm3574, %v3286, %v3869
      %v4158 = vsel %vm3575, %v3287, %v3870
      %v4159 = vsel %vm3576, %v3288, %v3871
      %v4160 = vsel %vm3577, %v3289, %v3872
      %v4161 = vsel %vm3578, %v3290, %v3873
      %v4162 = vsel %vm3579, %v3291, %v3874
      %v4163 = vsel %vm3580, %v3292, %v3875
      %v4164 = vsel %vm3581, %v3293, %v3876
      %v4165 = vsel %vm3582, %v3294, %v3877
      %v4166 = vsel %vm3583, %v3295, %v3878
      %v4167 = vsel %vm3584, %v3296, %v3879
      %v4168 = vsel %vm3585, %v3297, %v3880
      %v4169 = vsel %vm3586, %v3298, %v3881
      %v4170 = vsel %vm3587, %v3299, %v3882
      %v4171 = vsel %vm3588, %v3300, %v3883
      %v4172 = vsel %vm3589, %v3301, %v3884
      %v4173 = vsel %vm3590, %v3302, %v3885
      %v4174 = vsel %vm3591, %v3303, %v3886
      %v4175 = vsel %vm3592, %v3304, %v3887
      %v4176 = vsel %vm3593, %v3305, %v3888
      %v4177 = vsel %vm3594, %v3306, %v3889
      %v4178 = vsel %vm3595, %v3307, %v3890
      %v4179 = vsel %vm3596, %v3308, %v3891
      %v4180 = vsel %vm3597, %v3309, %v3892
      %v4181 = vsel %vm3598, %v3310, %v3893
      %v4182 = vsel %vm3599, %v3311, %v3894
      %v4183 = vsel %vm3600, %v3312, %v3895
      %v4184 = vsel %vm3601, %v3313, %v3896
      %v4185 = vsel %vm3602, %v3314, %v3897
      %v4186 = vsel %vm3603, %v3315, %v3898
      %v4187 = vsel %vm3604, %v3316, %v3899
      %v4188 = vsel %vm3605, %v3317, %v3900
      %v4189 = vsel %vm3606, %v3318, %v3901
      %v4190 = vsel %vm3607, %v3319, %v3902
      %v4191 = vsel %vm3608, %v3320, %v3903
      %v4192 = vsel %vm3609, %v3321, %v3904
      %v4193 = vsel %vm3610, %v3322, %v3905
      %v4194 = vsel %vm3611, %v3323, %v3906
      %v4195 = vsel %vm3612, %v3324, %v3907
      %v4196 = vsel %vm3613, %v3325, %v3908
      %v4197 = vsel %vm3614, %v3326, %v3909
      %v4198 = vsel %vm3615, %v3327, %v3910
      %v4199 = vsel %vm3616, %v3328, %v3911
      %v4200 = vsel %vm3617, %v3329, %v3912
      %v4201 = vsel %vm3618, %v3330, %v3913
      %v4202 = vsel %vm3619, %v3331, %v3914
      %v4203 = vsel %vm3620, %v3332, %v3915
      %v4204 = vsel %vm3621, %v3333, %v3916
      %v4205 = vsel %vm3622, %v3334, %v3917
      %v4206 = vsel %vm3623, %v3335, %v3918
      %v4207 = vsel %vm3624, %v3336, %v3919
      %v4208 = vsel %vm3625, %v3337, %v3920
      %v4209 = vsel %vm3626, %v3338, %v3921
      %v4210 = vsel %vm3627, %v3339, %v3922
      %v4211 = vsel %vm3628, %v3340, %v3923
      %v4212 = vsel %vm3629, %v3341, %v3924
      %v4213 = vsel %vm3630, %v3342, %v3925
      %v4214 = vsel %vm3631, %v3343, %v3926
      %v4215 = vsel %vm3632, %v3344, %v3927
      %v4216 = vsel %vm3633, %v3345, %v3928
      %v4217 = vsel %vm3634, %v3346, %v3929
      %v4218 = vsel %vm3635, %v3347, %v3930
      %v4219 = vsel %vm3636, %v3348, %v3931
      %v4220 = vsel %vm3637, %v3349, %v3932
      %v4221 = vsel %vm3638, %v3350, %v3933
      %v4222 = vsel %vm3639, %v3351, %v3934
      %v4223 = vsel %vm3640, %v3352, %v3935
      %v4224 = vsel %vm3641, %v3353, %v3936
      %v4225 = vsel %vm3642, %v3354, %v3937
      %v4226 = vsel %vm3643, %v3355, %v3938
      %v4227 = vsel %vm3644, %v3356, %v3939
      %v4228 = vsel %vm3645, %v3357, %v3940
      %v4229 = vsel %vm3646, %v3358, %v3941
      %v4230 = vsel %vm3647, %v3359, %v3942
      %v4231 = vsel %vm3648, %v3360, %v3943
      %v4232 = vsel %vm3649, %v3361, %v3944
      %v4233 = vsel %vm3650, %v3362, %v3945
      %v4234 = vsel %vm3651, %v3363, %v3946
      %v4235 = vsel %vm3652, %v3364, %v3947
      %v4236 = vsel %vm3653, %v3365, %v3948
      %v4237 = vsel %vm3654, %v3366, %v3949
      %v4238 = vsel %vm3655, %v3367, %v3950
      %v4239 = vsel %vm3656, %v3368, %v3951
      %v4240 = vsel %vm3657, %v3369, %v3952
      %v4241 = vsel %vm3658, %v3370, %v3953
      %v4242 = vsel %vm3659, %v3371, %v3954
      %v4243 = vsel %vm3660, %v3372, %v3955
      %v4244 = vsel %vm3661, %v3373, %v3956
      %v4245 = vsel %vm3662, %v3374, %v3957
      %v4246 = vsel %vm3663, %v3375, %v3958
      %v4247 = vsel %vm3664, %v3376, %v3959
      %v4248 = vsel %vm3665, %v3377, %v3960
      %v4249 = vsel %vm3666, %v3378, %v3961
      %v4250 = vsel %vm3667, %v3379, %v3962
      %v4251 = vsel %vm3668, %v3380, %v3963
      %v4252 = vsel %vm3669, %v3381, %v3964
      %v4253 = vsel %vm3670, %v3382, %v3965
      %v4254 = vsel %vm3671, %v3383, %v3966
      %v4255 = vsel %vm3672, %v3384, %v3967
      %v4256 = vsel %vm3673, %v3385, %v3968
      %v4257 = vsel %vm3674, %v3386, %v3969
      %v4258 = vsel %vm3675, %v3387, %v3970
      %v4259 = vsel %vm3676, %v3388, %v3971
      %v4260 = vsel %vm3677, %v3389, %v3972
      %v4261 = vsel %vm3678, %v3390, %v3973
      %v4262 = vsel %vm3679, %v3391, %v3974
      %v4263 = vsel %vm3680, %v3392, %v3975
      %v4264 = vsel %vm3681, %v3393, %v3976
      %v4265 = vsel %vm3682, %v3394, %v3977
      %v4266 = vsel %vm3683, %v3395, %v3978
      %v4267 = vsel %vm3684, %v3396, %v3979
      %v4268 = vsel %vm3685, %v3397, %v3980
      %v4269 = vsel %vm3686, %v3398, %v3981
      %v4270 = vsel %vm3687, %v3399, %v3982
      %v4271 = vsel %vm3688, %v3400, %v3983
      %v4272 = vsel %vm3689, %v3401, %v3984
      %v4273 = vsel %vm3690, %v3402, %v3985
      %v4274 = vsel %vm3691, %v3403, %v3986
      %v4275 = vsel %vm3692, %v3404, %v3987
      %v4276 = vsel %vm3693, %v3405, %v3988
      %v4277 = vsel %vm3694, %v3406, %v3989
      %v4278 = vsel %vm3695, %v3407, %v3990
      %v4279 = vsel %vm3696, %v3408, %v3991
      %v4280 = vsel %vm3697, %v3409, %v3992
      %v4281 = vsel %vm3698, %v3410, %v3993
      %v4282 = vsel %vm3699, %v3411, %v3994
      %v4283 = vsel %vm3700, %v3412, %v3995
      %v4284 = vsel %vm3701, %v3413, %v3996
      %v4285 = vsel %vm3702, %v3414, %v3997
      %v4286 = vsel %vm3703, %v3415, %v3998
      %v4287 = vsel %vm3704, %v3416, %v3999
      %v4288 = vsel %vm3705, %v3417, %v4000
      %v4289 = vsel %vm3706, %v3418, %v4001
      %v4290 = vsel %vm3707, %v3419, %v4002
      %v4291 = vsel %vm3708, %v3420, %v4003
      %v4292 = vsel %vm3709, %v3421, %v4004
      %v4293 = vsel %vm3710, %v3422, %v4005
      %v4294 = vsel %vm3711, %v3423, %v4006
      %v4295 = vsel %vm3712, %v3424, %v4007
      %v4296 = vsel %vm3713, %v3425, %v4008
      %v4297 = vsel %vm3714, %v3426, %v4009
      %v4298 = vsel %vm3715, %v3427, %v4010
      %v4299 = vsel %vm3716, %v3428, %v4011
      %v4300 = vsel %vm3717, %v3429, %v4012
      %v4301 = vsel %vm3718, %v3430, %v4013
      %v4302 = vsel %vm3719, %v3431, %v4014
      %v4303 = vsel %vm3720, %v3432, %v4015
      %v4304 = vsel %vm3721, %v3433, %v4016
      %v4305 = vsel %vm3722, %v3434, %v4017
      %v4306 = vsel %vm3723, %v3435, %v4018
      %v4307 = vsel %vm3724, %v3436, %v4019
      %v4308 = vsel %vm3725, %v3437, %v4020
      %v4309 = vsel %vm3726, %v3438, %v4021
      %v4310 = vsel %vm3727, %v3439, %v4022
      %v4311 = vsel %vm3728, %v3440, %v4023
      %v4312 = vsel %vm3729, %v3441, %v4024
      %v4313 = vsel %vm3730, %v3442, %v4025
      %v4314 = vsel %vm3731, %v3443, %v4026
      %v4315 = vsel %vm3732, %v3444, %v4027
      %v4316 = vsel %vm3733, %v3445, %v4028
      %v4317 = vsel %vm3734, %v3446, %v4029
      %v4318 = vsel %vm3735, %v3447, %v4030
      %v4319 = vsel %vm3736, %v3448, %v4031
      %v4320 = vsel %vm3737, %v3449, %v4032
      %v4321 = vsel %vm3738, %v3450, %v4033
      %v4322 = vsel %vm3739, %v3451, %v4034
      %v4323 = vsel %vm3740, %v3452, %v4035
      %v4324 = vsel %vm3741, %v3453, %v4036
      %v4325 = vsel %vm3742, %v3454, %v4037
      %v4326 = vsel %vm3743, %v3455, %v4038
      %v4327 = vsel %vm3744, %v3456, %v4039
      %v4328 = vsel %vm3745, %v3457, %v4040
      %v4329 = vsel %vm3746, %v3458, %v4041
      %v4330 = vsel %vm3747, %v3459, %v4042
      %v4331 = vsel %vm3748, %v3460, %v4043
      %v4332 = vsel %vm3749, %v3461, %v4044
      %v4333 = vsel %vm3750, %v3462, %v4045
      %v4334 = vsel %vm3751, %v3463, %v4046
      %v4335 = vsel %vm3752, %v3464, %v4047
      %v4336 = vsel %vm3753, %v3465, %v4048
      %v4337 = vmax.f32 %v4049, %v4067
      %v4338 = vmax.f32 %v4050, %v4068
      %v4339 = vmax.f32 %v4051, %v4069
      %v4340 = vmax.f32 %v4052, %v4070
      %v4341 = vmax.f32 %v4053, %v4071
      %v4342 = vmax.f32 %v4054, %v4072
      %v4343 = vmax.f32 %v4055, %v4073
      %v4344 = vmax.f32 %v4056, %v4074
      %v4345 = vmax.f32 %v4057, %v4075
      %v4346 = vmax.f32 %v4058, %v4076
      %v4347 = vmax.f32 %v4059, %v4077
      %v4348 = vmax.f32 %v4060, %v4078
      %v4349 = vmax.f32 %v4061, %v4079
      %v4350 = vmax.f32 %v4062, %v4080
      %v4351 = vmax.f32 %v4063, %v4081
      %v4352 = vmax.f32 %v4064, %v4082
      %v4353 = vmax.f32 %v4065, %v4083
      %v4354 = vmax.f32 %v4066, %v4084
      %v4355 = vmax.f32 %v4121, %v4139
      %v4356 = vmax.f32 %v4122, %v4140
      %v4357 = vmax.f32 %v4123, %v4141
      %v4358 = vmax.f32 %v4124, %v4142
      %v4359 = vmax.f32 %v4125, %v4143
      %v4360 = vmax.f32 %v4126, %v4144
      %v4361 = vmax.f32 %v4127, %v4145
      %v4362 = vmax.f32 %v4128, %v4146
      %v4363 = vmax.f32 %v4129, %v4147
      %v4364 = vmax.f32 %v4130, %v4148
      %v4365 = vmax.f32 %v4131, %v4149
      %v4366 = vmax.f32 %v4132, %v4150
      %v4367 = vmax.f32 %v4133, %v4151
      %v4368 = vmax.f32 %v4134, %v4152
      %v4369 = vmax.f32 %v4135, %v4153
      %v4370 = vmax.f32 %v4136, %v4154
      %v4371 = vmax.f32 %v4137, %v4155
      %v4372 = vmax.f32 %v4138, %v4156
      %v4373 = vmax.f32 %v4193, %v4211
      %v4374 = vmax.f32 %v4194, %v4212
      %v4375 = vmax.f32 %v4195, %v4213
      %v4376 = vmax.f32 %v4196, %v4214
      %v4377 = vmax.f32 %v4197, %v4215
      %v4378 = vmax.f32 %v4198, %v4216
      %v4379 = vmax.f32 %v4199, %v4217
      %v4380 = vmax.f32 %v4200, %v4218
      %v4381 = vmax.f32 %v4201, %v4219
      %v4382 = vmax.f32 %v4202, %v4220
      %v4383 = vmax.f32 %v4203, %v4221
      %v4384 = vmax.f32 %v4204, %v4222
      %v4385 = vmax.f32 %v4205, %v4223
      %v4386 = vmax.f32 %v4206, %v4224
      %v4387 = vmax.f32 %v4207, %v4225
      %v4388 = vmax.f32 %v4208, %v4226
      %v4389 = vmax.f32 %v4209, %v4227
      %v4390 = vmax.f32 %v4210, %v4228
      %v4391 = vmax.f32 %v4265, %v4283
      %v4392 = vmax.f32 %v4266, %v4284
      %v4393 = vmax.f32 %v4267, %v4285
      %v4394 = vmax.f32 %v4268, %v4286
      %v4395 = vmax.f32 %v4269, %v4287
      %v4396 = vmax.f32 %v4270, %v4288
      %v4397 = vmax.f32 %v4271, %v4289
      %v4398 = vmax.f32 %v4272, %v4290
      %v4399 = vmax.f32 %v4273, %v4291
      %v4400 = vmax.f32 %v4274, %v4292
      %v4401 = vmax.f32 %v4275, %v4293
      %v4402 = vmax.f32 %v4276, %v4294
      %v4403 = vmax.f32 %v4277, %v4295
      %v4404 = vmax.f32 %v4278, %v4296
      %v4405 = vmax.f32 %v4279, %v4297
      %v4406 = vmax.f32 %v4280, %v4298
      %v4407 = vmax.f32 %v4281, %v4299
      %v4408 = vmax.f32 %v4282, %v4300
      %v4409 = vmax.f32 %v4085, %v4103
      %v4410 = vmax.f32 %v4086, %v4104
      %v4411 = vmax.f32 %v4087, %v4105
      %v4412 = vmax.f32 %v4088, %v4106
      %v4413 = vmax.f32 %v4089, %v4107
      %v4414 = vmax.f32 %v4090, %v4108
      %v4415 = vmax.f32 %v4091, %v4109
      %v4416 = vmax.f32 %v4092, %v4110
      %v4417 = vmax.f32 %v4093, %v4111
      %v4418 = vmax.f32 %v4094, %v4112
      %v4419 = vmax.f32 %v4095, %v4113
      %v4420 = vmax.f32 %v4096, %v4114
      %v4421 = vmax.f32 %v4097, %v4115
      %v4422 = vmax.f32 %v4098, %v4116
      %v4423 = vmax.f32 %v4099, %v4117
      %v4424 = vmax.f32 %v4100, %v4118
      %v4425 = vmax.f32 %v4101, %v4119
      %v4426 = vmax.f32 %v4102, %v4120
      %v4427 = vmax.f32 %v4157, %v4175
      %v4428 = vmax.f32 %v4158, %v4176
      %v4429 = vmax.f32 %v4159, %v4177
      %v4430 = vmax.f32 %v4160, %v4178
      %v4431 = vmax.f32 %v4161, %v4179
      %v4432 = vmax.f32 %v4162, %v4180
      %v4433 = vmax.f32 %v4163, %v4181
      %v4434 = vmax.f32 %v4164, %v4182
      %v4435 = vmax.f32 %v4165, %v4183
      %v4436 = vmax.f32 %v4166, %v4184
      %v4437 = vmax.f32 %v4167, %v4185
      %v4438 = vmax.f32 %v4168, %v4186
      %v4439 = vmax.f32 %v4169, %v4187
      %v4440 = vmax.f32 %v4170, %v4188
      %v4441 = vmax.f32 %v4171, %v4189
      %v4442 = vmax.f32 %v4172, %v4190
      %v4443 = vmax.f32 %v4173, %v4191
      %v4444 = vmax.f32 %v4174, %v4192
      %v4445 = vmax.f32 %v4229, %v4247
      %v4446 = vmax.f32 %v4230, %v4248
      %v4447 = vmax.f32 %v4231, %v4249
      %v4448 = vmax.f32 %v4232, %v4250
      %v4449 = vmax.f32 %v4233, %v4251
      %v4450 = vmax.f32 %v4234, %v4252
      %v4451 = vmax.f32 %v4235, %v4253
      %v4452 = vmax.f32 %v4236, %v4254
      %v4453 = vmax.f32 %v4237, %v4255
      %v4454 = vmax.f32 %v4238, %v4256
      %v4455 = vmax.f32 %v4239, %v4257
      %v4456 = vmax.f32 %v4240, %v4258
      %v4457 = vmax.f32 %v4241, %v4259
      %v4458 = vmax.f32 %v4242, %v4260
      %v4459 = vmax.f32 %v4243, %v4261
      %v4460 = vmax.f32 %v4244, %v4262
      %v4461 = vmax.f32 %v4245, %v4263
      %v4462 = vmax.f32 %v4246, %v4264
      %v4463 = vmax.f32 %v4301, %v4319
      %v4464 = vmax.f32 %v4302, %v4320
      %v4465 = vmax.f32 %v4303, %v4321
      %v4466 = vmax.f32 %v4304, %v4322
      %v4467 = vmax.f32 %v4305, %v4323
      %v4468 = vmax.f32 %v4306, %v4324
      %v4469 = vmax.f32 %v4307, %v4325
      %v4470 = vmax.f32 %v4308, %v4326
      %v4471 = vmax.f32 %v4309, %v4327
      %v4472 = vmax.f32 %v4310, %v4328
      %v4473 = vmax.f32 %v4311, %v4329
      %v4474 = vmax.f32 %v4312, %v4330
      %v4475 = vmax.f32 %v4313, %v4331
      %v4476 = vmax.f32 %v4314, %v4332
      %v4477 = vmax.f32 %v4315, %v4333
      %v4478 = vmax.f32 %v4316, %v4334
      %v4479 = vmax.f32 %v4317, %v4335
      %v4480 = vmax.f32 %v4318, %v4336
      %v4481 = vmax.f32 %v4337, %v4409
      %v4482 = vmax.f32 %v4338, %v4410
      %v4483 = vmax.f32 %v4339, %v4411
      %v4484 = vmax.f32 %v4340, %v4412
      %v4485 = vmax.f32 %v4341, %v4413
      %v4486 = vmax.f32 %v4342, %v4414
      %v4487 = vmax.f32 %v4343, %v4415
      %v4488 = vmax.f32 %v4344, %v4416
      %v4489 = vmax.f32 %v4345, %v4417
      %v4490 = vmax.f32 %v4346, %v4418
      %v4491 = vmax.f32 %v4347, %v4419
      %v4492 = vmax.f32 %v4348, %v4420
      %v4493 = vmax.f32 %v4349, %v4421
      %v4494 = vmax.f32 %v4350, %v4422
      %v4495 = vmax.f32 %v4351, %v4423
      %v4496 = vmax.f32 %v4352, %v4424
      %v4497 = vmax.f32 %v4353, %v4425
      %v4498 = vmax.f32 %v4354, %v4426
      %v4499 = vmax.f32 %v4355, %v4427
      %v4500 = vmax.f32 %v4356, %v4428
      %v4501 = vmax.f32 %v4357, %v4429
      %v4502 = vmax.f32 %v4358, %v4430
      %v4503 = vmax.f32 %v4359, %v4431
      %v4504 = vmax.f32 %v4360, %v4432
      %v4505 = vmax.f32 %v4361, %v4433
      %v4506 = vmax.f32 %v4362, %v4434
      %v4507 = vmax.f32 %v4363, %v4435
      %v4508 = vmax.f32 %v4364, %v4436
      %v4509 = vmax.f32 %v4365, %v4437
      %v4510 = vmax.f32 %v4366, %v4438
      %v4511 = vmax.f32 %v4367, %v4439
      %v4512 = vmax.f32 %v4368, %v4440
      %v4513 = vmax.f32 %v4369, %v4441
      %v4514 = vmax.f32 %v4370, %v4442
      %v4515 = vmax.f32 %v4371, %v4443
      %v4516 = vmax.f32 %v4372, %v4444
      %v4517 = vmax.f32 %v4373, %v4445
      %v4518 = vmax.f32 %v4374, %v4446
      %v4519 = vmax.f32 %v4375, %v4447
      %v4520 = vmax.f32 %v4376, %v4448
      %v4521 = vmax.f32 %v4377, %v4449
      %v4522 = vmax.f32 %v4378, %v4450
      %v4523 = vmax.f32 %v4379, %v4451
      %v4524 = vmax.f32 %v4380, %v4452
      %v4525 = vmax.f32 %v4381, %v4453
      %v4526 = vmax.f32 %v4382, %v4454
      %v4527 = vmax.f32 %v4383, %v4455
      %v4528 = vmax.f32 %v4384, %v4456
      %v4529 = vmax.f32 %v4385, %v4457
      %v4530 = vmax.f32 %v4386, %v4458
      %v4531 = vmax.f32 %v4387, %v4459
      %v4532 = vmax.f32 %v4388, %v4460
      %v4533 = vmax.f32 %v4389, %v4461
      %v4534 = vmax.f32 %v4390, %v4462
      %v4535 = vmax.f32 %v4391, %v4463
      %v4536 = vmax.f32 %v4392, %v4464
      %v4537 = vmax.f32 %v4393, %v4465
      %v4538 = vmax.f32 %v4394, %v4466
      %v4539 = vmax.f32 %v4395, %v4467
      %v4540 = vmax.f32 %v4396, %v4468
      %v4541 = vmax.f32 %v4397, %v4469
      %v4542 = vmax.f32 %v4398, %v4470
      %v4543 = vmax.f32 %v4399, %v4471
      %v4544 = vmax.f32 %v4400, %v4472
      %v4545 = vmax.f32 %v4401, %v4473
      %v4546 = vmax.f32 %v4402, %v4474
      %v4547 = vmax.f32 %v4403, %v4475
      %v4548 = vmax.f32 %v4404, %v4476
      %v4549 = vmax.f32 %v4405, %v4477
      %v4550 = vmax.f32 %v4406, %v4478
      %v4551 = vmax.f32 %v4407, %v4479
      %v4552 = vmax.f32 %v4408, %v4480
      %v4553 = vpack.c.bf16 %v4482, %v4481
      %v4554 = vpack.c.bf16 %v4484, %v4483
      %v4555 = vpack.c.bf16 %v4486, %v4485
      %v4556 = vpack.c.bf16 %v4488, %v4487
      %v4557 = vpack.c.bf16 %v4490, %v4489
      %v4558 = vpack.c.bf16 %v4492, %v4491
      %v4559 = vpack.c.bf16 %v4494, %v4493
      %v4560 = vpack.c.bf16 %v4496, %v4495
      %v4561 = vpack.c.bf16 %v4498, %v4497
      %v4562 = vpack.c.bf16 %v4500, %v4499
      %v4563 = vpack.c.bf16 %v4502, %v4501
      %v4564 = vpack.c.bf16 %v4504, %v4503
      %v4565 = vpack.c.bf16 %v4506, %v4505
      %v4566 = vpack.c.bf16 %v4508, %v4507
      %v4567 = vpack.c.bf16 %v4510, %v4509
      %v4568 = vpack.c.bf16 %v4512, %v4511
      %v4569 = vpack.c.bf16 %v4514, %v4513
      %v4570 = vpack.c.bf16 %v4516, %v4515
      %v4571 = vpack.c.bf16 %v4518, %v4517
      %v4572 = vpack.c.bf16 %v4520, %v4519
      %v4573 = vpack.c.bf16 %v4522, %v4521
      %v4574 = vpack.c.bf16 %v4524, %v4523
      %v4575 = vpack.c.bf16 %v4526, %v4525
      %v4576 = vpack.c.bf16 %v4528, %v4527
      %v4577 = vpack.c.bf16 %v4530, %v4529
      %v4578 = vpack.c.bf16 %v4532, %v4531
      %v4579 = vpack.c.bf16 %v4534, %v4533
      %v4580 = vpack.c.bf16 %v4536, %v4535
      %v4581 = vpack.c.bf16 %v4538, %v4537
      %v4582 = vpack.c.bf16 %v4540, %v4539
      %v4583 = vpack.c.bf16 %v4542, %v4541
      %v4584 = vpack.c.bf16 %v4544, %v4543
      %v4585 = vpack.c.bf16 %v4546, %v4545
      %v4586 = vpack.c.bf16 %v4548, %v4547
      %v4587 = vpack.c.bf16 %v4550, %v4549
      %v4588 = vpack.c.bf16 %v4552, %v4551
      %v4625 = vunpack.c.l.b16 %v4553
      %v4626 = vunpack.c.h.b16 %v4553
      %v4627 = vunpack.c.l.b16 %v4554
      %v4628 = vunpack.c.h.b16 %v4554
      %v4629 = vunpack.c.l.b16 %v4555
      %v4630 = vunpack.c.h.b16 %v4555
      %v4631 = vunpack.c.l.b16 %v4556
      %v4632 = vunpack.c.h.b16 %v4556
      %v4633 = vunpack.c.l.b16 %v4557
      %v4634 = vunpack.c.h.b16 %v4557
      %v4635 = vunpack.c.l.b16 %v4558
      %v4636 = vunpack.c.h.b16 %v4558
      %v4637 = vunpack.c.l.b16 %v4559
      %v4638 = vunpack.c.h.b16 %v4559
      %v4639 = vunpack.c.l.b16 %v4560
      %v4640 = vunpack.c.h.b16 %v4560
      %v4641 = vunpack.c.l.b16 %v4561
      %v4642 = vunpack.c.h.b16 %v4561
      %v4643 = vunpack.c.l.b16 %v4562
      %v4644 = vunpack.c.h.b16 %v4562
      %v4645 = vunpack.c.l.b16 %v4563
      %v4646 = vunpack.c.h.b16 %v4563
      %v4647 = vunpack.c.l.b16 %v4564
      %v4648 = vunpack.c.h.b16 %v4564
      %v4649 = vunpack.c.l.b16 %v4565
      %v4650 = vunpack.c.h.b16 %v4565
      %v4651 = vunpack.c.l.b16 %v4566
      %v4652 = vunpack.c.h.b16 %v4566
      %v4653 = vunpack.c.l.b16 %v4567
      %v4654 = vunpack.c.h.b16 %v4567
      %v4655 = vunpack.c.l.b16 %v4568
      %v4656 = vunpack.c.h.b16 %v4568
      %v4657 = vunpack.c.l.b16 %v4569
      %v4658 = vunpack.c.h.b16 %v4569
      %v4659 = vunpack.c.l.b16 %v4570
      %v4660 = vunpack.c.h.b16 %v4570
      %v4661 = vunpack.c.l.b16 %v4571
      %v4662 = vunpack.c.h.b16 %v4571
      %v4663 = vunpack.c.l.b16 %v4572
      %v4664 = vunpack.c.h.b16 %v4572
      %v4665 = vunpack.c.l.b16 %v4573
      %v4666 = vunpack.c.h.b16 %v4573
      %v4667 = vunpack.c.l.b16 %v4574
      %v4668 = vunpack.c.h.b16 %v4574
      %v4669 = vunpack.c.l.b16 %v4575
      %v4670 = vunpack.c.h.b16 %v4575
      %v4671 = vunpack.c.l.b16 %v4576
      %v4672 = vunpack.c.h.b16 %v4576
      %v4673 = vunpack.c.l.b16 %v4577
      %v4674 = vunpack.c.h.b16 %v4577
      %v4675 = vunpack.c.l.b16 %v4578
      %v4676 = vunpack.c.h.b16 %v4578
      %v4677 = vunpack.c.l.b16 %v4579
      %v4678 = vunpack.c.h.b16 %v4579
      %v4679 = vunpack.c.l.b16 %v4580
      %v4680 = vunpack.c.h.b16 %v4580
      %v4681 = vunpack.c.l.b16 %v4581
      %v4682 = vunpack.c.h.b16 %v4581
      %v4683 = vunpack.c.l.b16 %v4582
      %v4684 = vunpack.c.h.b16 %v4582
      %v4685 = vunpack.c.l.b16 %v4583
      %v4686 = vunpack.c.h.b16 %v4583
      %v4687 = vunpack.c.l.b16 %v4584
      %v4688 = vunpack.c.h.b16 %v4584
      %v4689 = vunpack.c.l.b16 %v4585
      %v4690 = vunpack.c.h.b16 %v4585
      %v4691 = vunpack.c.l.b16 %v4586
      %v4692 = vunpack.c.h.b16 %v4586
      %v4693 = vunpack.c.l.b16 %v4587
      %v4694 = vunpack.c.h.b16 %v4587
      %v4695 = vunpack.c.l.b16 %v4588
      %v4696 = vunpack.c.h.b16 %v4588
      %v4697 = vpack.c.b16 %v4625, %v4625
      %v4698 = vpack.c.b16 %v4626, %v4626
      %v4699 = vpack.c.b16 %v4627, %v4627
      %v4700 = vpack.c.b16 %v4628, %v4628
      %v4701 = vpack.c.b16 %v4629, %v4629
      %v4702 = vpack.c.b16 %v4630, %v4630
      %v4703 = vpack.c.b16 %v4631, %v4631
      %v4704 = vpack.c.b16 %v4632, %v4632
      %v4705 = vpack.c.b16 %v4633, %v4633
      %v4706 = vpack.c.b16 %v4634, %v4634
      %v4707 = vpack.c.b16 %v4635, %v4635
      %v4708 = vpack.c.b16 %v4636, %v4636
      %v4709 = vpack.c.b16 %v4637, %v4637
      %v4710 = vpack.c.b16 %v4638, %v4638
      %v4711 = vpack.c.b16 %v4639, %v4639
      %v4712 = vpack.c.b16 %v4640, %v4640
      %v4713 = vpack.c.b16 %v4641, %v4641
      %v4714 = vpack.c.b16 %v4642, %v4642
      %v4715 = vpack.c.b16 %v4643, %v4643
      %v4716 = vpack.c.b16 %v4644, %v4644
      %v4717 = vpack.c.b16 %v4645, %v4645
      %v4718 = vpack.c.b16 %v4646, %v4646
      %v4719 = vpack.c.b16 %v4647, %v4647
      %v4720 = vpack.c.b16 %v4648, %v4648
      %v4721 = vpack.c.b16 %v4649, %v4649
      %v4722 = vpack.c.b16 %v4650, %v4650
      %v4723 = vpack.c.b16 %v4651, %v4651
      %v4724 = vpack.c.b16 %v4652, %v4652
      %v4725 = vpack.c.b16 %v4653, %v4653
      %v4726 = vpack.c.b16 %v4654, %v4654
      %v4727 = vpack.c.b16 %v4655, %v4655
      %v4728 = vpack.c.b16 %v4656, %v4656
      %v4729 = vpack.c.b16 %v4657, %v4657
      %v4730 = vpack.c.b16 %v4658, %v4658
      %v4731 = vpack.c.b16 %v4659, %v4659
      %v4732 = vpack.c.b16 %v4660, %v4660
      %v4733 = vpack.c.b16 %v4661, %v4661
      %v4734 = vpack.c.b16 %v4662, %v4662
      %v4735 = vpack.c.b16 %v4663, %v4663
      %v4736 = vpack.c.b16 %v4664, %v4664
      %v4737 = vpack.c.b16 %v4665, %v4665
      %v4738 = vpack.c.b16 %v4666, %v4666
      %v4739 = vpack.c.b16 %v4667, %v4667
      %v4740 = vpack.c.b16 %v4668, %v4668
      %v4741 = vpack.c.b16 %v4669, %v4669
      %v4742 = vpack.c.b16 %v4670, %v4670
      %v4743 = vpack.c.b16 %v4671, %v4671
      %v4744 = vpack.c.b16 %v4672, %v4672
      %v4745 = vpack.c.b16 %v4673, %v4673
      %v4746 = vpack.c.b16 %v4674, %v4674
      %v4747 = vpack.c.b16 %v4675, %v4675
      %v4748 = vpack.c.b16 %v4676, %v4676
      %v4749 = vpack.c.b16 %v4677, %v4677
      %v4750 = vpack.c.b16 %v4678, %v4678
      %v4751 = vpack.c.b16 %v4679, %v4679
      %v4752 = vpack.c.b16 %v4680, %v4680
      %v4753 = vpack.c.b16 %v4681, %v4681
      %v4754 = vpack.c.b16 %v4682, %v4682
      %v4755 = vpack.c.b16 %v4683, %v4683
      %v4756 = vpack.c.b16 %v4684, %v4684
      %v4757 = vpack.c.b16 %v4685, %v4685
      %v4758 = vpack.c.b16 %v4686, %v4686
      %v4759 = vpack.c.b16 %v4687, %v4687
      %v4760 = vpack.c.b16 %v4688, %v4688
      %v4761 = vpack.c.b16 %v4689, %v4689
      %v4762 = vpack.c.b16 %v4690, %v4690
      %v4763 = vpack.c.b16 %v4691, %v4691
      %v4764 = vpack.c.b16 %v4692, %v4692
      %v4765 = vpack.c.b16 %v4693, %v4693
      %v4766 = vpack.c.b16 %v4694, %v4694
      %v4767 = vpack.c.b16 %v4695, %v4695
      %v4768 = vpack.c.b16 %v4696, %v4696
      %4841 = vst [vmem:[%s231] sm:$0xf] %v4697
      %4842 = vst [vmem:[%s231 + $0x4] sm:$0xf] %v4698
      %4843 = vst [vmem:[%s231 + $0x8] sm:$0xf] %v4699
      %4844 = vst [vmem:[%s231 + $0xc] sm:$0xf] %v4700
      %4845 = vst [vmem:[%s231 + $0x10] sm:$0xf] %v4701
      %4846 = vst [vmem:[%s231 + $0x14] sm:$0xf] %v4702
      %4847 = vst [vmem:[%s231 + $0x18] sm:$0xf] %v4703
      %4848 = vst [vmem:[%s231 + $0x1c] sm:$0xf] %v4704
      %4849 = vst [vmem:[%s231 + $0x20] sm:$0xf] %v4705
      %4850 = vst [vmem:[%s231 + $0x24] sm:$0xf] %v4706
      %4851 = vst [vmem:[%s231 + $0x28] sm:$0xf] %v4707
      %4852 = vst [vmem:[%s231 + $0x2c] sm:$0xf] %v4708
      %4853 = vst [vmem:[%s231 + $0x30] sm:$0xf] %v4709
      %4854 = vst [vmem:[%s231 + $0x34] sm:$0xf] %v4710
      %4855 = vst [vmem:[%s231 + $0x38] sm:$0xf] %v4711
      %4856 = vst [vmem:[%s231 + $0x3c] sm:$0xf] %v4712
      %4857 = vst [vmem:[%s231 + $0x40] sm:$0xf] %v4713
      %4858 = vst [vmem:[%s231 + $0x44] sm:$0xf] %v4714
      %4859 = vst [vmem:[%s231 + $0x48] sm:$0xf] %v4715
      %4860 = vst [vmem:[%s231 + $0x4c] sm:$0xf] %v4716
      %4861 = vst [vmem:[%s231 + $0x50] sm:$0xf] %v4717
      %4862 = vst [vmem:[%s231 + $0x54] sm:$0xf] %v4718
      %4863 = vst [vmem:[%s231 + $0x58] sm:$0xf] %v4719
      %4864 = vst [vmem:[%s231 + $0x5c] sm:$0xf] %v4720
      %4865 = vst [vmem:[%s231 + $0x60] sm:$0xf] %v4721
      %4866 = vst [vmem:[%s231 + $0x64] sm:$0xf] %v4722
      %4867 = vst [vmem:[%s231 + $0x68] sm:$0xf] %v4723
      %4868 = vst [vmem:[%s231 + $0x6c] sm:$0xf] %v4724
      %4869 = vst [vmem:[%s231 + $0x70] sm:$0xf] %v4725
      %4870 = vst [vmem:[%s231 + $0x74] sm:$0xf] %v4726
      %4871 = vst [vmem:[%s231 + $0x78] sm:$0xf] %v4727
      %4872 = vst [vmem:[%s231 + $0x7c] sm:$0xf] %v4728
      %4873 = vst [vmem:[%s231 + $0x80] sm:$0xf] %v4729
      %4874 = vst [vmem:[%s231 + $0x84] sm:$0xf] %v4730
      %4875 = vst [vmem:[%s231 + $0x88] sm:$0xf] %v4731
      %4876 = vst [vmem:[%s231 + $0x8c] sm:$0xf] %v4732
      %4877 = vst [vmem:[%s231 + $0x90] sm:$0xf] %v4733
      %4878 = vst [vmem:[%s231 + $0x94] sm:$0xf] %v4734
      %4879 = vst [vmem:[%s231 + $0x98] sm:$0xf] %v4735
      %4880 = vst [vmem:[%s231 + $0x9c] sm:$0xf] %v4736
      %4881 = vst [vmem:[%s231 + $0xa0] sm:$0xf] %v4737
      %4882 = vst [vmem:[%s231 + $0xa4] sm:$0xf] %v4738
      %4883 = vst [vmem:[%s231 + $0xa8] sm:$0xf] %v4739
      %4884 = vst [vmem:[%s231 + $0xac] sm:$0xf] %v4740
      %4885 = vst [vmem:[%s231 + $0xb0] sm:$0xf] %v4741
      %4886 = vst [vmem:[%s231 + $0xb4] sm:$0xf] %v4742
      %4887 = vst [vmem:[%s231 + $0xb8] sm:$0xf] %v4743
      %4888 = vst [vmem:[%s231 + $0xbc] sm:$0xf] %v4744
      %4889 = vst [vmem:[%s231 + $0xc0] sm:$0xf] %v4745
      %4890 = vst [vmem:[%s231 + $0xc4] sm:$0xf] %v4746
      %4891 = vst [vmem:[%s231 + $0xc8] sm:$0xf] %v4747
      %4892 = vst [vmem:[%s231 + $0xcc] sm:$0xf] %v4748
      %4893 = vst [vmem:[%s231 + $0xd0] sm:$0xf] %v4749
      %4894 = vst [vmem:[%s231 + $0xd4] sm:$0xf] %v4750
      %4895 = vst [vmem:[%s231 + $0xd8] sm:$0xf] %v4751
      %4896 = vst [vmem:[%s231 + $0xdc] sm:$0xf] %v4752
      %4897 = vst [vmem:[%s231 + $0xe0] sm:$0xf] %v4753
      %4898 = vst [vmem:[%s231 + $0xe4] sm:$0xf] %v4754
      %4899 = vst [vmem:[%s231 + $0xe8] sm:$0xf] %v4755
      %4900 = vst [vmem:[%s231 + $0xec] sm:$0xf] %v4756
      %4901 = vst [vmem:[%s231 + $0xf0] sm:$0xf] %v4757
      %4902 = vst [vmem:[%s231 + $0xf4] sm:$0xf] %v4758
      %4903 = vst [vmem:[%s231 + $0xf8] sm:$0xf] %v4759
      %4904 = vst [vmem:[%s231 + $0xfc] sm:$0xf] %v4760
      %4905 = vst [vmem:[%s231 + $0x100] sm:$0xf] %v4761
      %4906 = vst [vmem:[%s231 + $0x104] sm:$0xf] %v4762
      %4907 = vst [vmem:[%s231 + $0x108] sm:$0xf] %v4763
      %4908 = vst [vmem:[%s231 + $0x10c] sm:$0xf] %v4764
      %4909 = vst [vmem:[%s231 + $0x110] sm:$0xf] %v4765
      %4910 = vst [vmem:[%s231 + $0x114] sm:$0xf] %v4766
      %4911 = vst [vmem:[%s231 + $0x118] sm:$0xf] %v4767
      %4912 = vst [vmem:[%s231 + $0x11c] sm:$0xf] %v4768
      %s4913 = smul.u32 4, %s16
      %p4914 = scmp.lt.s32.totalorder %s4913, 7
      %s4915 = scalar_select %p4914, %s4913, 7
      %s4916 = smul.addr %s4915, 18
      %s4917 = smul.addr %s4916, 4
      %s4918 = scalar_lea.vmem %s5, %s4917
      // Predicated region
      $region41: #{forward.3} parent=39 // pred_check
        %p4919 = pneg %p144
      $region42: #{forward.3} parent=39 // pred_check_branch
        %4921 = sbr.rel (%p4919) target = $region44
      $region43: #{forward.3} parent=39 // pred_region
        %s4922 = smul.u32 4, %s16
      $region44: #{forward.3} parent=39 // pred_fallthru
        _
    $region40: #{forward.3} parent=5 // pred_fallthru
      _
    %p4923 = scmp.le.s32.totalorder 2, %s11
    // Predicated region
    $region45: #{forward.3} parent=5 // pred_check
      %p4924 = pneg %p4923
    $region46: #{forward.3} parent=5 // pred_check_branch
      %4926 = sbr.rel (%p4924) target = $region48
    $region47: #{forward.3} parent=5 // pred_region
      %s4927 = ssub.s32 %s11, 2
      // Predicated region
      $region49: #{forward.3} parent=47 // pred_check
        %p4928 = pneg %p150
      $region50: #{forward.3} parent=47 // pred_check_branch
        %4930 = sbr.rel (%p4928) target = $region52
      $region51: #{forward.3} parent=47 // pred_region
        %s4931 = smul.u32 4, %s17
        %p4932 = scmp.lt.s32.totalorder %s4931, 7
        %s4933 = scalar_select %p4932, %s4931, 7
        %s4934 = smul.addr %s4933, 18
        %s4935 = smul.addr %s4934, 4
        %s4936 = scalar_lea.vmem %s5, %s4935
      $region52: #{forward.3} parent=47 // pred_fallthru
        _
    $region48: #{forward.3} parent=5 // pred_fallthru
      _
  $region6: #{forward.3} parent=0 // loop_footer
    %s15 = sadd.s32 1, %s11
  $region7: #{forward.3} parent=0 // loop_footer_branch
    %10 = sbr.rel target = $region3
  $region8: #{forward.3} parent=0 // loop_exit
    _

// kernel: forward.4
$region0: #{forward.4}
  #allocation0 [shape = 'u32[]', space=smem, size = 0x4, offset = 0x4, fixed_abs, tag = 'smem constant byte address 0x4 - core index']
  #allocation1 [shape = 'u32[144,128]{1,0:T(1,128)}', space=vmem, size = 0x12000, scoped, tag = 'internal scratch']
  %s0 = inlined_call_operand.vmem [shape: bf16[8,64,512], index: 0, kind: input, shape index: {}]
  %s1 = inlined_call_operand.vmem [shape: bf16[512,128], index: 1, kind: input, shape index: {}]
  %s2 = inlined_call_operand.vmem [shape: f32[1,128], index: 2, kind: input, shape index: {}]
  %s3 = inlined_call_operand.vmem [shape: f32[1,128], index: 3, kind: input, shape index: {}]
  %s4 = inlined_call_operand.vmem [shape: f32[1,128], index: 4, kind: input, shape index: {}]
  %s5 = inlined_call_operand.vmem [shape: bf16[8,16,128], index: 5, kind: output, shape index: {}]
  %s6 = sld [smem:[#allocation0]]
  $region53: #{forward.4} parent=0
    _
  %s8 = ssub.s32 1, %s6
  %s9 = scalar_select 0, %s8, %s6
  loop: start=0, step=1, limit=4
  $region2: #{forward.4} parent=0 // loop_pre_header
    _
  $region3: #{forward.4} parent=0 // loop_header
    %s11 = sphi 0, %s15
    %p12 = scmp.ge.s32.totalorder %s11, 4
    %s21 = sphi 0, %s23
    %s24 = sphi 0, %s21
    %s25 = sphi 0, %s24
    %s41 = sphi 0, %s25
    %s45 = sphi 0, %s45
    %s47 = sphi 0, %s45
    %s48 = sphi 0, %s47
    %s62 = sphi 0, %s48
    %s66 = sphi 0, %s66
    %s68 = sphi 0, %s66
    %s69 = sphi 0, %s68
    %s83 = sphi 0, %s69
    %s87 = sphi 0, %s87
    %s89 = sphi 0, %s87
    %s90 = sphi 0, %s89
    %s104 = sphi 0, %s90
    %s108 = sphi 0, %s108
    %s110 = sphi 0, %s108
    %s111 = sphi 0, %s110
    %s125 = sphi 0, %s111
    %s131 = sphi 0, %s133
    %s134 = sphi 0, %s131
    %s135 = sphi 0, %s134
    %s151 = sphi 0, %s135
  $region4: #{forward.4} parent=0 // loop_header_branch
    %14 = sbr.rel (%p12) target = $region8
  $region5: #{forward.4} parent=0 // loop_body
    %s16 = ssub.s32 %s11, 1
    %s17 = ssub.s32 %s11, 2
    %s18 = sadd.s32 %s11, 1
    %s19 = ssub.s32 %s11, %s18
    %p20 = scmp.eq.s32.totalorder %s19, 0
    %s22 = sadd.s32 %s21, 1
    %s23 = scalar_select %p20, %s21, %s22
    %p26 = pneg %p20
    %p27 = scmp.eq.s32.totalorder %s11, 1
    %p28 = por %p26, %p27
    %p29 = scmp.ne.s32.totalorder %s21, %s24
    %p30 = scmp.eq.s32.totalorder %s11, 0
    %p31 = por %p29, %p30
    %p32 = scmp.ne.s32.totalorder %s21, %s24
    %p33 = scmp.eq.s32.totalorder %s16, 1
    %p34 = por %p32, %p33
    %p35 = scmp.ne.s32.totalorder %s24, %s25
    %p36 = scmp.eq.s32.totalorder %s16, 0
    %p37 = por %p35, %p36
    %p38 = scmp.ne.s32.totalorder %s24, %s25
    %p39 = scmp.eq.s32.totalorder %s17, 1
    %p40 = por %p38, %p39
    %p42 = scmp.ne.s32.totalorder %s25, %s41
    %p43 = scmp.eq.s32.totalorder %s17, 0
    %p44 = por %p42, %p43
    %s46 = sadd.s32 %s45, 1
    %p49 = scmp.eq.s32.totalorder %s11, 1
    %p50 = scmp.ne.s32.totalorder %s45, %s47
    %p51 = scmp.eq.s32.totalorder %s11, 0
    %p52 = por %p50, %p51
    %p53 = scmp.ne.s32.totalorder %s45, %s47
    %p54 = scmp.eq.s32.totalorder %s16, 1
    %p55 = por %p53, %p54
    %p56 = scmp.ne.s32.totalorder %s47, %s48
    %p57 = scmp.eq.s32.totalorder %s16, 0
    %p58 = por %p56, %p57
    %p59 = scmp.ne.s32.totalorder %s47, %s48
    %p60 = scmp.eq.s32.totalorder %s17, 1
    %p61 = por %p59, %p60
    %p63 = scmp.ne.s32.totalorder %s48, %s62
    %p64 = scmp.eq.s32.totalorder %s17, 0
    %p65 = por %p63, %p64
    %s67 = sadd.s32 %s66, 1
    %p70 = scmp.eq.s32.totalorder %s11, 1
    %p71 = scmp.ne.s32.totalorder %s66, %s68
    %p72 = scmp.eq.s32.totalorder %s11, 0
    %p73 = por %p71, %p72
    %p74 = scmp.ne.s32.totalorder %s66, %s68
    %p75 = scmp.eq.s32.totalorder %s16, 1
    %p76 = por %p74, %p75
    %p77 = scmp.ne.s32.totalorder %s68, %s69
    %p78 = scmp.eq.s32.totalorder %s16, 0
    %p79 = por %p77, %p78
    %p80 = scmp.ne.s32.totalorder %s68, %s69
    %p81 = scmp.eq.s32.totalorder %s17, 1
    %p82 = por %p80, %p81
    %p84 = scmp.ne.s32.totalorder %s69, %s83
    %p85 = scmp.eq.s32.totalorder %s17, 0
    %p86 = por %p84, %p85
    %s88 = sadd.s32 %s87, 1
    %p91 = scmp.eq.s32.totalorder %s11, 1
    %p92 = scmp.ne.s32.totalorder %s87, %s89
    %p93 = scmp.eq.s32.totalorder %s11, 0
    %p94 = por %p92, %p93
    %p95 = scmp.ne.s32.totalorder %s87, %s89
    %p96 = scmp.eq.s32.totalorder %s16, 1
    %p97 = por %p95, %p96
    %p98 = scmp.ne.s32.totalorder %s89, %s90
    %p99 = scmp.eq.s32.totalorder %s16, 0
    %p100 = por %p98, %p99
    %p101 = scmp.ne.s32.totalorder %s89, %s90
    %p102 = scmp.eq.s32.totalorder %s17, 1
    %p103 = por %p101, %p102
    %p105 = scmp.ne.s32.totalorder %s90, %s104
    %p106 = scmp.eq.s32.totalorder %s17, 0
    %p107 = por %p105, %p106
    %s109 = sadd.s32 %s108, 1
    %p112 = scmp.eq.s32.totalorder %s11, 1
    %p113 = scmp.ne.s32.totalorder %s108, %s110
    %p114 = scmp.eq.s32.totalorder %s11, 0
    %p115 = por %p113, %p114
    %p116 = scmp.ne.s32.totalorder %s108, %s110
    %p117 = scmp.eq.s32.totalorder %s16, 1
    %p118 = por %p116, %p117
    %p119 = scmp.ne.s32.totalorder %s110, %s111
    %p120 = scmp.eq.s32.totalorder %s16, 0
    %p121 = por %p119, %p120
    %p122 = scmp.ne.s32.totalorder %s110, %s111
    %p123 = scmp.eq.s32.totalorder %s17, 1
    %p124 = por %p122, %p123
    %p126 = scmp.ne.s32.totalorder %s111, %s125
    %p127 = scmp.eq.s32.totalorder %s17, 0
    %p128 = por %p126, %p127
    %s129 = ssub.s32 %s11, %s18
    %p130 = scmp.eq.s32.totalorder %s129, 0
    %s132 = sadd.s32 %s131, 1
    %s133 = scalar_select %p130, %s131, %s132
    %p136 = pneg %p130
    %p137 = scmp.eq.s32.totalorder %s11, 1
    %p138 = por %p136, %p137
    %p139 = scmp.ne.s32.totalorder %s131, %s134
    %p140 = scmp.eq.s32.totalorder %s11, 0
    %p141 = por %p139, %p140
    %p142 = scmp.ne.s32.totalorder %s131, %s134
    %p143 = scmp.eq.s32.totalorder %s16, 1
    %p144 = por %p142, %p143
    %p145 = scmp.ne.s32.totalorder %s134, %s135
    %p146 = scmp.eq.s32.totalorder %s16, 0
    %p147 = por %p145, %p146
    %p148 = scmp.ne.s32.totalorder %s134, %s135
    %p149 = scmp.eq.s32.totalorder %s17, 1
    %p150 = por %p148, %p149
    %p152 = scmp.ne.s32.totalorder %s135, %s151
    %p153 = scmp.eq.s32.totalorder %s17, 0
    %p154 = por %p152, %p153
    %p155 = scmp.le.s32.totalorder 1, %s11
    %p156 = scmp.lt.s32.totalorder %s11, 3
    %p157 = pnand %p155, %p156
    %p158 = pneg %p157
    // Predicated region
    $region9: #{forward.4} parent=5 // pred_check
      _
    $region10: #{forward.4} parent=5 // pred_check_branch
      %160 = sbr.rel (%p157) target = $region12
    $region11: #{forward.4} parent=5 // pred_region
      %s161 = ssub.s32 %s11, 1
      // Predicated region
      $region13: #{forward.4} parent=11 // pred_check
        %p162 = pneg %p58
      $region14: #{forward.4} parent=11 // pred_check_branch
        %164 = sbr.rel (%p162) target = $region16
      $region15: #{forward.4} parent=11 // pred_region
        _
      $region16: #{forward.4} parent=11 // pred_fallthru
        _
      // Predicated region
      $region17: #{forward.4} parent=11 // pred_check
        %p165 = pneg %p79
      $region18: #{forward.4} parent=11 // pred_check_branch
        %167 = sbr.rel (%p165) target = $region20
      $region19: #{forward.4} parent=11 // pred_region
        _
      $region20: #{forward.4} parent=11 // pred_fallthru
        _
      // Predicated region
      $region21: #{forward.4} parent=11 // pred_check
        %p168 = pneg %p100
      $region22: #{forward.4} parent=11 // pred_check_branch
        %170 = sbr.rel (%p168) target = $region24
      $region23: #{forward.4} parent=11 // pred_region
        _
      $region24: #{forward.4} parent=11 // pred_fallthru
        _
      // Predicated region
      $region25: #{forward.4} parent=11 // pred_check
        %p171 = pneg %p121
      $region26: #{forward.4} parent=11 // pred_check_branch
        %173 = sbr.rel (%p171) target = $region28
      $region27: #{forward.4} parent=11 // pred_region
        _
      $region28: #{forward.4} parent=11 // pred_fallthru
        _
    $region12: #{forward.4} parent=5 // pred_fallthru
      _
    %p174 = scmp.lt.s32.totalorder %s11, 2
    // Predicated region
    $region29: #{forward.4} parent=5 // pred_check
      %p175 = pneg %p174
    $region30: #{forward.4} parent=5 // pred_check_branch
      %177 = sbr.rel (%p175) target = $region32
    $region31: #{forward.4} parent=5 // pred_region
      // Predicated region
      $region33: #{forward.4} parent=31 // pred_check
        %p178 = pneg %p31
      $region34: #{forward.4} parent=31 // pred_check_branch
        %180 = sbr.rel (%p178) target = $region36
      $region35: #{forward.4} parent=31 // pred_region
        %s181 = smul.u32 4, %s11
        %p182 = scmp.lt.s32.totalorder %s181, 7
        %s183 = scalar_select %p182, %s181, 7
        %s184 = smul.addr %s183, 32
        %s185 = smul.addr %s184, 4
        %s186 = scalar_lea.vmem %s0, %s185
        %s187 = smul.u32 4, %s11
      $region36: #{forward.4} parent=31 // pred_fallthru
        _
    $region32: #{forward.4} parent=5 // pred_fallthru
      _
    %p188 = scmp.le.s32.totalorder 1, %s11
    %p189 = scmp.lt.s32.totalorder %s11, 3
    %p190 = pnand %p188, %p189
    %p191 = pneg %p190
    // Predicated region
    $region37: #{forward.4} parent=5 // pred_check
      _
    $region38: #{forward.4} parent=5 // pred_check_branch
      %193 = sbr.rel (%p190) target = $region40
    $region39: #{forward.4} parent=5 // pred_region
      %s194 = ssub.s32 %s11, 1
      %s195 = smul.u32 4, %s16
      %p196 = scmp.lt.s32.totalorder %s195, 7
      %s197 = scalar_select %p196, %s195, 7
      %s198 = smul.addr %s197, 32
      %s199 = smul.addr %s198, 4
      %s200 = scalar_lea.vmem %s0, %s199
      %p201 = pneg %p37
      %p202 = pneg %p34
      %p203 = pneg %p58
      %p204 = pneg %p55
      %p205 = pneg %p79
      %p206 = pneg %p76
      %p207 = pneg %p100
      %p208 = pneg %p97
      %p209 = pneg %p121
      %p210 = pneg %p118
      %p211 = pneg %p147
      %p212 = pneg %p144
      %s213 = smul.u32 4, %s16
      %p214 = scmp.lt.s32.totalorder %s213, 7
      %s215 = scalar_select %p214, %s213, 7
      %s216 = smul.addr %s215, 2
      %s217 = smul.addr %s216, 4
      %s218 = scalar_lea.vmem %s5, %s217
      %s219 = smul.u32 4, %s16
      %p220 = scmp.lt.s32.totalorder %s219, 7
      %s221 = scalar_select %p220, %s219, 7
      %s222 = smul.addr %s221, 32
      %s223 = smul.addr %s222, 4
      %s224 = scalar_lea.vmem %s0, %s223
      %s225 = smul.u32 4, %s16
      %s226 = smul.u32 4, %s16
      %p227 = scmp.lt.s32.totalorder %s226, 7
      %s228 = scalar_select %p227, %s226, 7
      %s229 = smul.addr %s228, 2
      %s230 = smul.addr %s229, 4
      %s231 = scalar_lea.vmem %s5, %s230
      %s232 = smul.u32 4, %s16
      %v234 = vld [vmem:[%s224] sm:$0xff]
      %v235 = vld [vmem:[%s224 + $0x8] sm:$0xff]
      %v236 = vld [vmem:[%s224 + $0x10] sm:$0xff]
      %v237 = vld [vmem:[%s224 + $0x18] sm:$0xff]
      %v238 = vld [vmem:[%s224 + $0x20] sm:$0xff]
      %v239 = vld [vmem:[%s224 + $0x28] sm:$0xff]
      %v240 = vld [vmem:[%s224 + $0x30] sm:$0xff]
      %v241 = vld [vmem:[%s224 + $0x38] sm:$0xff]
      %v242 = vld [vmem:[%s224 + $0x40] sm:$0xff]
      %v243 = vld [vmem:[%s224 + $0x48] sm:$0xff]
      %v244 = vld [vmem:[%s224 + $0x50] sm:$0xff]
      %v245 = vld [vmem:[%s224 + $0x58] sm:$0xff]
      %v246 = vld [vmem:[%s224 + $0x60] sm:$0xff]
      %v247 = vld [vmem:[%s224 + $0x68] sm:$0xff]
      %v248 = vld [vmem:[%s224 + $0x70] sm:$0xff]
      %v249 = vld [vmem:[%s224 + $0x78] sm:$0xff]
      %v250 = vld [vmem:[%s224 + $0x80] sm:$0xff]
      %v251 = vld [vmem:[%s224 + $0x88] sm:$0xff]
      %v252 = vld [vmem:[%s224 + $0x90] sm:$0xff]
      %v253 = vld [vmem:[%s224 + $0x98] sm:$0xff]
      %v254 = vld [vmem:[%s224 + $0xa0] sm:$0xff]
      %v255 = vld [vmem:[%s224 + $0xa8] sm:$0xff]
      %v256 = vld [vmem:[%s224 + $0xb0] sm:$0xff]
      %v257 = vld [vmem:[%s224 + $0xb8] sm:$0xff]
      %v258 = vld [vmem:[%s224 + $0xc0] sm:$0xff]
      %v259 = vld [vmem:[%s224 + $0xc8] sm:$0xff]
      %v260 = vld [vmem:[%s224 + $0xd0] sm:$0xff]
      %v261 = vld [vmem:[%s224 + $0xd8] sm:$0xff]
      %v262 = vld [vmem:[%s224 + $0xe0] sm:$0xff]
      %v263 = vld [vmem:[%s224 + $0xe8] sm:$0xff]
      %v264 = vld [vmem:[%s224 + $0xf0] sm:$0xff]
      %v265 = vld [vmem:[%s224 + $0xf8] sm:$0xff]
      %v266 = vld [vmem:[%s224 + $0x100] sm:$0xff]
      %v267 = vld [vmem:[%s224 + $0x108] sm:$0xff]
      %v268 = vld [vmem:[%s224 + $0x110] sm:$0xff]
      %v269 = vld [vmem:[%s224 + $0x118] sm:$0xff]
      %v270 = vld [vmem:[%s224 + $0x120] sm:$0xff]
      %v271 = vld [vmem:[%s224 + $0x128] sm:$0xff]
      %v272 = vld [vmem:[%s224 + $0x130] sm:$0xff]
      %v273 = vld [vmem:[%s224 + $0x138] sm:$0xff]
      %v274 = vld [vmem:[%s224 + $0x140] sm:$0xff]
      %v275 = vld [vmem:[%s224 + $0x148] sm:$0xff]
      %v276 = vld [vmem:[%s224 + $0x150] sm:$0xff]
      %v277 = vld [vmem:[%s224 + $0x158] sm:$0xff]
      %v278 = vld [vmem:[%s224 + $0x160] sm:$0xff]
      %v279 = vld [vmem:[%s224 + $0x168] sm:$0xff]
      %v280 = vld [vmem:[%s224 + $0x170] sm:$0xff]
      %v281 = vld [vmem:[%s224 + $0x178] sm:$0xff]
      %v282 = vld [vmem:[%s224 + $0x180] sm:$0xff]
      %v283 = vld [vmem:[%s224 + $0x188] sm:$0xff]
      %v284 = vld [vmem:[%s224 + $0x190] sm:$0xff]
      %v285 = vld [vmem:[%s224 + $0x198] sm:$0xff]
      %v286 = vld [vmem:[%s224 + $0x1a0] sm:$0xff]
      %v287 = vld [vmem:[%s224 + $0x1a8] sm:$0xff]
      %v288 = vld [vmem:[%s224 + $0x1b0] sm:$0xff]
      %v289 = vld [vmem:[%s224 + $0x1b8] sm:$0xff]
      %v290 = vld [vmem:[%s224 + $0x1c0] sm:$0xff]
      %v291 = vld [vmem:[%s224 + $0x1c8] sm:$0xff]
      %v292 = vld [vmem:[%s224 + $0x1d0] sm:$0xff]
      %v293 = vld [vmem:[%s224 + $0x1d8] sm:$0xff]
      %v294 = vld [vmem:[%s224 + $0x1e0] sm:$0xff]
      %v295 = vld [vmem:[%s224 + $0x1e8] sm:$0xff]
      %v296 = vld [vmem:[%s224 + $0x1f0] sm:$0xff]
      %v297 = vld [vmem:[%s224 + $0x1f8] sm:$0xff]
      %v298 = vld [vmem:[%s1] sm:$0xf]
      %v299 = vld [vmem:[%s1 + $0x4] sm:$0xf]
      %v300 = vld [vmem:[%s1 + $0x8] sm:$0xf]
      %v301 = vld [vmem:[%s1 + $0xc] sm:$0xf]
      %v302 = vld [vmem:[%s1 + $0x10] sm:$0xf]
      %v303 = vld [vmem:[%s1 + $0x14] sm:$0xf]
      %v304 = vld [vmem:[%s1 + $0x18] sm:$0xf]
      %v305 = vld [vmem:[%s1 + $0x1c] sm:$0xf]
      %v306 = vld [vmem:[%s1 + $0x20] sm:$0xf]
      %v307 = vld [vmem:[%s1 + $0x24] sm:$0xf]
      %v308 = vld [vmem:[%s1 + $0x28] sm:$0xf]
      %v309 = vld [vmem:[%s1 + $0x2c] sm:$0xf]
      %v310 = vld [vmem:[%s1 + $0x30] sm:$0xf]
      %v311 = vld [vmem:[%s1 + $0x34] sm:$0xf]
      %v312 = vld [vmem:[%s1 + $0x38] sm:$0xf]
      %v313 = vld [vmem:[%s1 + $0x3c] sm:$0xf]
      %v314 = vld [vmem:[%s1 + $0x40] sm:$0xf]
      %v315 = vld [vmem:[%s1 + $0x44] sm:$0xf]
      %v316 = vld [vmem:[%s1 + $0x48] sm:$0xf]
      %v317 = vld [vmem:[%s1 + $0x4c] sm:$0xf]
      %v318 = vld [vmem:[%s1 + $0x50] sm:$0xf]
      %v319 = vld [vmem:[%s1 + $0x54] sm:$0xf]
      %v320 = vld [vmem:[%s1 + $0x58] sm:$0xf]
      %v321 = vld [vmem:[%s1 + $0x5c] sm:$0xf]
      %v322 = vld [vmem:[%s1 + $0x60] sm:$0xf]
      %v323 = vld [vmem:[%s1 + $0x64] sm:$0xf]
      %v324 = vld [vmem:[%s1 + $0x68] sm:$0xf]
      %v325 = vld [vmem:[%s1 + $0x6c] sm:$0xf]
      %v326 = vld [vmem:[%s1 + $0x70] sm:$0xf]
      %v327 = vld [vmem:[%s1 + $0x74] sm:$0xf]
      %v328 = vld [vmem:[%s1 + $0x78] sm:$0xf]
      %v329 = vld [vmem:[%s1 + $0x7c] sm:$0xf]
      %v330 = vld [vmem:[%s1 + $0x80] sm:$0xf]
      %v331 = vld [vmem:[%s1 + $0x84] sm:$0xf]
      %v332 = vld [vmem:[%s1 + $0x88] sm:$0xf]
      %v333 = vld [vmem:[%s1 + $0x8c] sm:$0xf]
      %v334 = vld [vmem:[%s1 + $0x90] sm:$0xf]
      %v335 = vld [vmem:[%s1 + $0x94] sm:$0xf]
      %v336 = vld [vmem:[%s1 + $0x98] sm:$0xf]
      %v337 = vld [vmem:[%s1 + $0x9c] sm:$0xf]
      %v338 = vld [vmem:[%s1 + $0xa0] sm:$0xf]
      %v339 = vld [vmem:[%s1 + $0xa4] sm:$0xf]
      %v340 = vld [vmem:[%s1 + $0xa8] sm:$0xf]
      %v341 = vld [vmem:[%s1 + $0xac] sm:$0xf]
      %v342 = vld [vmem:[%s1 + $0xb0] sm:$0xf]
      %v343 = vld [vmem:[%s1 + $0xb4] sm:$0xf]
      %v344 = vld [vmem:[%s1 + $0xb8] sm:$0xf]
      %v345 = vld [vmem:[%s1 + $0xbc] sm:$0xf]
      %v346 = vld [vmem:[%s1 + $0xc0] sm:$0xf]
      %v347 = vld [vmem:[%s1 + $0xc4] sm:$0xf]
      %v348 = vld [vmem:[%s1 + $0xc8] sm:$0xf]
      %v349 = vld [vmem:[%s1 + $0xcc] sm:$0xf]
      %v350 = vld [vmem:[%s1 + $0xd0] sm:$0xf]
      %v351 = vld [vmem:[%s1 + $0xd4] sm:$0xf]
      %v352 = vld [vmem:[%s1 + $0xd8] sm:$0xf]
      %v353 = vld [vmem:[%s1 + $0xdc] sm:$0xf]
      %v354 = vld [vmem:[%s1 + $0xe0] sm:$0xf]
      %v355 = vld [vmem:[%s1 + $0xe4] sm:$0xf]
      %v356 = vld [vmem:[%s1 + $0xe8] sm:$0xf]
      %v357 = vld [vmem:[%s1 + $0xec] sm:$0xf]
      %v358 = vld [vmem:[%s1 + $0xf0] sm:$0xf]
      %v359 = vld [vmem:[%s1 + $0xf4] sm:$0xf]
      %v360 = vld [vmem:[%s1 + $0xf8] sm:$0xf]
      %v361 = vld [vmem:[%s1 + $0xfc] sm:$0xf]
      %v426 = vunpack.c.l.b16 %v234
      %v427 = vunpack.c.h.b16 %v234
      %v428 = vunpack.c.l.b16 %v235
      %v429 = vunpack.c.h.b16 %v235
      %v430 = vunpack.c.l.b16 %v236
      %v431 = vunpack.c.h.b16 %v236
      %v432 = vunpack.c.l.b16 %v237
      %v433 = vunpack.c.h.b16 %v237
      %v434 = vunpack.c.l.b16 %v238
      %v435 = vunpack.c.h.b16 %v238
      %v436 = vunpack.c.l.b16 %v239
      %v437 = vunpack.c.h.b16 %v239
      %v438 = vunpack.c.l.b16 %v240
      %v439 = vunpack.c.h.b16 %v240
      %v440 = vunpack.c.l.b16 %v241
      %v441 = vunpack.c.h.b16 %v241
      %v442 = vunpack.c.l.b16 %v242
      %v443 = vunpack.c.h.b16 %v242
      %v444 = vunpack.c.l.b16 %v243
      %v445 = vunpack.c.h.b16 %v243
      %v446 = vunpack.c.l.b16 %v244
      %v447 = vunpack.c.h.b16 %v244
      %v448 = vunpack.c.l.b16 %v245
      %v449 = vunpack.c.h.b16 %v245
      %v450 = vunpack.c.l.b16 %v246
      %v451 = vunpack.c.h.b16 %v246
      %v452 = vunpack.c.l.b16 %v247
      %v453 = vunpack.c.h.b16 %v247
      %v454 = vunpack.c.l.b16 %v248
      %v455 = vunpack.c.h.b16 %v248
      %v456 = vunpack.c.l.b16 %v249
      %v457 = vunpack.c.h.b16 %v249
      %v458 = vunpack.c.l.b16 %v250
      %v459 = vunpack.c.h.b16 %v250
      %v460 = vunpack.c.l.b16 %v251
      %v461 = vunpack.c.h.b16 %v251
      %v462 = vunpack.c.l.b16 %v252
      %v463 = vunpack.c.h.b16 %v252
      %v464 = vunpack.c.l.b16 %v253
      %v465 = vunpack.c.h.b16 %v253
      %v466 = vunpack.c.l.b16 %v254
      %v467 = vunpack.c.h.b16 %v254
      %v468 = vunpack.c.l.b16 %v255
      %v469 = vunpack.c.h.b16 %v255
      %v470 = vunpack.c.l.b16 %v256
      %v471 = vunpack.c.h.b16 %v256
      %v472 = vunpack.c.l.b16 %v257
      %v473 = vunpack.c.h.b16 %v257
      %v474 = vunpack.c.l.b16 %v258
      %v475 = vunpack.c.h.b16 %v258
      %v476 = vunpack.c.l.b16 %v259
      %v477 = vunpack.c.h.b16 %v259
      %v478 = vunpack.c.l.b16 %v260
      %v479 = vunpack.c.h.b16 %v260
      %v480 = vunpack.c.l.b16 %v261
      %v481 = vunpack.c.h.b16 %v261
      %v482 = vunpack.c.l.b16 %v262
      %v483 = vunpack.c.h.b16 %v262
      %v484 = vunpack.c.l.b16 %v263
      %v485 = vunpack.c.h.b16 %v263
      %v486 = vunpack.c.l.b16 %v264
      %v487 = vunpack.c.h.b16 %v264
      %v488 = vunpack.c.l.b16 %v265
      %v489 = vunpack.c.h.b16 %v265
      %v490 = vunpack.c.l.b16 %v266
      %v491 = vunpack.c.h.b16 %v266
      %v492 = vunpack.c.l.b16 %v267
      %v493 = vunpack.c.h.b16 %v267
      %v494 = vunpack.c.l.b16 %v268
      %v495 = vunpack.c.h.b16 %v268
      %v496 = vunpack.c.l.b16 %v269
      %v497 = vunpack.c.h.b16 %v269
      %v498 = vunpack.c.l.b16 %v270
      %v499 = vunpack.c.h.b16 %v270
      %v500 = vunpack.c.l.b16 %v271
      %v501 = vunpack.c.h.b16 %v271
      %v502 = vunpack.c.l.b16 %v272
      %v503 = vunpack.c.h.b16 %v272
      %v504 = vunpack.c.l.b16 %v273
      %v505 = vunpack.c.h.b16 %v273
      %v506 = vunpack.c.l.b16 %v274
      %v507 = vunpack.c.h.b16 %v274
      %v508 = vunpack.c.l.b16 %v275
      %v509 = vunpack.c.h.b16 %v275
      %v510 = vunpack.c.l.b16 %v276
      %v511 = vunpack.c.h.b16 %v276
      %v512 = vunpack.c.l.b16 %v277
      %v513 = vunpack.c.h.b16 %v277
      %v514 = vunpack.c.l.b16 %v278
      %v515 = vunpack.c.h.b16 %v278
      %v516 = vunpack.c.l.b16 %v279
      %v517 = vunpack.c.h.b16 %v279
      %v518 = vunpack.c.l.b16 %v280
      %v519 = vunpack.c.h.b16 %v280
      %v520 = vunpack.c.l.b16 %v281
      %v521 = vunpack.c.h.b16 %v281
      %v522 = vunpack.c.l.b16 %v282
      %v523 = vunpack.c.h.b16 %v282
      %v524 = vunpack.c.l.b16 %v283
      %v525 = vunpack.c.h.b16 %v283
      %v526 = vunpack.c.l.b16 %v284
      %v527 = vunpack.c.h.b16 %v284
      %v528 = vunpack.c.l.b16 %v285
      %v529 = vunpack.c.h.b16 %v285
      %v530 = vunpack.c.l.b16 %v286
      %v531 = vunpack.c.h.b16 %v286
      %v532 = vunpack.c.l.b16 %v287
      %v533 = vunpack.c.h.b16 %v287
      %v534 = vunpack.c.l.b16 %v288
      %v535 = vunpack.c.h.b16 %v288
      %v536 = vunpack.c.l.b16 %v289
      %v537 = vunpack.c.h.b16 %v289
      %v538 = vunpack.c.l.b16 %v290
      %v539 = vunpack.c.h.b16 %v290
      %v540 = vunpack.c.l.b16 %v291
      %v541 = vunpack.c.h.b16 %v291
      %v542 = vunpack.c.l.b16 %v292
      %v543 = vunpack.c.h.b16 %v292
      %v544 = vunpack.c.l.b16 %v293
      %v545 = vunpack.c.h.b16 %v293
      %v546 = vunpack.c.l.b16 %v294
      %v547 = vunpack.c.h.b16 %v294
      %v548 = vunpack.c.l.b16 %v295
      %v549 = vunpack.c.h.b16 %v295
      %v550 = vunpack.c.l.b16 %v296
      %v551 = vunpack.c.h.b16 %v296
      %v552 = vunpack.c.l.b16 %v297
      %v553 = vunpack.c.h.b16 %v297
      %v554 = vpack.c.b16 %v430, %v426
      %v555 = vpack.c.b16 %v431, %v427
      %v556 = vpack.c.b16 %v432, %v428
      %v557 = vpack.c.b16 %v433, %v429
      %v558 = vpack.c.b16 %v438, %v434
      %v559 = vpack.c.b16 %v439, %v435
      %v560 = vpack.c.b16 %v440, %v436
      %v561 = vpack.c.b16 %v441, %v437
      %v562 = vpack.c.b16 %v446, %v442
      %v563 = vpack.c.b16 %v447, %v443
      %v564 = vpack.c.b16 %v448, %v444
      %v565 = vpack.c.b16 %v449, %v445
      %v566 = vpack.c.b16 %v454, %v450
      %v567 = vpack.c.b16 %v455, %v451
      %v568 = vpack.c.b16 %v456, %v452
      %v569 = vpack.c.b16 %v457, %v453
      %v570 = vpack.c.b16 %v462, %v458
      %v571 = vpack.c.b16 %v463, %v459
      %v572 = vpack.c.b16 %v464, %v460
      %v573 = vpack.c.b16 %v465, %v461
      %v574 = vpack.c.b16 %v470, %v466
      %v575 = vpack.c.b16 %v471, %v467
      %v576 = vpack.c.b16 %v472, %v468
      %v577 = vpack.c.b16 %v473, %v469
      %v578 = vpack.c.b16 %v478, %v474
      %v579 = vpack.c.b16 %v479, %v475
      %v580 = vpack.c.b16 %v480, %v476
      %v581 = vpack.c.b16 %v481, %v477
      %v582 = vpack.c.b16 %v486, %v482
      %v583 = vpack.c.b16 %v487, %v483
      %v584 = vpack.c.b16 %v488, %v484
      %v585 = vpack.c.b16 %v489, %v485
      %v586 = vpack.c.b16 %v494, %v490
      %v587 = vpack.c.b16 %v495, %v491
      %v588 = vpack.c.b16 %v496, %v492
      %v589 = vpack.c.b16 %v497, %v493
      %v590 = vpack.c.b16 %v502, %v498
      %v591 = vpack.c.b16 %v503, %v499
      %v592 = vpack.c.b16 %v504, %v500
      %v593 = vpack.c.b16 %v505, %v501
      %v594 = vpack.c.b16 %v510, %v506
      %v595 = vpack.c.b16 %v511, %v507
      %v596 = vpack.c.b16 %v512, %v508
      %v597 = vpack.c.b16 %v513, %v509
      %v598 = vpack.c.b16 %v518, %v514
      %v599 = vpack.c.b16 %v519, %v515
      %v600 = vpack.c.b16 %v520, %v516
      %v601 = vpack.c.b16 %v521, %v517
      %v602 = vpack.c.b16 %v526, %v522
      %v603 = vpack.c.b16 %v527, %v523
      %v604 = vpack.c.b16 %v528, %v524
      %v605 = vpack.c.b16 %v529, %v525
      %v606 = vpack.c.b16 %v534, %v530
      %v607 = vpack.c.b16 %v535, %v531
      %v608 = vpack.c.b16 %v536, %v532
      %v609 = vpack.c.b16 %v537, %v533
      %v610 = vpack.c.b16 %v542, %v538
      %v611 = vpack.c.b16 %v543, %v539
      %v612 = vpack.c.b16 %v544, %v540
      %v613 = vpack.c.b16 %v545, %v541
      %v614 = vpack.c.b16 %v550, %v546
      %v615 = vpack.c.b16 %v551, %v547
      %v616 = vpack.c.b16 %v552, %v548
      %v617 = vpack.c.b16 %v553, %v549
      %v746 = vunpack.c.l.b16 %v298
      %v747 = vunpack.c.l.b16 %v299
      %v748 = vunpack.c.l.b16 %v300
      %v749 = vunpack.c.l.b16 %v301
      %v750 = vunpack.c.l.b16 %v302
      %v751 = vunpack.c.l.b16 %v303
      %v752 = vunpack.c.l.b16 %v304
      %v753 = vunpack.c.l.b16 %v305
      %v754 = vunpack.c.l.b16 %v306
      %v755 = vunpack.c.l.b16 %v307
      %v756 = vunpack.c.l.b16 %v308
      %v757 = vunpack.c.l.b16 %v309
      %v758 = vunpack.c.l.b16 %v310
      %v759 = vunpack.c.l.b16 %v311
      %v760 = vunpack.c.l.b16 %v312
      %v761 = vunpack.c.l.b16 %v313
      %v762 = vunpack.c.l.b16 %v314
      %v763 = vunpack.c.l.b16 %v315
      %v764 = vunpack.c.l.b16 %v316
      %v765 = vunpack.c.l.b16 %v317
      %v766 = vunpack.c.l.b16 %v318
      %v767 = vunpack.c.l.b16 %v319
      %v768 = vunpack.c.l.b16 %v320
      %v769 = vunpack.c.l.b16 %v321
      %v770 = vunpack.c.l.b16 %v322
      %v771 = vunpack.c.l.b16 %v323
      %v772 = vunpack.c.l.b16 %v324
      %v773 = vunpack.c.l.b16 %v325
      %v774 = vunpack.c.l.b16 %v326
      %v775 = vunpack.c.l.b16 %v327
      %v776 = vunpack.c.l.b16 %v328
      %v777 = vunpack.c.l.b16 %v329
      %v778 = vunpack.c.l.b16 %v330
      %v779 = vunpack.c.l.b16 %v331
      %v780 = vunpack.c.l.b16 %v332
      %v781 = vunpack.c.l.b16 %v333
      %v782 = vunpack.c.l.b16 %v334
      %v783 = vunpack.c.l.b16 %v335
      %v784 = vunpack.c.l.b16 %v336
      %v785 = vunpack.c.l.b16 %v337
      %v786 = vunpack.c.l.b16 %v338
      %v787 = vunpack.c.l.b16 %v339
      %v788 = vunpack.c.l.b16 %v340
      %v789 = vunpack.c.l.b16 %v341
      %v790 = vunpack.c.l.b16 %v342
      %v791 = vunpack.c.l.b16 %v343
      %v792 = vunpack.c.l.b16 %v344
      %v793 = vunpack.c.l.b16 %v345
      %v794 = vunpack.c.l.b16 %v346
      %v795 = vunpack.c.l.b16 %v347
      %v796 = vunpack.c.l.b16 %v348
      %v797 = vunpack.c.l.b16 %v349
      %v798 = vunpack.c.l.b16 %v350
      %v799 = vunpack.c.l.b16 %v351
      %v800 = vunpack.c.l.b16 %v352
      %v801 = vunpack.c.l.b16 %v353
      %v802 = vunpack.c.l.b16 %v354
      %v803 = vunpack.c.l.b16 %v355
      %v804 = vunpack.c.l.b16 %v356
      %v805 = vunpack.c.l.b16 %v357
      %v806 = vunpack.c.l.b16 %v358
      %v807 = vunpack.c.l.b16 %v359
      %v808 = vunpack.c.l.b16 %v360
      %v809 = vunpack.c.l.b16 %v361
      %v810 = vpack.c.b16 %v747, %v746
      %v811 = vpack.c.b16 %v749, %v748
      %v812 = vpack.c.b16 %v751, %v750
      %v813 = vpack.c.b16 %v753, %v752
      %v814 = vpack.c.b16 %v755, %v754
      %v815 = vpack.c.b16 %v757, %v756
      %v816 = vpack.c.b16 %v759, %v758
      %v817 = vpack.c.b16 %v761, %v760
      %v818 = vpack.c.b16 %v763, %v762
      %v819 = vpack.c.b16 %v765, %v764
      %v820 = vpack.c.b16 %v767, %v766
      %v821 = vpack.c.b16 %v769, %v768
      %v822 = vpack.c.b16 %v771, %v770
      %v823 = vpack.c.b16 %v773, %v772
      %v824 = vpack.c.b16 %v775, %v774
      %v825 = vpack.c.b16 %v777, %v776
      %v826 = vpack.c.b16 %v779, %v778
      %v827 = vpack.c.b16 %v781, %v780
      %v828 = vpack.c.b16 %v783, %v782
      %v829 = vpack.c.b16 %v785, %v784
      %v830 = vpack.c.b16 %v787, %v786
      %v831 = vpack.c.b16 %v789, %v788
      %v832 = vpack.c.b16 %v791, %v790
      %v833 = vpack.c.b16 %v793, %v792
      %v834 = vpack.c.b16 %v795, %v794
      %v835 = vpack.c.b16 %v797, %v796
      %v836 = vpack.c.b16 %v799, %v798
      %v837 = vpack.c.b16 %v801, %v800
      %v838 = vpack.c.b16 %v803, %v802
      %v839 = vpack.c.b16 %v805, %v804
      %v840 = vpack.c.b16 %v807, %v806
      %v841 = vpack.c.b16 %v809, %v808
      %874 = vmatprep.subr.bf16.mxu0 0
      %875 = vmatpush1.bf16.msra.mxu0 %v817
      %876 = vmatprep.subr.bf16.mxu0 0
      %877 = vmatpush1.bf16.msra.mxu0 %v816
      %878 = vmatprep.subr.bf16.mxu0 0
      %879 = vmatpush1.bf16.msra.mxu0 %v815
      %880 = vmatprep.subr.bf16.mxu0 0
      %881 = vmatpush1.bf16.msra.mxu0 %v814
      %882 = vmatprep.subr.bf16.mxu0 0
      %883 = vmatpush1.bf16.msra.mxu0 %v813
      %884 = vmatprep.subr.bf16.mxu0 0
      %885 = vmatpush1.bf16.msra.mxu0 %v812
      %886 = vmatprep.subr.bf16.mxu0 0
      %887 = vmatpush1.bf16.msra.mxu0 %v811
      %888 = vmatprep.subr.bf16.mxu0 0
      %889 = vmatpush1.bf16.msra.mxu0 %v810
      %890 = vmatprep.subr.bf16.mxu0 0
      %891 = vmatpush2.bf16.msra.mxu0 %v825
      %892 = vmatprep.subr.bf16.mxu0 0
      %893 = vmatpush2.bf16.msra.mxu0 %v824
      %894 = vmatprep.subr.bf16.mxu0 0
      %895 = vmatpush2.bf16.msra.mxu0 %v823
      %896 = vmatprep.subr.bf16.mxu0 0
      %897 = vmatpush2.bf16.msra.mxu0 %v822
      %898 = vmatprep.subr.bf16.mxu0 0
      %899 = vmatpush2.bf16.msra.mxu0 %v821
      %900 = vmatprep.subr.bf16.mxu0 0
      %901 = vmatpush2.bf16.msra.mxu0 %v820
      %902 = vmatprep.subr.bf16.mxu0 0
      %903 = vmatpush2.bf16.msra.mxu0 %v819
      %904 = vmatprep.subr.bf16.mxu0 0
      %905 = vmatpush2.bf16.msra.mxu0 %v818
      %906 = vmatprep.mubr.bf16.mxu0 %v555
      %907 = vmatmul.mubr.bf16.gmra.mxu0 %v554
      %v908 = vpop.f32.mrf.mxu0
      %v909 = vadd.f32 0.0, %v908
      %v910 = vpop.f32.mrf.mxu0
      %v911 = vpop.f32.mrf.mxu0
      %v912 = vadd.f32 0.0, %v911
      %v913 = vpop.f32.mrf.mxu0
      %914 = vmatprep.mubr.bf16.mxu0 %v559
      %915 = vmatmul.mubr.bf16.gmra.mxu0 %v558
      %v916 = vpop.f32.mrf.mxu0
      %v917 = vadd.f32 0.0, %v916
      %v918 = vpop.f32.mrf.mxu0
      %v919 = vpop.f32.mrf.mxu0
      %v920 = vadd.f32 0.0, %v919
      %v921 = vpop.f32.mrf.mxu0
      %922 = vmatprep.mubr.bf16.mxu0 %v563
      %923 = vmatmul.mubr.bf16.gmra.mxu0 %v562
      %v924 = vpop.f32.mrf.mxu0
      %v925 = vadd.f32 0.0, %v924
      %v926 = vpop.f32.mrf.mxu0
      %v927 = vpop.f32.mrf.mxu0
      %v928 = vadd.f32 0.0, %v927
      %v929 = vpop.f32.mrf.mxu0
      %930 = vmatprep.mubr.bf16.mxu0 %v567
      %931 = vmatmul.mubr.bf16.gmra.mxu0 %v566
      %v932 = vpop.f32.mrf.mxu0
      %v933 = vadd.f32 0.0, %v932
      %v934 = vpop.f32.mrf.mxu0
      %v935 = vpop.f32.mrf.mxu0
      %v936 = vadd.f32 0.0, %v935
      %v937 = vpop.f32.mrf.mxu0
      %938 = vmatprep.mubr.bf16.mxu0 %v571
      %939 = vmatmul.mubr.bf16.gmra.mxu0 %v570
      %v940 = vpop.f32.mrf.mxu0
      %v941 = vadd.f32 0.0, %v940
      %v942 = vpop.f32.mrf.mxu0
      %v943 = vpop.f32.mrf.mxu0
      %v944 = vadd.f32 0.0, %v943
      %v945 = vpop.f32.mrf.mxu0
      %946 = vmatprep.mubr.bf16.mxu0 %v575
      %947 = vmatmul.mubr.bf16.gmra.mxu0 %v574
      %v948 = vpop.f32.mrf.mxu0
      %v949 = vadd.f32 0.0, %v948
      %v950 = vpop.f32.mrf.mxu0
      %v951 = vpop.f32.mrf.mxu0
      %v952 = vadd.f32 0.0, %v951
      %v953 = vpop.f32.mrf.mxu0
      %954 = vmatprep.mubr.bf16.mxu0 %v579
      %955 = vmatmul.mubr.bf16.gmra.mxu0 %v578
      %v956 = vpop.f32.mrf.mxu0
      %v957 = vadd.f32 0.0, %v956
      %v958 = vpop.f32.mrf.mxu0
      %v959 = vpop.f32.mrf.mxu0
      %v960 = vadd.f32 0.0, %v959
      %v961 = vpop.f32.mrf.mxu0
      %962 = vmatprep.mubr.bf16.mxu0 %v583
      %963 = vmatmul.mubr.bf16.gmra.mxu0 %v582
      %v964 = vpop.f32.mrf.mxu0
      %v965 = vadd.f32 0.0, %v964
      %v966 = vpop.f32.mrf.mxu0
      %v967 = vpop.f32.mrf.mxu0
      %v968 = vadd.f32 0.0, %v967
      %v969 = vpop.f32.mrf.mxu0
      %970 = vmatprep.mubr.bf16.mxu0 %v587
      %971 = vmatmul.mubr.bf16.gmra.mxu0 %v586
      %v972 = vpop.f32.mrf.mxu0
      %v973 = vadd.f32 0.0, %v972
      %v974 = vpop.f32.mrf.mxu0
      %v975 = vpop.f32.mrf.mxu0
      %v976 = vadd.f32 0.0, %v975
      %v977 = vpop.f32.mrf.mxu0
      %978 = vmatprep.mubr.bf16.mxu0 %v591
      %979 = vmatmul.mubr.bf16.gmra.mxu0 %v590
      %v980 = vpop.f32.mrf.mxu0
      %v981 = vadd.f32 0.0, %v980
      %v982 = vpop.f32.mrf.mxu0
      %v983 = vpop.f32.mrf.mxu0
      %v984 = vadd.f32 0.0, %v983
      %v985 = vpop.f32.mrf.mxu0
      %986 = vmatprep.mubr.bf16.mxu0 %v595
      %987 = vmatmul.mubr.bf16.gmra.mxu0 %v594
      %v988 = vpop.f32.mrf.mxu0
      %v989 = vadd.f32 0.0, %v988
      %v990 = vpop.f32.mrf.mxu0
      %v991 = vpop.f32.mrf.mxu0
      %v992 = vadd.f32 0.0, %v991
      %v993 = vpop.f32.mrf.mxu0
      %994 = vmatprep.mubr.bf16.mxu0 %v599
      %995 = vmatmul.mubr.bf16.gmra.mxu0 %v598
      %v996 = vpop.f32.mrf.mxu0
      %v997 = vadd.f32 0.0, %v996
      %v998 = vpop.f32.mrf.mxu0
      %v999 = vpop.f32.mrf.mxu0
      %v1000 = vadd.f32 0.0, %v999
      %v1001 = vpop.f32.mrf.mxu0
      %1002 = vmatprep.mubr.bf16.mxu0 %v603
      %1003 = vmatmul.mubr.bf16.gmra.mxu0 %v602
      %v1004 = vpop.f32.mrf.mxu0
      %v1005 = vadd.f32 0.0, %v1004
      %v1006 = vpop.f32.mrf.mxu0
      %v1007 = vpop.f32.mrf.mxu0
      %v1008 = vadd.f32 0.0, %v1007
      %v1009 = vpop.f32.mrf.mxu0
      %1010 = vmatprep.mubr.bf16.mxu0 %v607
      %1011 = vmatmul.mubr.bf16.gmra.mxu0 %v606
      %v1012 = vpop.f32.mrf.mxu0
      %v1013 = vadd.f32 0.0, %v1012
      %v1014 = vpop.f32.mrf.mxu0
      %v1015 = vpop.f32.mrf.mxu0
      %v1016 = vadd.f32 0.0, %v1015
      %v1017 = vpop.f32.mrf.mxu0
      %1018 = vmatprep.mubr.bf16.mxu0 %v611
      %1019 = vmatmul.mubr.bf16.gmra.mxu0 %v610
      %v1020 = vpop.f32.mrf.mxu0
      %v1021 = vadd.f32 0.0, %v1020
      %v1022 = vpop.f32.mrf.mxu0
      %v1023 = vpop.f32.mrf.mxu0
      %v1024 = vadd.f32 0.0, %v1023
      %v1025 = vpop.f32.mrf.mxu0
      %1026 = vmatprep.mubr.bf16.mxu0 %v615
      %1027 = vmatmul.mubr.bf16.gmra.mxu0 %v614
      %v1028 = vpop.f32.mrf.mxu0
      %v1029 = vadd.f32 0.0, %v1028
      %v1030 = vpop.f32.mrf.mxu0
      %v1031 = vpop.f32.mrf.mxu0
      %v1032 = vadd.f32 0.0, %v1031
      %v1033 = vpop.f32.mrf.mxu0
      %1034 = vdwg.mxu0
      %1035 = vmatprep.subr.bf16.mxu0 0
      %1036 = vmatpush1.bf16.msra.mxu0 %v833
      %1037 = vmatprep.subr.bf16.mxu0 0
      %1038 = vmatpush1.bf16.msra.mxu0 %v832
      %1039 = vmatprep.subr.bf16.mxu0 0
      %1040 = vmatpush1.bf16.msra.mxu0 %v831
      %1041 = vmatprep.subr.bf16.mxu0 0
      %1042 = vmatpush1.bf16.msra.mxu0 %v830
      %1043 = vmatprep.subr.bf16.mxu0 0
      %1044 = vmatpush1.bf16.msra.mxu0 %v829
      %1045 = vmatprep.subr.bf16.mxu0 0
      %1046 = vmatpush1.bf16.msra.mxu0 %v828
      %1047 = vmatprep.subr.bf16.mxu0 0
      %1048 = vmatpush1.bf16.msra.mxu0 %v827
      %1049 = vmatprep.subr.bf16.mxu0 0
      %1050 = vmatpush1.bf16.msra.mxu0 %v826
      %1051 = vmatprep.subr.bf16.mxu0 0
      %1052 = vmatpush2.bf16.msra.mxu0 %v841
      %1053 = vmatprep.subr.bf16.mxu0 0
      %1054 = vmatpush2.bf16.msra.mxu0 %v840
      %1055 = vmatprep.subr.bf16.mxu0 0
      %1056 = vmatpush2.bf16.msra.mxu0 %v839
      %1057 = vmatprep.subr.bf16.mxu0 0
      %1058 = vmatpush2.bf16.msra.mxu0 %v838
      %1059 = vmatprep.subr.bf16.mxu0 0
      %1060 = vmatpush2.bf16.msra.mxu0 %v837
      %1061 = vmatprep.subr.bf16.mxu0 0
      %1062 = vmatpush2.bf16.msra.mxu0 %v836
      %1063 = vmatprep.subr.bf16.mxu0 0
      %1064 = vmatpush2.bf16.msra.mxu0 %v835
      %1065 = vmatprep.subr.bf16.mxu0 0
      %1066 = vmatpush2.bf16.msra.mxu0 %v834
      %1067 = vmatprep.mubr.bf16.mxu0 %v557
      %1068 = vmatmul.mubr.bf16.gmra.mxu0 %v556
      %v1069 = vpop.f32.mrf.mxu0
      %v1070 = vadd.f32 %v909, %v1069
      %v1071 = vpop.f32.mrf.mxu0
      %v1072 = vpop.f32.mrf.mxu0
      %v1073 = vadd.f32 %v912, %v1072
      %v1074 = vpop.f32.mrf.mxu0
      %1075 = vmatprep.mubr.bf16.mxu0 %v561
      %1076 = vmatmul.mubr.bf16.gmra.mxu0 %v560
      %v1077 = vpop.f32.mrf.mxu0
      %v1078 = vadd.f32 %v917, %v1077
      %v1079 = vpop.f32.mrf.mxu0
      %v1080 = vpop.f32.mrf.mxu0
      %v1081 = vadd.f32 %v920, %v1080
      %v1082 = vpop.f32.mrf.mxu0
      %1083 = vmatprep.mubr.bf16.mxu0 %v565
      %1084 = vmatmul.mubr.bf16.gmra.mxu0 %v564
      %v1085 = vpop.f32.mrf.mxu0
      %v1086 = vadd.f32 %v925, %v1085
      %v1087 = vpop.f32.mrf.mxu0
      %v1088 = vpop.f32.mrf.mxu0
      %v1089 = vadd.f32 %v928, %v1088
      %v1090 = vpop.f32.mrf.mxu0
      %1091 = vmatprep.mubr.bf16.mxu0 %v569
      %1092 = vmatmul.mubr.bf16.gmra.mxu0 %v568
      %v1093 = vpop.f32.mrf.mxu0
      %v1094 = vadd.f32 %v933, %v1093
      %v1095 = vpop.f32.mrf.mxu0
      %v1096 = vpop.f32.mrf.mxu0
      %v1097 = vadd.f32 %v936, %v1096
      %v1098 = vpop.f32.mrf.mxu0
      %1099 = vmatprep.mubr.bf16.mxu0 %v573
      %1100 = vmatmul.mubr.bf16.gmra.mxu0 %v572
      %v1101 = vpop.f32.mrf.mxu0
      %v1102 = vadd.f32 %v941, %v1101
      %v1103 = vpop.f32.mrf.mxu0
      %v1104 = vpop.f32.mrf.mxu0
      %v1105 = vadd.f32 %v944, %v1104
      %v1106 = vpop.f32.mrf.mxu0
      %1107 = vmatprep.mubr.bf16.mxu0 %v577
      %1108 = vmatmul.mubr.bf16.gmra.mxu0 %v576
      %v1109 = vpop.f32.mrf.mxu0
      %v1110 = vadd.f32 %v949, %v1109
      %v1111 = vpop.f32.mrf.mxu0
      %v1112 = vpop.f32.mrf.mxu0
      %v1113 = vadd.f32 %v952, %v1112
      %v1114 = vpop.f32.mrf.mxu0
      %1115 = vmatprep.mubr.bf16.mxu0 %v581
      %1116 = vmatmul.mubr.bf16.gmra.mxu0 %v580
      %v1117 = vpop.f32.mrf.mxu0
      %v1118 = vadd.f32 %v957, %v1117
      %v1119 = vpop.f32.mrf.mxu0
      %v1120 = vpop.f32.mrf.mxu0
      %v1121 = vadd.f32 %v960, %v1120
      %v1122 = vpop.f32.mrf.mxu0
      %1123 = vmatprep.mubr.bf16.mxu0 %v585
      %1124 = vmatmul.mubr.bf16.gmra.mxu0 %v584
      %v1125 = vpop.f32.mrf.mxu0
      %v1126 = vadd.f32 %v965, %v1125
      %v1127 = vpop.f32.mrf.mxu0
      %v1128 = vpop.f32.mrf.mxu0
      %v1129 = vadd.f32 %v968, %v1128
      %v1130 = vpop.f32.mrf.mxu0
      %1131 = vmatprep.mubr.bf16.mxu0 %v589
      %1132 = vmatmul.mubr.bf16.gmra.mxu0 %v588
      %v1133 = vpop.f32.mrf.mxu0
      %v1134 = vadd.f32 %v973, %v1133
      %v1135 = vpop.f32.mrf.mxu0
      %v1136 = vpop.f32.mrf.mxu0
      %v1137 = vadd.f32 %v976, %v1136
      %v1138 = vpop.f32.mrf.mxu0
      %1139 = vmatprep.mubr.bf16.mxu0 %v593
      %1140 = vmatmul.mubr.bf16.gmra.mxu0 %v592
      %v1141 = vpop.f32.mrf.mxu0
      %v1142 = vadd.f32 %v981, %v1141
      %v1143 = vpop.f32.mrf.mxu0
      %v1144 = vpop.f32.mrf.mxu0
      %v1145 = vadd.f32 %v984, %v1144
      %v1146 = vpop.f32.mrf.mxu0
      %1147 = vmatprep.mubr.bf16.mxu0 %v597
      %1148 = vmatmul.mubr.bf16.gmra.mxu0 %v596
      %v1149 = vpop.f32.mrf.mxu0
      %v1150 = vadd.f32 %v989, %v1149
      %v1151 = vpop.f32.mrf.mxu0
      %v1152 = vpop.f32.mrf.mxu0
      %v1153 = vadd.f32 %v992, %v1152
      %v1154 = vpop.f32.mrf.mxu0
      %1155 = vmatprep.mubr.bf16.mxu0 %v601
      %1156 = vmatmul.mubr.bf16.gmra.mxu0 %v600
      %v1157 = vpop.f32.mrf.mxu0
      %v1158 = vadd.f32 %v997, %v1157
      %v1159 = vpop.f32.mrf.mxu0
      %v1160 = vpop.f32.mrf.mxu0
      %v1161 = vadd.f32 %v1000, %v1160
      %v1162 = vpop.f32.mrf.mxu0
      %1163 = vmatprep.mubr.bf16.mxu0 %v605
      %1164 = vmatmul.mubr.bf16.gmra.mxu0 %v604
      %v1165 = vpop.f32.mrf.mxu0
      %v1166 = vadd.f32 %v1005, %v1165
      %v1167 = vpop.f32.mrf.mxu0
      %v1168 = vpop.f32.mrf.mxu0
      %v1169 = vadd.f32 %v1008, %v1168
      %v1170 = vpop.f32.mrf.mxu0
      %1171 = vmatprep.mubr.bf16.mxu0 %v609
      %1172 = vmatmul.mubr.bf16.gmra.mxu0 %v608
      %v1173 = vpop.f32.mrf.mxu0
      %v1174 = vadd.f32 %v1013, %v1173
      %v1175 = vpop.f32.mrf.mxu0
      %v1176 = vpop.f32.mrf.mxu0
      %v1177 = vadd.f32 %v1016, %v1176
      %v1178 = vpop.f32.mrf.mxu0
      %1179 = vmatprep.mubr.bf16.mxu0 %v613
      %1180 = vmatmul.mubr.bf16.gmra.mxu0 %v612
      %v1181 = vpop.f32.mrf.mxu0
      %v1182 = vadd.f32 %v1021, %v1181
      %v1183 = vpop.f32.mrf.mxu0
      %v1184 = vpop.f32.mrf.mxu0
      %v1185 = vadd.f32 %v1024, %v1184
      %v1186 = vpop.f32.mrf.mxu0
      %1187 = vmatprep.mubr.bf16.mxu0 %v617
      %1188 = vmatmul.mubr.bf16.gmra.mxu0 %v616
      %v1189 = vpop.f32.mrf.mxu0
      %v1190 = vadd.f32 %v1029, %v1189
      %v1191 = vpop.f32.mrf.mxu0
      %v1192 = vpop.f32.mrf.mxu0
      %v1193 = vadd.f32 %v1032, %v1192
      %v1194 = vpop.f32.mrf.mxu0
      %1195 = vdwg.mxu0
      %v1196 = vld [vmem:[%s2] sm:$0x1]
      %v1198 = vlaneseq
      %v1199 = vshrl.u32 %v1198, 7
      %v1200 = vsub.s32 0, %v1199
      %v1201 = vrot.slane %v1196, %v1200
      %v1203 = vmul.f32 %v1070, %v1201
      %v1204 = vmul.f32 %v1073, %v1201
      %v1205 = vmul.f32 %v1078, %v1201
      %v1206 = vmul.f32 %v1081, %v1201
      %v1207 = vmul.f32 %v1086, %v1201
      %v1208 = vmul.f32 %v1089, %v1201
      %v1209 = vmul.f32 %v1094, %v1201
      %v1210 = vmul.f32 %v1097, %v1201
      %v1211 = vmul.f32 %v1102, %v1201
      %v1212 = vmul.f32 %v1105, %v1201
      %v1213 = vmul.f32 %v1110, %v1201
      %v1214 = vmul.f32 %v1113, %v1201
      %v1215 = vmul.f32 %v1118, %v1201
      %v1216 = vmul.f32 %v1121, %v1201
      %v1217 = vmul.f32 %v1126, %v1201
      %v1218 = vmul.f32 %v1129, %v1201
      %v1219 = vmul.f32 %v1134, %v1201
      %v1220 = vmul.f32 %v1137, %v1201
      %v1221 = vmul.f32 %v1142, %v1201
      %v1222 = vmul.f32 %v1145, %v1201
      %v1223 = vmul.f32 %v1150, %v1201
      %v1224 = vmul.f32 %v1153, %v1201
      %v1225 = vmul.f32 %v1158, %v1201
      %v1226 = vmul.f32 %v1161, %v1201
      %v1227 = vmul.f32 %v1166, %v1201
      %v1228 = vmul.f32 %v1169, %v1201
      %v1229 = vmul.f32 %v1174, %v1201
      %v1230 = vmul.f32 %v1177, %v1201
      %v1231 = vmul.f32 %v1182, %v1201
      %v1232 = vmul.f32 %v1185, %v1201
      %v1233 = vmul.f32 %v1190, %v1201
      %v1234 = vmul.f32 %v1193, %v1201
      %v1235 = vld [vmem:[%s3] sm:$0x1]
      %v1237 = vlaneseq
      %v1238 = vshrl.u32 %v1237, 7
      %v1239 = vsub.s32 0, %v1238
      %v1240 = vrot.slane %v1235, %v1239
      %v1242 = vadd.f32 %v1203, %v1240
      %v1243 = vadd.f32 %v1204, %v1240
      %v1244 = vadd.f32 %v1205, %v1240
      %v1245 = vadd.f32 %v1206, %v1240
      %v1246 = vadd.f32 %v1207, %v1240
      %v1247 = vadd.f32 %v1208, %v1240
      %v1248 = vadd.f32 %v1209, %v1240
      %v1249 = vadd.f32 %v1210, %v1240
      %v1250 = vadd.f32 %v1211, %v1240
      %v1251 = vadd.f32 %v1212, %v1240
      %v1252 = vadd.f32 %v1213, %v1240
      %v1253 = vadd.f32 %v1214, %v1240
      %v1254 = vadd.f32 %v1215, %v1240
      %v1255 = vadd.f32 %v1216, %v1240
      %v1256 = vadd.f32 %v1217, %v1240
      %v1257 = vadd.f32 %v1218, %v1240
      %v1258 = vadd.f32 %v1219, %v1240
      %v1259 = vadd.f32 %v1220, %v1240
      %v1260 = vadd.f32 %v1221, %v1240
      %v1261 = vadd.f32 %v1222, %v1240
      %v1262 = vadd.f32 %v1223, %v1240
      %v1263 = vadd.f32 %v1224, %v1240
      %v1264 = vadd.f32 %v1225, %v1240
      %v1265 = vadd.f32 %v1226, %v1240
      %v1266 = vadd.f32 %v1227, %v1240
      %v1267 = vadd.f32 %v1228, %v1240
      %v1268 = vadd.f32 %v1229, %v1240
      %v1269 = vadd.f32 %v1230, %v1240
      %v1270 = vadd.f32 %v1231, %v1240
      %v1271 = vadd.f32 %v1232, %v1240
      %v1272 = vadd.f32 %v1233, %v1240
      %v1273 = vadd.f32 %v1234, %v1240
      %vm1274 = vcmp.gt.f32.partialorder %v1242, 0.0
      %vm1275 = vcmp.gt.f32.partialorder %v1243, 0.0
      %vm1276 = vcmp.gt.f32.partialorder %v1244, 0.0
      %vm1277 = vcmp.gt.f32.partialorder %v1245, 0.0
      %vm1278 = vcmp.gt.f32.partialorder %v1246, 0.0
      %vm1279 = vcmp.gt.f32.partialorder %v1247, 0.0
      %vm1280 = vcmp.gt.f32.partialorder %v1248, 0.0
      %vm1281 = vcmp.gt.f32.partialorder %v1249, 0.0
      %vm1282 = vcmp.gt.f32.partialorder %v1250, 0.0
      %vm1283 = vcmp.gt.f32.partialorder %v1251, 0.0
      %vm1284 = vcmp.gt.f32.partialorder %v1252, 0.0
      %vm1285 = vcmp.gt.f32.partialorder %v1253, 0.0
      %vm1286 = vcmp.gt.f32.partialorder %v1254, 0.0
      %vm1287 = vcmp.gt.f32.partialorder %v1255, 0.0
      %vm1288 = vcmp.gt.f32.partialorder %v1256, 0.0
      %vm1289 = vcmp.gt.f32.partialorder %v1257, 0.0
      %vm1290 = vcmp.gt.f32.partialorder %v1258, 0.0
      %vm1291 = vcmp.gt.f32.partialorder %v1259, 0.0
      %vm1292 = vcmp.gt.f32.partialorder %v1260, 0.0
      %vm1293 = vcmp.gt.f32.partialorder %v1261, 0.0
      %vm1294 = vcmp.gt.f32.partialorder %v1262, 0.0
      %vm1295 = vcmp.gt.f32.partialorder %v1263, 0.0
      %vm1296 = vcmp.gt.f32.partialorder %v1264, 0.0
      %vm1297 = vcmp.gt.f32.partialorder %v1265, 0.0
      %vm1298 = vcmp.gt.f32.partialorder %v1266, 0.0
      %vm1299 = vcmp.gt.f32.partialorder %v1267, 0.0
      %vm1300 = vcmp.gt.f32.partialorder %v1268, 0.0
      %vm1301 = vcmp.gt.f32.partialorder %v1269, 0.0
      %vm1302 = vcmp.gt.f32.partialorder %v1270, 0.0
      %vm1303 = vcmp.gt.f32.partialorder %v1271, 0.0
      %vm1304 = vcmp.gt.f32.partialorder %v1272, 0.0
      %vm1305 = vcmp.gt.f32.partialorder %v1273, 0.0
      %v1306 = vld [vmem:[%s4] sm:$0x1]
      %v1308 = vlaneseq
      %v1309 = vshrl.u32 %v1308, 7
      %v1310 = vsub.s32 0, %v1309
      %v1311 = vrot.slane %v1306, %v1310
      %v1313 = vmul.f32 %v1311, %v1242
      %v1314 = vmul.f32 %v1311, %v1243
      %v1315 = vmul.f32 %v1311, %v1244
      %v1316 = vmul.f32 %v1311, %v1245
      %v1317 = vmul.f32 %v1311, %v1246
      %v1318 = vmul.f32 %v1311, %v1247
      %v1319 = vmul.f32 %v1311, %v1248
      %v1320 = vmul.f32 %v1311, %v1249
      %v1321 = vmul.f32 %v1311, %v1250
      %v1322 = vmul.f32 %v1311, %v1251
      %v1323 = vmul.f32 %v1311, %v1252
      %v1324 = vmul.f32 %v1311, %v1253
      %v1325 = vmul.f32 %v1311, %v1254
      %v1326 = vmul.f32 %v1311, %v1255
      %v1327 = vmul.f32 %v1311, %v1256
      %v1328 = vmul.f32 %v1311, %v1257
      %v1329 = vmul.f32 %v1311, %v1258
      %v1330 = vmul.f32 %v1311, %v1259
      %v1331 = vmul.f32 %v1311, %v1260
      %v1332 = vmul.f32 %v1311, %v1261
      %v1333 = vmul.f32 %v1311, %v1262
      %v1334 = vmul.f32 %v1311, %v1263
      %v1335 = vmul.f32 %v1311, %v1264
      %v1336 = vmul.f32 %v1311, %v1265
      %v1337 = vmul.f32 %v1311, %v1266
      %v1338 = vmul.f32 %v1311, %v1267
      %v1339 = vmul.f32 %v1311, %v1268
      %v1340 = vmul.f32 %v1311, %v1269
      %v1341 = vmul.f32 %v1311, %v1270
      %v1342 = vmul.f32 %v1311, %v1271
      %v1343 = vmul.f32 %v1311, %v1272
      %v1344 = vmul.f32 %v1311, %v1273
      %v1345 = vsel %vm1274, %v1242, %v1313
      %v1346 = vsel %vm1275, %v1243, %v1314
      %v1347 = vsel %vm1276, %v1244, %v1315
      %v1348 = vsel %vm1277, %v1245, %v1316
      %v1349 = vsel %vm1278, %v1246, %v1317
      %v1350 = vsel %vm1279, %v1247, %v1318
      %v1351 = vsel %vm1280, %v1248, %v1319
      %v1352 = vsel %vm1281, %v1249, %v1320
      %v1353 = vsel %vm1282, %v1250, %v1321
      %v1354 = vsel %vm1283, %v1251, %v1322
      %v1355 = vsel %vm1284, %v1252, %v1323
      %v1356 = vsel %vm1285, %v1253, %v1324
      %v1357 = vsel %vm1286, %v1254, %v1325
      %v1358 = vsel %vm1287, %v1255, %v1326
      %v1359 = vsel %vm1288, %v1256, %v1327
      %v1360 = vsel %vm1289, %v1257, %v1328
      %v1361 = vsel %vm1290, %v1258, %v1329
      %v1362 = vsel %vm1291, %v1259, %v1330
      %v1363 = vsel %vm1292, %v1260, %v1331
      %v1364 = vsel %vm1293, %v1261, %v1332
      %v1365 = vsel %vm1294, %v1262, %v1333
      %v1366 = vsel %vm1295, %v1263, %v1334
      %v1367 = vsel %vm1296, %v1264, %v1335
      %v1368 = vsel %vm1297, %v1265, %v1336
      %v1369 = vsel %vm1298, %v1266, %v1337
      %v1370 = vsel %vm1299, %v1267, %v1338
      %v1371 = vsel %vm1300, %v1268, %v1339
      %v1372 = vsel %vm1301, %v1269, %v1340
      %v1373 = vsel %vm1302, %v1270, %v1341
      %v1374 = vsel %vm1303, %v1271, %v1342
      %v1375 = vsel %vm1304, %v1272, %v1343
      %v1376 = vsel %vm1305, %v1273, %v1344
      %v1377 = vmax.f32 %v1345, %v1347
      %v1378 = vmax.f32 %v1346, %v1348
      %v1379 = vmax.f32 %v1353, %v1355
      %v1380 = vmax.f32 %v1354, %v1356
      %v1381 = vmax.f32 %v1361, %v1363
      %v1382 = vmax.f32 %v1362, %v1364
      %v1383 = vmax.f32 %v1369, %v1371
      %v1384 = vmax.f32 %v1370, %v1372
      %v1385 = vmax.f32 %v1349, %v1351
      %v1386 = vmax.f32 %v1350, %v1352
      %v1387 = vmax.f32 %v1357, %v1359
      %v1388 = vmax.f32 %v1358, %v1360
      %v1389 = vmax.f32 %v1365, %v1367
      %v1390 = vmax.f32 %v1366, %v1368
      %v1391 = vmax.f32 %v1373, %v1375
      %v1392 = vmax.f32 %v1374, %v1376
      %v1393 = vmax.f32 %v1377, %v1385
      %v1394 = vmax.f32 %v1378, %v1386
      %v1395 = vmax.f32 %v1379, %v1387
      %v1396 = vmax.f32 %v1380, %v1388
      %v1397 = vmax.f32 %v1381, %v1389
      %v1398 = vmax.f32 %v1382, %v1390
      %v1399 = vmax.f32 %v1383, %v1391
      %v1400 = vmax.f32 %v1384, %v1392
      %v1401 = vpack.c.bf16 %v1394, %v1393
      %v1402 = vpack.c.bf16 %v1396, %v1395
      %v1403 = vpack.c.bf16 %v1398, %v1397
      %v1404 = vpack.c.bf16 %v1400, %v1399
      %v1409 = vunpack.c.l.b16 %v1401
      %v1410 = vunpack.c.h.b16 %v1401
      %v1411 = vunpack.c.l.b16 %v1402
      %v1412 = vunpack.c.h.b16 %v1402
      %v1413 = vunpack.c.l.b16 %v1403
      %v1414 = vunpack.c.h.b16 %v1403
      %v1415 = vunpack.c.l.b16 %v1404
      %v1416 = vunpack.c.h.b16 %v1404
      %v1417 = vpack.c.b16 %v1409, %v1409
      %v1418 = vpack.c.b16 %v1410, %v1410
      %v1419 = vpack.c.b16 %v1411, %v1411
      %v1420 = vpack.c.b16 %v1412, %v1412
      %v1421 = vpack.c.b16 %v1413, %v1413
      %v1422 = vpack.c.b16 %v1414, %v1414
      %v1423 = vpack.c.b16 %v1415, %v1415
      %v1424 = vpack.c.b16 %v1416, %v1416
      %1433 = vst [vmem:[%s231] sm:$0xf] %v1417
      %1434 = vst [vmem:[%s231 + $0x4] sm:$0xf] %v1418
      %1435 = vst [vmem:[%s231 + $0x8] sm:$0xf] %v1419
      %1436 = vst [vmem:[%s231 + $0xc] sm:$0xf] %v1420
      %1437 = vst [vmem:[%s231 + $0x10] sm:$0xf] %v1421
      %1438 = vst [vmem:[%s231 + $0x14] sm:$0xf] %v1422
      %1439 = vst [vmem:[%s231 + $0x18] sm:$0xf] %v1423
      %1440 = vst [vmem:[%s231 + $0x1c] sm:$0xf] %v1424
      %s1441 = smul.u32 4, %s16
      %p1442 = scmp.lt.s32.totalorder %s1441, 7
      %s1443 = scalar_select %p1442, %s1441, 7
      %s1444 = smul.addr %s1443, 2
      %s1445 = smul.addr %s1444, 4
      %s1446 = scalar_lea.vmem %s5, %s1445
      // Predicated region
      $region41: #{forward.4} parent=39 // pred_check
        %p1447 = pneg %p144
      $region42: #{forward.4} parent=39 // pred_check_branch
        %1449 = sbr.rel (%p1447) target = $region44
      $region43: #{forward.4} parent=39 // pred_region
        %s1450 = smul.u32 4, %s16
      $region44: #{forward.4} parent=39 // pred_fallthru
        _
    $region40: #{forward.4} parent=5 // pred_fallthru
      _
    %p1451 = scmp.le.s32.totalorder 2, %s11
    // Predicated region
    $region45: #{forward.4} parent=5 // pred_check
      %p1452 = pneg %p1451
    $region46: #{forward.4} parent=5 // pred_check_branch
      %1454 = sbr.rel (%p1452) target = $region48
    $region47: #{forward.4} parent=5 // pred_region
      %s1455 = ssub.s32 %s11, 2
      // Predicated region
      $region49: #{forward.4} parent=47 // pred_check
        %p1456 = pneg %p150
      $region50: #{forward.4} parent=47 // pred_check_branch
        %1458 = sbr.rel (%p1456) target = $region52
      $region51: #{forward.4} parent=47 // pred_region
        %s1459 = smul.u32 4, %s17
        %p1460 = scmp.lt.s32.totalorder %s1459, 7
        %s1461 = scalar_select %p1460, %s1459, 7
        %s1462 = smul.addr %s1461, 2
        %s1463 = smul.addr %s1462, 4
        %s1464 = scalar_lea.vmem %s5, %s1463
      $region52: #{forward.4} parent=47 // pred_fallthru
        _
    $region48: #{forward.4} parent=5 // pred_fallthru
      _
  $region6: #{forward.4} parent=0 // loop_footer
    %s15 = sadd.s32 1, %s11
  $region7: #{forward.4} parent=0 // loop_footer_branch
    %10 = sbr.rel target = $region3
  $region8: #{forward.4} parent=0 // loop_exit
    _

// kernel: forward.5
$region0: #{forward.5}
  #allocation0 [shape = 'u32[]', space=smem, size = 0x4, offset = 0x4, fixed_abs, tag = 'smem constant byte address 0x4 - core index']
  #allocation1 [shape = 'u32[144,128]{1,0:T(1,128)}', space=vmem, size = 0x12000, scoped, tag = 'internal scratch']
  %s0 = inlined_call_operand.vmem [shape: bf16[8,2048], index: 0, kind: input, shape index: {}]
  %s1 = inlined_call_operand.vmem [shape: bf16[2048,512], index: 1, kind: input, shape index: {}]
  %s2 = inlined_call_operand.vmem [shape: f32[1,512], index: 2, kind: input, shape index: {}]
  %s3 = inlined_call_operand.vmem [shape: f32[1,512], index: 3, kind: input, shape index: {}]
  %s4 = inlined_call_operand.vmem [shape: f32[1,512], index: 4, kind: input, shape index: {}]
  %s5 = inlined_call_operand.vmem [shape: f32[512,128], index: 5, kind: input, shape index: {}]
  %s6 = inlined_call_operand.vmem [shape: f32[1,128], index: 6, kind: input, shape index: {}]
  %s7 = inlined_call_operand.hbm [shape: f32[8,128], index: 7, kind: output, shape index: {}]
  %s8 = sld [smem:[#allocation0]]
  $region38: #{forward.5} parent=0
    _
  %s10 = ssub.s32 1, %s8
  %s11 = scalar_select 0, %s10, %s8
  $region1: #{forward.5} parent=0
    #allocation2 [shape = 'u8[4096]{0}', space=vmem, size = 0x1000, scoped, tag = 'output window, operand 0, single buffered']
    #allocation3 [shape = 's32[1]{0}', space=sflag, size = 0x4, scoped, tag = 'scoped memory for forward.5']
    %12 = vsyncpa [#allocation3], 0
    // Predicated region
    $region2: #{forward.5} parent=1 // pred_check
      _
    $region3: #{forward.5} parent=1 // pred_check_branch
      %14 = sbr.rel (0) target = $region5
    $region4: #{forward.5} parent=1 // pred_region
      _
    $region5: #{forward.5} parent=1 // pred_fallthru
      _
    // Predicated region
    $region6: #{forward.5} parent=1 // pred_check
      _
    $region7: #{forward.5} parent=1 // pred_check_branch
      %16 = sbr.rel (0) target = $region9
    $region8: #{forward.5} parent=1 // pred_region
      _
    $region9: #{forward.5} parent=1 // pred_fallthru
      _
    // Predicated region
    $region10: #{forward.5} parent=1 // pred_check
      _
    $region11: #{forward.5} parent=1 // pred_check_branch
      %18 = sbr.rel (0) target = $region13
    $region12: #{forward.5} parent=1 // pred_region
      _
    $region13: #{forward.5} parent=1 // pred_fallthru
      _
    // Predicated region
    $region14: #{forward.5} parent=1 // pred_check
      _
    $region15: #{forward.5} parent=1 // pred_check_branch
      %20 = sbr.rel (0) target = $region17
    $region16: #{forward.5} parent=1 // pred_region
      _
    $region17: #{forward.5} parent=1 // pred_fallthru
      _
    // Predicated region
    $region18: #{forward.5} parent=1 // pred_check
      _
    $region19: #{forward.5} parent=1 // pred_check_branch
      %22 = sbr.rel (0) target = $region21
    $region20: #{forward.5} parent=1 // pred_region
      _
    $region21: #{forward.5} parent=1 // pred_fallthru
      _
    // Predicated region
    $region22: #{forward.5} parent=1 // pred_check
      _
    $region23: #{forward.5} parent=1 // pred_check_branch
      %24 = sbr.rel (0) target = $region25
    $region24: #{forward.5} parent=1 // pred_region
      _
    $region25: #{forward.5} parent=1 // pred_fallthru
      _
    // Predicated region
    $region26: #{forward.5} parent=1 // pred_check
      _
    $region27: #{forward.5} parent=1 // pred_check_branch
      %26 = sbr.rel (0) target = $region29
    $region28: #{forward.5} parent=1 // pred_region
      _
    $region29: #{forward.5} parent=1 // pred_fallthru
      _
    %v27 = vld [vmem:[%s0] sm:$0xff]
    %v28 = vld [vmem:[%s0 + $0x8] sm:$0xff]
    %v29 = vld [vmem:[%s0 + $0x10] sm:$0xff]
    %v30 = vld [vmem:[%s0 + $0x18] sm:$0xff]
    %v31 = vld [vmem:[%s0 + $0x20] sm:$0xff]
    %v32 = vld [vmem:[%s0 + $0x28] sm:$0xff]
    %v33 = vld [vmem:[%s0 + $0x30] sm:$0xff]
    %v34 = vld [vmem:[%s0 + $0x38] sm:$0xff]
    %v35 = vld [vmem:[%s1] sm:$0xff]
    %v36 = vld [vmem:[%s1 + $0x8] sm:$0xff]
    %v37 = vld [vmem:[%s1 + $0x10] sm:$0xff]
    %v38 = vld [vmem:[%s1 + $0x18] sm:$0xff]
    %v39 = vld [vmem:[%s1 + $0x20] sm:$0xff]
    %v40 = vld [vmem:[%s1 + $0x28] sm:$0xff]
    %v41 = vld [vmem:[%s1 + $0x30] sm:$0xff]
    %v42 = vld [vmem:[%s1 + $0x38] sm:$0xff]
    %v43 = vld [vmem:[%s1 + $0x40] sm:$0xff]
    %v44 = vld [vmem:[%s1 + $0x48] sm:$0xff]
    %v45 = vld [vmem:[%s1 + $0x50] sm:$0xff]
    %v46 = vld [vmem:[%s1 + $0x58] sm:$0xff]
    %v47 = vld [vmem:[%s1 + $0x60] sm:$0xff]
    %v48 = vld [vmem:[%s1 + $0x68] sm:$0xff]
    %v49 = vld [vmem:[%s1 + $0x70] sm:$0xff]
    %v50 = vld [vmem:[%s1 + $0x78] sm:$0xff]
    %v51 = vld [vmem:[%s1 + $0x80] sm:$0xff]
    %v52 = vld [vmem:[%s1 + $0x88] sm:$0xff]
    %v53 = vld [vmem:[%s1 + $0x90] sm:$0xff]
    %v54 = vld [vmem:[%s1 + $0x98] sm:$0xff]
    %v55 = vld [vmem:[%s1 + $0xa0] sm:$0xff]
    %v56 = vld [vmem:[%s1 + $0xa8] sm:$0xff]
    %v57 = vld [vmem:[%s1 + $0xb0] sm:$0xff]
    %v58 = vld [vmem:[%s1 + $0xb8] sm:$0xff]
    %v59 = vld [vmem:[%s1 + $0xc0] sm:$0xff]
    %v60 = vld [vmem:[%s1 + $0xc8] sm:$0xff]
    %v61 = vld [vmem:[%s1 + $0xd0] sm:$0xff]
    %v62 = vld [vmem:[%s1 + $0xd8] sm:$0xff]
    %v63 = vld [vmem:[%s1 + $0xe0] sm:$0xff]
    %v64 = vld [vmem:[%s1 + $0xe8] sm:$0xff]
    %v65 = vld [vmem:[%s1 + $0xf0] sm:$0xff]
    %v66 = vld [vmem:[%s1 + $0xf8] sm:$0xff]
    %v67 = vld [vmem:[%s1 + $0x100] sm:$0xff]
    %v68 = vld [vmem:[%s1 + $0x108] sm:$0xff]
    %v69 = vld [vmem:[%s1 + $0x110] sm:$0xff]
    %v70 = vld [vmem:[%s1 + $0x118] sm:$0xff]
    %v71 = vld [vmem:[%s1 + $0x120] sm:$0xff]
    %v72 = vld [vmem:[%s1 + $0x128] sm:$0xff]
    %v73 = vld [vmem:[%s1 + $0x130] sm:$0xff]
    %v74 = vld [vmem:[%s1 + $0x138] sm:$0xff]
    %v75 = vld [vmem:[%s1 + $0x140] sm:$0xff]
    %v76 = vld [vmem:[%s1 + $0x148] sm:$0xff]
    %v77 = vld [vmem:[%s1 + $0x150] sm:$0xff]
    %v78 = vld [vmem:[%s1 + $0x158] sm:$0xff]
    %v79 = vld [vmem:[%s1 + $0x160] sm:$0xff]
    %v80 = vld [vmem:[%s1 + $0x168] sm:$0xff]
    %v81 = vld [vmem:[%s1 + $0x170] sm:$0xff]
    %v82 = vld [vmem:[%s1 + $0x178] sm:$0xff]
    %v83 = vld [vmem:[%s1 + $0x180] sm:$0xff]
    %v84 = vld [vmem:[%s1 + $0x188] sm:$0xff]
    %v85 = vld [vmem:[%s1 + $0x190] sm:$0xff]
    %v86 = vld [vmem:[%s1 + $0x198] sm:$0xff]
    %v87 = vld [vmem:[%s1 + $0x1a0] sm:$0xff]
    %v88 = vld [vmem:[%s1 + $0x1a8] sm:$0xff]
    %v89 = vld [vmem:[%s1 + $0x1b0] sm:$0xff]
    %v90 = vld [vmem:[%s1 + $0x1b8] sm:$0xff]
    %v91 = vld [vmem:[%s1 + $0x1c0] sm:$0xff]
    %v92 = vld [vmem:[%s1 + $0x1c8] sm:$0xff]
    %v93 = vld [vmem:[%s1 + $0x1d0] sm:$0xff]
    %v94 = vld [vmem:[%s1 + $0x1d8] sm:$0xff]
    %v95 = vld [vmem:[%s1 + $0x1e0] sm:$0xff]
    %v96 = vld [vmem:[%s1 + $0x1e8] sm:$0xff]
    %v97 = vld [vmem:[%s1 + $0x1f0] sm:$0xff]
    %v98 = vld [vmem:[%s1 + $0x1f8] sm:$0xff]
    %v99 = vld [vmem:[%s1 + $0x200] sm:$0xff]
    %v100 = vld [vmem:[%s1 + $0x208] sm:$0xff]
    %v101 = vld [vmem:[%s1 + $0x210] sm:$0xff]
    %v102 = vld [vmem:[%s1 + $0x218] sm:$0xff]
    %v103 = vld [vmem:[%s1 + $0x220] sm:$0xff]
    %v104 = vld [vmem:[%s1 + $0x228] sm:$0xff]
    %v105 = vld [vmem:[%s1 + $0x230] sm:$0xff]
    %v106 = vld [vmem:[%s1 + $0x238] sm:$0xff]
    %v107 = vld [vmem:[%s1 + $0x240] sm:$0xff]
    %v108 = vld [vmem:[%s1 + $0x248] sm:$0xff]
    %v109 = vld [vmem:[%s1 + $0x250] sm:$0xff]
    %v110 = vld [vmem:[%s1 + $0x258] sm:$0xff]
    %v111 = vld [vmem:[%s1 + $0x260] sm:$0xff]
    %v112 = vld [vmem:[%s1 + $0x268] sm:$0xff]
    %v113 = vld [vmem:[%s1 + $0x270] sm:$0xff]
    %v114 = vld [vmem:[%s1 + $0x278] sm:$0xff]
    %v115 = vld [vmem:[%s1 + $0x280] sm:$0xff]
    %v116 = vld [vmem:[%s1 + $0x288] sm:$0xff]
    %v117 = vld [vmem:[%s1 + $0x290] sm:$0xff]
    %v118 = vld [vmem:[%s1 + $0x298] sm:$0xff]
    %v119 = vld [vmem:[%s1 + $0x2a0] sm:$0xff]
    %v120 = vld [vmem:[%s1 + $0x2a8] sm:$0xff]
    %v121 = vld [vmem:[%s1 + $0x2b0] sm:$0xff]
    %v122 = vld [vmem:[%s1 + $0x2b8] sm:$0xff]
    %v123 = vld [vmem:[%s1 + $0x2c0] sm:$0xff]
    %v124 = vld [vmem:[%s1 + $0x2c8] sm:$0xff]
    %v125 = vld [vmem:[%s1 + $0x2d0] sm:$0xff]
    %v126 = vld [vmem:[%s1 + $0x2d8] sm:$0xff]
    %v127 = vld [vmem:[%s1 + $0x2e0] sm:$0xff]
    %v128 = vld [vmem:[%s1 + $0x2e8] sm:$0xff]
    %v129 = vld [vmem:[%s1 + $0x2f0] sm:$0xff]
    %v130 = vld [vmem:[%s1 + $0x2f8] sm:$0xff]
    %v131 = vld [vmem:[%s1 + $0x300] sm:$0xff]
    %v132 = vld [vmem:[%s1 + $0x308] sm:$0xff]
    %v133 = vld [vmem:[%s1 + $0x310] sm:$0xff]
    %v134 = vld [vmem:[%s1 + $0x318] sm:$0xff]
    %v135 = vld [vmem:[%s1 + $0x320] sm:$0xff]
    %v136 = vld [vmem:[%s1 + $0x328] sm:$0xff]
    %v137 = vld [vmem:[%s1 + $0x330] sm:$0xff]
    %v138 = vld [vmem:[%s1 + $0x338] sm:$0xff]
    %v139 = vld [vmem:[%s1 + $0x340] sm:$0xff]
    %v140 = vld [vmem:[%s1 + $0x348] sm:$0xff]
    %v141 = vld [vmem:[%s1 + $0x350] sm:$0xff]
    %v142 = vld [vmem:[%s1 + $0x358] sm:$0xff]
    %v143 = vld [vmem:[%s1 + $0x360] sm:$0xff]
    %v144 = vld [vmem:[%s1 + $0x368] sm:$0xff]
    %v145 = vld [vmem:[%s1 + $0x370] sm:$0xff]
    %v146 = vld [vmem:[%s1 + $0x378] sm:$0xff]
    %v147 = vld [vmem:[%s1 + $0x380] sm:$0xff]
    %v148 = vld [vmem:[%s1 + $0x388] sm:$0xff]
    %v149 = vld [vmem:[%s1 + $0x390] sm:$0xff]
    %v150 = vld [vmem:[%s1 + $0x398] sm:$0xff]
    %v151 = vld [vmem:[%s1 + $0x3a0] sm:$0xff]
    %v152 = vld [vmem:[%s1 + $0x3a8] sm:$0xff]
    %v153 = vld [vmem:[%s1 + $0x3b0] sm:$0xff]
    %v154 = vld [vmem:[%s1 + $0x3b8] sm:$0xff]
    %v155 = vld [vmem:[%s1 + $0x3c0] sm:$0xff]
    %v156 = vld [vmem:[%s1 + $0x3c8] sm:$0xff]
    %v157 = vld [vmem:[%s1 + $0x3d0] sm:$0xff]
    %v158 = vld [vmem:[%s1 + $0x3d8] sm:$0xff]
    %v159 = vld [vmem:[%s1 + $0x3e0] sm:$0xff]
    %v160 = vld [vmem:[%s1 + $0x3e8] sm:$0xff]
    %v161 = vld [vmem:[%s1 + $0x3f0] sm:$0xff]
    %v162 = vld [vmem:[%s1 + $0x3f8] sm:$0xff]
    %v163 = vld [vmem:[%s1 + $0x400] sm:$0xff]
    %v164 = vld [vmem:[%s1 + $0x408] sm:$0xff]
    %v165 = vld [vmem:[%s1 + $0x410] sm:$0xff]
    %v166 = vld [vmem:[%s1 + $0x418] sm:$0xff]
    %v167 = vld [vmem:[%s1 + $0x420] sm:$0xff]
    %v168 = vld [vmem:[%s1 + $0x428] sm:$0xff]
    %v169 = vld [vmem:[%s1 + $0x430] sm:$0xff]
    %v170 = vld [vmem:[%s1 + $0x438] sm:$0xff]
    %v171 = vld [vmem:[%s1 + $0x440] sm:$0xff]
    %v172 = vld [vmem:[%s1 + $0x448] sm:$0xff]
    %v173 = vld [vmem:[%s1 + $0x450] sm:$0xff]
    %v174 = vld [vmem:[%s1 + $0x458] sm:$0xff]
    %v175 = vld [vmem:[%s1 + $0x460] sm:$0xff]
    %v176 = vld [vmem:[%s1 + $0x468] sm:$0xff]
    %v177 = vld [vmem:[%s1 + $0x470] sm:$0xff]
    %v178 = vld [vmem:[%s1 + $0x478] sm:$0xff]
    %v179 = vld [vmem:[%s1 + $0x480] sm:$0xff]
    %v180 = vld [vmem:[%s1 + $0x488] sm:$0xff]
    %v181 = vld [vmem:[%s1 + $0x490] sm:$0xff]
    %v182 = vld [vmem:[%s1 + $0x498] sm:$0xff]
    %v183 = vld [vmem:[%s1 + $0x4a0] sm:$0xff]
    %v184 = vld [vmem:[%s1 + $0x4a8] sm:$0xff]
    %v185 = vld [vmem:[%s1 + $0x4b0] sm:$0xff]
    %v186 = vld [vmem:[%s1 + $0x4b8] sm:$0xff]
    %v187 = vld [vmem:[%s1 + $0x4c0] sm:$0xff]
    %v188 = vld [vmem:[%s1 + $0x4c8] sm:$0xff]
    %v189 = vld [vmem:[%s1 + $0x4d0] sm:$0xff]
    %v190 = vld [vmem:[%s1 + $0x4d8] sm:$0xff]
    %v191 = vld [vmem:[%s1 + $0x4e0] sm:$0xff]
    %v192 = vld [vmem:[%s1 + $0x4e8] sm:$0xff]
    %v193 = vld [vmem:[%s1 + $0x4f0] sm:$0xff]
    %v194 = vld [vmem:[%s1 + $0x4f8] sm:$0xff]
    %v195 = vld [vmem:[%s1 + $0x500] sm:$0xff]
    %v196 = vld [vmem:[%s1 + $0x508] sm:$0xff]
    %v197 = vld [vmem:[%s1 + $0x510] sm:$0xff]
    %v198 = vld [vmem:[%s1 + $0x518] sm:$0xff]
    %v199 = vld [vmem:[%s1 + $0x520] sm:$0xff]
    %v200 = vld [vmem:[%s1 + $0x528] sm:$0xff]
    %v201 = vld [vmem:[%s1 + $0x530] sm:$0xff]
    %v202 = vld [vmem:[%s1 + $0x538] sm:$0xff]
    %v203 = vld [vmem:[%s1 + $0x540] sm:$0xff]
    %v204 = vld [vmem:[%s1 + $0x548] sm:$0xff]
    %v205 = vld [vmem:[%s1 + $0x550] sm:$0xff]
    %v206 = vld [vmem:[%s1 + $0x558] sm:$0xff]
    %v207 = vld [vmem:[%s1 + $0x560] sm:$0xff]
    %v208 = vld [vmem:[%s1 + $0x568] sm:$0xff]
    %v209 = vld [vmem:[%s1 + $0x570] sm:$0xff]
    %v210 = vld [vmem:[%s1 + $0x578] sm:$0xff]
    %v211 = vld [vmem:[%s1 + $0x580] sm:$0xff]
    %v212 = vld [vmem:[%s1 + $0x588] sm:$0xff]
    %v213 = vld [vmem:[%s1 + $0x590] sm:$0xff]
    %v214 = vld [vmem:[%s1 + $0x598] sm:$0xff]
    %v215 = vld [vmem:[%s1 + $0x5a0] sm:$0xff]
    %v216 = vld [vmem:[%s1 + $0x5a8] sm:$0xff]
    %v217 = vld [vmem:[%s1 + $0x5b0] sm:$0xff]
    %v218 = vld [vmem:[%s1 + $0x5b8] sm:$0xff]
    %v219 = vld [vmem:[%s1 + $0x5c0] sm:$0xff]
    %v220 = vld [vmem:[%s1 + $0x5c8] sm:$0xff]
    %v221 = vld [vmem:[%s1 + $0x5d0] sm:$0xff]
    %v222 = vld [vmem:[%s1 + $0x5d8] sm:$0xff]
    %v223 = vld [vmem:[%s1 + $0x5e0] sm:$0xff]
    %v224 = vld [vmem:[%s1 + $0x5e8] sm:$0xff]
    %v225 = vld [vmem:[%s1 + $0x5f0] sm:$0xff]
    %v226 = vld [vmem:[%s1 + $0x5f8] sm:$0xff]
    %v227 = vld [vmem:[%s1 + $0x600] sm:$0xff]
    %v228 = vld [vmem:[%s1 + $0x608] sm:$0xff]
    %v229 = vld [vmem:[%s1 + $0x610] sm:$0xff]
    %v230 = vld [vmem:[%s1 + $0x618] sm:$0xff]
    %v231 = vld [vmem:[%s1 + $0x620] sm:$0xff]
    %v232 = vld [vmem:[%s1 + $0x628] sm:$0xff]
    %v233 = vld [vmem:[%s1 + $0x630] sm:$0xff]
    %v234 = vld [vmem:[%s1 + $0x638] sm:$0xff]
    %v235 = vld [vmem:[%s1 + $0x640] sm:$0xff]
    %v236 = vld [vmem:[%s1 + $0x648] sm:$0xff]
    %v237 = vld [vmem:[%s1 + $0x650] sm:$0xff]
    %v238 = vld [vmem:[%s1 + $0x658] sm:$0xff]
    %v239 = vld [vmem:[%s1 + $0x660] sm:$0xff]
    %v240 = vld [vmem:[%s1 + $0x668] sm:$0xff]
    %v241 = vld [vmem:[%s1 + $0x670] sm:$0xff]
    %v242 = vld [vmem:[%s1 + $0x678] sm:$0xff]
    %v243 = vld [vmem:[%s1 + $0x680] sm:$0xff]
    %v244 = vld [vmem:[%s1 + $0x688] sm:$0xff]
    %v245 = vld [vmem:[%s1 + $0x690] sm:$0xff]
    %v246 = vld [vmem:[%s1 + $0x698] sm:$0xff]
    %v247 = vld [vmem:[%s1 + $0x6a0] sm:$0xff]
    %v248 = vld [vmem:[%s1 + $0x6a8] sm:$0xff]
    %v249 = vld [vmem:[%s1 + $0x6b0] sm:$0xff]
    %v250 = vld [vmem:[%s1 + $0x6b8] sm:$0xff]
    %v251 = vld [vmem:[%s1 + $0x6c0] sm:$0xff]
    %v252 = vld [vmem:[%s1 + $0x6c8] sm:$0xff]
    %v253 = vld [vmem:[%s1 + $0x6d0] sm:$0xff]
    %v254 = vld [vmem:[%s1 + $0x6d8] sm:$0xff]
    %v255 = vld [vmem:[%s1 + $0x6e0] sm:$0xff]
    %v256 = vld [vmem:[%s1 + $0x6e8] sm:$0xff]
    %v257 = vld [vmem:[%s1 + $0x6f0] sm:$0xff]
    %v258 = vld [vmem:[%s1 + $0x6f8] sm:$0xff]
    %v259 = vld [vmem:[%s1 + $0x700] sm:$0xff]
    %v260 = vld [vmem:[%s1 + $0x708] sm:$0xff]
    %v261 = vld [vmem:[%s1 + $0x710] sm:$0xff]
    %v262 = vld [vmem:[%s1 + $0x718] sm:$0xff]
    %v263 = vld [vmem:[%s1 + $0x720] sm:$0xff]
    %v264 = vld [vmem:[%s1 + $0x728] sm:$0xff]
    %v265 = vld [vmem:[%s1 + $0x730] sm:$0xff]
    %v266 = vld [vmem:[%s1 + $0x738] sm:$0xff]
    %v267 = vld [vmem:[%s1 + $0x740] sm:$0xff]
    %v268 = vld [vmem:[%s1 + $0x748] sm:$0xff]
    %v269 = vld [vmem:[%s1 + $0x750] sm:$0xff]
    %v270 = vld [vmem:[%s1 + $0x758] sm:$0xff]
    %v271 = vld [vmem:[%s1 + $0x760] sm:$0xff]
    %v272 = vld [vmem:[%s1 + $0x768] sm:$0xff]
    %v273 = vld [vmem:[%s1 + $0x770] sm:$0xff]
    %v274 = vld [vmem:[%s1 + $0x778] sm:$0xff]
    %v275 = vld [vmem:[%s1 + $0x780] sm:$0xff]
    %v276 = vld [vmem:[%s1 + $0x788] sm:$0xff]
    %v277 = vld [vmem:[%s1 + $0x790] sm:$0xff]
    %v278 = vld [vmem:[%s1 + $0x798] sm:$0xff]
    %v279 = vld [vmem:[%s1 + $0x7a0] sm:$0xff]
    %v280 = vld [vmem:[%s1 + $0x7a8] sm:$0xff]
    %v281 = vld [vmem:[%s1 + $0x7b0] sm:$0xff]
    %v282 = vld [vmem:[%s1 + $0x7b8] sm:$0xff]
    %v283 = vld [vmem:[%s1 + $0x7c0] sm:$0xff]
    %v284 = vld [vmem:[%s1 + $0x7c8] sm:$0xff]
    %v285 = vld [vmem:[%s1 + $0x7d0] sm:$0xff]
    %v286 = vld [vmem:[%s1 + $0x7d8] sm:$0xff]
    %v287 = vld [vmem:[%s1 + $0x7e0] sm:$0xff]
    %v288 = vld [vmem:[%s1 + $0x7e8] sm:$0xff]
    %v289 = vld [vmem:[%s1 + $0x7f0] sm:$0xff]
    %v290 = vld [vmem:[%s1 + $0x7f8] sm:$0xff]
    %v291 = vld [vmem:[%s1 + $0x800] sm:$0xff]
    %v292 = vld [vmem:[%s1 + $0x808] sm:$0xff]
    %v293 = vld [vmem:[%s1 + $0x810] sm:$0xff]
    %v294 = vld [vmem:[%s1 + $0x818] sm:$0xff]
    %v295 = vld [vmem:[%s1 + $0x820] sm:$0xff]
    %v296 = vld [vmem:[%s1 + $0x828] sm:$0xff]
    %v297 = vld [vmem:[%s1 + $0x830] sm:$0xff]
    %v298 = vld [vmem:[%s1 + $0x838] sm:$0xff]
    %v299 = vld [vmem:[%s1 + $0x840] sm:$0xff]
    %v300 = vld [vmem:[%s1 + $0x848] sm:$0xff]
    %v301 = vld [vmem:[%s1 + $0x850] sm:$0xff]
    %v302 = vld [vmem:[%s1 + $0x858] sm:$0xff]
    %v303 = vld [vmem:[%s1 + $0x860] sm:$0xff]
    %v304 = vld [vmem:[%s1 + $0x868] sm:$0xff]
    %v305 = vld [vmem:[%s1 + $0x870] sm:$0xff]
    %v306 = vld [vmem:[%s1 + $0x878] sm:$0xff]
    %v307 = vld [vmem:[%s1 + $0x880] sm:$0xff]
    %v308 = vld [vmem:[%s1 + $0x888] sm:$0xff]
    %v309 = vld [vmem:[%s1 + $0x890] sm:$0xff]
    %v310 = vld [vmem:[%s1 + $0x898] sm:$0xff]
    %v311 = vld [vmem:[%s1 + $0x8a0] sm:$0xff]
    %v312 = vld [vmem:[%s1 + $0x8a8] sm:$0xff]
    %v313 = vld [vmem:[%s1 + $0x8b0] sm:$0xff]
    %v314 = vld [vmem:[%s1 + $0x8b8] sm:$0xff]
    %v315 = vld [vmem:[%s1 + $0x8c0] sm:$0xff]
    %v316 = vld [vmem:[%s1 + $0x8c8] sm:$0xff]
    %v317 = vld [vmem:[%s1 + $0x8d0] sm:$0xff]
    %v318 = vld [vmem:[%s1 + $0x8d8] sm:$0xff]
    %v319 = vld [vmem:[%s1 + $0x8e0] sm:$0xff]
    %v320 = vld [vmem:[%s1 + $0x8e8] sm:$0xff]
    %v321 = vld [vmem:[%s1 + $0x8f0] sm:$0xff]
    %v322 = vld [vmem:[%s1 + $0x8f8] sm:$0xff]
    %v323 = vld [vmem:[%s1 + $0x900] sm:$0xff]
    %v324 = vld [vmem:[%s1 + $0x908] sm:$0xff]
    %v325 = vld [vmem:[%s1 + $0x910] sm:$0xff]
    %v326 = vld [vmem:[%s1 + $0x918] sm:$0xff]
    %v327 = vld [vmem:[%s1 + $0x920] sm:$0xff]
    %v328 = vld [vmem:[%s1 + $0x928] sm:$0xff]
    %v329 = vld [vmem:[%s1 + $0x930] sm:$0xff]
    %v330 = vld [vmem:[%s1 + $0x938] sm:$0xff]
    %v331 = vld [vmem:[%s1 + $0x940] sm:$0xff]
    %v332 = vld [vmem:[%s1 + $0x948] sm:$0xff]
    %v333 = vld [vmem:[%s1 + $0x950] sm:$0xff]
    %v334 = vld [vmem:[%s1 + $0x958] sm:$0xff]
    %v335 = vld [vmem:[%s1 + $0x960] sm:$0xff]
    %v336 = vld [vmem:[%s1 + $0x968] sm:$0xff]
    %v337 = vld [vmem:[%s1 + $0x970] sm:$0xff]
    %v338 = vld [vmem:[%s1 + $0x978] sm:$0xff]
    %v339 = vld [vmem:[%s1 + $0x980] sm:$0xff]
    %v340 = vld [vmem:[%s1 + $0x988] sm:$0xff]
    %v341 = vld [vmem:[%s1 + $0x990] sm:$0xff]
    %v342 = vld [vmem:[%s1 + $0x998] sm:$0xff]
    %v343 = vld [vmem:[%s1 + $0x9a0] sm:$0xff]
    %v344 = vld [vmem:[%s1 + $0x9a8] sm:$0xff]
    %v345 = vld [vmem:[%s1 + $0x9b0] sm:$0xff]
    %v346 = vld [vmem:[%s1 + $0x9b8] sm:$0xff]
    %v347 = vld [vmem:[%s1 + $0x9c0] sm:$0xff]
    %v348 = vld [vmem:[%s1 + $0x9c8] sm:$0xff]
    %v349 = vld [vmem:[%s1 + $0x9d0] sm:$0xff]
    %v350 = vld [vmem:[%s1 + $0x9d8] sm:$0xff]
    %v351 = vld [vmem:[%s1 + $0x9e0] sm:$0xff]
    %v352 = vld [vmem:[%s1 + $0x9e8] sm:$0xff]
    %v353 = vld [vmem:[%s1 + $0x9f0] sm:$0xff]
    %v354 = vld [vmem:[%s1 + $0x9f8] sm:$0xff]
    %v355 = vld [vmem:[%s1 + $0xa00] sm:$0xff]
    %v356 = vld [vmem:[%s1 + $0xa08] sm:$0xff]
    %v357 = vld [vmem:[%s1 + $0xa10] sm:$0xff]
    %v358 = vld [vmem:[%s1 + $0xa18] sm:$0xff]
    %v359 = vld [vmem:[%s1 + $0xa20] sm:$0xff]
    %v360 = vld [vmem:[%s1 + $0xa28] sm:$0xff]
    %v361 = vld [vmem:[%s1 + $0xa30] sm:$0xff]
    %v362 = vld [vmem:[%s1 + $0xa38] sm:$0xff]
    %v363 = vld [vmem:[%s1 + $0xa40] sm:$0xff]
    %v364 = vld [vmem:[%s1 + $0xa48] sm:$0xff]
    %v365 = vld [vmem:[%s1 + $0xa50] sm:$0xff]
    %v366 = vld [vmem:[%s1 + $0xa58] sm:$0xff]
    %v367 = vld [vmem:[%s1 + $0xa60] sm:$0xff]
    %v368 = vld [vmem:[%s1 + $0xa68] sm:$0xff]
    %v369 = vld [vmem:[%s1 + $0xa70] sm:$0xff]
    %v370 = vld [vmem:[%s1 + $0xa78] sm:$0xff]
    %v371 = vld [vmem:[%s1 + $0xa80] sm:$0xff]
    %v372 = vld [vmem:[%s1 + $0xa88] sm:$0xff]
    %v373 = vld [vmem:[%s1 + $0xa90] sm:$0xff]
    %v374 = vld [vmem:[%s1 + $0xa98] sm:$0xff]
    %v375 = vld [vmem:[%s1 + $0xaa0] sm:$0xff]
    %v376 = vld [vmem:[%s1 + $0xaa8] sm:$0xff]
    %v377 = vld [vmem:[%s1 + $0xab0] sm:$0xff]
    %v378 = vld [vmem:[%s1 + $0xab8] sm:$0xff]
    %v379 = vld [vmem:[%s1 + $0xac0] sm:$0xff]
    %v380 = vld [vmem:[%s1 + $0xac8] sm:$0xff]
    %v381 = vld [vmem:[%s1 + $0xad0] sm:$0xff]
    %v382 = vld [vmem:[%s1 + $0xad8] sm:$0xff]
    %v383 = vld [vmem:[%s1 + $0xae0] sm:$0xff]
    %v384 = vld [vmem:[%s1 + $0xae8] sm:$0xff]
    %v385 = vld [vmem:[%s1 + $0xaf0] sm:$0xff]
    %v386 = vld [vmem:[%s1 + $0xaf8] sm:$0xff]
    %v387 = vld [vmem:[%s1 + $0xb00] sm:$0xff]
    %v388 = vld [vmem:[%s1 + $0xb08] sm:$0xff]
    %v389 = vld [vmem:[%s1 + $0xb10] sm:$0xff]
    %v390 = vld [vmem:[%s1 + $0xb18] sm:$0xff]
    %v391 = vld [vmem:[%s1 + $0xb20] sm:$0xff]
    %v392 = vld [vmem:[%s1 + $0xb28] sm:$0xff]
    %v393 = vld [vmem:[%s1 + $0xb30] sm:$0xff]
    %v394 = vld [vmem:[%s1 + $0xb38] sm:$0xff]
    %v395 = vld [vmem:[%s1 + $0xb40] sm:$0xff]
    %v396 = vld [vmem:[%s1 + $0xb48] sm:$0xff]
    %v397 = vld [vmem:[%s1 + $0xb50] sm:$0xff]
    %v398 = vld [vmem:[%s1 + $0xb58] sm:$0xff]
    %v399 = vld [vmem:[%s1 + $0xb60] sm:$0xff]
    %v400 = vld [vmem:[%s1 + $0xb68] sm:$0xff]
    %v401 = vld [vmem:[%s1 + $0xb70] sm:$0xff]
    %v402 = vld [vmem:[%s1 + $0xb78] sm:$0xff]
    %v403 = vld [vmem:[%s1 + $0xb80] sm:$0xff]
    %v404 = vld [vmem:[%s1 + $0xb88] sm:$0xff]
    %v405 = vld [vmem:[%s1 + $0xb90] sm:$0xff]
    %v406 = vld [vmem:[%s1 + $0xb98] sm:$0xff]
    %v407 = vld [vmem:[%s1 + $0xba0] sm:$0xff]
    %v408 = vld [vmem:[%s1 + $0xba8] sm:$0xff]
    %v409 = vld [vmem:[%s1 + $0xbb0] sm:$0xff]
    %v410 = vld [vmem:[%s1 + $0xbb8] sm:$0xff]
    %v411 = vld [vmem:[%s1 + $0xbc0] sm:$0xff]
    %v412 = vld [vmem:[%s1 + $0xbc8] sm:$0xff]
    %v413 = vld [vmem:[%s1 + $0xbd0] sm:$0xff]
    %v414 = vld [vmem:[%s1 + $0xbd8] sm:$0xff]
    %v415 = vld [vmem:[%s1 + $0xbe0] sm:$0xff]
    %v416 = vld [vmem:[%s1 + $0xbe8] sm:$0xff]
    %v417 = vld [vmem:[%s1 + $0xbf0] sm:$0xff]
    %v418 = vld [vmem:[%s1 + $0xbf8] sm:$0xff]
    %v419 = vld [vmem:[%s1 + $0xc00] sm:$0xff]
    %v420 = vld [vmem:[%s1 + $0xc08] sm:$0xff]
    %v421 = vld [vmem:[%s1 + $0xc10] sm:$0xff]
    %v422 = vld [vmem:[%s1 + $0xc18] sm:$0xff]
    %v423 = vld [vmem:[%s1 + $0xc20] sm:$0xff]
    %v424 = vld [vmem:[%s1 + $0xc28] sm:$0xff]
    %v425 = vld [vmem:[%s1 + $0xc30] sm:$0xff]
    %v426 = vld [vmem:[%s1 + $0xc38] sm:$0xff]
    %v427 = vld [vmem:[%s1 + $0xc40] sm:$0xff]
    %v428 = vld [vmem:[%s1 + $0xc48] sm:$0xff]
    %v429 = vld [vmem:[%s1 + $0xc50] sm:$0xff]
    %v430 = vld [vmem:[%s1 + $0xc58] sm:$0xff]
    %v431 = vld [vmem:[%s1 + $0xc60] sm:$0xff]
    %v432 = vld [vmem:[%s1 + $0xc68] sm:$0xff]
    %v433 = vld [vmem:[%s1 + $0xc70] sm:$0xff]
    %v434 = vld [vmem:[%s1 + $0xc78] sm:$0xff]
    %v435 = vld [vmem:[%s1 + $0xc80] sm:$0xff]
    %v436 = vld [vmem:[%s1 + $0xc88] sm:$0xff]
    %v437 = vld [vmem:[%s1 + $0xc90] sm:$0xff]
    %v438 = vld [vmem:[%s1 + $0xc98] sm:$0xff]
    %v439 = vld [vmem:[%s1 + $0xca0] sm:$0xff]
    %v440 = vld [vmem:[%s1 + $0xca8] sm:$0xff]
    %v441 = vld [vmem:[%s1 + $0xcb0] sm:$0xff]
    %v442 = vld [vmem:[%s1 + $0xcb8] sm:$0xff]
    %v443 = vld [vmem:[%s1 + $0xcc0] sm:$0xff]
    %v444 = vld [vmem:[%s1 + $0xcc8] sm:$0xff]
    %v445 = vld [vmem:[%s1 + $0xcd0] sm:$0xff]
    %v446 = vld [vmem:[%s1 + $0xcd8] sm:$0xff]
    %v447 = vld [vmem:[%s1 + $0xce0] sm:$0xff]
    %v448 = vld [vmem:[%s1 + $0xce8] sm:$0xff]
    %v449 = vld [vmem:[%s1 + $0xcf0] sm:$0xff]
    %v450 = vld [vmem:[%s1 + $0xcf8] sm:$0xff]
    %v451 = vld [vmem:[%s1 + $0xd00] sm:$0xff]
    %v452 = vld [vmem:[%s1 + $0xd08] sm:$0xff]
    %v453 = vld [vmem:[%s1 + $0xd10] sm:$0xff]
    %v454 = vld [vmem:[%s1 + $0xd18] sm:$0xff]
    %v455 = vld [vmem:[%s1 + $0xd20] sm:$0xff]
    %v456 = vld [vmem:[%s1 + $0xd28] sm:$0xff]
    %v457 = vld [vmem:[%s1 + $0xd30] sm:$0xff]
    %v458 = vld [vmem:[%s1 + $0xd38] sm:$0xff]
    %v459 = vld [vmem:[%s1 + $0xd40] sm:$0xff]
    %v460 = vld [vmem:[%s1 + $0xd48] sm:$0xff]
    %v461 = vld [vmem:[%s1 + $0xd50] sm:$0xff]
    %v462 = vld [vmem:[%s1 + $0xd58] sm:$0xff]
    %v463 = vld [vmem:[%s1 + $0xd60] sm:$0xff]
    %v464 = vld [vmem:[%s1 + $0xd68] sm:$0xff]
    %v465 = vld [vmem:[%s1 + $0xd70] sm:$0xff]
    %v466 = vld [vmem:[%s1 + $0xd78] sm:$0xff]
    %v467 = vld [vmem:[%s1 + $0xd80] sm:$0xff]
    %v468 = vld [vmem:[%s1 + $0xd88] sm:$0xff]
    %v469 = vld [vmem:[%s1 + $0xd90] sm:$0xff]
    %v470 = vld [vmem:[%s1 + $0xd98] sm:$0xff]
    %v471 = vld [vmem:[%s1 + $0xda0] sm:$0xff]
    %v472 = vld [vmem:[%s1 + $0xda8] sm:$0xff]
    %v473 = vld [vmem:[%s1 + $0xdb0] sm:$0xff]
    %v474 = vld [vmem:[%s1 + $0xdb8] sm:$0xff]
    %v475 = vld [vmem:[%s1 + $0xdc0] sm:$0xff]
    %v476 = vld [vmem:[%s1 + $0xdc8] sm:$0xff]
    %v477 = vld [vmem:[%s1 + $0xdd0] sm:$0xff]
    %v478 = vld [vmem:[%s1 + $0xdd8] sm:$0xff]
    %v479 = vld [vmem:[%s1 + $0xde0] sm:$0xff]
    %v480 = vld [vmem:[%s1 + $0xde8] sm:$0xff]
    %v481 = vld [vmem:[%s1 + $0xdf0] sm:$0xff]
    %v482 = vld [vmem:[%s1 + $0xdf8] sm:$0xff]
    %v483 = vld [vmem:[%s1 + $0xe00] sm:$0xff]
    %v484 = vld [vmem:[%s1 + $0xe08] sm:$0xff]
    %v485 = vld [vmem:[%s1 + $0xe10] sm:$0xff]
    %v486 = vld [vmem:[%s1 + $0xe18] sm:$0xff]
    %v487 = vld [vmem:[%s1 + $0xe20] sm:$0xff]
    %v488 = vld [vmem:[%s1 + $0xe28] sm:$0xff]
    %v489 = vld [vmem:[%s1 + $0xe30] sm:$0xff]
    %v490 = vld [vmem:[%s1 + $0xe38] sm:$0xff]
    %v491 = vld [vmem:[%s1 + $0xe40] sm:$0xff]
    %v492 = vld [vmem:[%s1 + $0xe48] sm:$0xff]
    %v493 = vld [vmem:[%s1 + $0xe50] sm:$0xff]
    %v494 = vld [vmem:[%s1 + $0xe58] sm:$0xff]
    %v495 = vld [vmem:[%s1 + $0xe60] sm:$0xff]
    %v496 = vld [vmem:[%s1 + $0xe68] sm:$0xff]
    %v497 = vld [vmem:[%s1 + $0xe70] sm:$0xff]
    %v498 = vld [vmem:[%s1 + $0xe78] sm:$0xff]
    %v499 = vld [vmem:[%s1 + $0xe80] sm:$0xff]
    %v500 = vld [vmem:[%s1 + $0xe88] sm:$0xff]
    %v501 = vld [vmem:[%s1 + $0xe90] sm:$0xff]
    %v502 = vld [vmem:[%s1 + $0xe98] sm:$0xff]
    %v503 = vld [vmem:[%s1 + $0xea0] sm:$0xff]
    %v504 = vld [vmem:[%s1 + $0xea8] sm:$0xff]
    %v505 = vld [vmem:[%s1 + $0xeb0] sm:$0xff]
    %v506 = vld [vmem:[%s1 + $0xeb8] sm:$0xff]
    %v507 = vld [vmem:[%s1 + $0xec0] sm:$0xff]
    %v508 = vld [vmem:[%s1 + $0xec8] sm:$0xff]
    %v509 = vld [vmem:[%s1 + $0xed0] sm:$0xff]
    %v510 = vld [vmem:[%s1 + $0xed8] sm:$0xff]
    %v511 = vld [vmem:[%s1 + $0xee0] sm:$0xff]
    %v512 = vld [vmem:[%s1 + $0xee8] sm:$0xff]
    %v513 = vld [vmem:[%s1 + $0xef0] sm:$0xff]
    %v514 = vld [vmem:[%s1 + $0xef8] sm:$0xff]
    %v515 = vld [vmem:[%s1 + $0xf00] sm:$0xff]
    %v516 = vld [vmem:[%s1 + $0xf08] sm:$0xff]
    %v517 = vld [vmem:[%s1 + $0xf10] sm:$0xff]
    %v518 = vld [vmem:[%s1 + $0xf18] sm:$0xff]
    %v519 = vld [vmem:[%s1 + $0xf20] sm:$0xff]
    %v520 = vld [vmem:[%s1 + $0xf28] sm:$0xff]
    %v521 = vld [vmem:[%s1 + $0xf30] sm:$0xff]
    %v522 = vld [vmem:[%s1 + $0xf38] sm:$0xff]
    %v523 = vld [vmem:[%s1 + $0xf40] sm:$0xff]
    %v524 = vld [vmem:[%s1 + $0xf48] sm:$0xff]
    %v525 = vld [vmem:[%s1 + $0xf50] sm:$0xff]
    %v526 = vld [vmem:[%s1 + $0xf58] sm:$0xff]
    %v527 = vld [vmem:[%s1 + $0xf60] sm:$0xff]
    %v528 = vld [vmem:[%s1 + $0xf68] sm:$0xff]
    %v529 = vld [vmem:[%s1 + $0xf70] sm:$0xff]
    %v530 = vld [vmem:[%s1 + $0xf78] sm:$0xff]
    %v531 = vld [vmem:[%s1 + $0xf80] sm:$0xff]
    %v532 = vld [vmem:[%s1 + $0xf88] sm:$0xff]
    %v533 = vld [vmem:[%s1 + $0xf90] sm:$0xff]
    %v534 = vld [vmem:[%s1 + $0xf98] sm:$0xff]
    %v535 = vld [vmem:[%s1 + $0xfa0] sm:$0xff]
    %v536 = vld [vmem:[%s1 + $0xfa8] sm:$0xff]
    %v537 = vld [vmem:[%s1 + $0xfb0] sm:$0xff]
    %v538 = vld [vmem:[%s1 + $0xfb8] sm:$0xff]
    %v539 = vld [vmem:[%s1 + $0xfc0] sm:$0xff]
    %v540 = vld [vmem:[%s1 + $0xfc8] sm:$0xff]
    %v541 = vld [vmem:[%s1 + $0xfd0] sm:$0xff]
    %v542 = vld [vmem:[%s1 + $0xfd8] sm:$0xff]
    %v543 = vld [vmem:[%s1 + $0xfe0] sm:$0xff]
    %v544 = vld [vmem:[%s1 + $0xfe8] sm:$0xff]
    %v545 = vld [vmem:[%s1 + $0xff0] sm:$0xff]
    %v546 = vld [vmem:[%s1 + $0xff8] sm:$0xff]
    %v555 = vunpack.c.l.b16 %v27
    %v556 = vunpack.c.h.b16 %v27
    %v557 = vunpack.c.l.b16 %v28
    %v558 = vunpack.c.h.b16 %v28
    %v559 = vunpack.c.l.b16 %v29
    %v560 = vunpack.c.h.b16 %v29
    %v561 = vunpack.c.l.b16 %v30
    %v562 = vunpack.c.h.b16 %v30
    %v563 = vunpack.c.l.b16 %v31
    %v564 = vunpack.c.h.b16 %v31
    %v565 = vunpack.c.l.b16 %v32
    %v566 = vunpack.c.h.b16 %v32
    %v567 = vunpack.c.l.b16 %v33
    %v568 = vunpack.c.h.b16 %v33
    %v569 = vunpack.c.l.b16 %v34
    %v570 = vunpack.c.h.b16 %v34
    %v571 = vpack.c.b16 %v555, %v555
    %v572 = vpack.c.b16 %v556, %v556
    %v573 = vpack.c.b16 %v557, %v557
    %v574 = vpack.c.b16 %v558, %v558
    %v575 = vpack.c.b16 %v559, %v559
    %v576 = vpack.c.b16 %v560, %v560
    %v577 = vpack.c.b16 %v561, %v561
    %v578 = vpack.c.b16 %v562, %v562
    %v579 = vpack.c.b16 %v563, %v563
    %v580 = vpack.c.b16 %v564, %v564
    %v581 = vpack.c.b16 %v565, %v565
    %v582 = vpack.c.b16 %v566, %v566
    %v583 = vpack.c.b16 %v567, %v567
    %v584 = vpack.c.b16 %v568, %v568
    %v585 = vpack.c.b16 %v569, %v569
    %v586 = vpack.c.b16 %v570, %v570
    %v1115 = vunpack.c.l.b16 %v35
    %v1116 = vunpack.c.h.b16 %v35
    %v1117 = vunpack.c.l.b16 %v36
    %v1118 = vunpack.c.h.b16 %v36
    %v1119 = vunpack.c.l.b16 %v37
    %v1120 = vunpack.c.h.b16 %v37
    %v1121 = vunpack.c.l.b16 %v38
    %v1122 = vunpack.c.h.b16 %v38
    %v1123 = vunpack.c.l.b16 %v39
    %v1124 = vunpack.c.h.b16 %v39
    %v1125 = vunpack.c.l.b16 %v40
    %v1126 = vunpack.c.h.b16 %v40
    %v1127 = vunpack.c.l.b16 %v41
    %v1128 = vunpack.c.h.b16 %v41
    %v1129 = vunpack.c.l.b16 %v42
    %v1130 = vunpack.c.h.b16 %v42
    %v1131 = vunpack.c.l.b16 %v43
    %v1132 = vunpack.c.h.b16 %v43
    %v1133 = vunpack.c.l.b16 %v44
    %v1134 = vunpack.c.h.b16 %v44
    %v1135 = vunpack.c.l.b16 %v45
    %v1136 = vunpack.c.h.b16 %v45
    %v1137 = vunpack.c.l.b16 %v46
    %v1138 = vunpack.c.h.b16 %v46
    %v1139 = vunpack.c.l.b16 %v47
    %v1140 = vunpack.c.h.b16 %v47
    %v1141 = vunpack.c.l.b16 %v48
    %v1142 = vunpack.c.h.b16 %v48
    %v1143 = vunpack.c.l.b16 %v49
    %v1144 = vunpack.c.h.b16 %v49
    %v1145 = vunpack.c.l.b16 %v50
    %v1146 = vunpack.c.h.b16 %v50
    %v1147 = vunpack.c.l.b16 %v51
    %v1148 = vunpack.c.h.b16 %v51
    %v1149 = vunpack.c.l.b16 %v52
    %v1150 = vunpack.c.h.b16 %v52
    %v1151 = vunpack.c.l.b16 %v53
    %v1152 = vunpack.c.h.b16 %v53
    %v1153 = vunpack.c.l.b16 %v54
    %v1154 = vunpack.c.h.b16 %v54
    %v1155 = vunpack.c.l.b16 %v55
    %v1156 = vunpack.c.h.b16 %v55
    %v1157 = vunpack.c.l.b16 %v56
    %v1158 = vunpack.c.h.b16 %v56
    %v1159 = vunpack.c.l.b16 %v57
    %v1160 = vunpack.c.h.b16 %v57
    %v1161 = vunpack.c.l.b16 %v58
    %v1162 = vunpack.c.h.b16 %v58
    %v1163 = vunpack.c.l.b16 %v59
    %v1164 = vunpack.c.h.b16 %v59
    %v1165 = vunpack.c.l.b16 %v60
    %v1166 = vunpack.c.h.b16 %v60
    %v1167 = vunpack.c.l.b16 %v61
    %v1168 = vunpack.c.h.b16 %v61
    %v1169 = vunpack.c.l.b16 %v62
    %v1170 = vunpack.c.h.b16 %v62
    %v1171 = vunpack.c.l.b16 %v63
    %v1172 = vunpack.c.h.b16 %v63
    %v1173 = vunpack.c.l.b16 %v64
    %v1174 = vunpack.c.h.b16 %v64
    %v1175 = vunpack.c.l.b16 %v65
    %v1176 = vunpack.c.h.b16 %v65
    %v1177 = vunpack.c.l.b16 %v66
    %v1178 = vunpack.c.h.b16 %v66
    %v1179 = vunpack.c.l.b16 %v67
    %v1180 = vunpack.c.h.b16 %v67
    %v1181 = vunpack.c.l.b16 %v68
    %v1182 = vunpack.c.h.b16 %v68
    %v1183 = vunpack.c.l.b16 %v69
    %v1184 = vunpack.c.h.b16 %v69
    %v1185 = vunpack.c.l.b16 %v70
    %v1186 = vunpack.c.h.b16 %v70
    %v1187 = vunpack.c.l.b16 %v71
    %v1188 = vunpack.c.h.b16 %v71
    %v1189 = vunpack.c.l.b16 %v72
    %v1190 = vunpack.c.h.b16 %v72
    %v1191 = vunpack.c.l.b16 %v73
    %v1192 = vunpack.c.h.b16 %v73
    %v1193 = vunpack.c.l.b16 %v74
    %v1194 = vunpack.c.h.b16 %v74
    %v1195 = vunpack.c.l.b16 %v75
    %v1196 = vunpack.c.h.b16 %v75
    %v1197 = vunpack.c.l.b16 %v76
    %v1198 = vunpack.c.h.b16 %v76
    %v1199 = vunpack.c.l.b16 %v77
    %v1200 = vunpack.c.h.b16 %v77
    %v1201 = vunpack.c.l.b16 %v78
    %v1202 = vunpack.c.h.b16 %v78
    %v1203 = vunpack.c.l.b16 %v79
    %v1204 = vunpack.c.h.b16 %v79
    %v1205 = vunpack.c.l.b16 %v80
    %v1206 = vunpack.c.h.b16 %v80
    %v1207 = vunpack.c.l.b16 %v81
    %v1208 = vunpack.c.h.b16 %v81
    %v1209 = vunpack.c.l.b16 %v82
    %v1210 = vunpack.c.h.b16 %v82
    %v1211 = vunpack.c.l.b16 %v83
    %v1212 = vunpack.c.h.b16 %v83
    %v1213 = vunpack.c.l.b16 %v84
    %v1214 = vunpack.c.h.b16 %v84
    %v1215 = vunpack.c.l.b16 %v85
    %v1216 = vunpack.c.h.b16 %v85
    %v1217 = vunpack.c.l.b16 %v86
    %v1218 = vunpack.c.h.b16 %v86
    %v1219 = vunpack.c.l.b16 %v87
    %v1220 = vunpack.c.h.b16 %v87
    %v1221 = vunpack.c.l.b16 %v88
    %v1222 = vunpack.c.h.b16 %v88
    %v1223 = vunpack.c.l.b16 %v89
    %v1224 = vunpack.c.h.b16 %v89
    %v1225 = vunpack.c.l.b16 %v90
    %v1226 = vunpack.c.h.b16 %v90
    %v1227 = vunpack.c.l.b16 %v91
    %v1228 = vunpack.c.h.b16 %v91
    %v1229 = vunpack.c.l.b16 %v92
    %v1230 = vunpack.c.h.b16 %v92
    %v1231 = vunpack.c.l.b16 %v93
    %v1232 = vunpack.c.h.b16 %v93
    %v1233 = vunpack.c.l.b16 %v94
    %v1234 = vunpack.c.h.b16 %v94
    %v1235 = vunpack.c.l.b16 %v95
    %v1236 = vunpack.c.h.b16 %v95
    %v1237 = vunpack.c.l.b16 %v96
    %v1238 = vunpack.c.h.b16 %v96
    %v1239 = vunpack.c.l.b16 %v97
    %v1240 = vunpack.c.h.b16 %v97
    %v1241 = vunpack.c.l.b16 %v98
    %v1242 = vunpack.c.h.b16 %v98
    %v1243 = vunpack.c.l.b16 %v99
    %v1244 = vunpack.c.h.b16 %v99
    %v1245 = vunpack.c.l.b16 %v100
    %v1246 = vunpack.c.h.b16 %v100
    %v1247 = vunpack.c.l.b16 %v101
    %v1248 = vunpack.c.h.b16 %v101
    %v1249 = vunpack.c.l.b16 %v102
    %v1250 = vunpack.c.h.b16 %v102
    %v1251 = vunpack.c.l.b16 %v103
    %v1252 = vunpack.c.h.b16 %v103
    %v1253 = vunpack.c.l.b16 %v104
    %v1254 = vunpack.c.h.b16 %v104
    %v1255 = vunpack.c.l.b16 %v105
    %v1256 = vunpack.c.h.b16 %v105
    %v1257 = vunpack.c.l.b16 %v106
    %v1258 = vunpack.c.h.b16 %v106
    %v1259 = vunpack.c.l.b16 %v107
    %v1260 = vunpack.c.h.b16 %v107
    %v1261 = vunpack.c.l.b16 %v108
    %v1262 = vunpack.c.h.b16 %v108
    %v1263 = vunpack.c.l.b16 %v109
    %v1264 = vunpack.c.h.b16 %v109
    %v1265 = vunpack.c.l.b16 %v110
    %v1266 = vunpack.c.h.b16 %v110
    %v1267 = vunpack.c.l.b16 %v111
    %v1268 = vunpack.c.h.b16 %v111
    %v1269 = vunpack.c.l.b16 %v112
    %v1270 = vunpack.c.h.b16 %v112
    %v1271 = vunpack.c.l.b16 %v113
    %v1272 = vunpack.c.h.b16 %v113
    %v1273 = vunpack.c.l.b16 %v114
    %v1274 = vunpack.c.h.b16 %v114
    %v1275 = vunpack.c.l.b16 %v115
    %v1276 = vunpack.c.h.b16 %v115
    %v1277 = vunpack.c.l.b16 %v116
    %v1278 = vunpack.c.h.b16 %v116
    %v1279 = vunpack.c.l.b16 %v117
    %v1280 = vunpack.c.h.b16 %v117
    %v1281 = vunpack.c.l.b16 %v118
    %v1282 = vunpack.c.h.b16 %v118
    %v1283 = vunpack.c.l.b16 %v119
    %v1284 = vunpack.c.h.b16 %v119
    %v1285 = vunpack.c.l.b16 %v120
    %v1286 = vunpack.c.h.b16 %v120
    %v1287 = vunpack.c.l.b16 %v121
    %v1288 = vunpack.c.h.b16 %v121
    %v1289 = vunpack.c.l.b16 %v122
    %v1290 = vunpack.c.h.b16 %v122
    %v1291 = vunpack.c.l.b16 %v123
    %v1292 = vunpack.c.h.b16 %v123
    %v1293 = vunpack.c.l.b16 %v124
    %v1294 = vunpack.c.h.b16 %v124
    %v1295 = vunpack.c.l.b16 %v125
    %v1296 = vunpack.c.h.b16 %v125
    %v1297 = vunpack.c.l.b16 %v126
    %v1298 = vunpack.c.h.b16 %v126
    %v1299 = vunpack.c.l.b16 %v127
    %v1300 = vunpack.c.h.b16 %v127
    %v1301 = vunpack.c.l.b16 %v128
    %v1302 = vunpack.c.h.b16 %v128
    %v1303 = vunpack.c.l.b16 %v129
    %v1304 = vunpack.c.h.b16 %v129
    %v1305 = vunpack.c.l.b16 %v130
    %v1306 = vunpack.c.h.b16 %v130
    %v1307 = vunpack.c.l.b16 %v131
    %v1308 = vunpack.c.h.b16 %v131
    %v1309 = vunpack.c.l.b16 %v132
    %v1310 = vunpack.c.h.b16 %v132
    %v1311 = vunpack.c.l.b16 %v133
    %v1312 = vunpack.c.h.b16 %v133
    %v1313 = vunpack.c.l.b16 %v134
    %v1314 = vunpack.c.h.b16 %v134
    %v1315 = vunpack.c.l.b16 %v135
    %v1316 = vunpack.c.h.b16 %v135
    %v1317 = vunpack.c.l.b16 %v136
    %v1318 = vunpack.c.h.b16 %v136
    %v1319 = vunpack.c.l.b16 %v137
    %v1320 = vunpack.c.h.b16 %v137
    %v1321 = vunpack.c.l.b16 %v138
    %v1322 = vunpack.c.h.b16 %v138
    %v1323 = vunpack.c.l.b16 %v139
    %v1324 = vunpack.c.h.b16 %v139
    %v1325 = vunpack.c.l.b16 %v140
    %v1326 = vunpack.c.h.b16 %v140
    %v1327 = vunpack.c.l.b16 %v141
    %v1328 = vunpack.c.h.b16 %v141
    %v1329 = vunpack.c.l.b16 %v142
    %v1330 = vunpack.c.h.b16 %v142
    %v1331 = vunpack.c.l.b16 %v143
    %v1332 = vunpack.c.h.b16 %v143
    %v1333 = vunpack.c.l.b16 %v144
    %v1334 = vunpack.c.h.b16 %v144
    %v1335 = vunpack.c.l.b16 %v145
    %v1336 = vunpack.c.h.b16 %v145
    %v1337 = vunpack.c.l.b16 %v146
    %v1338 = vunpack.c.h.b16 %v146
    %v1339 = vunpack.c.l.b16 %v147
    %v1340 = vunpack.c.h.b16 %v147
    %v1341 = vunpack.c.l.b16 %v148
    %v1342 = vunpack.c.h.b16 %v148
    %v1343 = vunpack.c.l.b16 %v149
    %v1344 = vunpack.c.h.b16 %v149
    %v1345 = vunpack.c.l.b16 %v150
    %v1346 = vunpack.c.h.b16 %v150
    %v1347 = vunpack.c.l.b16 %v151
    %v1348 = vunpack.c.h.b16 %v151
    %v1349 = vunpack.c.l.b16 %v152
    %v1350 = vunpack.c.h.b16 %v152
    %v1351 = vunpack.c.l.b16 %v153
    %v1352 = vunpack.c.h.b16 %v153
    %v1353 = vunpack.c.l.b16 %v154
    %v1354 = vunpack.c.h.b16 %v154
    %v1355 = vunpack.c.l.b16 %v155
    %v1356 = vunpack.c.h.b16 %v155
    %v1357 = vunpack.c.l.b16 %v156
    %v1358 = vunpack.c.h.b16 %v156
    %v1359 = vunpack.c.l.b16 %v157
    %v1360 = vunpack.c.h.b16 %v157
    %v1361 = vunpack.c.l.b16 %v158
    %v1362 = vunpack.c.h.b16 %v158
    %v1363 = vunpack.c.l.b16 %v159
    %v1364 = vunpack.c.h.b16 %v159
    %v1365 = vunpack.c.l.b16 %v160
    %v1366 = vunpack.c.h.b16 %v160
    %v1367 = vunpack.c.l.b16 %v161
    %v1368 = vunpack.c.h.b16 %v161
    %v1369 = vunpack.c.l.b16 %v162
    %v1370 = vunpack.c.h.b16 %v162
    %v1371 = vunpack.c.l.b16 %v163
    %v1372 = vunpack.c.h.b16 %v163
    %v1373 = vunpack.c.l.b16 %v164
    %v1374 = vunpack.c.h.b16 %v164
    %v1375 = vunpack.c.l.b16 %v165
    %v1376 = vunpack.c.h.b16 %v165
    %v1377 = vunpack.c.l.b16 %v166
    %v1378 = vunpack.c.h.b16 %v166
    %v1379 = vunpack.c.l.b16 %v167
    %v1380 = vunpack.c.h.b16 %v167
    %v1381 = vunpack.c.l.b16 %v168
    %v1382 = vunpack.c.h.b16 %v168
    %v1383 = vunpack.c.l.b16 %v169
    %v1384 = vunpack.c.h.b16 %v169
    %v1385 = vunpack.c.l.b16 %v170
    %v1386 = vunpack.c.h.b16 %v170
    %v1387 = vunpack.c.l.b16 %v171
    %v1388 = vunpack.c.h.b16 %v171
    %v1389 = vunpack.c.l.b16 %v172
    %v1390 = vunpack.c.h.b16 %v172
    %v1391 = vunpack.c.l.b16 %v173
    %v1392 = vunpack.c.h.b16 %v173
    %v1393 = vunpack.c.l.b16 %v174
    %v1394 = vunpack.c.h.b16 %v174
    %v1395 = vunpack.c.l.b16 %v175
    %v1396 = vunpack.c.h.b16 %v175
    %v1397 = vunpack.c.l.b16 %v176
    %v1398 = vunpack.c.h.b16 %v176
    %v1399 = vunpack.c.l.b16 %v177
    %v1400 = vunpack.c.h.b16 %v177
    %v1401 = vunpack.c.l.b16 %v178
    %v1402 = vunpack.c.h.b16 %v178
    %v1403 = vunpack.c.l.b16 %v179
    %v1404 = vunpack.c.h.b16 %v179
    %v1405 = vunpack.c.l.b16 %v180
    %v1406 = vunpack.c.h.b16 %v180
    %v1407 = vunpack.c.l.b16 %v181
    %v1408 = vunpack.c.h.b16 %v181
    %v1409 = vunpack.c.l.b16 %v182
    %v1410 = vunpack.c.h.b16 %v182
    %v1411 = vunpack.c.l.b16 %v183
    %v1412 = vunpack.c.h.b16 %v183
    %v1413 = vunpack.c.l.b16 %v184
    %v1414 = vunpack.c.h.b16 %v184
    %v1415 = vunpack.c.l.b16 %v185
    %v1416 = vunpack.c.h.b16 %v185
    %v1417 = vunpack.c.l.b16 %v186
    %v1418 = vunpack.c.h.b16 %v186
    %v1419 = vunpack.c.l.b16 %v187
    %v1420 = vunpack.c.h.b16 %v187
    %v1421 = vunpack.c.l.b16 %v188
    %v1422 = vunpack.c.h.b16 %v188
    %v1423 = vunpack.c.l.b16 %v189
    %v1424 = vunpack.c.h.b16 %v189
    %v1425 = vunpack.c.l.b16 %v190
    %v1426 = vunpack.c.h.b16 %v190
    %v1427 = vunpack.c.l.b16 %v191
    %v1428 = vunpack.c.h.b16 %v191
    %v1429 = vunpack.c.l.b16 %v192
    %v1430 = vunpack.c.h.b16 %v192
    %v1431 = vunpack.c.l.b16 %v193
    %v1432 = vunpack.c.h.b16 %v193
    %v1433 = vunpack.c.l.b16 %v194
    %v1434 = vunpack.c.h.b16 %v194
    %v1435 = vunpack.c.l.b16 %v195
    %v1436 = vunpack.c.h.b16 %v195
    %v1437 = vunpack.c.l.b16 %v196
    %v1438 = vunpack.c.h.b16 %v196
    %v1439 = vunpack.c.l.b16 %v197
    %v1440 = vunpack.c.h.b16 %v197
    %v1441 = vunpack.c.l.b16 %v198
    %v1442 = vunpack.c.h.b16 %v198
    %v1443 = vunpack.c.l.b16 %v199
    %v1444 = vunpack.c.h.b16 %v199
    %v1445 = vunpack.c.l.b16 %v200
    %v1446 = vunpack.c.h.b16 %v200
    %v1447 = vunpack.c.l.b16 %v201
    %v1448 = vunpack.c.h.b16 %v201
    %v1449 = vunpack.c.l.b16 %v202
    %v1450 = vunpack.c.h.b16 %v202
    %v1451 = vunpack.c.l.b16 %v203
    %v1452 = vunpack.c.h.b16 %v203
    %v1453 = vunpack.c.l.b16 %v204
    %v1454 = vunpack.c.h.b16 %v204
    %v1455 = vunpack.c.l.b16 %v205
    %v1456 = vunpack.c.h.b16 %v205
    %v1457 = vunpack.c.l.b16 %v206
    %v1458 = vunpack.c.h.b16 %v206
    %v1459 = vunpack.c.l.b16 %v207
    %v1460 = vunpack.c.h.b16 %v207
    %v1461 = vunpack.c.l.b16 %v208
    %v1462 = vunpack.c.h.b16 %v208
    %v1463 = vunpack.c.l.b16 %v209
    %v1464 = vunpack.c.h.b16 %v209
    %v1465 = vunpack.c.l.b16 %v210
    %v1466 = vunpack.c.h.b16 %v210
    %v1467 = vunpack.c.l.b16 %v211
    %v1468 = vunpack.c.h.b16 %v211
    %v1469 = vunpack.c.l.b16 %v212
    %v1470 = vunpack.c.h.b16 %v212
    %v1471 = vunpack.c.l.b16 %v213
    %v1472 = vunpack.c.h.b16 %v213
    %v1473 = vunpack.c.l.b16 %v214
    %v1474 = vunpack.c.h.b16 %v214
    %v1475 = vunpack.c.l.b16 %v215
    %v1476 = vunpack.c.h.b16 %v215
    %v1477 = vunpack.c.l.b16 %v216
    %v1478 = vunpack.c.h.b16 %v216
    %v1479 = vunpack.c.l.b16 %v217
    %v1480 = vunpack.c.h.b16 %v217
    %v1481 = vunpack.c.l.b16 %v218
    %v1482 = vunpack.c.h.b16 %v218
    %v1483 = vunpack.c.l.b16 %v219
    %v1484 = vunpack.c.h.b16 %v219
    %v1485 = vunpack.c.l.b16 %v220
    %v1486 = vunpack.c.h.b16 %v220
    %v1487 = vunpack.c.l.b16 %v221
    %v1488 = vunpack.c.h.b16 %v221
    %v1489 = vunpack.c.l.b16 %v222
    %v1490 = vunpack.c.h.b16 %v222
    %v1491 = vunpack.c.l.b16 %v223
    %v1492 = vunpack.c.h.b16 %v223
    %v1493 = vunpack.c.l.b16 %v224
    %v1494 = vunpack.c.h.b16 %v224
    %v1495 = vunpack.c.l.b16 %v225
    %v1496 = vunpack.c.h.b16 %v225
    %v1497 = vunpack.c.l.b16 %v226
    %v1498 = vunpack.c.h.b16 %v226
    %v1499 = vunpack.c.l.b16 %v227
    %v1500 = vunpack.c.h.b16 %v227
    %v1501 = vunpack.c.l.b16 %v228
    %v1502 = vunpack.c.h.b16 %v228
    %v1503 = vunpack.c.l.b16 %v229
    %v1504 = vunpack.c.h.b16 %v229
    %v1505 = vunpack.c.l.b16 %v230
    %v1506 = vunpack.c.h.b16 %v230
    %v1507 = vunpack.c.l.b16 %v231
    %v1508 = vunpack.c.h.b16 %v231
    %v1509 = vunpack.c.l.b16 %v232
    %v1510 = vunpack.c.h.b16 %v232
    %v1511 = vunpack.c.l.b16 %v233
    %v1512 = vunpack.c.h.b16 %v233
    %v1513 = vunpack.c.l.b16 %v234
    %v1514 = vunpack.c.h.b16 %v234
    %v1515 = vunpack.c.l.b16 %v235
    %v1516 = vunpack.c.h.b16 %v235
    %v1517 = vunpack.c.l.b16 %v236
    %v1518 = vunpack.c.h.b16 %v236
    %v1519 = vunpack.c.l.b16 %v237
    %v1520 = vunpack.c.h.b16 %v237
    %v1521 = vunpack.c.l.b16 %v238
    %v1522 = vunpack.c.h.b16 %v238
    %v1523 = vunpack.c.l.b16 %v239
    %v1524 = vunpack.c.h.b16 %v239
    %v1525 = vunpack.c.l.b16 %v240
    %v1526 = vunpack.c.h.b16 %v240
    %v1527 = vunpack.c.l.b16 %v241
    %v1528 = vunpack.c.h.b16 %v241
    %v1529 = vunpack.c.l.b16 %v242
    %v1530 = vunpack.c.h.b16 %v242
    %v1531 = vunpack.c.l.b16 %v243
    %v1532 = vunpack.c.h.b16 %v243
    %v1533 = vunpack.c.l.b16 %v244
    %v1534 = vunpack.c.h.b16 %v244
    %v1535 = vunpack.c.l.b16 %v245
    %v1536 = vunpack.c.h.b16 %v245
    %v1537 = vunpack.c.l.b16 %v246
    %v1538 = vunpack.c.h.b16 %v246
    %v1539 = vunpack.c.l.b16 %v247
    %v1540 = vunpack.c.h.b16 %v247
    %v1541 = vunpack.c.l.b16 %v248
    %v1542 = vunpack.c.h.b16 %v248
    %v1543 = vunpack.c.l.b16 %v249
    %v1544 = vunpack.c.h.b16 %v249
    %v1545 = vunpack.c.l.b16 %v250
    %v1546 = vunpack.c.h.b16 %v250
    %v1547 = vunpack.c.l.b16 %v251
    %v1548 = vunpack.c.h.b16 %v251
    %v1549 = vunpack.c.l.b16 %v252
    %v1550 = vunpack.c.h.b16 %v252
    %v1551 = vunpack.c.l.b16 %v253
    %v1552 = vunpack.c.h.b16 %v253
    %v1553 = vunpack.c.l.b16 %v254
    %v1554 = vunpack.c.h.b16 %v254
    %v1555 = vunpack.c.l.b16 %v255
    %v1556 = vunpack.c.h.b16 %v255
    %v1557 = vunpack.c.l.b16 %v256
    %v1558 = vunpack.c.h.b16 %v256
    %v1559 = vunpack.c.l.b16 %v257
    %v1560 = vunpack.c.h.b16 %v257
    %v1561 = vunpack.c.l.b16 %v258
    %v1562 = vunpack.c.h.b16 %v258
    %v1563 = vunpack.c.l.b16 %v259
    %v1564 = vunpack.c.h.b16 %v259
    %v1565 = vunpack.c.l.b16 %v260
    %v1566 = vunpack.c.h.b16 %v260
    %v1567 = vunpack.c.l.b16 %v261
    %v1568 = vunpack.c.h.b16 %v261
    %v1569 = vunpack.c.l.b16 %v262
    %v1570 = vunpack.c.h.b16 %v262
    %v1571 = vunpack.c.l.b16 %v263
    %v1572 = vunpack.c.h.b16 %v263
    %v1573 = vunpack.c.l.b16 %v264
    %v1574 = vunpack.c.h.b16 %v264
    %v1575 = vunpack.c.l.b16 %v265
    %v1576 = vunpack.c.h.b16 %v265
    %v1577 = vunpack.c.l.b16 %v266
    %v1578 = vunpack.c.h.b16 %v266
    %v1579 = vunpack.c.l.b16 %v267
    %v1580 = vunpack.c.h.b16 %v267
    %v1581 = vunpack.c.l.b16 %v268
    %v1582 = vunpack.c.h.b16 %v268
    %v1583 = vunpack.c.l.b16 %v269
    %v1584 = vunpack.c.h.b16 %v269
    %v1585 = vunpack.c.l.b16 %v270
    %v1586 = vunpack.c.h.b16 %v270
    %v1587 = vunpack.c.l.b16 %v271
    %v1588 = vunpack.c.h.b16 %v271
    %v1589 = vunpack.c.l.b16 %v272
    %v1590 = vunpack.c.h.b16 %v272
    %v1591 = vunpack.c.l.b16 %v273
    %v1592 = vunpack.c.h.b16 %v273
    %v1593 = vunpack.c.l.b16 %v274
    %v1594 = vunpack.c.h.b16 %v274
    %v1595 = vunpack.c.l.b16 %v275
    %v1596 = vunpack.c.h.b16 %v275
    %v1597 = vunpack.c.l.b16 %v276
    %v1598 = vunpack.c.h.b16 %v276
    %v1599 = vunpack.c.l.b16 %v277
    %v1600 = vunpack.c.h.b16 %v277
    %v1601 = vunpack.c.l.b16 %v278
    %v1602 = vunpack.c.h.b16 %v278
    %v1603 = vunpack.c.l.b16 %v279
    %v1604 = vunpack.c.h.b16 %v279
    %v1605 = vunpack.c.l.b16 %v280
    %v1606 = vunpack.c.h.b16 %v280
    %v1607 = vunpack.c.l.b16 %v281
    %v1608 = vunpack.c.h.b16 %v281
    %v1609 = vunpack.c.l.b16 %v282
    %v1610 = vunpack.c.h.b16 %v282
    %v1611 = vunpack.c.l.b16 %v283
    %v1612 = vunpack.c.h.b16 %v283
    %v1613 = vunpack.c.l.b16 %v284
    %v1614 = vunpack.c.h.b16 %v284
    %v1615 = vunpack.c.l.b16 %v285
    %v1616 = vunpack.c.h.b16 %v285
    %v1617 = vunpack.c.l.b16 %v286
    %v1618 = vunpack.c.h.b16 %v286
    %v1619 = vunpack.c.l.b16 %v287
    %v1620 = vunpack.c.h.b16 %v287
    %v1621 = vunpack.c.l.b16 %v288
    %v1622 = vunpack.c.h.b16 %v288
    %v1623 = vunpack.c.l.b16 %v289
    %v1624 = vunpack.c.h.b16 %v289
    %v1625 = vunpack.c.l.b16 %v290
    %v1626 = vunpack.c.h.b16 %v290
    %v1627 = vunpack.c.l.b16 %v291
    %v1628 = vunpack.c.h.b16 %v291
    %v1629 = vunpack.c.l.b16 %v292
    %v1630 = vunpack.c.h.b16 %v292
    %v1631 = vunpack.c.l.b16 %v293
    %v1632 = vunpack.c.h.b16 %v293
    %v1633 = vunpack.c.l.b16 %v294
    %v1634 = vunpack.c.h.b16 %v294
    %v1635 = vunpack.c.l.b16 %v295
    %v1636 = vunpack.c.h.b16 %v295
    %v1637 = vunpack.c.l.b16 %v296
    %v1638 = vunpack.c.h.b16 %v296
    %v1639 = vunpack.c.l.b16 %v297
    %v1640 = vunpack.c.h.b16 %v297
    %v1641 = vunpack.c.l.b16 %v298
    %v1642 = vunpack.c.h.b16 %v298
    %v1643 = vunpack.c.l.b16 %v299
    %v1644 = vunpack.c.h.b16 %v299
    %v1645 = vunpack.c.l.b16 %v300
    %v1646 = vunpack.c.h.b16 %v300
    %v1647 = vunpack.c.l.b16 %v301
    %v1648 = vunpack.c.h.b16 %v301
    %v1649 = vunpack.c.l.b16 %v302
    %v1650 = vunpack.c.h.b16 %v302
    %v1651 = vunpack.c.l.b16 %v303
    %v1652 = vunpack.c.h.b16 %v303
    %v1653 = vunpack.c.l.b16 %v304
    %v1654 = vunpack.c.h.b16 %v304
    %v1655 = vunpack.c.l.b16 %v305
    %v1656 = vunpack.c.h.b16 %v305
    %v1657 = vunpack.c.l.b16 %v306
    %v1658 = vunpack.c.h.b16 %v306
    %v1659 = vunpack.c.l.b16 %v307
    %v1660 = vunpack.c.h.b16 %v307
    %v1661 = vunpack.c.l.b16 %v308
    %v1662 = vunpack.c.h.b16 %v308
    %v1663 = vunpack.c.l.b16 %v309
    %v1664 = vunpack.c.h.b16 %v309
    %v1665 = vunpack.c.l.b16 %v310
    %v1666 = vunpack.c.h.b16 %v310
    %v1667 = vunpack.c.l.b16 %v311
    %v1668 = vunpack.c.h.b16 %v311
    %v1669 = vunpack.c.l.b16 %v312
    %v1670 = vunpack.c.h.b16 %v312
    %v1671 = vunpack.c.l.b16 %v313
    %v1672 = vunpack.c.h.b16 %v313
    %v1673 = vunpack.c.l.b16 %v314
    %v1674 = vunpack.c.h.b16 %v314
    %v1675 = vunpack.c.l.b16 %v315
    %v1676 = vunpack.c.h.b16 %v315
    %v1677 = vunpack.c.l.b16 %v316
    %v1678 = vunpack.c.h.b16 %v316
    %v1679 = vunpack.c.l.b16 %v317
    %v1680 = vunpack.c.h.b16 %v317
    %v1681 = vunpack.c.l.b16 %v318
    %v1682 = vunpack.c.h.b16 %v318
    %v1683 = vunpack.c.l.b16 %v319
    %v1684 = vunpack.c.h.b16 %v319
    %v1685 = vunpack.c.l.b16 %v320
    %v1686 = vunpack.c.h.b16 %v320
    %v1687 = vunpack.c.l.b16 %v321
    %v1688 = vunpack.c.h.b16 %v321
    %v1689 = vunpack.c.l.b16 %v322
    %v1690 = vunpack.c.h.b16 %v322
    %v1691 = vunpack.c.l.b16 %v323
    %v1692 = vunpack.c.h.b16 %v323
    %v1693 = vunpack.c.l.b16 %v324
    %v1694 = vunpack.c.h.b16 %v324
    %v1695 = vunpack.c.l.b16 %v325
    %v1696 = vunpack.c.h.b16 %v325
    %v1697 = vunpack.c.l.b16 %v326
    %v1698 = vunpack.c.h.b16 %v326
    %v1699 = vunpack.c.l.b16 %v327
    %v1700 = vunpack.c.h.b16 %v327
    %v1701 = vunpack.c.l.b16 %v328
    %v1702 = vunpack.c.h.b16 %v328
    %v1703 = vunpack.c.l.b16 %v329
    %v1704 = vunpack.c.h.b16 %v329
    %v1705 = vunpack.c.l.b16 %v330
    %v1706 = vunpack.c.h.b16 %v330
    %v1707 = vunpack.c.l.b16 %v331
    %v1708 = vunpack.c.h.b16 %v331
    %v1709 = vunpack.c.l.b16 %v332
    %v1710 = vunpack.c.h.b16 %v332
    %v1711 = vunpack.c.l.b16 %v333
    %v1712 = vunpack.c.h.b16 %v333
    %v1713 = vunpack.c.l.b16 %v334
    %v1714 = vunpack.c.h.b16 %v334
    %v1715 = vunpack.c.l.b16 %v335
    %v1716 = vunpack.c.h.b16 %v335
    %v1717 = vunpack.c.l.b16 %v336
    %v1718 = vunpack.c.h.b16 %v336
    %v1719 = vunpack.c.l.b16 %v337
    %v1720 = vunpack.c.h.b16 %v337
    %v1721 = vunpack.c.l.b16 %v338
    %v1722 = vunpack.c.h.b16 %v338
    %v1723 = vunpack.c.l.b16 %v339
    %v1724 = vunpack.c.h.b16 %v339
    %v1725 = vunpack.c.l.b16 %v340
    %v1726 = vunpack.c.h.b16 %v340
    %v1727 = vunpack.c.l.b16 %v341
    %v1728 = vunpack.c.h.b16 %v341
    %v1729 = vunpack.c.l.b16 %v342
    %v1730 = vunpack.c.h.b16 %v342
    %v1731 = vunpack.c.l.b16 %v343
    %v1732 = vunpack.c.h.b16 %v343
    %v1733 = vunpack.c.l.b16 %v344
    %v1734 = vunpack.c.h.b16 %v344
    %v1735 = vunpack.c.l.b16 %v345
    %v1736 = vunpack.c.h.b16 %v345
    %v1737 = vunpack.c.l.b16 %v346
    %v1738 = vunpack.c.h.b16 %v346
    %v1739 = vunpack.c.l.b16 %v347
    %v1740 = vunpack.c.h.b16 %v347
    %v1741 = vunpack.c.l.b16 %v348
    %v1742 = vunpack.c.h.b16 %v348
    %v1743 = vunpack.c.l.b16 %v349
    %v1744 = vunpack.c.h.b16 %v349
    %v1745 = vunpack.c.l.b16 %v350
    %v1746 = vunpack.c.h.b16 %v350
    %v1747 = vunpack.c.l.b16 %v351
    %v1748 = vunpack.c.h.b16 %v351
    %v1749 = vunpack.c.l.b16 %v352
    %v1750 = vunpack.c.h.b16 %v352
    %v1751 = vunpack.c.l.b16 %v353
    %v1752 = vunpack.c.h.b16 %v353
    %v1753 = vunpack.c.l.b16 %v354
    %v1754 = vunpack.c.h.b16 %v354
    %v1755 = vunpack.c.l.b16 %v355
    %v1756 = vunpack.c.h.b16 %v355
    %v1757 = vunpack.c.l.b16 %v356
    %v1758 = vunpack.c.h.b16 %v356
    %v1759 = vunpack.c.l.b16 %v357
    %v1760 = vunpack.c.h.b16 %v357
    %v1761 = vunpack.c.l.b16 %v358
    %v1762 = vunpack.c.h.b16 %v358
    %v1763 = vunpack.c.l.b16 %v359
    %v1764 = vunpack.c.h.b16 %v359
    %v1765 = vunpack.c.l.b16 %v360
    %v1766 = vunpack.c.h.b16 %v360
    %v1767 = vunpack.c.l.b16 %v361
    %v1768 = vunpack.c.h.b16 %v361
    %v1769 = vunpack.c.l.b16 %v362
    %v1770 = vunpack.c.h.b16 %v362
    %v1771 = vunpack.c.l.b16 %v363
    %v1772 = vunpack.c.h.b16 %v363
    %v1773 = vunpack.c.l.b16 %v364
    %v1774 = vunpack.c.h.b16 %v364
    %v1775 = vunpack.c.l.b16 %v365
    %v1776 = vunpack.c.h.b16 %v365
    %v1777 = vunpack.c.l.b16 %v366
    %v1778 = vunpack.c.h.b16 %v366
    %v1779 = vunpack.c.l.b16 %v367
    %v1780 = vunpack.c.h.b16 %v367
    %v1781 = vunpack.c.l.b16 %v368
    %v1782 = vunpack.c.h.b16 %v368
    %v1783 = vunpack.c.l.b16 %v369
    %v1784 = vunpack.c.h.b16 %v369
    %v1785 = vunpack.c.l.b16 %v370
    %v1786 = vunpack.c.h.b16 %v370
    %v1787 = vunpack.c.l.b16 %v371
    %v1788 = vunpack.c.h.b16 %v371
    %v1789 = vunpack.c.l.b16 %v372
    %v1790 = vunpack.c.h.b16 %v372
    %v1791 = vunpack.c.l.b16 %v373
    %v1792 = vunpack.c.h.b16 %v373
    %v1793 = vunpack.c.l.b16 %v374
    %v1794 = vunpack.c.h.b16 %v374
    %v1795 = vunpack.c.l.b16 %v375
    %v1796 = vunpack.c.h.b16 %v375
    %v1797 = vunpack.c.l.b16 %v376
    %v1798 = vunpack.c.h.b16 %v376
    %v1799 = vunpack.c.l.b16 %v377
    %v1800 = vunpack.c.h.b16 %v377
    %v1801 = vunpack.c.l.b16 %v378
    %v1802 = vunpack.c.h.b16 %v378
    %v1803 = vunpack.c.l.b16 %v379
    %v1804 = vunpack.c.h.b16 %v379
    %v1805 = vunpack.c.l.b16 %v380
    %v1806 = vunpack.c.h.b16 %v380
    %v1807 = vunpack.c.l.b16 %v381
    %v1808 = vunpack.c.h.b16 %v381
    %v1809 = vunpack.c.l.b16 %v382
    %v1810 = vunpack.c.h.b16 %v382
    %v1811 = vunpack.c.l.b16 %v383
    %v1812 = vunpack.c.h.b16 %v383
    %v1813 = vunpack.c.l.b16 %v384
    %v1814 = vunpack.c.h.b16 %v384
    %v1815 = vunpack.c.l.b16 %v385
    %v1816 = vunpack.c.h.b16 %v385
    %v1817 = vunpack.c.l.b16 %v386
    %v1818 = vunpack.c.h.b16 %v386
    %v1819 = vunpack.c.l.b16 %v387
    %v1820 = vunpack.c.h.b16 %v387
    %v1821 = vunpack.c.l.b16 %v388
    %v1822 = vunpack.c.h.b16 %v388
    %v1823 = vunpack.c.l.b16 %v389
    %v1824 = vunpack.c.h.b16 %v389
    %v1825 = vunpack.c.l.b16 %v390
    %v1826 = vunpack.c.h.b16 %v390
    %v1827 = vunpack.c.l.b16 %v391
    %v1828 = vunpack.c.h.b16 %v391
    %v1829 = vunpack.c.l.b16 %v392
    %v1830 = vunpack.c.h.b16 %v392
    %v1831 = vunpack.c.l.b16 %v393
    %v1832 = vunpack.c.h.b16 %v393
    %v1833 = vunpack.c.l.b16 %v394
    %v1834 = vunpack.c.h.b16 %v394
    %v1835 = vunpack.c.l.b16 %v395
    %v1836 = vunpack.c.h.b16 %v395
    %v1837 = vunpack.c.l.b16 %v396
    %v1838 = vunpack.c.h.b16 %v396
    %v1839 = vunpack.c.l.b16 %v397
    %v1840 = vunpack.c.h.b16 %v397
    %v1841 = vunpack.c.l.b16 %v398
    %v1842 = vunpack.c.h.b16 %v398
    %v1843 = vunpack.c.l.b16 %v399
    %v1844 = vunpack.c.h.b16 %v399
    %v1845 = vunpack.c.l.b16 %v400
    %v1846 = vunpack.c.h.b16 %v400
    %v1847 = vunpack.c.l.b16 %v401
    %v1848 = vunpack.c.h.b16 %v401
    %v1849 = vunpack.c.l.b16 %v402
    %v1850 = vunpack.c.h.b16 %v402
    %v1851 = vunpack.c.l.b16 %v403
    %v1852 = vunpack.c.h.b16 %v403
    %v1853 = vunpack.c.l.b16 %v404
    %v1854 = vunpack.c.h.b16 %v404
    %v1855 = vunpack.c.l.b16 %v405
    %v1856 = vunpack.c.h.b16 %v405
    %v1857 = vunpack.c.l.b16 %v406
    %v1858 = vunpack.c.h.b16 %v406
    %v1859 = vunpack.c.l.b16 %v407
    %v1860 = vunpack.c.h.b16 %v407
    %v1861 = vunpack.c.l.b16 %v408
    %v1862 = vunpack.c.h.b16 %v408
    %v1863 = vunpack.c.l.b16 %v409
    %v1864 = vunpack.c.h.b16 %v409
    %v1865 = vunpack.c.l.b16 %v410
    %v1866 = vunpack.c.h.b16 %v410
    %v1867 = vunpack.c.l.b16 %v411
    %v1868 = vunpack.c.h.b16 %v411
    %v1869 = vunpack.c.l.b16 %v412
    %v1870 = vunpack.c.h.b16 %v412
    %v1871 = vunpack.c.l.b16 %v413
    %v1872 = vunpack.c.h.b16 %v413
    %v1873 = vunpack.c.l.b16 %v414
    %v1874 = vunpack.c.h.b16 %v414
    %v1875 = vunpack.c.l.b16 %v415
    %v1876 = vunpack.c.h.b16 %v415
    %v1877 = vunpack.c.l.b16 %v416
    %v1878 = vunpack.c.h.b16 %v416
    %v1879 = vunpack.c.l.b16 %v417
    %v1880 = vunpack.c.h.b16 %v417
    %v1881 = vunpack.c.l.b16 %v418
    %v1882 = vunpack.c.h.b16 %v418
    %v1883 = vunpack.c.l.b16 %v419
    %v1884 = vunpack.c.h.b16 %v419
    %v1885 = vunpack.c.l.b16 %v420
    %v1886 = vunpack.c.h.b16 %v420
    %v1887 = vunpack.c.l.b16 %v421
    %v1888 = vunpack.c.h.b16 %v421
    %v1889 = vunpack.c.l.b16 %v422
    %v1890 = vunpack.c.h.b16 %v422
    %v1891 = vunpack.c.l.b16 %v423
    %v1892 = vunpack.c.h.b16 %v423
    %v1893 = vunpack.c.l.b16 %v424
    %v1894 = vunpack.c.h.b16 %v424
    %v1895 = vunpack.c.l.b16 %v425
    %v1896 = vunpack.c.h.b16 %v425
    %v1897 = vunpack.c.l.b16 %v426
    %v1898 = vunpack.c.h.b16 %v426
    %v1899 = vunpack.c.l.b16 %v427
    %v1900 = vunpack.c.h.b16 %v427
    %v1901 = vunpack.c.l.b16 %v428
    %v1902 = vunpack.c.h.b16 %v428
    %v1903 = vunpack.c.l.b16 %v429
    %v1904 = vunpack.c.h.b16 %v429
    %v1905 = vunpack.c.l.b16 %v430
    %v1906 = vunpack.c.h.b16 %v430
    %v1907 = vunpack.c.l.b16 %v431
    %v1908 = vunpack.c.h.b16 %v431
    %v1909 = vunpack.c.l.b16 %v432
    %v1910 = vunpack.c.h.b16 %v432
    %v1911 = vunpack.c.l.b16 %v433
    %v1912 = vunpack.c.h.b16 %v433
    %v1913 = vunpack.c.l.b16 %v434
    %v1914 = vunpack.c.h.b16 %v434
    %v1915 = vunpack.c.l.b16 %v435
    %v1916 = vunpack.c.h.b16 %v435
    %v1917 = vunpack.c.l.b16 %v436
    %v1918 = vunpack.c.h.b16 %v436
    %v1919 = vunpack.c.l.b16 %v437
    %v1920 = vunpack.c.h.b16 %v437
    %v1921 = vunpack.c.l.b16 %v438
    %v1922 = vunpack.c.h.b16 %v438
    %v1923 = vunpack.c.l.b16 %v439
    %v1924 = vunpack.c.h.b16 %v439
    %v1925 = vunpack.c.l.b16 %v440
    %v1926 = vunpack.c.h.b16 %v440
    %v1927 = vunpack.c.l.b16 %v441
    %v1928 = vunpack.c.h.b16 %v441
    %v1929 = vunpack.c.l.b16 %v442
    %v1930 = vunpack.c.h.b16 %v442
    %v1931 = vunpack.c.l.b16 %v443
    %v1932 = vunpack.c.h.b16 %v443
    %v1933 = vunpack.c.l.b16 %v444
    %v1934 = vunpack.c.h.b16 %v444
    %v1935 = vunpack.c.l.b16 %v445
    %v1936 = vunpack.c.h.b16 %v445
    %v1937 = vunpack.c.l.b16 %v446
    %v1938 = vunpack.c.h.b16 %v446
    %v1939 = vunpack.c.l.b16 %v447
    %v1940 = vunpack.c.h.b16 %v447
    %v1941 = vunpack.c.l.b16 %v448
    %v1942 = vunpack.c.h.b16 %v448
    %v1943 = vunpack.c.l.b16 %v449
    %v1944 = vunpack.c.h.b16 %v449
    %v1945 = vunpack.c.l.b16 %v450
    %v1946 = vunpack.c.h.b16 %v450
    %v1947 = vunpack.c.l.b16 %v451
    %v1948 = vunpack.c.h.b16 %v451
    %v1949 = vunpack.c.l.b16 %v452
    %v1950 = vunpack.c.h.b16 %v452
    %v1951 = vunpack.c.l.b16 %v453
    %v1952 = vunpack.c.h.b16 %v453
    %v1953 = vunpack.c.l.b16 %v454
    %v1954 = vunpack.c.h.b16 %v454
    %v1955 = vunpack.c.l.b16 %v455
    %v1956 = vunpack.c.h.b16 %v455
    %v1957 = vunpack.c.l.b16 %v456
    %v1958 = vunpack.c.h.b16 %v456
    %v1959 = vunpack.c.l.b16 %v457
    %v1960 = vunpack.c.h.b16 %v457
    %v1961 = vunpack.c.l.b16 %v458
    %v1962 = vunpack.c.h.b16 %v458
    %v1963 = vunpack.c.l.b16 %v459
    %v1964 = vunpack.c.h.b16 %v459
    %v1965 = vunpack.c.l.b16 %v460
    %v1966 = vunpack.c.h.b16 %v460
    %v1967 = vunpack.c.l.b16 %v461
    %v1968 = vunpack.c.h.b16 %v461
    %v1969 = vunpack.c.l.b16 %v462
    %v1970 = vunpack.c.h.b16 %v462
    %v1971 = vunpack.c.l.b16 %v463
    %v1972 = vunpack.c.h.b16 %v463
    %v1973 = vunpack.c.l.b16 %v464
    %v1974 = vunpack.c.h.b16 %v464
    %v1975 = vunpack.c.l.b16 %v465
    %v1976 = vunpack.c.h.b16 %v465
    %v1977 = vunpack.c.l.b16 %v466
    %v1978 = vunpack.c.h.b16 %v466
    %v1979 = vunpack.c.l.b16 %v467
    %v1980 = vunpack.c.h.b16 %v467
    %v1981 = vunpack.c.l.b16 %v468
    %v1982 = vunpack.c.h.b16 %v468
    %v1983 = vunpack.c.l.b16 %v469
    %v1984 = vunpack.c.h.b16 %v469
    %v1985 = vunpack.c.l.b16 %v470
    %v1986 = vunpack.c.h.b16 %v470
    %v1987 = vunpack.c.l.b16 %v471
    %v1988 = vunpack.c.h.b16 %v471
    %v1989 = vunpack.c.l.b16 %v472
    %v1990 = vunpack.c.h.b16 %v472
    %v1991 = vunpack.c.l.b16 %v473
    %v1992 = vunpack.c.h.b16 %v473
    %v1993 = vunpack.c.l.b16 %v474
    %v1994 = vunpack.c.h.b16 %v474
    %v1995 = vunpack.c.l.b16 %v475
    %v1996 = vunpack.c.h.b16 %v475
    %v1997 = vunpack.c.l.b16 %v476
    %v1998 = vunpack.c.h.b16 %v476
    %v1999 = vunpack.c.l.b16 %v477
    %v2000 = vunpack.c.h.b16 %v477
    %v2001 = vunpack.c.l.b16 %v478
    %v2002 = vunpack.c.h.b16 %v478
    %v2003 = vunpack.c.l.b16 %v479
    %v2004 = vunpack.c.h.b16 %v479
    %v2005 = vunpack.c.l.b16 %v480
    %v2006 = vunpack.c.h.b16 %v480
    %v2007 = vunpack.c.l.b16 %v481
    %v2008 = vunpack.c.h.b16 %v481
    %v2009 = vunpack.c.l.b16 %v482
    %v2010 = vunpack.c.h.b16 %v482
    %v2011 = vunpack.c.l.b16 %v483
    %v2012 = vunpack.c.h.b16 %v483
    %v2013 = vunpack.c.l.b16 %v484
    %v2014 = vunpack.c.h.b16 %v484
    %v2015 = vunpack.c.l.b16 %v485
    %v2016 = vunpack.c.h.b16 %v485
    %v2017 = vunpack.c.l.b16 %v486
    %v2018 = vunpack.c.h.b16 %v486
    %v2019 = vunpack.c.l.b16 %v487
    %v2020 = vunpack.c.h.b16 %v487
    %v2021 = vunpack.c.l.b16 %v488
    %v2022 = vunpack.c.h.b16 %v488
    %v2023 = vunpack.c.l.b16 %v489
    %v2024 = vunpack.c.h.b16 %v489
    %v2025 = vunpack.c.l.b16 %v490
    %v2026 = vunpack.c.h.b16 %v490
    %v2027 = vunpack.c.l.b16 %v491
    %v2028 = vunpack.c.h.b16 %v491
    %v2029 = vunpack.c.l.b16 %v492
    %v2030 = vunpack.c.h.b16 %v492
    %v2031 = vunpack.c.l.b16 %v493
    %v2032 = vunpack.c.h.b16 %v493
    %v2033 = vunpack.c.l.b16 %v494
    %v2034 = vunpack.c.h.b16 %v494
    %v2035 = vunpack.c.l.b16 %v495
    %v2036 = vunpack.c.h.b16 %v495
    %v2037 = vunpack.c.l.b16 %v496
    %v2038 = vunpack.c.h.b16 %v496
    %v2039 = vunpack.c.l.b16 %v497
    %v2040 = vunpack.c.h.b16 %v497
    %v2041 = vunpack.c.l.b16 %v498
    %v2042 = vunpack.c.h.b16 %v498
    %v2043 = vunpack.c.l.b16 %v499
    %v2044 = vunpack.c.h.b16 %v499
    %v2045 = vunpack.c.l.b16 %v500
    %v2046 = vunpack.c.h.b16 %v500
    %v2047 = vunpack.c.l.b16 %v501
    %v2048 = vunpack.c.h.b16 %v501
    %v2049 = vunpack.c.l.b16 %v502
    %v2050 = vunpack.c.h.b16 %v502
    %v2051 = vunpack.c.l.b16 %v503
    %v2052 = vunpack.c.h.b16 %v503
    %v2053 = vunpack.c.l.b16 %v504
    %v2054 = vunpack.c.h.b16 %v504
    %v2055 = vunpack.c.l.b16 %v505
    %v2056 = vunpack.c.h.b16 %v505
    %v2057 = vunpack.c.l.b16 %v506
    %v2058 = vunpack.c.h.b16 %v506
    %v2059 = vunpack.c.l.b16 %v507
    %v2060 = vunpack.c.h.b16 %v507
    %v2061 = vunpack.c.l.b16 %v508
    %v2062 = vunpack.c.h.b16 %v508
    %v2063 = vunpack.c.l.b16 %v509
    %v2064 = vunpack.c.h.b16 %v509
    %v2065 = vunpack.c.l.b16 %v510
    %v2066 = vunpack.c.h.b16 %v510
    %v2067 = vunpack.c.l.b16 %v511
    %v2068 = vunpack.c.h.b16 %v511
    %v2069 = vunpack.c.l.b16 %v512
    %v2070 = vunpack.c.h.b16 %v512
    %v2071 = vunpack.c.l.b16 %v513
    %v2072 = vunpack.c.h.b16 %v513
    %v2073 = vunpack.c.l.b16 %v514
    %v2074 = vunpack.c.h.b16 %v514
    %v2075 = vunpack.c.l.b16 %v515
    %v2076 = vunpack.c.h.b16 %v515
    %v2077 = vunpack.c.l.b16 %v516
    %v2078 = vunpack.c.h.b16 %v516
    %v2079 = vunpack.c.l.b16 %v517
    %v2080 = vunpack.c.h.b16 %v517
    %v2081 = vunpack.c.l.b16 %v518
    %v2082 = vunpack.c.h.b16 %v518
    %v2083 = vunpack.c.l.b16 %v519
    %v2084 = vunpack.c.h.b16 %v519
    %v2085 = vunpack.c.l.b16 %v520
    %v2086 = vunpack.c.h.b16 %v520
    %v2087 = vunpack.c.l.b16 %v521
    %v2088 = vunpack.c.h.b16 %v521
    %v2089 = vunpack.c.l.b16 %v522
    %v2090 = vunpack.c.h.b16 %v522
    %v2091 = vunpack.c.l.b16 %v523
    %v2092 = vunpack.c.h.b16 %v523
    %v2093 = vunpack.c.l.b16 %v524
    %v2094 = vunpack.c.h.b16 %v524
    %v2095 = vunpack.c.l.b16 %v525
    %v2096 = vunpack.c.h.b16 %v525
    %v2097 = vunpack.c.l.b16 %v526
    %v2098 = vunpack.c.h.b16 %v526
    %v2099 = vunpack.c.l.b16 %v527
    %v2100 = vunpack.c.h.b16 %v527
    %v2101 = vunpack.c.l.b16 %v528
    %v2102 = vunpack.c.h.b16 %v528
    %v2103 = vunpack.c.l.b16 %v529
    %v2104 = vunpack.c.h.b16 %v529
    %v2105 = vunpack.c.l.b16 %v530
    %v2106 = vunpack.c.h.b16 %v530
    %v2107 = vunpack.c.l.b16 %v531
    %v2108 = vunpack.c.h.b16 %v531
    %v2109 = vunpack.c.l.b16 %v532
    %v2110 = vunpack.c.h.b16 %v532
    %v2111 = vunpack.c.l.b16 %v533
    %v2112 = vunpack.c.h.b16 %v533
    %v2113 = vunpack.c.l.b16 %v534
    %v2114 = vunpack.c.h.b16 %v534
    %v2115 = vunpack.c.l.b16 %v535
    %v2116 = vunpack.c.h.b16 %v535
    %v2117 = vunpack.c.l.b16 %v536
    %v2118 = vunpack.c.h.b16 %v536
    %v2119 = vunpack.c.l.b16 %v537
    %v2120 = vunpack.c.h.b16 %v537
    %v2121 = vunpack.c.l.b16 %v538
    %v2122 = vunpack.c.h.b16 %v538
    %v2123 = vunpack.c.l.b16 %v539
    %v2124 = vunpack.c.h.b16 %v539
    %v2125 = vunpack.c.l.b16 %v540
    %v2126 = vunpack.c.h.b16 %v540
    %v2127 = vunpack.c.l.b16 %v541
    %v2128 = vunpack.c.h.b16 %v541
    %v2129 = vunpack.c.l.b16 %v542
    %v2130 = vunpack.c.h.b16 %v542
    %v2131 = vunpack.c.l.b16 %v543
    %v2132 = vunpack.c.h.b16 %v543
    %v2133 = vunpack.c.l.b16 %v544
    %v2134 = vunpack.c.h.b16 %v544
    %v2135 = vunpack.c.l.b16 %v545
    %v2136 = vunpack.c.h.b16 %v545
    %v2137 = vunpack.c.l.b16 %v546
    %v2138 = vunpack.c.h.b16 %v546
    %v2139 = vpack.c.b16 %v1119, %v1115
    %v2140 = vpack.c.b16 %v1120, %v1116
    %v2141 = vpack.c.b16 %v1121, %v1117
    %v2142 = vpack.c.b16 %v1122, %v1118
    %v2143 = vpack.c.b16 %v1127, %v1123
    %v2144 = vpack.c.b16 %v1128, %v1124
    %v2145 = vpack.c.b16 %v1129, %v1125
    %v2146 = vpack.c.b16 %v1130, %v1126
    %v2147 = vpack.c.b16 %v1135, %v1131
    %v2148 = vpack.c.b16 %v1136, %v1132
    %v2149 = vpack.c.b16 %v1137, %v1133
    %v2150 = vpack.c.b16 %v1138, %v1134
    %v2151 = vpack.c.b16 %v1143, %v1139
    %v2152 = vpack.c.b16 %v1144, %v1140
    %v2153 = vpack.c.b16 %v1145, %v1141
    %v2154 = vpack.c.b16 %v1146, %v1142
    %v2155 = vpack.c.b16 %v1151, %v1147
    %v2156 = vpack.c.b16 %v1152, %v1148
    %v2157 = vpack.c.b16 %v1153, %v1149
    %v2158 = vpack.c.b16 %v1154, %v1150
    %v2159 = vpack.c.b16 %v1159, %v1155
    %v2160 = vpack.c.b16 %v1160, %v1156
    %v2161 = vpack.c.b16 %v1161, %v1157
    %v2162 = vpack.c.b16 %v1162, %v1158
    %v2163 = vpack.c.b16 %v1167, %v1163
    %v2164 = vpack.c.b16 %v1168, %v1164
    %v2165 = vpack.c.b16 %v1169, %v1165
    %v2166 = vpack.c.b16 %v1170, %v1166
    %v2167 = vpack.c.b16 %v1175, %v1171
    %v2168 = vpack.c.b16 %v1176, %v1172
    %v2169 = vpack.c.b16 %v1177, %v1173
    %v2170 = vpack.c.b16 %v1178, %v1174
    %v2171 = vpack.c.b16 %v1183, %v1179
    %v2172 = vpack.c.b16 %v1184, %v1180
    %v2173 = vpack.c.b16 %v1185, %v1181
    %v2174 = vpack.c.b16 %v1186, %v1182
    %v2175 = vpack.c.b16 %v1191, %v1187
    %v2176 = vpack.c.b16 %v1192, %v1188
    %v2177 = vpack.c.b16 %v1193, %v1189
    %v2178 = vpack.c.b16 %v1194, %v1190
    %v2179 = vpack.c.b16 %v1199, %v1195
    %v2180 = vpack.c.b16 %v1200, %v1196
    %v2181 = vpack.c.b16 %v1201, %v1197
    %v2182 = vpack.c.b16 %v1202, %v1198
    %v2183 = vpack.c.b16 %v1207, %v1203
    %v2184 = vpack.c.b16 %v1208, %v1204
    %v2185 = vpack.c.b16 %v1209, %v1205
    %v2186 = vpack.c.b16 %v1210, %v1206
    %v2187 = vpack.c.b16 %v1215, %v1211
    %v2188 = vpack.c.b16 %v1216, %v1212
    %v2189 = vpack.c.b16 %v1217, %v1213
    %v2190 = vpack.c.b16 %v1218, %v1214
    %v2191 = vpack.c.b16 %v1223, %v1219
    %v2192 = vpack.c.b16 %v1224, %v1220
    %v2193 = vpack.c.b16 %v1225, %v1221
    %v2194 = vpack.c.b16 %v1226, %v1222
    %v2195 = vpack.c.b16 %v1231, %v1227
    %v2196 = vpack.c.b16 %v1232, %v1228
    %v2197 = vpack.c.b16 %v1233, %v1229
    %v2198 = vpack.c.b16 %v1234, %v1230
    %v2199 = vpack.c.b16 %v1239, %v1235
    %v2200 = vpack.c.b16 %v1240, %v1236
    %v2201 = vpack.c.b16 %v1241, %v1237
    %v2202 = vpack.c.b16 %v1242, %v1238
    %v2203 = vpack.c.b16 %v1247, %v1243
    %v2204 = vpack.c.b16 %v1248, %v1244
    %v2205 = vpack.c.b16 %v1249, %v1245
    %v2206 = vpack.c.b16 %v1250, %v1246
    %v2207 = vpack.c.b16 %v1255, %v1251
    %v2208 = vpack.c.b16 %v1256, %v1252
    %v2209 = vpack.c.b16 %v1257, %v1253
    %v2210 = vpack.c.b16 %v1258, %v1254
    %v2211 = vpack.c.b16 %v1263, %v1259
    %v2212 = vpack.c.b16 %v1264, %v1260
    %v2213 = vpack.c.b16 %v1265, %v1261
    %v2214 = vpack.c.b16 %v1266, %v1262
    %v2215 = vpack.c.b16 %v1271, %v1267
    %v2216 = vpack.c.b16 %v1272, %v1268
    %v2217 = vpack.c.b16 %v1273, %v1269
    %v2218 = vpack.c.b16 %v1274, %v1270
    %v2219 = vpack.c.b16 %v1279, %v1275
    %v2220 = vpack.c.b16 %v1280, %v1276
    %v2221 = vpack.c.b16 %v1281, %v1277
    %v2222 = vpack.c.b16 %v1282, %v1278
    %v2223 = vpack.c.b16 %v1287, %v1283
    %v2224 = vpack.c.b16 %v1288, %v1284
    %v2225 = vpack.c.b16 %v1289, %v1285
    %v2226 = vpack.c.b16 %v1290, %v1286
    %v2227 = vpack.c.b16 %v1295, %v1291
    %v2228 = vpack.c.b16 %v1296, %v1292
    %v2229 = vpack.c.b16 %v1297, %v1293
    %v2230 = vpack.c.b16 %v1298, %v1294
    %v2231 = vpack.c.b16 %v1303, %v1299
    %v2232 = vpack.c.b16 %v1304, %v1300
    %v2233 = vpack.c.b16 %v1305, %v1301
    %v2234 = vpack.c.b16 %v1306, %v1302
    %v2235 = vpack.c.b16 %v1311, %v1307
    %v2236 = vpack.c.b16 %v1312, %v1308
    %v2237 = vpack.c.b16 %v1313, %v1309
    %v2238 = vpack.c.b16 %v1314, %v1310
    %v2239 = vpack.c.b16 %v1319, %v1315
    %v2240 = vpack.c.b16 %v1320, %v1316
    %v2241 = vpack.c.b16 %v1321, %v1317
    %v2242 = vpack.c.b16 %v1322, %v1318
    %v2243 = vpack.c.b16 %v1327, %v1323
    %v2244 = vpack.c.b16 %v1328, %v1324
    %v2245 = vpack.c.b16 %v1329, %v1325
    %v2246 = vpack.c.b16 %v1330, %v1326
    %v2247 = vpack.c.b16 %v1335, %v1331
    %v2248 = vpack.c.b16 %v1336, %v1332
    %v2249 = vpack.c.b16 %v1337, %v1333
    %v2250 = vpack.c.b16 %v1338, %v1334
    %v2251 = vpack.c.b16 %v1343, %v1339
    %v2252 = vpack.c.b16 %v1344, %v1340
    %v2253 = vpack.c.b16 %v1345, %v1341
    %v2254 = vpack.c.b16 %v1346, %v1342
    %v2255 = vpack.c.b16 %v1351, %v1347
    %v2256 = vpack.c.b16 %v1352, %v1348
    %v2257 = vpack.c.b16 %v1353, %v1349
    %v2258 = vpack.c.b16 %v1354, %v1350
    %v2259 = vpack.c.b16 %v1359, %v1355
    %v2260 = vpack.c.b16 %v1360, %v1356
    %v2261 = vpack.c.b16 %v1361, %v1357
    %v2262 = vpack.c.b16 %v1362, %v1358
    %v2263 = vpack.c.b16 %v1367, %v1363
    %v2264 = vpack.c.b16 %v1368, %v1364
    %v2265 = vpack.c.b16 %v1369, %v1365
    %v2266 = vpack.c.b16 %v1370, %v1366
    %v2267 = vpack.c.b16 %v1375, %v1371
    %v2268 = vpack.c.b16 %v1376, %v1372
    %v2269 = vpack.c.b16 %v1377, %v1373
    %v2270 = vpack.c.b16 %v1378, %v1374
    %v2271 = vpack.c.b16 %v1383, %v1379
    %v2272 = vpack.c.b16 %v1384, %v1380
    %v2273 = vpack.c.b16 %v1385, %v1381
    %v2274 = vpack.c.b16 %v1386, %v1382
    %v2275 = vpack.c.b16 %v1391, %v1387
    %v2276 = vpack.c.b16 %v1392, %v1388
    %v2277 = vpack.c.b16 %v1393, %v1389
    %v2278 = vpack.c.b16 %v1394, %v1390
    %v2279 = vpack.c.b16 %v1399, %v1395
    %v2280 = vpack.c.b16 %v1400, %v1396
    %v2281 = vpack.c.b16 %v1401, %v1397
    %v2282 = vpack.c.b16 %v1402, %v1398
    %v2283 = vpack.c.b16 %v1407, %v1403
    %v2284 = vpack.c.b16 %v1408, %v1404
    %v2285 = vpack.c.b16 %v1409, %v1405
    %v2286 = vpack.c.b16 %v1410, %v1406
    %v2287 = vpack.c.b16 %v1415, %v1411
    %v2288 = vpack.c.b16 %v1416, %v1412
    %v2289 = vpack.c.b16 %v1417, %v1413
    %v2290 = vpack.c.b16 %v1418, %v1414
    %v2291 = vpack.c.b16 %v1423, %v1419
    %v2292 = vpack.c.b16 %v1424, %v1420
    %v2293 = vpack.c.b16 %v1425, %v1421
    %v2294 = vpack.c.b16 %v1426, %v1422
    %v2295 = vpack.c.b16 %v1431, %v1427
    %v2296 = vpack.c.b16 %v1432, %v1428
    %v2297 = vpack.c.b16 %v1433, %v1429
    %v2298 = vpack.c.b16 %v1434, %v1430
    %v2299 = vpack.c.b16 %v1439, %v1435
    %v2300 = vpack.c.b16 %v1440, %v1436
    %v2301 = vpack.c.b16 %v1441, %v1437
    %v2302 = vpack.c.b16 %v1442, %v1438
    %v2303 = vpack.c.b16 %v1447, %v1443
    %v2304 = vpack.c.b16 %v1448, %v1444
    %v2305 = vpack.c.b16 %v1449, %v1445
    %v2306 = vpack.c.b16 %v1450, %v1446
    %v2307 = vpack.c.b16 %v1455, %v1451
    %v2308 = vpack.c.b16 %v1456, %v1452
    %v2309 = vpack.c.b16 %v1457, %v1453
    %v2310 = vpack.c.b16 %v1458, %v1454
    %v2311 = vpack.c.b16 %v1463, %v1459
    %v2312 = vpack.c.b16 %v1464, %v1460
    %v2313 = vpack.c.b16 %v1465, %v1461
    %v2314 = vpack.c.b16 %v1466, %v1462
    %v2315 = vpack.c.b16 %v1471, %v1467
    %v2316 = vpack.c.b16 %v1472, %v1468
    %v2317 = vpack.c.b16 %v1473, %v1469
    %v2318 = vpack.c.b16 %v1474, %v1470
    %v2319 = vpack.c.b16 %v1479, %v1475
    %v2320 = vpack.c.b16 %v1480, %v1476
    %v2321 = vpack.c.b16 %v1481, %v1477
    %v2322 = vpack.c.b16 %v1482, %v1478
    %v2323 = vpack.c.b16 %v1487, %v1483
    %v2324 = vpack.c.b16 %v1488, %v1484
    %v2325 = vpack.c.b16 %v1489, %v1485
    %v2326 = vpack.c.b16 %v1490, %v1486
    %v2327 = vpack.c.b16 %v1495, %v1491
    %v2328 = vpack.c.b16 %v1496, %v1492
    %v2329 = vpack.c.b16 %v1497, %v1493
    %v2330 = vpack.c.b16 %v1498, %v1494
    %v2331 = vpack.c.b16 %v1503, %v1499
    %v2332 = vpack.c.b16 %v1504, %v1500
    %v2333 = vpack.c.b16 %v1505, %v1501
    %v2334 = vpack.c.b16 %v1506, %v1502
    %v2335 = vpack.c.b16 %v1511, %v1507
    %v2336 = vpack.c.b16 %v1512, %v1508
    %v2337 = vpack.c.b16 %v1513, %v1509
    %v2338 = vpack.c.b16 %v1514, %v1510
    %v2339 = vpack.c.b16 %v1519, %v1515
    %v2340 = vpack.c.b16 %v1520, %v1516
    %v2341 = vpack.c.b16 %v1521, %v1517
    %v2342 = vpack.c.b16 %v1522, %v1518
    %v2343 = vpack.c.b16 %v1527, %v1523
    %v2344 = vpack.c.b16 %v1528, %v1524
    %v2345 = vpack.c.b16 %v1529, %v1525
    %v2346 = vpack.c.b16 %v1530, %v1526
    %v2347 = vpack.c.b16 %v1535, %v1531
    %v2348 = vpack.c.b16 %v1536, %v1532
    %v2349 = vpack.c.b16 %v1537, %v1533
    %v2350 = vpack.c.b16 %v1538, %v1534
    %v2351 = vpack.c.b16 %v1543, %v1539
    %v2352 = vpack.c.b16 %v1544, %v1540
    %v2353 = vpack.c.b16 %v1545, %v1541
    %v2354 = vpack.c.b16 %v1546, %v1542
    %v2355 = vpack.c.b16 %v1551, %v1547
    %v2356 = vpack.c.b16 %v1552, %v1548
    %v2357 = vpack.c.b16 %v1553, %v1549
    %v2358 = vpack.c.b16 %v1554, %v1550
    %v2359 = vpack.c.b16 %v1559, %v1555
    %v2360 = vpack.c.b16 %v1560, %v1556
    %v2361 = vpack.c.b16 %v1561, %v1557
    %v2362 = vpack.c.b16 %v1562, %v1558
    %v2363 = vpack.c.b16 %v1567, %v1563
    %v2364 = vpack.c.b16 %v1568, %v1564
    %v2365 = vpack.c.b16 %v1569, %v1565
    %v2366 = vpack.c.b16 %v1570, %v1566
    %v2367 = vpack.c.b16 %v1575, %v1571
    %v2368 = vpack.c.b16 %v1576, %v1572
    %v2369 = vpack.c.b16 %v1577, %v1573
    %v2370 = vpack.c.b16 %v1578, %v1574
    %v2371 = vpack.c.b16 %v1583, %v1579
    %v2372 = vpack.c.b16 %v1584, %v1580
    %v2373 = vpack.c.b16 %v1585, %v1581
    %v2374 = vpack.c.b16 %v1586, %v1582
    %v2375 = vpack.c.b16 %v1591, %v1587
    %v2376 = vpack.c.b16 %v1592, %v1588
    %v2377 = vpack.c.b16 %v1593, %v1589
    %v2378 = vpack.c.b16 %v1594, %v1590
    %v2379 = vpack.c.b16 %v1599, %v1595
    %v2380 = vpack.c.b16 %v1600, %v1596
    %v2381 = vpack.c.b16 %v1601, %v1597
    %v2382 = vpack.c.b16 %v1602, %v1598
    %v2383 = vpack.c.b16 %v1607, %v1603
    %v2384 = vpack.c.b16 %v1608, %v1604
    %v2385 = vpack.c.b16 %v1609, %v1605
    %v2386 = vpack.c.b16 %v1610, %v1606
    %v2387 = vpack.c.b16 %v1615, %v1611
    %v2388 = vpack.c.b16 %v1616, %v1612
    %v2389 = vpack.c.b16 %v1617, %v1613
    %v2390 = vpack.c.b16 %v1618, %v1614
    %v2391 = vpack.c.b16 %v1623, %v1619
    %v2392 = vpack.c.b16 %v1624, %v1620
    %v2393 = vpack.c.b16 %v1625, %v1621
    %v2394 = vpack.c.b16 %v1626, %v1622
    %v2395 = vpack.c.b16 %v1631, %v1627
    %v2396 = vpack.c.b16 %v1632, %v1628
    %v2397 = vpack.c.b16 %v1633, %v1629
    %v2398 = vpack.c.b16 %v1634, %v1630
    %v2399 = vpack.c.b16 %v1639, %v1635
    %v2400 = vpack.c.b16 %v1640, %v1636
    %v2401 = vpack.c.b16 %v1641, %v1637
    %v2402 = vpack.c.b16 %v1642, %v1638
    %v2403 = vpack.c.b16 %v1647, %v1643
    %v2404 = vpack.c.b16 %v1648, %v1644
    %v2405 = vpack.c.b16 %v1649, %v1645
    %v2406 = vpack.c.b16 %v1650, %v1646
    %v2407 = vpack.c.b16 %v1655, %v1651
    %v2408 = vpack.c.b16 %v1656, %v1652
    %v2409 = vpack.c.b16 %v1657, %v1653
    %v2410 = vpack.c.b16 %v1658, %v1654
    %v2411 = vpack.c.b16 %v1663, %v1659
    %v2412 = vpack.c.b16 %v1664, %v1660
    %v2413 = vpack.c.b16 %v1665, %v1661
    %v2414 = vpack.c.b16 %v1666, %v1662
    %v2415 = vpack.c.b16 %v1671, %v1667
    %v2416 = vpack.c.b16 %v1672, %v1668
    %v2417 = vpack.c.b16 %v1673, %v1669
    %v2418 = vpack.c.b16 %v1674, %v1670
    %v2419 = vpack.c.b16 %v1679, %v1675
    %v2420 = vpack.c.b16 %v1680, %v1676
    %v2421 = vpack.c.b16 %v1681, %v1677
    %v2422 = vpack.c.b16 %v1682, %v1678
    %v2423 = vpack.c.b16 %v1687, %v1683
    %v2424 = vpack.c.b16 %v1688, %v1684
    %v2425 = vpack.c.b16 %v1689, %v1685
    %v2426 = vpack.c.b16 %v1690, %v1686
    %v2427 = vpack.c.b16 %v1695, %v1691
    %v2428 = vpack.c.b16 %v1696, %v1692
    %v2429 = vpack.c.b16 %v1697, %v1693
    %v2430 = vpack.c.b16 %v1698, %v1694
    %v2431 = vpack.c.b16 %v1703, %v1699
    %v2432 = vpack.c.b16 %v1704, %v1700
    %v2433 = vpack.c.b16 %v1705, %v1701
    %v2434 = vpack.c.b16 %v1706, %v1702
    %v2435 = vpack.c.b16 %v1711, %v1707
    %v2436 = vpack.c.b16 %v1712, %v1708
    %v2437 = vpack.c.b16 %v1713, %v1709
    %v2438 = vpack.c.b16 %v1714, %v1710
    %v2439 = vpack.c.b16 %v1719, %v1715
    %v2440 = vpack.c.b16 %v1720, %v1716
    %v2441 = vpack.c.b16 %v1721, %v1717
    %v2442 = vpack.c.b16 %v1722, %v1718
    %v2443 = vpack.c.b16 %v1727, %v1723
    %v2444 = vpack.c.b16 %v1728, %v1724
    %v2445 = vpack.c.b16 %v1729, %v1725
    %v2446 = vpack.c.b16 %v1730, %v1726
    %v2447 = vpack.c.b16 %v1735, %v1731
    %v2448 = vpack.c.b16 %v1736, %v1732
    %v2449 = vpack.c.b16 %v1737, %v1733
    %v2450 = vpack.c.b16 %v1738, %v1734
    %v2451 = vpack.c.b16 %v1743, %v1739
    %v2452 = vpack.c.b16 %v1744, %v1740
    %v2453 = vpack.c.b16 %v1745, %v1741
    %v2454 = vpack.c.b16 %v1746, %v1742
    %v2455 = vpack.c.b16 %v1751, %v1747
    %v2456 = vpack.c.b16 %v1752, %v1748
    %v2457 = vpack.c.b16 %v1753, %v1749
    %v2458 = vpack.c.b16 %v1754, %v1750
    %v2459 = vpack.c.b16 %v1759, %v1755
    %v2460 = vpack.c.b16 %v1760, %v1756
    %v2461 = vpack.c.b16 %v1761, %v1757
    %v2462 = vpack.c.b16 %v1762, %v1758
    %v2463 = vpack.c.b16 %v1767, %v1763
    %v2464 = vpack.c.b16 %v1768, %v1764
    %v2465 = vpack.c.b16 %v1769, %v1765
    %v2466 = vpack.c.b16 %v1770, %v1766
    %v2467 = vpack.c.b16 %v1775, %v1771
    %v2468 = vpack.c.b16 %v1776, %v1772
    %v2469 = vpack.c.b16 %v1777, %v1773
    %v2470 = vpack.c.b16 %v1778, %v1774
    %v2471 = vpack.c.b16 %v1783, %v1779
    %v2472 = vpack.c.b16 %v1784, %v1780
    %v2473 = vpack.c.b16 %v1785, %v1781
    %v2474 = vpack.c.b16 %v1786, %v1782
    %v2475 = vpack.c.b16 %v1791, %v1787
    %v2476 = vpack.c.b16 %v1792, %v1788
    %v2477 = vpack.c.b16 %v1793, %v1789
    %v2478 = vpack.c.b16 %v1794, %v1790
    %v2479 = vpack.c.b16 %v1799, %v1795
    %v2480 = vpack.c.b16 %v1800, %v1796
    %v2481 = vpack.c.b16 %v1801, %v1797
    %v2482 = vpack.c.b16 %v1802, %v1798
    %v2483 = vpack.c.b16 %v1807, %v1803
    %v2484 = vpack.c.b16 %v1808, %v1804
    %v2485 = vpack.c.b16 %v1809, %v1805
    %v2486 = vpack.c.b16 %v1810, %v1806
    %v2487 = vpack.c.b16 %v1815, %v1811
    %v2488 = vpack.c.b16 %v1816, %v1812
    %v2489 = vpack.c.b16 %v1817, %v1813
    %v2490 = vpack.c.b16 %v1818, %v1814
    %v2491 = vpack.c.b16 %v1823, %v1819
    %v2492 = vpack.c.b16 %v1824, %v1820
    %v2493 = vpack.c.b16 %v1825, %v1821
    %v2494 = vpack.c.b16 %v1826, %v1822
    %v2495 = vpack.c.b16 %v1831, %v1827
    %v2496 = vpack.c.b16 %v1832, %v1828
    %v2497 = vpack.c.b16 %v1833, %v1829
    %v2498 = vpack.c.b16 %v1834, %v1830
    %v2499 = vpack.c.b16 %v1839, %v1835
    %v2500 = vpack.c.b16 %v1840, %v1836
    %v2501 = vpack.c.b16 %v1841, %v1837
    %v2502 = vpack.c.b16 %v1842, %v1838
    %v2503 = vpack.c.b16 %v1847, %v1843
    %v2504 = vpack.c.b16 %v1848, %v1844
    %v2505 = vpack.c.b16 %v1849, %v1845
    %v2506 = vpack.c.b16 %v1850, %v1846
    %v2507 = vpack.c.b16 %v1855, %v1851
    %v2508 = vpack.c.b16 %v1856, %v1852
    %v2509 = vpack.c.b16 %v1857, %v1853
    %v2510 = vpack.c.b16 %v1858, %v1854
    %v2511 = vpack.c.b16 %v1863, %v1859
    %v2512 = vpack.c.b16 %v1864, %v1860
    %v2513 = vpack.c.b16 %v1865, %v1861
    %v2514 = vpack.c.b16 %v1866, %v1862
    %v2515 = vpack.c.b16 %v1871, %v1867
    %v2516 = vpack.c.b16 %v1872, %v1868
    %v2517 = vpack.c.b16 %v1873, %v1869
    %v2518 = vpack.c.b16 %v1874, %v1870
    %v2519 = vpack.c.b16 %v1879, %v1875
    %v2520 = vpack.c.b16 %v1880, %v1876
    %v2521 = vpack.c.b16 %v1881, %v1877
    %v2522 = vpack.c.b16 %v1882, %v1878
    %v2523 = vpack.c.b16 %v1887, %v1883
    %v2524 = vpack.c.b16 %v1888, %v1884
    %v2525 = vpack.c.b16 %v1889, %v1885
    %v2526 = vpack.c.b16 %v1890, %v1886
    %v2527 = vpack.c.b16 %v1895, %v1891
    %v2528 = vpack.c.b16 %v1896, %v1892
    %v2529 = vpack.c.b16 %v1897, %v1893
    %v2530 = vpack.c.b16 %v1898, %v1894
    %v2531 = vpack.c.b16 %v1903, %v1899
    %v2532 = vpack.c.b16 %v1904, %v1900
    %v2533 = vpack.c.b16 %v1905, %v1901
    %v2534 = vpack.c.b16 %v1906, %v1902
    %v2535 = vpack.c.b16 %v1911, %v1907
    %v2536 = vpack.c.b16 %v1912, %v1908
    %v2537 = vpack.c.b16 %v1913, %v1909
    %v2538 = vpack.c.b16 %v1914, %v1910
    %v2539 = vpack.c.b16 %v1919, %v1915
    %v2540 = vpack.c.b16 %v1920, %v1916
    %v2541 = vpack.c.b16 %v1921, %v1917
    %v2542 = vpack.c.b16 %v1922, %v1918
    %v2543 = vpack.c.b16 %v1927, %v1923
    %v2544 = vpack.c.b16 %v1928, %v1924
    %v2545 = vpack.c.b16 %v1929, %v1925
    %v2546 = vpack.c.b16 %v1930, %v1926
    %v2547 = vpack.c.b16 %v1935, %v1931
    %v2548 = vpack.c.b16 %v1936, %v1932
    %v2549 = vpack.c.b16 %v1937, %v1933
    %v2550 = vpack.c.b16 %v1938, %v1934
    %v2551 = vpack.c.b16 %v1943, %v1939
    %v2552 = vpack.c.b16 %v1944, %v1940
    %v2553 = vpack.c.b16 %v1945, %v1941
    %v2554 = vpack.c.b16 %v1946, %v1942
    %v2555 = vpack.c.b16 %v1951, %v1947
    %v2556 = vpack.c.b16 %v1952, %v1948
    %v2557 = vpack.c.b16 %v1953, %v1949
    %v2558 = vpack.c.b16 %v1954, %v1950
    %v2559 = vpack.c.b16 %v1959, %v1955
    %v2560 = vpack.c.b16 %v1960, %v1956
    %v2561 = vpack.c.b16 %v1961, %v1957
    %v2562 = vpack.c.b16 %v1962, %v1958
    %v2563 = vpack.c.b16 %v1967, %v1963
    %v2564 = vpack.c.b16 %v1968, %v1964
    %v2565 = vpack.c.b16 %v1969, %v1965
    %v2566 = vpack.c.b16 %v1970, %v1966
    %v2567 = vpack.c.b16 %v1975, %v1971
    %v2568 = vpack.c.b16 %v1976, %v1972
    %v2569 = vpack.c.b16 %v1977, %v1973
    %v2570 = vpack.c.b16 %v1978, %v1974
    %v2571 = vpack.c.b16 %v1983, %v1979
    %v2572 = vpack.c.b16 %v1984, %v1980
    %v2573 = vpack.c.b16 %v1985, %v1981
    %v2574 = vpack.c.b16 %v1986, %v1982
    %v2575 = vpack.c.b16 %v1991, %v1987
    %v2576 = vpack.c.b16 %v1992, %v1988
    %v2577 = vpack.c.b16 %v1993, %v1989
    %v2578 = vpack.c.b16 %v1994, %v1990
    %v2579 = vpack.c.b16 %v1999, %v1995
    %v2580 = vpack.c.b16 %v2000, %v1996
    %v2581 = vpack.c.b16 %v2001, %v1997
    %v2582 = vpack.c.b16 %v2002, %v1998
    %v2583 = vpack.c.b16 %v2007, %v2003
    %v2584 = vpack.c.b16 %v2008, %v2004
    %v2585 = vpack.c.b16 %v2009, %v2005
    %v2586 = vpack.c.b16 %v2010, %v2006
    %v2587 = vpack.c.b16 %v2015, %v2011
    %v2588 = vpack.c.b16 %v2016, %v2012
    %v2589 = vpack.c.b16 %v2017, %v2013
    %v2590 = vpack.c.b16 %v2018, %v2014
    %v2591 = vpack.c.b16 %v2023, %v2019
    %v2592 = vpack.c.b16 %v2024, %v2020
    %v2593 = vpack.c.b16 %v2025, %v2021
    %v2594 = vpack.c.b16 %v2026, %v2022
    %v2595 = vpack.c.b16 %v2031, %v2027
    %v2596 = vpack.c.b16 %v2032, %v2028
    %v2597 = vpack.c.b16 %v2033, %v2029
    %v2598 = vpack.c.b16 %v2034, %v2030
    %v2599 = vpack.c.b16 %v2039, %v2035
    %v2600 = vpack.c.b16 %v2040, %v2036
    %v2601 = vpack.c.b16 %v2041, %v2037
    %v2602 = vpack.c.b16 %v2042, %v2038
    %v2603 = vpack.c.b16 %v2047, %v2043
    %v2604 = vpack.c.b16 %v2048, %v2044
    %v2605 = vpack.c.b16 %v2049, %v2045
    %v2606 = vpack.c.b16 %v2050, %v2046
    %v2607 = vpack.c.b16 %v2055, %v2051
    %v2608 = vpack.c.b16 %v2056, %v2052
    %v2609 = vpack.c.b16 %v2057, %v2053
    %v2610 = vpack.c.b16 %v2058, %v2054
    %v2611 = vpack.c.b16 %v2063, %v2059
    %v2612 = vpack.c.b16 %v2064, %v2060
    %v2613 = vpack.c.b16 %v2065, %v2061
    %v2614 = vpack.c.b16 %v2066, %v2062
    %v2615 = vpack.c.b16 %v2071, %v2067
    %v2616 = vpack.c.b16 %v2072, %v2068
    %v2617 = vpack.c.b16 %v2073, %v2069
    %v2618 = vpack.c.b16 %v2074, %v2070
    %v2619 = vpack.c.b16 %v2079, %v2075
    %v2620 = vpack.c.b16 %v2080, %v2076
    %v2621 = vpack.c.b16 %v2081, %v2077
    %v2622 = vpack.c.b16 %v2082, %v2078
    %v2623 = vpack.c.b16 %v2087, %v2083
    %v2624 = vpack.c.b16 %v2088, %v2084
    %v2625 = vpack.c.b16 %v2089, %v2085
    %v2626 = vpack.c.b16 %v2090, %v2086
    %v2627 = vpack.c.b16 %v2095, %v2091
    %v2628 = vpack.c.b16 %v2096, %v2092
    %v2629 = vpack.c.b16 %v2097, %v2093
    %v2630 = vpack.c.b16 %v2098, %v2094
    %v2631 = vpack.c.b16 %v2103, %v2099
    %v2632 = vpack.c.b16 %v2104, %v2100
    %v2633 = vpack.c.b16 %v2105, %v2101
    %v2634 = vpack.c.b16 %v2106, %v2102
    %v2635 = vpack.c.b16 %v2111, %v2107
    %v2636 = vpack.c.b16 %v2112, %v2108
    %v2637 = vpack.c.b16 %v2113, %v2109
    %v2638 = vpack.c.b16 %v2114, %v2110
    %v2639 = vpack.c.b16 %v2119, %v2115
    %v2640 = vpack.c.b16 %v2120, %v2116
    %v2641 = vpack.c.b16 %v2121, %v2117
    %v2642 = vpack.c.b16 %v2122, %v2118
    %v2643 = vpack.c.b16 %v2127, %v2123
    %v2644 = vpack.c.b16 %v2128, %v2124
    %v2645 = vpack.c.b16 %v2129, %v2125
    %v2646 = vpack.c.b16 %v2130, %v2126
    %v2647 = vpack.c.b16 %v2135, %v2131
    %v2648 = vpack.c.b16 %v2136, %v2132
    %v2649 = vpack.c.b16 %v2137, %v2133
    %v2650 = vpack.c.b16 %v2138, %v2134
    %3163 = vmatprep.subr.bf16.mxu0 %v2168
    %3164 = vmatpush1.bf16.msra.mxu0 %v2167
    %3165 = vmatprep.subr.bf16.mxu0 %v2164
    %3166 = vmatpush1.bf16.msra.mxu0 %v2163
    %3167 = vmatprep.subr.bf16.mxu0 %v2160
    %3168 = vmatpush1.bf16.msra.mxu0 %v2159
    %3169 = vmatprep.subr.bf16.mxu0 %v2156
    %3170 = vmatpush1.bf16.msra.mxu0 %v2155
    %3171 = vmatprep.subr.bf16.mxu0 %v2152
    %3172 = vmatpush1.bf16.msra.mxu0 %v2151
    %3173 = vmatprep.subr.bf16.mxu0 %v2148
    %3174 = vmatpush1.bf16.msra.mxu0 %v2147
    %3175 = vmatprep.subr.bf16.mxu0 %v2144
    %3176 = vmatpush1.bf16.msra.mxu0 %v2143
    %3177 = vmatprep.subr.bf16.mxu0 %v2140
    %3178 = vmatpush1.bf16.msra.mxu0 %v2139
    %3179 = vmatprep.subr.bf16.mxu0 %v2200
    %3180 = vmatpush2.bf16.msra.mxu0 %v2199
    %3181 = vmatprep.subr.bf16.mxu0 %v2196
    %3182 = vmatpush2.bf16.msra.mxu0 %v2195
    %3183 = vmatprep.subr.bf16.mxu0 %v2192
    %3184 = vmatpush2.bf16.msra.mxu0 %v2191
    %3185 = vmatprep.subr.bf16.mxu0 %v2188
    %3186 = vmatpush2.bf16.msra.mxu0 %v2187
    %3187 = vmatprep.subr.bf16.mxu0 %v2184
    %3188 = vmatpush2.bf16.msra.mxu0 %v2183
    %3189 = vmatprep.subr.bf16.mxu0 %v2180
    %3190 = vmatpush2.bf16.msra.mxu0 %v2179
    %3191 = vmatprep.subr.bf16.mxu0 %v2176
    %3192 = vmatpush2.bf16.msra.mxu0 %v2175
    %3193 = vmatprep.subr.bf16.mxu0 %v2172
    %3194 = vmatpush2.bf16.msra.mxu0 %v2171
    %3195 = vmatprep.mubr.bf16.mxu0 %v572
    %3196 = vmatmul.mubr.bf16.gmra.mxu0 %v571
    %v3197 = vpop.f32.mrf.mxu0
    %v3198 = vadd.f32 0.0, %v3197
    %v3199 = vpop.f32.mrf.mxu0
    %v3200 = vadd.f32 0.0, %v3199
    %v3201 = vpop.f32.mrf.mxu0
    %v3202 = vpop.f32.mrf.mxu0
    %3203 = vdwg.mxu0
    %3204 = vmatprep.subr.bf16.mxu0 %v2232
    %3205 = vmatpush1.bf16.msra.mxu0 %v2231
    %3206 = vmatprep.subr.bf16.mxu0 %v2228
    %3207 = vmatpush1.bf16.msra.mxu0 %v2227
    %3208 = vmatprep.subr.bf16.mxu0 %v2224
    %3209 = vmatpush1.bf16.msra.mxu0 %v2223
    %3210 = vmatprep.subr.bf16.mxu0 %v2220
    %3211 = vmatpush1.bf16.msra.mxu0 %v2219
    %3212 = vmatprep.subr.bf16.mxu0 %v2216
    %3213 = vmatpush1.bf16.msra.mxu0 %v2215
    %3214 = vmatprep.subr.bf16.mxu0 %v2212
    %3215 = vmatpush1.bf16.msra.mxu0 %v2211
    %3216 = vmatprep.subr.bf16.mxu0 %v2208
    %3217 = vmatpush1.bf16.msra.mxu0 %v2207
    %3218 = vmatprep.subr.bf16.mxu0 %v2204
    %3219 = vmatpush1.bf16.msra.mxu0 %v2203
    %3220 = vmatprep.subr.bf16.mxu0 %v2264
    %3221 = vmatpush2.bf16.msra.mxu0 %v2263
    %3222 = vmatprep.subr.bf16.mxu0 %v2260
    %3223 = vmatpush2.bf16.msra.mxu0 %v2259
    %3224 = vmatprep.subr.bf16.mxu0 %v2256
    %3225 = vmatpush2.bf16.msra.mxu0 %v2255
    %3226 = vmatprep.subr.bf16.mxu0 %v2252
    %3227 = vmatpush2.bf16.msra.mxu0 %v2251
    %3228 = vmatprep.subr.bf16.mxu0 %v2248
    %3229 = vmatpush2.bf16.msra.mxu0 %v2247
    %3230 = vmatprep.subr.bf16.mxu0 %v2244
    %3231 = vmatpush2.bf16.msra.mxu0 %v2243
    %3232 = vmatprep.subr.bf16.mxu0 %v2240
    %3233 = vmatpush2.bf16.msra.mxu0 %v2239
    %3234 = vmatprep.subr.bf16.mxu0 %v2236
    %3235 = vmatpush2.bf16.msra.mxu0 %v2235
    %3236 = vmatprep.mubr.bf16.mxu0 %v574
    %3237 = vmatmul.mubr.bf16.gmra.mxu0 %v573
    %v3238 = vpop.f32.mrf.mxu0
    %v3239 = vadd.f32 %v3198, %v3238
    %v3240 = vpop.f32.mrf.mxu0
    %v3241 = vadd.f32 %v3200, %v3240
    %v3242 = vpop.f32.mrf.mxu0
    %v3243 = vpop.f32.mrf.mxu0
    %3244 = vdwg.mxu0
    %3245 = vmatprep.subr.bf16.mxu0 %v2296
    %3246 = vmatpush1.bf16.msra.mxu0 %v2295
    %3247 = vmatprep.subr.bf16.mxu0 %v2292
    %3248 = vmatpush1.bf16.msra.mxu0 %v2291
    %3249 = vmatprep.subr.bf16.mxu0 %v2288
    %3250 = vmatpush1.bf16.msra.mxu0 %v2287
    %3251 = vmatprep.subr.bf16.mxu0 %v2284
    %3252 = vmatpush1.bf16.msra.mxu0 %v2283
    %3253 = vmatprep.subr.bf16.mxu0 %v2280
    %3254 = vmatpush1.bf16.msra.mxu0 %v2279
    %3255 = vmatprep.subr.bf16.mxu0 %v2276
    %3256 = vmatpush1.bf16.msra.mxu0 %v2275
    %3257 = vmatprep.subr.bf16.mxu0 %v2272
    %3258 = vmatpush1.bf16.msra.mxu0 %v2271
    %3259 = vmatprep.subr.bf16.mxu0 %v2268
    %3260 = vmatpush1.bf16.msra.mxu0 %v2267
    %3261 = vmatprep.subr.bf16.mxu0 %v2328
    %3262 = vmatpush2.bf16.msra.mxu0 %v2327
    %3263 = vmatprep.subr.bf16.mxu0 %v2324
    %3264 = vmatpush2.bf16.msra.mxu0 %v2323
    %3265 = vmatprep.subr.bf16.mxu0 %v2320
    %3266 = vmatpush2.bf16.msra.mxu0 %v2319
    %3267 = vmatprep.subr.bf16.mxu0 %v2316
    %3268 = vmatpush2.bf16.msra.mxu0 %v2315
    %3269 = vmatprep.subr.bf16.mxu0 %v2312
    %3270 = vmatpush2.bf16.msra.mxu0 %v2311
    %3271 = vmatprep.subr.bf16.mxu0 %v2308
    %3272 = vmatpush2.bf16.msra.mxu0 %v2307
    %3273 = vmatprep.subr.bf16.mxu0 %v2304
    %3274 = vmatpush2.bf16.msra.mxu0 %v2303
    %3275 = vmatprep.subr.bf16.mxu0 %v2300
    %3276 = vmatpush2.bf16.msra.mxu0 %v2299
    %3277 = vmatprep.mubr.bf16.mxu0 %v576
    %3278 = vmatmul.mubr.bf16.gmra.mxu0 %v575
    %v3279 = vpop.f32.mrf.mxu0
    %v3280 = vadd.f32 %v3239, %v3279
    %v3281 = vpop.f32.mrf.mxu0
    %v3282 = vadd.f32 %v3241, %v3281
    %v3283 = vpop.f32.mrf.mxu0
    %v3284 = vpop.f32.mrf.mxu0
    %3285 = vdwg.mxu0
    %3286 = vmatprep.subr.bf16.mxu0 %v2360
    %3287 = vmatpush1.bf16.msra.mxu0 %v2359
    %3288 = vmatprep.subr.bf16.mxu0 %v2356
    %3289 = vmatpush1.bf16.msra.mxu0 %v2355
    %3290 = vmatprep.subr.bf16.mxu0 %v2352
    %3291 = vmatpush1.bf16.msra.mxu0 %v2351
    %3292 = vmatprep.subr.bf16.mxu0 %v2348
    %3293 = vmatpush1.bf16.msra.mxu0 %v2347
    %3294 = vmatprep.subr.bf16.mxu0 %v2344
    %3295 = vmatpush1.bf16.msra.mxu0 %v2343
    %3296 = vmatprep.subr.bf16.mxu0 %v2340
    %3297 = vmatpush1.bf16.msra.mxu0 %v2339
    %3298 = vmatprep.subr.bf16.mxu0 %v2336
    %3299 = vmatpush1.bf16.msra.mxu0 %v2335
    %3300 = vmatprep.subr.bf16.mxu0 %v2332
    %3301 = vmatpush1.bf16.msra.mxu0 %v2331
    %3302 = vmatprep.subr.bf16.mxu0 %v2392
    %3303 = vmatpush2.bf16.msra.mxu0 %v2391
    %3304 = vmatprep.subr.bf16.mxu0 %v2388
    %3305 = vmatpush2.bf16.msra.mxu0 %v2387
    %3306 = vmatprep.subr.bf16.mxu0 %v2384
    %3307 = vmatpush2.bf16.msra.mxu0 %v2383
    %3308 = vmatprep.subr.bf16.mxu0 %v2380
    %3309 = vmatpush2.bf16.msra.mxu0 %v2379
    %3310 = vmatprep.subr.bf16.mxu0 %v2376
    %3311 = vmatpush2.bf16.msra.mxu0 %v2375
    %3312 = vmatprep.subr.bf16.mxu0 %v2372
    %3313 = vmatpush2.bf16.msra.mxu0 %v2371
    %3314 = vmatprep.subr.bf16.mxu0 %v2368
    %3315 = vmatpush2.bf16.msra.mxu0 %v2367
    %3316 = vmatprep.subr.bf16.mxu0 %v2364
    %3317 = vmatpush2.bf16.msra.mxu0 %v2363
    %3318 = vmatprep.mubr.bf16.mxu0 %v578
    %3319 = vmatmul.mubr.bf16.gmra.mxu0 %v577
    %v3320 = vpop.f32.mrf.mxu0
    %v3321 = vadd.f32 %v3280, %v3320
    %v3322 = vpop.f32.mrf.mxu0
    %v3323 = vadd.f32 %v3282, %v3322
    %v3324 = vpop.f32.mrf.mxu0
    %v3325 = vpop.f32.mrf.mxu0
    %3326 = vdwg.mxu0
    %3327 = vmatprep.subr.bf16.mxu0 %v2424
    %3328 = vmatpush1.bf16.msra.mxu0 %v2423
    %3329 = vmatprep.subr.bf16.mxu0 %v2420
    %3330 = vmatpush1.bf16.msra.mxu0 %v2419
    %3331 = vmatprep.subr.bf16.mxu0 %v2416
    %3332 = vmatpush1.bf16.msra.mxu0 %v2415
    %3333 = vmatprep.subr.bf16.mxu0 %v2412
    %3334 = vmatpush1.bf16.msra.mxu0 %v2411
    %3335 = vmatprep.subr.bf16.mxu0 %v2408
    %3336 = vmatpush1.bf16.msra.mxu0 %v2407
    %3337 = vmatprep.subr.bf16.mxu0 %v2404
    %3338 = vmatpush1.bf16.msra.mxu0 %v2403
    %3339 = vmatprep.subr.bf16.mxu0 %v2400
    %3340 = vmatpush1.bf16.msra.mxu0 %v2399
    %3341 = vmatprep.subr.bf16.mxu0 %v2396
    %3342 = vmatpush1.bf16.msra.mxu0 %v2395
    %3343 = vmatprep.subr.bf16.mxu0 %v2456
    %3344 = vmatpush2.bf16.msra.mxu0 %v2455
    %3345 = vmatprep.subr.bf16.mxu0 %v2452
    %3346 = vmatpush2.bf16.msra.mxu0 %v2451
    %3347 = vmatprep.subr.bf16.mxu0 %v2448
    %3348 = vmatpush2.bf16.msra.mxu0 %v2447
    %3349 = vmatprep.subr.bf16.mxu0 %v2444
    %3350 = vmatpush2.bf16.msra.mxu0 %v2443
    %3351 = vmatprep.subr.bf16.mxu0 %v2440
    %3352 = vmatpush2.bf16.msra.mxu0 %v2439
    %3353 = vmatprep.subr.bf16.mxu0 %v2436
    %3354 = vmatpush2.bf16.msra.mxu0 %v2435
    %3355 = vmatprep.subr.bf16.mxu0 %v2432
    %3356 = vmatpush2.bf16.msra.mxu0 %v2431
    %3357 = vmatprep.subr.bf16.mxu0 %v2428
    %3358 = vmatpush2.bf16.msra.mxu0 %v2427
    %3359 = vmatprep.mubr.bf16.mxu0 %v580
    %3360 = vmatmul.mubr.bf16.gmra.mxu0 %v579
    %v3361 = vpop.f32.mrf.mxu0
    %v3362 = vadd.f32 %v3321, %v3361
    %v3363 = vpop.f32.mrf.mxu0
    %v3364 = vadd.f32 %v3323, %v3363
    %v3365 = vpop.f32.mrf.mxu0
    %v3366 = vpop.f32.mrf.mxu0
    %3367 = vdwg.mxu0
    %3368 = vmatprep.subr.bf16.mxu0 %v2488
    %3369 = vmatpush1.bf16.msra.mxu0 %v2487
    %3370 = vmatprep.subr.bf16.mxu0 %v2484
    %3371 = vmatpush1.bf16.msra.mxu0 %v2483
    %3372 = vmatprep.subr.bf16.mxu0 %v2480
    %3373 = vmatpush1.bf16.msra.mxu0 %v2479
    %3374 = vmatprep.subr.bf16.mxu0 %v2476
    %3375 = vmatpush1.bf16.msra.mxu0 %v2475
    %3376 = vmatprep.subr.bf16.mxu0 %v2472
    %3377 = vmatpush1.bf16.msra.mxu0 %v2471
    %3378 = vmatprep.subr.bf16.mxu0 %v2468
    %3379 = vmatpush1.bf16.msra.mxu0 %v2467
    %3380 = vmatprep.subr.bf16.mxu0 %v2464
    %3381 = vmatpush1.bf16.msra.mxu0 %v2463
    %3382 = vmatprep.subr.bf16.mxu0 %v2460
    %3383 = vmatpush1.bf16.msra.mxu0 %v2459
    %3384 = vmatprep.subr.bf16.mxu0 %v2520
    %3385 = vmatpush2.bf16.msra.mxu0 %v2519
    %3386 = vmatprep.subr.bf16.mxu0 %v2516
    %3387 = vmatpush2.bf16.msra.mxu0 %v2515
    %3388 = vmatprep.subr.bf16.mxu0 %v2512
    %3389 = vmatpush2.bf16.msra.mxu0 %v2511
    %3390 = vmatprep.subr.bf16.mxu0 %v2508
    %3391 = vmatpush2.bf16.msra.mxu0 %v2507
    %3392 = vmatprep.subr.bf16.mxu0 %v2504
    %3393 = vmatpush2.bf16.msra.mxu0 %v2503
    %3394 = vmatprep.subr.bf16.mxu0 %v2500
    %3395 = vmatpush2.bf16.msra.mxu0 %v2499
    %3396 = vmatprep.subr.bf16.mxu0 %v2496
    %3397 = vmatpush2.bf16.msra.mxu0 %v2495
    %3398 = vmatprep.subr.bf16.mxu0 %v2492
    %3399 = vmatpush2.bf16.msra.mxu0 %v2491
    %3400 = vmatprep.mubr.bf16.mxu0 %v582
    %3401 = vmatmul.mubr.bf16.gmra.mxu0 %v581
    %v3402 = vpop.f32.mrf.mxu0
    %v3403 = vadd.f32 %v3362, %v3402
    %v3404 = vpop.f32.mrf.mxu0
    %v3405 = vadd.f32 %v3364, %v3404
    %v3406 = vpop.f32.mrf.mxu0
    %v3407 = vpop.f32.mrf.mxu0
    %3408 = vdwg.mxu0
    %3409 = vmatprep.subr.bf16.mxu0 %v2552
    %3410 = vmatpush1.bf16.msra.mxu0 %v2551
    %3411 = vmatprep.subr.bf16.mxu0 %v2548
    %3412 = vmatpush1.bf16.msra.mxu0 %v2547
    %3413 = vmatprep.subr.bf16.mxu0 %v2544
    %3414 = vmatpush1.bf16.msra.mxu0 %v2543
    %3415 = vmatprep.subr.bf16.mxu0 %v2540
    %3416 = vmatpush1.bf16.msra.mxu0 %v2539
    %3417 = vmatprep.subr.bf16.mxu0 %v2536
    %3418 = vmatpush1.bf16.msra.mxu0 %v2535
    %3419 = vmatprep.subr.bf16.mxu0 %v2532
    %3420 = vmatpush1.bf16.msra.mxu0 %v2531
    %3421 = vmatprep.subr.bf16.mxu0 %v2528
    %3422 = vmatpush1.bf16.msra.mxu0 %v2527
    %3423 = vmatprep.subr.bf16.mxu0 %v2524
    %3424 = vmatpush1.bf16.msra.mxu0 %v2523
    %3425 = vmatprep.subr.bf16.mxu0 %v2584
    %3426 = vmatpush2.bf16.msra.mxu0 %v2583
    %3427 = vmatprep.subr.bf16.mxu0 %v2580
    %3428 = vmatpush2.bf16.msra.mxu0 %v2579
    %3429 = vmatprep.subr.bf16.mxu0 %v2576
    %3430 = vmatpush2.bf16.msra.mxu0 %v2575
    %3431 = vmatprep.subr.bf16.mxu0 %v2572
    %3432 = vmatpush2.bf16.msra.mxu0 %v2571
    %3433 = vmatprep.subr.bf16.mxu0 %v2568
    %3434 = vmatpush2.bf16.msra.mxu0 %v2567
    %3435 = vmatprep.subr.bf16.mxu0 %v2564
    %3436 = vmatpush2.bf16.msra.mxu0 %v2563
    %3437 = vmatprep.subr.bf16.mxu0 %v2560
    %3438 = vmatpush2.bf16.msra.mxu0 %v2559
    %3439 = vmatprep.subr.bf16.mxu0 %v2556
    %3440 = vmatpush2.bf16.msra.mxu0 %v2555
    %3441 = vmatprep.mubr.bf16.mxu0 %v584
    %3442 = vmatmul.mubr.bf16.gmra.mxu0 %v583
    %v3443 = vpop.f32.mrf.mxu0
    %v3444 = vadd.f32 %v3403, %v3443
    %v3445 = vpop.f32.mrf.mxu0
    %v3446 = vadd.f32 %v3405, %v3445
    %v3447 = vpop.f32.mrf.mxu0
    %v3448 = vpop.f32.mrf.mxu0
    %3449 = vdwg.mxu0
    %3450 = vmatprep.subr.bf16.mxu0 %v2616
    %3451 = vmatpush1.bf16.msra.mxu0 %v2615
    %3452 = vmatprep.subr.bf16.mxu0 %v2612
    %3453 = vmatpush1.bf16.msra.mxu0 %v2611
    %3454 = vmatprep.subr.bf16.mxu0 %v2608
    %3455 = vmatpush1.bf16.msra.mxu0 %v2607
    %3456 = vmatprep.subr.bf16.mxu0 %v2604
    %3457 = vmatpush1.bf16.msra.mxu0 %v2603
    %3458 = vmatprep.subr.bf16.mxu0 %v2600
    %3459 = vmatpush1.bf16.msra.mxu0 %v2599
    %3460 = vmatprep.subr.bf16.mxu0 %v2596
    %3461 = vmatpush1.bf16.msra.mxu0 %v2595
    %3462 = vmatprep.subr.bf16.mxu0 %v2592
    %3463 = vmatpush1.bf16.msra.mxu0 %v2591
    %3464 = vmatprep.subr.bf16.mxu0 %v2588
    %3465 = vmatpush1.bf16.msra.mxu0 %v2587
    %3466 = vmatprep.subr.bf16.mxu0 %v2648
    %3467 = vmatpush2.bf16.msra.mxu0 %v2647
    %3468 = vmatprep.subr.bf16.mxu0 %v2644
    %3469 = vmatpush2.bf16.msra.mxu0 %v2643
    %3470 = vmatprep.subr.bf16.mxu0 %v2640
    %3471 = vmatpush2.bf16.msra.mxu0 %v2639
    %3472 = vmatprep.subr.bf16.mxu0 %v2636
    %3473 = vmatpush2.bf16.msra.mxu0 %v2635
    %3474 = vmatprep.subr.bf16.mxu0 %v2632
    %3475 = vmatpush2.bf16.msra.mxu0 %v2631
    %3476 = vmatprep.subr.bf16.mxu0 %v2628
    %3477 = vmatpush2.bf16.msra.mxu0 %v2627
    %3478 = vmatprep.subr.bf16.mxu0 %v2624
    %3479 = vmatpush2.bf16.msra.mxu0 %v2623
    %3480 = vmatprep.subr.bf16.mxu0 %v2620
    %3481 = vmatpush2.bf16.msra.mxu0 %v2619
    %3482 = vmatprep.mubr.bf16.mxu0 %v586
    %3483 = vmatmul.mubr.bf16.gmra.mxu0 %v585
    %v3484 = vpop.f32.mrf.mxu0
    %v3485 = vadd.f32 %v3444, %v3484
    %v3486 = vpop.f32.mrf.mxu0
    %v3487 = vadd.f32 %v3446, %v3486
    %v3488 = vpop.f32.mrf.mxu0
    %v3489 = vpop.f32.mrf.mxu0
    %3490 = vdwg.mxu0
    %3491 = vmatprep.subr.bf16.mxu0 %v2170
    %3492 = vmatpush1.bf16.msra.mxu0 %v2169
    %3493 = vmatprep.subr.bf16.mxu0 %v2166
    %3494 = vmatpush1.bf16.msra.mxu0 %v2165
    %3495 = vmatprep.subr.bf16.mxu0 %v2162
    %3496 = vmatpush1.bf16.msra.mxu0 %v2161
    %3497 = vmatprep.subr.bf16.mxu0 %v2158
    %3498 = vmatpush1.bf16.msra.mxu0 %v2157
    %3499 = vmatprep.subr.bf16.mxu0 %v2154
    %3500 = vmatpush1.bf16.msra.mxu0 %v2153
    %3501 = vmatprep.subr.bf16.mxu0 %v2150
    %3502 = vmatpush1.bf16.msra.mxu0 %v2149
    %3503 = vmatprep.subr.bf16.mxu0 %v2146
    %3504 = vmatpush1.bf16.msra.mxu0 %v2145
    %3505 = vmatprep.subr.bf16.mxu0 %v2142
    %3506 = vmatpush1.bf16.msra.mxu0 %v2141
    %3507 = vmatprep.subr.bf16.mxu0 %v2202
    %3508 = vmatpush2.bf16.msra.mxu0 %v2201
    %3509 = vmatprep.subr.bf16.mxu0 %v2198
    %3510 = vmatpush2.bf16.msra.mxu0 %v2197
    %3511 = vmatprep.subr.bf16.mxu0 %v2194
    %3512 = vmatpush2.bf16.msra.mxu0 %v2193
    %3513 = vmatprep.subr.bf16.mxu0 %v2190
    %3514 = vmatpush2.bf16.msra.mxu0 %v2189
    %3515 = vmatprep.subr.bf16.mxu0 %v2186
    %3516 = vmatpush2.bf16.msra.mxu0 %v2185
    %3517 = vmatprep.subr.bf16.mxu0 %v2182
    %3518 = vmatpush2.bf16.msra.mxu0 %v2181
    %3519 = vmatprep.subr.bf16.mxu0 %v2178
    %3520 = vmatpush2.bf16.msra.mxu0 %v2177
    %3521 = vmatprep.subr.bf16.mxu0 %v2174
    %3522 = vmatpush2.bf16.msra.mxu0 %v2173
    %3523 = vmatprep.mubr.bf16.mxu0 %v572
    %3524 = vmatmul.mubr.bf16.gmra.mxu0 %v571
    %v3525 = vpop.f32.mrf.mxu0
    %v3526 = vadd.f32 0.0, %v3525
    %v3527 = vpop.f32.mrf.mxu0
    %v3528 = vadd.f32 0.0, %v3527
    %v3529 = vpop.f32.mrf.mxu0
    %v3530 = vpop.f32.mrf.mxu0
    %3531 = vdwg.mxu0
    %3532 = vmatprep.subr.bf16.mxu0 %v2234
    %3533 = vmatpush1.bf16.msra.mxu0 %v2233
    %3534 = vmatprep.subr.bf16.mxu0 %v2230
    %3535 = vmatpush1.bf16.msra.mxu0 %v2229
    %3536 = vmatprep.subr.bf16.mxu0 %v2226
    %3537 = vmatpush1.bf16.msra.mxu0 %v2225
    %3538 = vmatprep.subr.bf16.mxu0 %v2222
    %3539 = vmatpush1.bf16.msra.mxu0 %v2221
    %3540 = vmatprep.subr.bf16.mxu0 %v2218
    %3541 = vmatpush1.bf16.msra.mxu0 %v2217
    %3542 = vmatprep.subr.bf16.mxu0 %v2214
    %3543 = vmatpush1.bf16.msra.mxu0 %v2213
    %3544 = vmatprep.subr.bf16.mxu0 %v2210
    %3545 = vmatpush1.bf16.msra.mxu0 %v2209
    %3546 = vmatprep.subr.bf16.mxu0 %v2206
    %3547 = vmatpush1.bf16.msra.mxu0 %v2205
    %3548 = vmatprep.subr.bf16.mxu0 %v2266
    %3549 = vmatpush2.bf16.msra.mxu0 %v2265
    %3550 = vmatprep.subr.bf16.mxu0 %v2262
    %3551 = vmatpush2.bf16.msra.mxu0 %v2261
    %3552 = vmatprep.subr.bf16.mxu0 %v2258
    %3553 = vmatpush2.bf16.msra.mxu0 %v2257
    %3554 = vmatprep.subr.bf16.mxu0 %v2254
    %3555 = vmatpush2.bf16.msra.mxu0 %v2253
    %3556 = vmatprep.subr.bf16.mxu0 %v2250
    %3557 = vmatpush2.bf16.msra.mxu0 %v2249
    %3558 = vmatprep.subr.bf16.mxu0 %v2246
    %3559 = vmatpush2.bf16.msra.mxu0 %v2245
    %3560 = vmatprep.subr.bf16.mxu0 %v2242
    %3561 = vmatpush2.bf16.msra.mxu0 %v2241
    %3562 = vmatprep.subr.bf16.mxu0 %v2238
    %3563 = vmatpush2.bf16.msra.mxu0 %v2237
    %3564 = vmatprep.mubr.bf16.mxu0 %v574
    %3565 = vmatmul.mubr.bf16.gmra.mxu0 %v573
    %v3566 = vpop.f32.mrf.mxu0
    %v3567 = vadd.f32 %v3526, %v3566
    %v3568 = vpop.f32.mrf.mxu0
    %v3569 = vadd.f32 %v3528, %v3568
    %v3570 = vpop.f32.mrf.mxu0
    %v3571 = vpop.f32.mrf.mxu0
    %3572 = vdwg.mxu0
    %3573 = vmatprep.subr.bf16.mxu0 %v2298
    %3574 = vmatpush1.bf16.msra.mxu0 %v2297
    %3575 = vmatprep.subr.bf16.mxu0 %v2294
    %3576 = vmatpush1.bf16.msra.mxu0 %v2293
    %3577 = vmatprep.subr.bf16.mxu0 %v2290
    %3578 = vmatpush1.bf16.msra.mxu0 %v2289
    %3579 = vmatprep.subr.bf16.mxu0 %v2286
    %3580 = vmatpush1.bf16.msra.mxu0 %v2285
    %3581 = vmatprep.subr.bf16.mxu0 %v2282
    %3582 = vmatpush1.bf16.msra.mxu0 %v2281
    %3583 = vmatprep.subr.bf16.mxu0 %v2278
    %3584 = vmatpush1.bf16.msra.mxu0 %v2277
    %3585 = vmatprep.subr.bf16.mxu0 %v2274
    %3586 = vmatpush1.bf16.msra.mxu0 %v2273
    %3587 = vmatprep.subr.bf16.mxu0 %v2270
    %3588 = vmatpush1.bf16.msra.mxu0 %v2269
    %3589 = vmatprep.subr.bf16.mxu0 %v2330
    %3590 = vmatpush2.bf16.msra.mxu0 %v2329
    %3591 = vmatprep.subr.bf16.mxu0 %v2326
    %3592 = vmatpush2.bf16.msra.mxu0 %v2325
    %3593 = vmatprep.subr.bf16.mxu0 %v2322
    %3594 = vmatpush2.bf16.msra.mxu0 %v2321
    %3595 = vmatprep.subr.bf16.mxu0 %v2318
    %3596 = vmatpush2.bf16.msra.mxu0 %v2317
    %3597 = vmatprep.subr.bf16.mxu0 %v2314
    %3598 = vmatpush2.bf16.msra.mxu0 %v2313
    %3599 = vmatprep.subr.bf16.mxu0 %v2310
    %3600 = vmatpush2.bf16.msra.mxu0 %v2309
    %3601 = vmatprep.subr.bf16.mxu0 %v2306
    %3602 = vmatpush2.bf16.msra.mxu0 %v2305
    %3603 = vmatprep.subr.bf16.mxu0 %v2302
    %3604 = vmatpush2.bf16.msra.mxu0 %v2301
    %3605 = vmatprep.mubr.bf16.mxu0 %v576
    %3606 = vmatmul.mubr.bf16.gmra.mxu0 %v575
    %v3607 = vpop.f32.mrf.mxu0
    %v3608 = vadd.f32 %v3567, %v3607
    %v3609 = vpop.f32.mrf.mxu0
    %v3610 = vadd.f32 %v3569, %v3609
    %v3611 = vpop.f32.mrf.mxu0
    %v3612 = vpop.f32.mrf.mxu0
    %3613 = vdwg.mxu0
    %3614 = vmatprep.subr.bf16.mxu0 %v2362
    %3615 = vmatpush1.bf16.msra.mxu0 %v2361
    %3616 = vmatprep.subr.bf16.mxu0 %v2358
    %3617 = vmatpush1.bf16.msra.mxu0 %v2357
    %3618 = vmatprep.subr.bf16.mxu0 %v2354
    %3619 = vmatpush1.bf16.msra.mxu0 %v2353
    %3620 = vmatprep.subr.bf16.mxu0 %v2350
    %3621 = vmatpush1.bf16.msra.mxu0 %v2349
    %3622 = vmatprep.subr.bf16.mxu0 %v2346
    %3623 = vmatpush1.bf16.msra.mxu0 %v2345
    %3624 = vmatprep.subr.bf16.mxu0 %v2342
    %3625 = vmatpush1.bf16.msra.mxu0 %v2341
    %3626 = vmatprep.subr.bf16.mxu0 %v2338
    %3627 = vmatpush1.bf16.msra.mxu0 %v2337
    %3628 = vmatprep.subr.bf16.mxu0 %v2334
    %3629 = vmatpush1.bf16.msra.mxu0 %v2333
    %3630 = vmatprep.subr.bf16.mxu0 %v2394
    %3631 = vmatpush2.bf16.msra.mxu0 %v2393
    %3632 = vmatprep.subr.bf16.mxu0 %v2390
    %3633 = vmatpush2.bf16.msra.mxu0 %v2389
    %3634 = vmatprep.subr.bf16.mxu0 %v2386
    %3635 = vmatpush2.bf16.msra.mxu0 %v2385
    %3636 = vmatprep.subr.bf16.mxu0 %v2382
    %3637 = vmatpush2.bf16.msra.mxu0 %v2381
    %3638 = vmatprep.subr.bf16.mxu0 %v2378
    %3639 = vmatpush2.bf16.msra.mxu0 %v2377
    %3640 = vmatprep.subr.bf16.mxu0 %v2374
    %3641 = vmatpush2.bf16.msra.mxu0 %v2373
    %3642 = vmatprep.subr.bf16.mxu0 %v2370
    %3643 = vmatpush2.bf16.msra.mxu0 %v2369
    %3644 = vmatprep.subr.bf16.mxu0 %v2366
    %3645 = vmatpush2.bf16.msra.mxu0 %v2365
    %3646 = vmatprep.mubr.bf16.mxu0 %v578
    %3647 = vmatmul.mubr.bf16.gmra.mxu0 %v577
    %v3648 = vpop.f32.mrf.mxu0
    %v3649 = vadd.f32 %v3608, %v3648
    %v3650 = vpop.f32.mrf.mxu0
    %v3651 = vadd.f32 %v3610, %v3650
    %v3652 = vpop.f32.mrf.mxu0
    %v3653 = vpop.f32.mrf.mxu0
    %3654 = vdwg.mxu0
    %3655 = vmatprep.subr.bf16.mxu0 %v2426
    %3656 = vmatpush1.bf16.msra.mxu0 %v2425
    %3657 = vmatprep.subr.bf16.mxu0 %v2422
    %3658 = vmatpush1.bf16.msra.mxu0 %v2421
    %3659 = vmatprep.subr.bf16.mxu0 %v2418
    %3660 = vmatpush1.bf16.msra.mxu0 %v2417
    %3661 = vmatprep.subr.bf16.mxu0 %v2414
    %3662 = vmatpush1.bf16.msra.mxu0 %v2413
    %3663 = vmatprep.subr.bf16.mxu0 %v2410
    %3664 = vmatpush1.bf16.msra.mxu0 %v2409
    %3665 = vmatprep.subr.bf16.mxu0 %v2406
    %3666 = vmatpush1.bf16.msra.mxu0 %v2405
    %3667 = vmatprep.subr.bf16.mxu0 %v2402
    %3668 = vmatpush1.bf16.msra.mxu0 %v2401
    %3669 = vmatprep.subr.bf16.mxu0 %v2398
    %3670 = vmatpush1.bf16.msra.mxu0 %v2397
    %3671 = vmatprep.subr.bf16.mxu0 %v2458
    %3672 = vmatpush2.bf16.msra.mxu0 %v2457
    %3673 = vmatprep.subr.bf16.mxu0 %v2454
    %3674 = vmatpush2.bf16.msra.mxu0 %v2453
    %3675 = vmatprep.subr.bf16.mxu0 %v2450
    %3676 = vmatpush2.bf16.msra.mxu0 %v2449
    %3677 = vmatprep.subr.bf16.mxu0 %v2446
    %3678 = vmatpush2.bf16.msra.mxu0 %v2445
    %3679 = vmatprep.subr.bf16.mxu0 %v2442
    %3680 = vmatpush2.bf16.msra.mxu0 %v2441
    %3681 = vmatprep.subr.bf16.mxu0 %v2438
    %3682 = vmatpush2.bf16.msra.mxu0 %v2437
    %3683 = vmatprep.subr.bf16.mxu0 %v2434
    %3684 = vmatpush2.bf16.msra.mxu0 %v2433
    %3685 = vmatprep.subr.bf16.mxu0 %v2430
    %3686 = vmatpush2.bf16.msra.mxu0 %v2429
    %3687 = vmatprep.mubr.bf16.mxu0 %v580
    %3688 = vmatmul.mubr.bf16.gmra.mxu0 %v579
    %v3689 = vpop.f32.mrf.mxu0
    %v3690 = vadd.f32 %v3649, %v3689
    %v3691 = vpop.f32.mrf.mxu0
    %v3692 = vadd.f32 %v3651, %v3691
    %v3693 = vpop.f32.mrf.mxu0
    %v3694 = vpop.f32.mrf.mxu0
    %3695 = vdwg.mxu0
    %3696 = vmatprep.subr.bf16.mxu0 %v2490
    %3697 = vmatpush1.bf16.msra.mxu0 %v2489
    %3698 = vmatprep.subr.bf16.mxu0 %v2486
    %3699 = vmatpush1.bf16.msra.mxu0 %v2485
    %3700 = vmatprep.subr.bf16.mxu0 %v2482
    %3701 = vmatpush1.bf16.msra.mxu0 %v2481
    %3702 = vmatprep.subr.bf16.mxu0 %v2478
    %3703 = vmatpush1.bf16.msra.mxu0 %v2477
    %3704 = vmatprep.subr.bf16.mxu0 %v2474
    %3705 = vmatpush1.bf16.msra.mxu0 %v2473
    %3706 = vmatprep.subr.bf16.mxu0 %v2470
    %3707 = vmatpush1.bf16.msra.mxu0 %v2469
    %3708 = vmatprep.subr.bf16.mxu0 %v2466
    %3709 = vmatpush1.bf16.msra.mxu0 %v2465
    %3710 = vmatprep.subr.bf16.mxu0 %v2462
    %3711 = vmatpush1.bf16.msra.mxu0 %v2461
    %3712 = vmatprep.subr.bf16.mxu0 %v2522
    %3713 = vmatpush2.bf16.msra.mxu0 %v2521
    %3714 = vmatprep.subr.bf16.mxu0 %v2518
    %3715 = vmatpush2.bf16.msra.mxu0 %v2517
    %3716 = vmatprep.subr.bf16.mxu0 %v2514
    %3717 = vmatpush2.bf16.msra.mxu0 %v2513
    %3718 = vmatprep.subr.bf16.mxu0 %v2510
    %3719 = vmatpush2.bf16.msra.mxu0 %v2509
    %3720 = vmatprep.subr.bf16.mxu0 %v2506
    %3721 = vmatpush2.bf16.msra.mxu0 %v2505
    %3722 = vmatprep.subr.bf16.mxu0 %v2502
    %3723 = vmatpush2.bf16.msra.mxu0 %v2501
    %3724 = vmatprep.subr.bf16.mxu0 %v2498
    %3725 = vmatpush2.bf16.msra.mxu0 %v2497
    %3726 = vmatprep.subr.bf16.mxu0 %v2494
    %3727 = vmatpush2.bf16.msra.mxu0 %v2493
    %3728 = vmatprep.mubr.bf16.mxu0 %v582
    %3729 = vmatmul.mubr.bf16.gmra.mxu0 %v581
    %v3730 = vpop.f32.mrf.mxu0
    %v3731 = vadd.f32 %v3690, %v3730
    %v3732 = vpop.f32.mrf.mxu0
    %v3733 = vadd.f32 %v3692, %v3732
    %v3734 = vpop.f32.mrf.mxu0
    %v3735 = vpop.f32.mrf.mxu0
    %3736 = vdwg.mxu0
    %3737 = vmatprep.subr.bf16.mxu0 %v2554
    %3738 = vmatpush1.bf16.msra.mxu0 %v2553
    %3739 = vmatprep.subr.bf16.mxu0 %v2550
    %3740 = vmatpush1.bf16.msra.mxu0 %v2549
    %3741 = vmatprep.subr.bf16.mxu0 %v2546
    %3742 = vmatpush1.bf16.msra.mxu0 %v2545
    %3743 = vmatprep.subr.bf16.mxu0 %v2542
    %3744 = vmatpush1.bf16.msra.mxu0 %v2541
    %3745 = vmatprep.subr.bf16.mxu0 %v2538
    %3746 = vmatpush1.bf16.msra.mxu0 %v2537
    %3747 = vmatprep.subr.bf16.mxu0 %v2534
    %3748 = vmatpush1.bf16.msra.mxu0 %v2533
    %3749 = vmatprep.subr.bf16.mxu0 %v2530
    %3750 = vmatpush1.bf16.msra.mxu0 %v2529
    %3751 = vmatprep.subr.bf16.mxu0 %v2526
    %3752 = vmatpush1.bf16.msra.mxu0 %v2525
    %3753 = vmatprep.subr.bf16.mxu0 %v2586
    %3754 = vmatpush2.bf16.msra.mxu0 %v2585
    %3755 = vmatprep.subr.bf16.mxu0 %v2582
    %3756 = vmatpush2.bf16.msra.mxu0 %v2581
    %3757 = vmatprep.subr.bf16.mxu0 %v2578
    %3758 = vmatpush2.bf16.msra.mxu0 %v2577
    %3759 = vmatprep.subr.bf16.mxu0 %v2574
    %3760 = vmatpush2.bf16.msra.mxu0 %v2573
    %3761 = vmatprep.subr.bf16.mxu0 %v2570
    %3762 = vmatpush2.bf16.msra.mxu0 %v2569
    %3763 = vmatprep.subr.bf16.mxu0 %v2566
    %3764 = vmatpush2.bf16.msra.mxu0 %v2565
    %3765 = vmatprep.subr.bf16.mxu0 %v2562
    %3766 = vmatpush2.bf16.msra.mxu0 %v2561
    %3767 = vmatprep.subr.bf16.mxu0 %v2558
    %3768 = vmatpush2.bf16.msra.mxu0 %v2557
    %3769 = vmatprep.mubr.bf16.mxu0 %v584
    %3770 = vmatmul.mubr.bf16.gmra.mxu0 %v583
    %v3771 = vpop.f32.mrf.mxu0
    %v3772 = vadd.f32 %v3731, %v3771
    %v3773 = vpop.f32.mrf.mxu0
    %v3774 = vadd.f32 %v3733, %v3773
    %v3775 = vpop.f32.mrf.mxu0
    %v3776 = vpop.f32.mrf.mxu0
    %3777 = vdwg.mxu0
    %3778 = vmatprep.subr.bf16.mxu0 %v2618
    %3779 = vmatpush1.bf16.msra.mxu0 %v2617
    %3780 = vmatprep.subr.bf16.mxu0 %v2614
    %3781 = vmatpush1.bf16.msra.mxu0 %v2613
    %3782 = vmatprep.subr.bf16.mxu0 %v2610
    %3783 = vmatpush1.bf16.msra.mxu0 %v2609
    %3784 = vmatprep.subr.bf16.mxu0 %v2606
    %3785 = vmatpush1.bf16.msra.mxu0 %v2605
    %3786 = vmatprep.subr.bf16.mxu0 %v2602
    %3787 = vmatpush1.bf16.msra.mxu0 %v2601
    %3788 = vmatprep.subr.bf16.mxu0 %v2598
    %3789 = vmatpush1.bf16.msra.mxu0 %v2597
    %3790 = vmatprep.subr.bf16.mxu0 %v2594
    %3791 = vmatpush1.bf16.msra.mxu0 %v2593
    %3792 = vmatprep.subr.bf16.mxu0 %v2590
    %3793 = vmatpush1.bf16.msra.mxu0 %v2589
    %3794 = vmatprep.subr.bf16.mxu0 %v2650
    %3795 = vmatpush2.bf16.msra.mxu0 %v2649
    %3796 = vmatprep.subr.bf16.mxu0 %v2646
    %3797 = vmatpush2.bf16.msra.mxu0 %v2645
    %3798 = vmatprep.subr.bf16.mxu0 %v2642
    %3799 = vmatpush2.bf16.msra.mxu0 %v2641
    %3800 = vmatprep.subr.bf16.mxu0 %v2638
    %3801 = vmatpush2.bf16.msra.mxu0 %v2637
    %3802 = vmatprep.subr.bf16.mxu0 %v2634
    %3803 = vmatpush2.bf16.msra.mxu0 %v2633
    %3804 = vmatprep.subr.bf16.mxu0 %v2630
    %3805 = vmatpush2.bf16.msra.mxu0 %v2629
    %3806 = vmatprep.subr.bf16.mxu0 %v2626
    %3807 = vmatpush2.bf16.msra.mxu0 %v2625
    %3808 = vmatprep.subr.bf16.mxu0 %v2622
    %3809 = vmatpush2.bf16.msra.mxu0 %v2621
    %3810 = vmatprep.mubr.bf16.mxu0 %v586
    %3811 = vmatmul.mubr.bf16.gmra.mxu0 %v585
    %v3812 = vpop.f32.mrf.mxu0
    %v3813 = vadd.f32 %v3772, %v3812
    %v3814 = vpop.f32.mrf.mxu0
    %v3815 = vadd.f32 %v3774, %v3814
    %v3816 = vpop.f32.mrf.mxu0
    %v3817 = vpop.f32.mrf.mxu0
    %3818 = vdwg.mxu0
    %v3819 = vld [vmem:[%s2] sm:$0xf]
    %v3821 = vlaneseq
    %v3822 = vshrl.u32 %v3821, 7
    %v3823 = vsub.s32 0, %v3822
    %v3824 = vrot.slane %v3819, %v3823
    %v3825 = vlaneseq
    %v3826 = vshrl.u32 %v3825, 7
    %v3827 = vsub.s32 1, %v3826
    %v3828 = vrot.slane %v3819, %v3827
    %v3829 = vlaneseq
    %v3830 = vshrl.u32 %v3829, 7
    %v3831 = vsub.s32 2, %v3830
    %v3832 = vrot.slane %v3819, %v3831
    %v3833 = vlaneseq
    %v3834 = vshrl.u32 %v3833, 7
    %v3835 = vsub.s32 3, %v3834
    %v3836 = vrot.slane %v3819, %v3835
    %v3841 = vmul.f32 %v3485, %v3824
    %v3842 = vmul.f32 %v3487, %v3828
    %v3843 = vmul.f32 %v3813, %v3832
    %v3844 = vmul.f32 %v3815, %v3836
    %v3845 = vld [vmem:[%s3] sm:$0xf]
    %v3847 = vlaneseq
    %v3848 = vshrl.u32 %v3847, 7
    %v3849 = vsub.s32 0, %v3848
    %v3850 = vrot.slane %v3845, %v3849
    %v3851 = vlaneseq
    %v3852 = vshrl.u32 %v3851, 7
    %v3853 = vsub.s32 1, %v3852
    %v3854 = vrot.slane %v3845, %v3853
    %v3855 = vlaneseq
    %v3856 = vshrl.u32 %v3855, 7
    %v3857 = vsub.s32 2, %v3856
    %v3858 = vrot.slane %v3845, %v3857
    %v3859 = vlaneseq
    %v3860 = vshrl.u32 %v3859, 7
    %v3861 = vsub.s32 3, %v3860
    %v3862 = vrot.slane %v3845, %v3861
    %v3867 = vadd.f32 %v3841, %v3850
    %v3868 = vadd.f32 %v3842, %v3854
    %v3869 = vadd.f32 %v3843, %v3858
    %v3870 = vadd.f32 %v3844, %v3862
    %vm3871 = vcmp.gt.f32.partialorder %v3867, 0.0
    %vm3872 = vcmp.gt.f32.partialorder %v3868, 0.0
    %vm3873 = vcmp.gt.f32.partialorder %v3869, 0.0
    %vm3874 = vcmp.gt.f32.partialorder %v3870, 0.0
    %v3875 = vld [vmem:[%s4] sm:$0xf]
    %v3877 = vlaneseq
    %v3878 = vshrl.u32 %v3877, 7
    %v3879 = vsub.s32 0, %v3878
    %v3880 = vrot.slane %v3875, %v3879
    %v3881 = vlaneseq
    %v3882 = vshrl.u32 %v3881, 7
    %v3883 = vsub.s32 1, %v3882
    %v3884 = vrot.slane %v3875, %v3883
    %v3885 = vlaneseq
    %v3886 = vshrl.u32 %v3885, 7
    %v3887 = vsub.s32 2, %v3886
    %v3888 = vrot.slane %v3875, %v3887
    %v3889 = vlaneseq
    %v3890 = vshrl.u32 %v3889, 7
    %v3891 = vsub.s32 3, %v3890
    %v3892 = vrot.slane %v3875, %v3891
    %v3897 = vmul.f32 %v3880, %v3867
    %v3898 = vmul.f32 %v3884, %v3868
    %v3899 = vmul.f32 %v3888, %v3869
    %v3900 = vmul.f32 %v3892, %v3870
    %v3901 = vsel %vm3871, %v3867, %v3897
    %v3902 = vsel %vm3872, %v3868, %v3898
    %v3903 = vsel %vm3873, %v3869, %v3899
    %v3904 = vsel %vm3874, %v3870, %v3900
    %v3905 = vld [vmem:[%s5] sm:$0xff]
    %v3906 = vld [vmem:[%s5 + $0x8] sm:$0xff]
    %v3907 = vld [vmem:[%s5 + $0x10] sm:$0xff]
    %v3908 = vld [vmem:[%s5 + $0x18] sm:$0xff]
    %v3909 = vld [vmem:[%s5 + $0x20] sm:$0xff]
    %v3910 = vld [vmem:[%s5 + $0x28] sm:$0xff]
    %v3911 = vld [vmem:[%s5 + $0x30] sm:$0xff]
    %v3912 = vld [vmem:[%s5 + $0x38] sm:$0xff]
    %v3913 = vld [vmem:[%s5 + $0x40] sm:$0xff]
    %v3914 = vld [vmem:[%s5 + $0x48] sm:$0xff]
    %v3915 = vld [vmem:[%s5 + $0x50] sm:$0xff]
    %v3916 = vld [vmem:[%s5 + $0x58] sm:$0xff]
    %v3917 = vld [vmem:[%s5 + $0x60] sm:$0xff]
    %v3918 = vld [vmem:[%s5 + $0x68] sm:$0xff]
    %v3919 = vld [vmem:[%s5 + $0x70] sm:$0xff]
    %v3920 = vld [vmem:[%s5 + $0x78] sm:$0xff]
    %v3921 = vld [vmem:[%s5 + $0x80] sm:$0xff]
    %v3922 = vld [vmem:[%s5 + $0x88] sm:$0xff]
    %v3923 = vld [vmem:[%s5 + $0x90] sm:$0xff]
    %v3924 = vld [vmem:[%s5 + $0x98] sm:$0xff]
    %v3925 = vld [vmem:[%s5 + $0xa0] sm:$0xff]
    %v3926 = vld [vmem:[%s5 + $0xa8] sm:$0xff]
    %v3927 = vld [vmem:[%s5 + $0xb0] sm:$0xff]
    %v3928 = vld [vmem:[%s5 + $0xb8] sm:$0xff]
    %v3929 = vld [vmem:[%s5 + $0xc0] sm:$0xff]
    %v3930 = vld [vmem:[%s5 + $0xc8] sm:$0xff]
    %v3931 = vld [vmem:[%s5 + $0xd0] sm:$0xff]
    %v3932 = vld [vmem:[%s5 + $0xd8] sm:$0xff]
    %v3933 = vld [vmem:[%s5 + $0xe0] sm:$0xff]
    %v3934 = vld [vmem:[%s5 + $0xe8] sm:$0xff]
    %v3935 = vld [vmem:[%s5 + $0xf0] sm:$0xff]
    %v3936 = vld [vmem:[%s5 + $0xf8] sm:$0xff]
    %v3937 = vld [vmem:[%s5 + $0x100] sm:$0xff]
    %v3938 = vld [vmem:[%s5 + $0x108] sm:$0xff]
    %v3939 = vld [vmem:[%s5 + $0x110] sm:$0xff]
    %v3940 = vld [vmem:[%s5 + $0x118] sm:$0xff]
    %v3941 = vld [vmem:[%s5 + $0x120] sm:$0xff]
    %v3942 = vld [vmem:[%s5 + $0x128] sm:$0xff]
    %v3943 = vld [vmem:[%s5 + $0x130] sm:$0xff]
    %v3944 = vld [vmem:[%s5 + $0x138] sm:$0xff]
    %v3945 = vld [vmem:[%s5 + $0x140] sm:$0xff]
    %v3946 = vld [vmem:[%s5 + $0x148] sm:$0xff]
    %v3947 = vld [vmem:[%s5 + $0x150] sm:$0xff]
    %v3948 = vld [vmem:[%s5 + $0x158] sm:$0xff]
    %v3949 = vld [vmem:[%s5 + $0x160] sm:$0xff]
    %v3950 = vld [vmem:[%s5 + $0x168] sm:$0xff]
    %v3951 = vld [vmem:[%s5 + $0x170] sm:$0xff]
    %v3952 = vld [vmem:[%s5 + $0x178] sm:$0xff]
    %v3953 = vld [vmem:[%s5 + $0x180] sm:$0xff]
    %v3954 = vld [vmem:[%s5 + $0x188] sm:$0xff]
    %v3955 = vld [vmem:[%s5 + $0x190] sm:$0xff]
    %v3956 = vld [vmem:[%s5 + $0x198] sm:$0xff]
    %v3957 = vld [vmem:[%s5 + $0x1a0] sm:$0xff]
    %v3958 = vld [vmem:[%s5 + $0x1a8] sm:$0xff]
    %v3959 = vld [vmem:[%s5 + $0x1b0] sm:$0xff]
    %v3960 = vld [vmem:[%s5 + $0x1b8] sm:$0xff]
    %v3961 = vld [vmem:[%s5 + $0x1c0] sm:$0xff]
    %v3962 = vld [vmem:[%s5 + $0x1c8] sm:$0xff]
    %v3963 = vld [vmem:[%s5 + $0x1d0] sm:$0xff]
    %v3964 = vld [vmem:[%s5 + $0x1d8] sm:$0xff]
    %v3965 = vld [vmem:[%s5 + $0x1e0] sm:$0xff]
    %v3966 = vld [vmem:[%s5 + $0x1e8] sm:$0xff]
    %v3967 = vld [vmem:[%s5 + $0x1f0] sm:$0xff]
    %v3968 = vld [vmem:[%s5 + $0x1f8] sm:$0xff]
    %v3969 = vld [vmem:[%s6] sm:$0x1]
    %v3971 = vlaneseq
    %v3972 = vshrl.u32 %v3971, 7
    %v3973 = vsub.s32 0, %v3972
    %v3974 = vrot.slane %v3969, %v3973
    %3976 = vmatprep.subr.mxu0 0.0
    %3977 = vmatpush1.msra.mxu0 %v3920
    %3978 = vmatprep.subr.mxu0 0.0
    %3979 = vmatpush1.msra.mxu0 %v3919
    %3980 = vmatprep.subr.mxu0 0.0
    %3981 = vmatpush1.msra.mxu0 %v3918
    %3982 = vmatprep.subr.mxu0 0.0
    %3983 = vmatpush1.msra.mxu0 %v3917
    %3984 = vmatprep.subr.mxu0 0.0
    %3985 = vmatpush1.msra.mxu0 %v3916
    %3986 = vmatprep.subr.mxu0 0.0
    %3987 = vmatpush1.msra.mxu0 %v3915
    %3988 = vmatprep.subr.mxu0 0.0
    %3989 = vmatpush1.msra.mxu0 %v3914
    %3990 = vmatprep.subr.mxu0 0.0
    %3991 = vmatpush1.msra.mxu0 %v3913
    %3992 = vmatprep.subr.mxu0 0.0
    %3993 = vmatpush1.msra.mxu0 %v3912
    %3994 = vmatprep.subr.mxu0 0.0
    %3995 = vmatpush1.msra.mxu0 %v3911
    %3996 = vmatprep.subr.mxu0 0.0
    %3997 = vmatpush1.msra.mxu0 %v3910
    %3998 = vmatprep.subr.mxu0 0.0
    %3999 = vmatpush1.msra.mxu0 %v3909
    %4000 = vmatprep.subr.mxu0 0.0
    %4001 = vmatpush1.msra.mxu0 %v3908
    %4002 = vmatprep.subr.mxu0 0.0
    %4003 = vmatpush1.msra.mxu0 %v3907
    %4004 = vmatprep.subr.mxu0 0.0
    %4005 = vmatpush1.msra.mxu0 %v3906
    %4006 = vmatprep.subr.mxu0 0.0
    %4007 = vmatpush1.msra.mxu0 %v3905
    %4008 = vmatprep.subr.mxu0 0.0
    %4009 = vmatpush2.msra.mxu0 %v3936
    %4010 = vmatprep.subr.mxu0 0.0
    %4011 = vmatpush2.msra.mxu0 %v3935
    %4012 = vmatprep.subr.mxu0 0.0
    %4013 = vmatpush2.msra.mxu0 %v3934
    %4014 = vmatprep.subr.mxu0 0.0
    %4015 = vmatpush2.msra.mxu0 %v3933
    %4016 = vmatprep.subr.mxu0 0.0
    %4017 = vmatpush2.msra.mxu0 %v3932
    %4018 = vmatprep.subr.mxu0 0.0
    %4019 = vmatpush2.msra.mxu0 %v3931
    %4020 = vmatprep.subr.mxu0 0.0
    %4021 = vmatpush2.msra.mxu0 %v3930
    %4022 = vmatprep.subr.mxu0 0.0
    %4023 = vmatpush2.msra.mxu0 %v3929
    %4024 = vmatprep.subr.mxu0 0.0
    %4025 = vmatpush2.msra.mxu0 %v3928
    %4026 = vmatprep.subr.mxu0 0.0
    %4027 = vmatpush2.msra.mxu0 %v3927
    %4028 = vmatprep.subr.mxu0 0.0
    %4029 = vmatpush2.msra.mxu0 %v3926
    %4030 = vmatprep.subr.mxu0 0.0
    %4031 = vmatpush2.msra.mxu0 %v3925
    %4032 = vmatprep.subr.mxu0 0.0
    %4033 = vmatpush2.msra.mxu0 %v3924
    %4034 = vmatprep.subr.mxu0 0.0
    %4035 = vmatpush2.msra.mxu0 %v3923
    %4036 = vmatprep.subr.mxu0 0.0
    %4037 = vmatpush2.msra.mxu0 %v3922
    %4038 = vmatprep.subr.mxu0 0.0
    %4039 = vmatpush2.msra.mxu0 %v3921
    %4040 = vmatprep.mubr.f32.mxu0 %v3902
    %4041 = vmatmul.mubr.f32.gmra.mxu0 %v3901
    %v4042 = vpop.f32.mrf.mxu0
    %v4043 = vadd.f32 %v3974, %v4042
    %v4044 = vpop.f32.mrf.mxu0
    %4045 = vdwg.mxu0
    %4046 = vmatprep.subr.mxu0 0.0
    %4047 = vmatpush1.msra.mxu0 %v3952
    %4048 = vmatprep.subr.mxu0 0.0
    %4049 = vmatpush1.msra.mxu0 %v3951
    %4050 = vmatprep.subr.mxu0 0.0
    %4051 = vmatpush1.msra.mxu0 %v3950
    %4052 = vmatprep.subr.mxu0 0.0
    %4053 = vmatpush1.msra.mxu0 %v3949
    %4054 = vmatprep.subr.mxu0 0.0
    %4055 = vmatpush1.msra.mxu0 %v3948
    %4056 = vmatprep.subr.mxu0 0.0
    %4057 = vmatpush1.msra.mxu0 %v3947
    %4058 = vmatprep.subr.mxu0 0.0
    %4059 = vmatpush1.msra.mxu0 %v3946
    %4060 = vmatprep.subr.mxu0 0.0
    %4061 = vmatpush1.msra.mxu0 %v3945
    %4062 = vmatprep.subr.mxu0 0.0
    %4063 = vmatpush1.msra.mxu0 %v3944
    %4064 = vmatprep.subr.mxu0 0.0
    %4065 = vmatpush1.msra.mxu0 %v3943
    %4066 = vmatprep.subr.mxu0 0.0
    %4067 = vmatpush1.msra.mxu0 %v3942
    %4068 = vmatprep.subr.mxu0 0.0
    %4069 = vmatpush1.msra.mxu0 %v3941
    %4070 = vmatprep.subr.mxu0 0.0
    %4071 = vmatpush1.msra.mxu0 %v3940
    %4072 = vmatprep.subr.mxu0 0.0
    %4073 = vmatpush1.msra.mxu0 %v3939
    %4074 = vmatprep.subr.mxu0 0.0
    %4075 = vmatpush1.msra.mxu0 %v3938
    %4076 = vmatprep.subr.mxu0 0.0
    %4077 = vmatpush1.msra.mxu0 %v3937
    %4078 = vmatprep.subr.mxu0 0.0
    %4079 = vmatpush2.msra.mxu0 %v3968
    %4080 = vmatprep.subr.mxu0 0.0
    %4081 = vmatpush2.msra.mxu0 %v3967
    %4082 = vmatprep.subr.mxu0 0.0
    %4083 = vmatpush2.msra.mxu0 %v3966
    %4084 = vmatprep.subr.mxu0 0.0
    %4085 = vmatpush2.msra.mxu0 %v3965
    %4086 = vmatprep.subr.mxu0 0.0
    %4087 = vmatpush2.msra.mxu0 %v3964
    %4088 = vmatprep.subr.mxu0 0.0
    %4089 = vmatpush2.msra.mxu0 %v3963
    %4090 = vmatprep.subr.mxu0 0.0
    %4091 = vmatpush2.msra.mxu0 %v3962
    %4092 = vmatprep.subr.mxu0 0.0
    %4093 = vmatpush2.msra.mxu0 %v3961
    %4094 = vmatprep.subr.mxu0 0.0
    %4095 = vmatpush2.msra.mxu0 %v3960
    %4096 = vmatprep.subr.mxu0 0.0
    %4097 = vmatpush2.msra.mxu0 %v3959
    %4098 = vmatprep.subr.mxu0 0.0
    %4099 = vmatpush2.msra.mxu0 %v3958
    %4100 = vmatprep.subr.mxu0 0.0
    %4101 = vmatpush2.msra.mxu0 %v3957
    %4102 = vmatprep.subr.mxu0 0.0
    %4103 = vmatpush2.msra.mxu0 %v3956
    %4104 = vmatprep.subr.mxu0 0.0
    %4105 = vmatpush2.msra.mxu0 %v3955
    %4106 = vmatprep.subr.mxu0 0.0
    %4107 = vmatpush2.msra.mxu0 %v3954
    %4108 = vmatprep.subr.mxu0 0.0
    %4109 = vmatpush2.msra.mxu0 %v3953
    %4110 = vmatprep.mubr.f32.mxu0 %v3904
    %4111 = vmatmul.mubr.f32.gmra.mxu0 %v3903
    %v4112 = vpop.f32.mrf.mxu0
    %v4113 = vadd.f32 %v4043, %v4112
    %v4114 = vpop.f32.mrf.mxu0
    %4115 = vdwg.mxu0
    %4116 = vst [vmem:[#allocation2] sm:$0xff] %v4113
    // Predicated region
    $region30: #{forward.5} parent=1 // pred_check
      _
    $region31: #{forward.5} parent=1 // pred_check_branch
      %4118 = sbr.rel (0) target = $region33
    $region32: #{forward.5} parent=1 // pred_region
      %s4120 = ssub.s32 128, 128
      %4121 = vsyncadd [#allocation3], %s4120
      %s4123 = sshll.u32 [#allocation2], 4
      %s4124 = int_to_ptr.vmem [resolvable:$true] %s4123
      %4126 = dma.vmem_to_hbm [thread:$0]  %s4124, 128, %s7, [#allocation3]
    $region33: #{forward.5} parent=1 // pred_fallthru
      _
    // Predicated region
    $region34: #{forward.5} parent=1 // pred_check
      _
    $region35: #{forward.5} parent=1 // pred_check_branch
      %4128 = sbr.rel (0) target = $region37
    $region36: #{forward.5} parent=1 // pred_region
      %4129 = dma.done [#allocation3], 128
    $region37: #{forward.5} parent=1 // pred_fallthru
      _
    %4130 = vsyncpa [#allocation3], 1

</llo_original>
